<compile_context>
chip_gen: v7x
topology: tpu7x:2x2x1
jax: 0.10.0
libtpu: 0.0.40
codegen_flags: <defaults>
</compile_context>

<pallas_src>
import functools

import jax
import jax.numpy as jnp
from jax.experimental import pallas as pl
from jax.experimental.pallas import tpu as pltpu


def _layer_kernel(xq_ref, xk_ref, mask_ref,
                  ln1_w_ref, ln1_b_ref,
                  wq_ref, bq_ref, wkv_ref, bkv_ref, wo_ref, bo_ref,
                  ln2_w_ref, ln2_b_ref,
                  w1_ref, b1_ref, w2_ref, b2_ref,
                  o_ref,
                  q_scr, k_scr, v_scr, m_scr, l_scr, acc_scr, ctx_scr,
                  *, n_head, head_dim, pffn_residual, eps, causal_skip):
    """Grid = (batch, q_tile, kv_tile); kv_tile is the (innermost) reduction axis.

    xq_ref   : (1, TQ, E) bf16   query tile of x (residual + q projection + FFN)
    xk_ref   : (1, TK, E) bf16   KV tile of x (k/v projections)
    mask_ref : (TQ, TK)   f32    additive attention-mask tile
    weights  : bf16, pre-transposed, single-buffered (constant index_map)
    scratch  : per-(batch, q-tile) online-softmax state, persists across kv steps
    """
    qi = pl.program_id(1)
    ki = pl.program_id(2)
    nk = pl.num_programs(2)
    tq = q_scr.shape[1]
    tk = k_scr.shape[1]
    e_dim = n_head * head_dim

    def layer_norm(v, w, b):
        mu = jnp.mean(v, axis=-1, keepdims=True)
        var = jnp.mean((v - mu) ** 2, axis=-1, keepdims=True)
        return (v - mu) * jax.lax.rsqrt(var + eps) * w + b

    # ---- first KV step of each (batch, q-tile): project q once, reset softmax state
    @pl.when(ki == 0)
    def _init():
        xq = xq_ref[0].astype(jnp.float32)
        h1q = layer_norm(xq, ln1_w_ref[...], ln1_b_ref[...])
        # 1/sqrt(head_dim) is already folded into wq/bq by the wrapper.
        q = jnp.dot(h1q.astype(jnp.bfloat16), wq_ref[...],
                    preferred_element_type=jnp.float32) + bq_ref[...]
        # TODO(synk): replace the per-head slice stores with a layout-aware
        # pltpu.einshape('s(hd)->hsd') once that lowering is verified; these are
        # data-movement-only masked stores (O(H) per q-tile, not per kv step).
        for h in range(n_head):
            lo = h * head_dim
            q_scr[h] = q[:, lo:lo + head_dim].astype(jnp.bfloat16)
        m_scr[...] = jnp.full_like(m_scr, -1e30)
        l_scr[...] = jnp.zeros_like(l_scr)
        acc_scr[...] = jnp.zeros_like(acc_scr)

    # ---- per-KV-tile flash / online-softmax update
    def _update():
        xk = xk_ref[0].astype(jnp.float32)
        h1k = layer_norm(xk, ln1_w_ref[...], ln1_b_ref[...])
        # Fused K|V projection: one (TK,E)@(E,2E) MXU pass, bf16 operands, f32 acc.
        kv = jnp.dot(h1k.astype(jnp.bfloat16), wkv_ref[...],
                     preferred_element_type=jnp.float32) + bkv_ref[...]
        for h in range(n_head):                      # head split: data movement only
            lo = h * head_dim
            k_scr[h] = kv[:, lo:lo + head_dim].astype(jnp.bfloat16)
            v_scr[h] = kv[:, e_dim + lo:e_dim + lo + head_dim].astype(jnp.bfloat16)

        s = jnp.einsum('hqd,hkd->hqk', q_scr[...], k_scr[...],
                       preferred_element_type=jnp.float32)          # (H, TQ, TK)
        s = s + mask_ref[...][None, :, :]                            # additive mask
        m_prev = m_scr[...]
        m_new = jnp.maximum(m_prev, jnp.max(s, axis=-1, keepdims=True))
        alpha = jnp.exp(m_prev - m_new)
        p = jnp.exp(s - m_new)
        l_scr[...] = alpha * l_scr[...] + jnp.sum(p, axis=-1, keepdims=True)
        acc_scr[...] = alpha * acc_scr[...] + jnp.einsum(
            'hqk,hkd->hqd', p.astype(jnp.bfloat16), v_scr[...],
            preferred_element_type=jnp.float32)
        m_scr[...] = m_new
        # TODO(synk): attention dropout (train mode only) intentionally omitted.

    if causal_skip:
        # KV tiles entirely above the causal diagonal contribute exactly 0
        # (mask <= -1e9 underflows exp); skip both their projections and matmuls.
        pl.when(ki * tk < (qi + 1) * tq)(_update)
    else:
        _update()

    # ---- last KV step: normalize, out-proj + residual, LN2 + FFN + residuals
    @pl.when(ki == nk - 1)
    def _finalize():
        ctx = acc_scr[...] * pl.reciprocal(l_scr[...], approx=True)   # (H, TQ, hd) f32
        for h in range(n_head):     # reassemble heads lane-contiguously (bf16 MXU operand)
            lo = h * head_dim
            ctx_scr[:, lo:lo + head_dim] = ctx[h].astype(jnp.bfloat16)
        # Single well-shaped (TQ,E)@(E,E) output projection.
        attn_out = jnp.dot(ctx_scr[...], wo_ref[...],
                           preferred_element_type=jnp.float32) + bo_ref[...]
        xq = xq_ref[0].astype(jnp.float32)
        y1 = attn_out + xq

        inner = layer_norm(y1, ln2_w_ref[...], ln2_b_ref[...])
        hid = jnp.dot(inner.astype(jnp.bfloat16), w1_ref[...],
                      preferred_element_type=jnp.float32) + b1_ref[...]
        hid = jnp.maximum(hid, 0.0)                                   # ReLU
        f = jnp.dot(hid.astype(jnp.bfloat16), w2_ref[...],
                    preferred_element_type=jnp.float32) + b2_ref[...]
        if pffn_residual:
            f = f + inner
        # TODO(synk): FFN dropout layers are identity in eval mode and omitted.
        o_ref[0] = (f + y1).astype(o_ref.dtype)


def causal_transformer_layer(x, attn_mask, params, n_head, pffn_residual=True,
                             eps=1e-8, tq=None, tk=None, causal_skip=False):
    """x: (B, S, E), attn_mask: (S, S) additive float mask.

    eps defaults to 1e-8 to match the PyTorch module (nn.LayerNorm(n_embd, eps=1e-08)).
    causal_skip=True may only be used when attn_mask is (at least) causal.
    """
    B, S, E = x.shape
    assert E % n_head == 0
    head_dim = E // n_head
    if tq is None:
        tq = min(S, 256)        # v6e/v7x MXU wants M >= 256; v5e is happy with 128
    if tk is None:
        tk = min(S, 256)
    assert S % tq == 0 and S % tk == 0, "S must be a multiple of the tile sizes"
    assert tq % 8 == 0 and tk % 128 == 0, "(sublane, lane) constraints on the mask tile"
    nq, nk = S // tq, S // tk
    scale = 1.0 / (head_dim ** 0.5)

    in_w = params["in_proj_weight"]                              # (3E, E)
    in_b = params["in_proj_bias"]                                # (3E,)
    # 1/sqrt(head_dim) folded into the constant q-projection weight/bias.
    wq = (in_w[:E].T * scale).astype(jnp.bfloat16)               # (E, E)
    bq = (in_b[:E] * scale).reshape(1, E).astype(jnp.float32)
    wkv = in_w[E:].T.astype(jnp.bfloat16)                        # (E, 2E): [k | v]
    bkv = in_b[E:].reshape(1, 2 * E).astype(jnp.float32)
    wo = params["out_proj_weight"].T.astype(jnp.bfloat16)        # (E, E)
    bo = params["out_proj_bias"].reshape(1, E).astype(jnp.float32)
    w1 = params["conv1_weight"][:, :, 0].T.astype(jnp.bfloat16)  # 1x1 conv == linear
    b1 = params["conv1_bias"].reshape(1, E).astype(jnp.float32)
    w2 = params["conv2_weight"][:, :, 0].T.astype(jnp.bfloat16)
    b2 = params["conv2_bias"].reshape(1, E).astype(jnp.float32)
    ln1_w = params["ln1_weight"].reshape(1, E).astype(jnp.float32)
    ln1_b = params["ln1_bias"].reshape(1, E).astype(jnp.float32)
    ln2_w = params["ln2_weight"].reshape(1, E).astype(jnp.float32)
    ln2_b = params["ln2_bias"].reshape(1, E).astype(jnp.float32)

    # bf16 activations at the kernel boundary (halves x DMA); stats stay f32 inside.
    x_in = x.astype(jnp.bfloat16)
    mask = attn_mask.astype(jnp.float32)

    kernel = functools.partial(_layer_kernel, n_head=n_head, head_dim=head_dim,
                               pffn_residual=pffn_residual, eps=eps,
                               causal_skip=causal_skip)

    # Grid-invariant operands: constant index_map (never re-DMA'd) + single VMEM buffer.
    def const_spec(shape):
        return pl.BlockSpec(shape, lambda b, qi, ki: (0,) * len(shape),
                            pipeline_mode=pl.Buffered(1))

    # ---- explicit scoped-VMEM budget (defaults are only 16/32 MiB) -----------------
    bf, f4 = 2, 4
    weight_bytes = 6 * E * E * bf + 10 * E * f4          # 5 weight mats (single-buffered) + biases/LN
    act_bytes = (2 * tq * E * bf + 2 * tk * E * bf       # xq / xk blocks (double-buffered)
                 + 2 * tq * E * f4                       # output block
                 + 2 * tq * tk * f4)                     # mask tile
    scratch_bytes = (n_head * tq * head_dim * bf         # q
                     + 2 * n_head * tk * head_dim * bf   # k, v
                     + 2 * n_head * tq * 128 * f4        # m, l (lane-padded to 128)
                     + n_head * tq * head_dim * f4       # acc
                     + tq * E * bf)                      # reassembled ctx
    vmem_limit = int(min(max(weight_bytes + act_bytes + scratch_bytes + (16 << 20),
                             32 << 20), 64 << 20))

    flops = (2 * B * S * E * E                    # q projection
             + 2 * nq * B * S * 2 * E * E         # k/v projection (recomputed per q tile)
             + 4 * B * S * S * E                  # q@k^T and p@v
             + 2 * B * S * E * E                  # attention out-proj
             + 4 * B * S * E * E)                 # FFN
    cost = pl.CostEstimate(
        flops=flops,
        transcendentals=B * n_head * S * S,
        bytes_accessed=B * S * E * (bf * (1 + nq) + f4) + 6 * E * E * bf + S * S * f4)

    # TODO(synk): k/v projection is recomputed once per query tile; for very long S a
    # two-pass variant (QKV precompute + flash attention) would amortize it.
    return pl.pallas_call(
        kernel,
        out_shape=jax.ShapeDtypeStruct((B, S, E), x.dtype),
        grid=(B, nq, nk),
        in_specs=[
            pl.BlockSpec((1, tq, E), lambda b, qi, ki: (b, qi, 0)),   # x, query tile
            pl.BlockSpec((1, tk, E), lambda b, qi, ki: (b, ki, 0)),   # x, KV tile
            pl.BlockSpec((tq, tk), lambda b, qi, ki: (qi, ki)),       # mask tile
            const_spec((1, E)), const_spec((1, E)),                   # LN1 w/b
            const_spec((E, E)), const_spec((1, E)),                   # q proj (scale folded)
            const_spec((E, 2 * E)), const_spec((1, 2 * E)),           # fused k/v proj
            const_spec((E, E)), const_spec((1, E)),                   # out proj
            const_spec((1, E)), const_spec((1, E)),                   # LN2 w/b
            const_spec((E, E)), const_spec((1, E)),                   # conv1 (1x1)
            const_spec((E, E)), const_spec((1, E)),                   # conv2 (1x1)
        ],
        out_specs=pl.BlockSpec((1, tq, E), lambda b, qi, ki: (b, qi, 0)),
        scratch_shapes=[
            pltpu.VMEM((n_head, tq, head_dim), jnp.bfloat16),   # q per head (scaled)
            pltpu.VMEM((n_head, tk, head_dim), jnp.bfloat16),   # k per head (current tile)
            pltpu.VMEM((n_head, tk, head_dim), jnp.bfloat16),   # v per head (current tile)
            pltpu.VMEM((n_head, tq, 1), jnp.float32),           # online-softmax running max
            pltpu.VMEM((n_head, tq, 1), jnp.float32),           # online-softmax denominator
            pltpu.VMEM((n_head, tq, head_dim), jnp.float32),    # attention output accumulator
            pltpu.VMEM((tq, E), jnp.bfloat16),                  # reassembled context (bf16)
        ],
        compiler_params=pltpu.CompilerParams(
            dimension_semantics=("parallel", "parallel", "arbitrary"),
            vmem_limit_bytes=vmem_limit),
        cost_estimate=cost,
    )(x_in, x_in, mask,
      ln1_w, ln1_b, wq, bq, wkv, bkv, wo, bo,
      ln2_w, ln2_b, w1, b1, w2, b2)


def _reference_layer(x, attn_mask, params, n_head, pffn_residual, eps=1e-8):
    """Pure-JAX f32 replica of CausalTransformerLayer (eval mode) for checking."""
    B, S, E = x.shape
    hd = E // n_head

    def ln(v, w, b):
        mu = v.mean(-1, keepdims=True)
        var = ((v - mu) ** 2).mean(-1, keepdims=True)
        return (v - mu) / jnp.sqrt(var + eps) * w + b

    h1 = ln(x, params["ln1_weight"], params["ln1_bias"])
    in_w, in_b = params["in_proj_weight"], params["in_proj_bias"]
    q = h1 @ in_w[:E].T + in_b[:E]
    k = h1 @ in_w[E:2 * E].T + in_b[E:2 * E]
    v = h1 @ in_w[2 * E:].T + in_b[2 * E:]
    q = q.reshape(B, S, n_head, hd).transpose(0, 2, 1, 3)
    k = k.reshape(B, S, n_head, hd).transpose(0, 2, 1, 3)
    v = v.reshape(B, S, n_head, hd).transpose(0, 2, 1, 3)
    s = jnp.einsum("bhqd,bhkd->bhqk", q, k) / jnp.sqrt(float(hd)) + attn_mask
    a = jax.nn.softmax(s, axis=-1)
    ctx = jnp.einsum("bhqk,bhkd->bhqd", a, v).transpose(0, 2, 1, 3).reshape(B, S, E)
    attn_out = ctx @ params["out_proj_weight"].T + params["out_proj_bias"]
    y1 = attn_out + x

    inner = ln(y1, params["ln2_weight"], params["ln2_bias"])
    h = jnp.maximum(inner @ params["conv1_weight"][:, :, 0].T + params["conv1_bias"], 0.0)
    f = h @ params["conv2_weight"][:, :, 0].T + params["conv2_bias"]
    if pffn_residual:
        f = f + inner
    return f + y1


if __name__ == "__main__":
    # Small but exercises the tiling: 2 query tiles x 2 KV tiles per batch element,
    # one fully-masked (skipped) causal KV tile. E is a multiple of 128 (lane-dense).
    B, S, E, n_head = 2, 256, 128, 4
    TQ = TK = 128          # production: 256+ on v6e/v7x for MXU-row utilization
    pffn_residual = True

    keys = jax.random.split(jax.random.PRNGKey(0), 13)
    params = {
        "in_proj_weight":  jax.random.normal(keys[0], (3 * E, E), jnp.float32) * 0.1,
        "in_proj_bias":    jax.random.normal(keys[1], (3 * E,), jnp.float32) * 0.05,
        "out_proj_weight": jax.random.normal(keys[2], (E, E), jnp.float32) * 0.1,
        "out_proj_bias":   jax.random.normal(keys[3], (E,), jnp.float32) * 0.05,
        "conv1_weight":    jax.random.normal(keys[4], (E, E, 1), jnp.float32) * 0.1,
        "conv1_bias":      jax.random.normal(keys[5], (E,), jnp.float32) * 0.05,
        "conv2_weight":    jax.random.normal(keys[6], (E, E, 1), jnp.float32) * 0.1,
        "conv2_bias":      jax.random.normal(keys[7], (E,), jnp.float32) * 0.05,
        "ln1_weight": 1.0 + jax.random.normal(keys[8], (E,), jnp.float32) * 0.1,
        "ln1_bias":        jax.random.normal(keys[9], (E,), jnp.float32) * 0.05,
        "ln2_weight": 1.0 + jax.random.normal(keys[10], (E,), jnp.float32) * 0.1,
        "ln2_bias":        jax.random.normal(keys[11], (E,), jnp.float32) * 0.05,
    }
    x = jax.random.normal(keys[12], (B, S, E), jnp.float32)

    # Additive causal mask (large negative above the diagonal).
    causal = jnp.tril(jnp.ones((S, S), jnp.bool_))
    attn_mask = jnp.where(causal, 0.0, -1e9).astype(jnp.float32)

    out = causal_transformer_layer(x, attn_mask, params, n_head, pffn_residual,
                                   tq=TQ, tk=TK, causal_skip=True)
    out = jax.block_until_ready(out)

    ref = _reference_layer(x, attn_mask, params, n_head, pffn_residual)
    assert out.shape == (B, S, E)
    # bf16 boundary activations + bf16 MXU operands + approx softmax reciprocal
    # -> loose tolerance vs the f32 reference.
    assert jnp.allclose(out, ref, atol=2e-1, rtol=2e-1), "kernel/reference mismatch"

    print("KERNEL_OK")
</pallas_src>

<mosaic_0001>
module attributes {stable_mosaic.version = 11 : i64} {
  func.func @_layer_kernel(%arg0: i32, %arg1: i32, %arg2: i32, %arg3: memref<1x128x128xbf16, #tpu.memory_space<vmem>>, %arg4: memref<1x128x128xbf16, #tpu.memory_space<vmem>>, %arg5: memref<128x128xf32, #tpu.memory_space<vmem>>, %arg6: memref<1x128xf32, #tpu.memory_space<vmem>>, %arg7: memref<1x128xf32, #tpu.memory_space<vmem>>, %arg8: memref<128x128xbf16, #tpu.memory_space<vmem>>, %arg9: memref<1x128xf32, #tpu.memory_space<vmem>>, %arg10: memref<128x256xbf16, #tpu.memory_space<vmem>>, %arg11: memref<1x256xf32, #tpu.memory_space<vmem>>, %arg12: memref<128x128xbf16, #tpu.memory_space<vmem>>, %arg13: memref<1x128xf32, #tpu.memory_space<vmem>>, %arg14: memref<1x128xf32, #tpu.memory_space<vmem>>, %arg15: memref<1x128xf32, #tpu.memory_space<vmem>>, %arg16: memref<128x128xbf16, #tpu.memory_space<vmem>>, %arg17: memref<1x128xf32, #tpu.memory_space<vmem>>, %arg18: memref<128x128xbf16, #tpu.memory_space<vmem>>, %arg19: memref<1x128xf32, #tpu.memory_space<vmem>>, %arg20: memref<1x128x128xf32, #tpu.memory_space<vmem>>, %arg21: memref<4x128x32xbf16, #tpu.memory_space<vmem>>, %arg22: memref<4x128x32xbf16, #tpu.memory_space<vmem>>, %arg23: memref<4x128x32xbf16, #tpu.memory_space<vmem>>, %arg24: memref<4x128x1xf32, #tpu.memory_space<vmem>>, %arg25: memref<4x128x1xf32, #tpu.memory_space<vmem>>, %arg26: memref<4x128x32xf32, #tpu.memory_space<vmem>>, %arg27: memref<128x128xbf16, #tpu.memory_space<vmem>>) attributes {dimension_semantics = [#tpu.dimension_semantics<parallel>, #tpu.dimension_semantics<parallel>, #tpu.dimension_semantics<arbitrary>], iteration_bounds = array<i64: 2, 2, 2>, scalar_prefetch = 0 : i64, scratch_operands = 7 : i64, tpu.core_type = #tpu.core_type<tc>, window_params = [{transform_indices = @transform_0, window_bounds = array<i64: 1, 128, 128>}, {transform_indices = @transform_1, window_bounds = array<i64: 1, 128, 128>}, {transform_indices = @transform_2, window_bounds = array<i64: 128, 128>}, {pipeline_mode = #tpu.pipeline_mode<synchronous>, transform_indices = @transform_3, window_bounds = array<i64: 1, 128>}, {pipeline_mode = #tpu.pipeline_mode<synchronous>, transform_indices = @transform_4, window_bounds = array<i64: 1, 128>}, {pipeline_mode = #tpu.pipeline_mode<synchronous>, transform_indices = @transform_5, window_bounds = array<i64: 128, 128>}, {pipeline_mode = #tpu.pipeline_mode<synchronous>, transform_indices = @transform_6, window_bounds = array<i64: 1, 128>}, {pipeline_mode = #tpu.pipeline_mode<synchronous>, transform_indices = @transform_7, window_bounds = array<i64: 128, 256>}, {pipeline_mode = #tpu.pipeline_mode<synchronous>, transform_indices = @transform_8, window_bounds = array<i64: 1, 256>}, {pipeline_mode = #tpu.pipeline_mode<synchronous>, transform_indices = @transform_9, window_bounds = array<i64: 128, 128>}, {pipeline_mode = #tpu.pipeline_mode<synchronous>, transform_indices = @transform_10, window_bounds = array<i64: 1, 128>}, {pipeline_mode = #tpu.pipeline_mode<synchronous>, transform_indices = @transform_11, window_bounds = array<i64: 1, 128>}, {pipeline_mode = #tpu.pipeline_mode<synchronous>, transform_indices = @transform_12, window_bounds = array<i64: 1, 128>}, {pipeline_mode = #tpu.pipeline_mode<synchronous>, transform_indices = @transform_13, window_bounds = array<i64: 128, 128>}, {pipeline_mode = #tpu.pipeline_mode<synchronous>, transform_indices = @transform_14, window_bounds = array<i64: 1, 128>}, {pipeline_mode = #tpu.pipeline_mode<synchronous>, transform_indices = @transform_15, window_bounds = array<i64: 128, 128>}, {pipeline_mode = #tpu.pipeline_mode<synchronous>, transform_indices = @transform_16, window_bounds = array<i64: 1, 128>}, {transform_indices = @transform_17, window_bounds = array<i64: 1, 128, 128>}]} {
    %c0_i32 = arith.constant 0 : i32
    %0 = arith.cmpi eq, %arg2, %c0_i32 : i32
    %1 = arith.extui %0 : i1 to i32
    %c0_i32_0 = arith.constant 0 : i32
    %2 = arith.cmpi ne, %1, %c0_i32_0 : i32
    scf.if %2 {
      %c0 = arith.constant 0 : index
      %c0_5 = arith.constant 0 : index
      %c0_6 = arith.constant 0 : index
      %12 = vector.load %arg3[%c0, %c0_5, %c0_6] : memref<1x128x128xbf16, #tpu.memory_space<vmem>>, vector<1x128x128xbf16>
      %13 = vector.shape_cast %12 : vector<1x128x128xbf16> to vector<128x128xbf16>
      %14 = arith.extf %13 : vector<128x128xbf16> to vector<128x128xf32>
      %c0_7 = arith.constant 0 : index
      %c0_8 = arith.constant 0 : index
      %15 = vector.load %arg6[%c0_7, %c0_8] : memref<1x128xf32, #tpu.memory_space<vmem>>, vector<1x128xf32>
      %c0_9 = arith.constant 0 : index
      %c0_10 = arith.constant 0 : index
      %16 = vector.load %arg7[%c0_9, %c0_10] : memref<1x128xf32, #tpu.memory_space<vmem>>, vector<1x128xf32>
      %cst = arith.constant dense<0.000000e+00> : vector<128xf32>
      %17 = vector.multi_reduction <add>, %14, %cst [1] : vector<128x128xf32> to vector<128xf32>
      %18 = vector.shape_cast %17 : vector<128xf32> to vector<128x1xf32>
      %cst_11 = arith.constant 1.280000e+02 : f32
      %19 = vector.broadcast %cst_11 : f32 to vector<128x1xf32>
      %20 = arith.divf %18, %19 : vector<128x1xf32>
      %21 = vector.broadcast %20 : vector<128x1xf32> to vector<128x128xf32>
      %22 = arith.subf %14, %21 : vector<128x128xf32>
      %23 = arith.mulf %22, %22 : vector<128x128xf32>
      %cst_12 = arith.constant dense<0.000000e+00> : vector<128xf32>
      %24 = vector.multi_reduction <add>, %23, %cst_12 [1] : vector<128x128xf32> to vector<128xf32>
      %25 = vector.shape_cast %24 : vector<128xf32> to vector<128x1xf32>
      %cst_13 = arith.constant 1.280000e+02 : f32
      %26 = vector.broadcast %cst_13 : f32 to vector<128x1xf32>
      %27 = arith.divf %25, %26 : vector<128x1xf32>
      %28 = vector.broadcast %20 : vector<128x1xf32> to vector<128x128xf32>
      %29 = arith.subf %14, %28 : vector<128x128xf32>
      %cst_14 = arith.constant 9.99999993E-9 : f32
      %30 = vector.broadcast %cst_14 : f32 to vector<128x1xf32>
      %31 = arith.addf %27, %30 : vector<128x1xf32>
      %32 = math.rsqrt %31 : vector<128x1xf32>
      %33 = vector.broadcast %32 : vector<128x1xf32> to vector<128x128xf32>
      %34 = arith.mulf %29, %33 : vector<128x128xf32>
      %35 = vector.broadcast %15 : vector<1x128xf32> to vector<128x128xf32>
      %36 = arith.mulf %34, %35 : vector<128x128xf32>
      %37 = vector.broadcast %16 : vector<1x128xf32> to vector<128x128xf32>
      %38 = arith.addf %36, %37 : vector<128x128xf32>
      %39 = arith.truncf %38 : vector<128x128xf32> to vector<128x128xbf16>
      %c0_15 = arith.constant 0 : index
      %c0_16 = arith.constant 0 : index
      %40 = vector.load %arg8[%c0_15, %c0_16] : memref<128x128xbf16, #tpu.memory_space<vmem>>, vector<128x128xbf16>
      %cst_17 = arith.constant dense<0.000000e+00> : vector<128x128xf32>
      %41 = tpu.matmul %39, %40, %cst_17 {dimension_numbers = #tpu.dot_dimension_numbers<[1], [0], [0], [1], [0, 0, 1, 1], [], []>} : vector<128x128xbf16>, vector<128x128xbf16>, vector<128x128xf32> -> vector<128x128xf32>
      %c0_18 = arith.constant 0 : index
      %c0_19 = arith.constant 0 : index
      %42 = vector.load %arg9[%c0_18, %c0_19] : memref<1x128xf32, #tpu.memory_space<vmem>>, vector<1x128xf32>
      %43 = vector.broadcast %42 : vector<1x128xf32> to vector<128x128xf32>
      %44 = arith.addf %41, %43 : vector<128x128xf32>
      %45 = vector.extract_strided_slice %44 {offsets = [0, 0], sizes = [128, 32], strides = [1, 1]} : vector<128x128xf32> to vector<128x32xf32>
      %46 = arith.truncf %45 : vector<128x32xf32> to vector<128x32xbf16>
      %c0_20 = arith.constant 0 : index
      %c0_21 = arith.constant 0 : index
      %c0_22 = arith.constant 0 : index
      %47 = vector.load %arg21[%c0_20, %c0_21, %c0_22] : memref<4x128x32xbf16, #tpu.memory_space<vmem>>, vector<1x128x32xbf16>
      %48 = vector.shape_cast %47 : vector<1x128x32xbf16> to vector<128x32xbf16>
      %49 = vector.shape_cast %46 : vector<128x32xbf16> to vector<1x128x32xbf16>
      tpu.vector_store %arg21[%c0_20, %c0_21, %c0_22], %49 {strides = array<i32>} : memref<4x128x32xbf16, #tpu.memory_space<vmem>>, vector<1x128x32xbf16>,
      %50 = vector.extract_strided_slice %44 {offsets = [0, 32], sizes = [128, 32], strides = [1, 1]} : vector<128x128xf32> to vector<128x32xf32>
      %51 = arith.truncf %50 : vector<128x32xf32> to vector<128x32xbf16>
      %c1 = arith.constant 1 : index
      %c0_23 = arith.constant 0 : index
      %c0_24 = arith.constant 0 : index
      %52 = vector.load %arg21[%c1, %c0_23, %c0_24] : memref<4x128x32xbf16, #tpu.memory_space<vmem>>, vector<1x128x32xbf16>
      %53 = vector.shape_cast %52 : vector<1x128x32xbf16> to vector<128x32xbf16>
      %54 = vector.shape_cast %51 : vector<128x32xbf16> to vector<1x128x32xbf16>
      tpu.vector_store %arg21[%c1, %c0_23, %c0_24], %54 {strides = array<i32>} : memref<4x128x32xbf16, #tpu.memory_space<vmem>>, vector<1x128x32xbf16>,
      %55 = vector.extract_strided_slice %44 {offsets = [0, 64], sizes = [128, 32], strides = [1, 1]} : vector<128x128xf32> to vector<128x32xf32>
      %56 = arith.truncf %55 : vector<128x32xf32> to vector<128x32xbf16>
      %c2 = arith.constant 2 : index
      %c0_25 = arith.constant 0 : index
      %c0_26 = arith.constant 0 : index
      %57 = vector.load %arg21[%c2, %c0_25, %c0_26] : memref<4x128x32xbf16, #tpu.memory_space<vmem>>, vector<1x128x32xbf16>
      %58 = vector.shape_cast %57 : vector<1x128x32xbf16> to vector<128x32xbf16>
      %59 = vector.shape_cast %56 : vector<128x32xbf16> to vector<1x128x32xbf16>
      tpu.vector_store %arg21[%c2, %c0_25, %c0_26], %59 {strides = array<i32>} : memref<4x128x32xbf16, #tpu.memory_space<vmem>>, vector<1x128x32xbf16>,
      %60 = vector.extract_strided_slice %44 {offsets = [0, 96], sizes = [128, 32], strides = [1, 1]} : vector<128x128xf32> to vector<128x32xf32>
      %61 = arith.truncf %60 : vector<128x32xf32> to vector<128x32xbf16>
      %c3 = arith.constant 3 : index
      %c0_27 = arith.constant 0 : index
      %c0_28 = arith.constant 0 : index
      %62 = vector.load %arg21[%c3, %c0_27, %c0_28] : memref<4x128x32xbf16, #tpu.memory_space<vmem>>, vector<1x128x32xbf16>
      %63 = vector.shape_cast %62 : vector<1x128x32xbf16> to vector<128x32xbf16>
      %64 = vector.shape_cast %61 : vector<128x32xbf16> to vector<1x128x32xbf16>
      tpu.vector_store %arg21[%c3, %c0_27, %c0_28], %64 {strides = array<i32>} : memref<4x128x32xbf16, #tpu.memory_space<vmem>>, vector<1x128x32xbf16>,
      %cst_29 = arith.constant -1.000000e+30 : f32
      %65 = vector.broadcast %cst_29 : f32 to vector<4x128x1xf32>
      %c0_30 = arith.constant 0 : index
      %c0_31 = arith.constant 0 : index
      %c0_32 = arith.constant 0 : index
      %66 = vector.load %arg24[%c0_30, %c0_31, %c0_32] : memref<4x128x1xf32, #tpu.memory_space<vmem>>, vector<4x128x1xf32>
      tpu.vector_store %arg24[%c0_30, %c0_31, %c0_32], %65 {strides = array<i32>} : memref<4x128x1xf32, #tpu.memory_space<vmem>>, vector<4x128x1xf32>,
      %cst_33 = arith.constant 0.000000e+00 : f32
      %67 = vector.broadcast %cst_33 : f32 to vector<4x128x1xf32>
      %c0_34 = arith.constant 0 : index
      %c0_35 = arith.constant 0 : index
      %c0_36 = arith.constant 0 : index
      %68 = vector.load %arg25[%c0_34, %c0_35, %c0_36] : memref<4x128x1xf32, #tpu.memory_space<vmem>>, vector<4x128x1xf32>
      tpu.vector_store %arg25[%c0_34, %c0_35, %c0_36], %67 {strides = array<i32>} : memref<4x128x1xf32, #tpu.memory_space<vmem>>, vector<4x128x1xf32>,
      %cst_37 = arith.constant 0.000000e+00 : f32
      %69 = vector.broadcast %cst_37 : f32 to vector<4x128x32xf32>
      %c0_38 = arith.constant 0 : index
      %c0_39 = arith.constant 0 : index
      %c0_40 = arith.constant 0 : index
      %70 = vector.load %arg26[%c0_38, %c0_39, %c0_40] : memref<4x128x32xf32, #tpu.memory_space<vmem>>, vector<4x128x32xf32>
      tpu.vector_store %arg26[%c0_38, %c0_39, %c0_40], %69 {strides = array<i32>} : memref<4x128x32xf32, #tpu.memory_space<vmem>>, vector<4x128x32xf32>,
    } else {
    }
    %c128_i32 = arith.constant 128 : i32
    %3 = arith.muli %arg2, %c128_i32 : i32
    %c1_i32 = arith.constant 1 : i32
    %4 = arith.addi %arg1, %c1_i32 : i32
    %c128_i32_1 = arith.constant 128 : i32
    %5 = arith.muli %4, %c128_i32_1 : i32
    %6 = arith.cmpi slt, %3, %5 : i32
    %7 = arith.extui %6 : i1 to i32
    %c0_i32_2 = arith.constant 0 : i32
    %8 = arith.cmpi ne, %7, %c0_i32_2 : i32
    scf.if %8 {
      %c0 = arith.constant 0 : index
      %c0_5 = arith.constant 0 : index
      %c0_6 = arith.constant 0 : index
      %12 = vector.load %arg4[%c0, %c0_5, %c0_6] : memref<1x128x128xbf16, #tpu.memory_space<vmem>>, vector<1x128x128xbf16>
      %13 = vector.shape_cast %12 : vector<1x128x128xbf16> to vector<128x128xbf16>
      %14 = arith.extf %13 : vector<128x128xbf16> to vector<128x128xf32>
      %c0_7 = arith.constant 0 : index
      %c0_8 = arith.constant 0 : index
      %15 = vector.load %arg6[%c0_7, %c0_8] : memref<1x128xf32, #tpu.memory_space<vmem>>, vector<1x128xf32>
      %c0_9 = arith.constant 0 : index
      %c0_10 = arith.constant 0 : index
      %16 = vector.load %arg7[%c0_9, %c0_10] : memref<1x128xf32, #tpu.memory_space<vmem>>, vector<1x128xf32>
      %cst = arith.constant dense<0.000000e+00> : vector<128xf32>
      %17 = vector.multi_reduction <add>, %14, %cst [1] : vector<128x128xf32> to vector<128xf32>
      %18 = vector.shape_cast %17 : vector<128xf32> to vector<128x1xf32>
      %cst_11 = arith.constant 1.280000e+02 : f32
      %19 = vector.broadcast %cst_11 : f32 to vector<128x1xf32>
      %20 = arith.divf %18, %19 : vector<128x1xf32>
      %21 = vector.broadcast %20 : vector<128x1xf32> to vector<128x128xf32>
      %22 = arith.subf %14, %21 : vector<128x128xf32>
      %23 = arith.mulf %22, %22 : vector<128x128xf32>
      %cst_12 = arith.constant dense<0.000000e+00> : vector<128xf32>
      %24 = vector.multi_reduction <add>, %23, %cst_12 [1] : vector<128x128xf32> to vector<128xf32>
      %25 = vector.shape_cast %24 : vector<128xf32> to vector<128x1xf32>
      %cst_13 = arith.constant 1.280000e+02 : f32
      %26 = vector.broadcast %cst_13 : f32 to vector<128x1xf32>
      %27 = arith.divf %25, %26 : vector<128x1xf32>
      %28 = vector.broadcast %20 : vector<128x1xf32> to vector<128x128xf32>
      %29 = arith.subf %14, %28 : vector<128x128xf32>
      %cst_14 = arith.constant 9.99999993E-9 : f32
      %30 = vector.broadcast %cst_14 : f32 to vector<128x1xf32>
      %31 = arith.addf %27, %30 : vector<128x1xf32>
      %32 = math.rsqrt %31 : vector<128x1xf32>
      %33 = vector.broadcast %32 : vector<128x1xf32> to vector<128x128xf32>
      %34 = arith.mulf %29, %33 : vector<128x128xf32>
      %35 = vector.broadcast %15 : vector<1x128xf32> to vector<128x128xf32>
      %36 = arith.mulf %34, %35 : vector<128x128xf32>
      %37 = vector.broadcast %16 : vector<1x128xf32> to vector<128x128xf32>
      %38 = arith.addf %36, %37 : vector<128x128xf32>
      %39 = arith.truncf %38 : vector<128x128xf32> to vector<128x128xbf16>
      %c0_15 = arith.constant 0 : index
      %c0_16 = arith.constant 0 : index
      %40 = vector.load %arg10[%c0_15, %c0_16] : memref<128x256xbf16, #tpu.memory_space<vmem>>, vector<128x256xbf16>
      %cst_17 = arith.constant dense<0.000000e+00> : vector<128x256xf32>
      %41 = tpu.matmul %39, %40, %cst_17 {dimension_numbers = #tpu.dot_dimension_numbers<[1], [0], [0], [1], [0, 0, 1, 1], [], []>} : vector<128x128xbf16>, vector<128x256xbf16>, vector<128x256xf32> -> vector<128x256xf32>
      %c0_18 = arith.constant 0 : index
      %c0_19 = arith.constant 0 : index
      %42 = vector.load %arg11[%c0_18, %c0_19] : memref<1x256xf32, #tpu.memory_space<vmem>>, vector<1x256xf32>
      %43 = vector.broadcast %42 : vector<1x256xf32> to vector<128x256xf32>
      %44 = arith.addf %41, %43 : vector<128x256xf32>
      %45 = vector.extract_strided_slice %44 {offsets = [0, 0], sizes = [128, 32], strides = [1, 1]} : vector<128x256xf32> to vector<128x32xf32>
      %46 = arith.truncf %45 : vector<128x32xf32> to vector<128x32xbf16>
      %c0_20 = arith.constant 0 : index
      %c0_21 = arith.constant 0 : index
      %c0_22 = arith.constant 0 : index
      %47 = vector.load %arg22[%c0_20, %c0_21, %c0_22] : memref<4x128x32xbf16, #tpu.memory_space<vmem>>, vector<1x128x32xbf16>
      %48 = vector.shape_cast %47 : vector<1x128x32xbf16> to vector<128x32xbf16>
      %49 = vector.shape_cast %46 : vector<128x32xbf16> to vector<1x128x32xbf16>
      tpu.vector_store %arg22[%c0_20, %c0_21, %c0_22], %49 {strides = array<i32>} : memref<4x128x32xbf16, #tpu.memory_space<vmem>>, vector<1x128x32xbf16>,
      %50 = vector.extract_strided_slice %44 {offsets = [0, 128], sizes = [128, 32], strides = [1, 1]} : vector<128x256xf32> to vector<128x32xf32>
      %51 = arith.truncf %50 : vector<128x32xf32> to vector<128x32xbf16>
      %c0_23 = arith.constant 0 : index
      %c0_24 = arith.constant 0 : index
      %c0_25 = arith.constant 0 : index
      %52 = vector.load %arg23[%c0_23, %c0_24, %c0_25] : memref<4x128x32xbf16, #tpu.memory_space<vmem>>, vector<1x128x32xbf16>
      %53 = vector.shape_cast %52 : vector<1x128x32xbf16> to vector<128x32xbf16>
      %54 = vector.shape_cast %51 : vector<128x32xbf16> to vector<1x128x32xbf16>
      tpu.vector_store %arg23[%c0_23, %c0_24, %c0_25], %54 {strides = array<i32>} : memref<4x128x32xbf16, #tpu.memory_space<vmem>>, vector<1x128x32xbf16>,
      %55 = vector.extract_strided_slice %44 {offsets = [0, 32], sizes = [128, 32], strides = [1, 1]} : vector<128x256xf32> to vector<128x32xf32>
      %56 = arith.truncf %55 : vector<128x32xf32> to vector<128x32xbf16>
      %c1 = arith.constant 1 : index
      %c0_26 = arith.constant 0 : index
      %c0_27 = arith.constant 0 : index
      %57 = vector.load %arg22[%c1, %c0_26, %c0_27] : memref<4x128x32xbf16, #tpu.memory_space<vmem>>, vector<1x128x32xbf16>
      %58 = vector.shape_cast %57 : vector<1x128x32xbf16> to vector<128x32xbf16>
      %59 = vector.shape_cast %56 : vector<128x32xbf16> to vector<1x128x32xbf16>
      tpu.vector_store %arg22[%c1, %c0_26, %c0_27], %59 {strides = array<i32>} : memref<4x128x32xbf16, #tpu.memory_space<vmem>>, vector<1x128x32xbf16>,
      %60 = vector.extract_strided_slice %44 {offsets = [0, 160], sizes = [128, 32], strides = [1, 1]} : vector<128x256xf32> to vector<128x32xf32>
      %61 = arith.truncf %60 : vector<128x32xf32> to vector<128x32xbf16>
      %c1_28 = arith.constant 1 : index
      %c0_29 = arith.constant 0 : index
      %c0_30 = arith.constant 0 : index
      %62 = vector.load %arg23[%c1_28, %c0_29, %c0_30] : memref<4x128x32xbf16, #tpu.memory_space<vmem>>, vector<1x128x32xbf16>
      %63 = vector.shape_cast %62 : vector<1x128x32xbf16> to vector<128x32xbf16>
      %64 = vector.shape_cast %61 : vector<128x32xbf16> to vector<1x128x32xbf16>
      tpu.vector_store %arg23[%c1_28, %c0_29, %c0_30], %64 {strides = array<i32>} : memref<4x128x32xbf16, #tpu.memory_space<vmem>>, vector<1x128x32xbf16>,
      %65 = vector.extract_strided_slice %44 {offsets = [0, 64], sizes = [128, 32], strides = [1, 1]} : vector<128x256xf32> to vector<128x32xf32>
      %66 = arith.truncf %65 : vector<128x32xf32> to vector<128x32xbf16>
      %c2 = arith.constant 2 : index
      %c0_31 = arith.constant 0 : index
      %c0_32 = arith.constant 0 : index
      %67 = vector.load %arg22[%c2, %c0_31, %c0_32] : memref<4x128x32xbf16, #tpu.memory_space<vmem>>, vector<1x128x32xbf16>
      %68 = vector.shape_cast %67 : vector<1x128x32xbf16> to vector<128x32xbf16>
      %69 = vector.shape_cast %66 : vector<128x32xbf16> to vector<1x128x32xbf16>
      tpu.vector_store %arg22[%c2, %c0_31, %c0_32], %69 {strides = array<i32>} : memref<4x128x32xbf16, #tpu.memory_space<vmem>>, vector<1x128x32xbf16>,
      %70 = vector.extract_strided_slice %44 {offsets = [0, 192], sizes = [128, 32], strides = [1, 1]} : vector<128x256xf32> to vector<128x32xf32>
      %71 = arith.truncf %70 : vector<128x32xf32> to vector<128x32xbf16>
      %c2_33 = arith.constant 2 : index
      %c0_34 = arith.constant 0 : index
      %c0_35 = arith.constant 0 : index
      %72 = vector.load %arg23[%c2_33, %c0_34, %c0_35] : memref<4x128x32xbf16, #tpu.memory_space<vmem>>, vector<1x128x32xbf16>
      %73 = vector.shape_cast %72 : vector<1x128x32xbf16> to vector<128x32xbf16>
      %74 = vector.shape_cast %71 : vector<128x32xbf16> to vector<1x128x32xbf16>
      tpu.vector_store %arg23[%c2_33, %c0_34, %c0_35], %74 {strides = array<i32>} : memref<4x128x32xbf16, #tpu.memory_space<vmem>>, vector<1x128x32xbf16>,
      %75 = vector.extract_strided_slice %44 {offsets = [0, 96], sizes = [128, 32], strides = [1, 1]} : vector<128x256xf32> to vector<128x32xf32>
      %76 = arith.truncf %75 : vector<128x32xf32> to vector<128x32xbf16>
      %c3 = arith.constant 3 : index
      %c0_36 = arith.constant 0 : index
      %c0_37 = arith.constant 0 : index
      %77 = vector.load %arg22[%c3, %c0_36, %c0_37] : memref<4x128x32xbf16, #tpu.memory_space<vmem>>, vector<1x128x32xbf16>
      %78 = vector.shape_cast %77 : vector<1x128x32xbf16> to vector<128x32xbf16>
      %79 = vector.shape_cast %76 : vector<128x32xbf16> to vector<1x128x32xbf16>
      tpu.vector_store %arg22[%c3, %c0_36, %c0_37], %79 {strides = array<i32>} : memref<4x128x32xbf16, #tpu.memory_space<vmem>>, vector<1x128x32xbf16>,
      %80 = vector.extract_strided_slice %44 {offsets = [0, 224], sizes = [128, 32], strides = [1, 1]} : vector<128x256xf32> to vector<128x32xf32>
      %81 = arith.truncf %80 : vector<128x32xf32> to vector<128x32xbf16>
      %c3_38 = arith.constant 3 : index
      %c0_39 = arith.constant 0 : index
      %c0_40 = arith.constant 0 : index
      %82 = vector.load %arg23[%c3_38, %c0_39, %c0_40] : memref<4x128x32xbf16, #tpu.memory_space<vmem>>, vector<1x128x32xbf16>
      %83 = vector.shape_cast %82 : vector<1x128x32xbf16> to vector<128x32xbf16>
      %84 = vector.shape_cast %81 : vector<128x32xbf16> to vector<1x128x32xbf16>
      tpu.vector_store %arg23[%c3_38, %c0_39, %c0_40], %84 {strides = array<i32>} : memref<4x128x32xbf16, #tpu.memory_space<vmem>>, vector<1x128x32xbf16>,
      %c0_41 = arith.constant 0 : index
      %c0_42 = arith.constant 0 : index
      %c0_43 = arith.constant 0 : index
      %85 = vector.load %arg21[%c0_41, %c0_42, %c0_43] : memref<4x128x32xbf16, #tpu.memory_space<vmem>>, vector<4x128x32xbf16>
      %c0_44 = arith.constant 0 : index
      %c0_45 = arith.constant 0 : index
      %c0_46 = arith.constant 0 : index
      %86 = vector.load %arg22[%c0_44, %c0_45, %c0_46] : memref<4x128x32xbf16, #tpu.memory_space<vmem>>, vector<4x128x32xbf16>
      "tpu.trace_start"() <{level = 10 : i32, message = "hqd,hkd->hqk"}> : () -> ()
      %cst_47 = arith.constant dense<0.000000e+00> : vector<4x128x128xf32>
      %87 = tpu.matmul %85, %86, %cst_47 {dimension_numbers = #tpu.dot_dimension_numbers<[2], [2], [1], [1], [0, 0, 0, 1, 1, 1], [0], [0]>} : vector<4x128x32xbf16>, vector<4x128x32xbf16>, vector<4x128x128xf32> -> vector<4x128x128xf32>
      "tpu.trace_stop"() : () -> ()
      %c0_48 = arith.constant 0 : index
      %c0_49 = arith.constant 0 : index
      %88 = vector.load %arg5[%c0_48, %c0_49] : memref<128x128xf32, #tpu.memory_space<vmem>>, vector<128x128xf32>
      %89 = vector.shape_cast %88 : vector<128x128xf32> to vector<1x128x128xf32>
      %90 = vector.broadcast %89 : vector<1x128x128xf32> to vector<4x128x128xf32>
      %91 = arith.addf %87, %90 : vector<4x128x128xf32>
      %c0_50 = arith.constant 0 : index
      %c0_51 = arith.constant 0 : index
      %c0_52 = arith.constant 0 : index
      %92 = vector.load %arg24[%c0_50, %c0_51, %c0_52] : memref<4x128x1xf32, #tpu.memory_space<vmem>>, vector<4x128x1xf32>
      %cst_53 = arith.constant dense<0xFF800000> : vector<4x128xf32>
      %93 = vector.multi_reduction <maximumf>, %91, %cst_53 [2] : vector<4x128x128xf32> to vector<4x128xf32>
      %94 = vector.shape_cast %93 : vector<4x128xf32> to vector<4x128x1xf32>
      %95 = arith.maximumf %92, %94 : vector<4x128x1xf32>
      %96 = arith.subf %92, %95 : vector<4x128x1xf32>
      %97 = math.exp %96 : vector<4x128x1xf32>
      %98 = vector.broadcast %95 : vector<4x128x1xf32> to vector<4x128x128xf32>
      %99 = arith.subf %91, %98 : vector<4x128x128xf32>
      %100 = math.exp %99 : vector<4x128x128xf32>
      %c0_54 = arith.constant 0 : index
      %c0_55 = arith.constant 0 : index
      %c0_56 = arith.constant 0 : index
      %101 = vector.load %arg25[%c0_54, %c0_55, %c0_56] : memref<4x128x1xf32, #tpu.memory_space<vmem>>, vector<4x128x1xf32>
      %102 = arith.mulf %97, %101 : vector<4x128x1xf32>
      %cst_57 = arith.constant dense<0.000000e+00> : vector<4x128xf32>
      %103 = vector.multi_reduction <add>, %100, %cst_57 [2] : vector<4x128x128xf32> to vector<4x128xf32>
      %104 = vector.shape_cast %103 : vector<4x128xf32> to vector<4x128x1xf32>
      %105 = arith.addf %102, %104 : vector<4x128x1xf32>
      %c0_58 = arith.constant 0 : index
      %c0_59 = arith.constant 0 : index
      %c0_60 = arith.constant 0 : index
      %106 = vector.load %arg25[%c0_58, %c0_59, %c0_60] : memref<4x128x1xf32, #tpu.memory_space<vmem>>, vector<4x128x1xf32>
      tpu.vector_store %arg25[%c0_58, %c0_59, %c0_60], %105 {strides = array<i32>} : memref<4x128x1xf32, #tpu.memory_space<vmem>>, vector<4x128x1xf32>,
      %c0_61 = arith.constant 0 : index
      %c0_62 = arith.constant 0 : index
      %c0_63 = arith.constant 0 : index
      %107 = vector.load %arg26[%c0_61, %c0_62, %c0_63] : memref<4x128x32xf32, #tpu.memory_space<vmem>>, vector<4x128x32xf32>
      %108 = vector.broadcast %97 : vector<4x128x1xf32> to vector<4x128x32xf32>
      %109 = arith.mulf %108, %107 : vector<4x128x32xf32>
      %110 = arith.truncf %100 : vector<4x128x128xf32> to vector<4x128x128xbf16>
      %c0_64 = arith.constant 0 : index
      %c0_65 = arith.constant 0 : index
      %c0_66 = arith.constant 0 : index
      %111 = vector.load %arg23[%c0_64, %c0_65, %c0_66] : memref<4x128x32xbf16, #tpu.memory_space<vmem>>, vector<4x128x32xbf16>
      "tpu.trace_start"() <{level = 10 : i32, message = "hqk,hkd->hqd"}> : () -> ()
      %cst_67 = arith.constant dense<0.000000e+00> : vector<4x128x32xf32>
      %112 = tpu.matmul %110, %111, %cst_67 {dimension_numbers = #tpu.dot_dimension_numbers<[2], [1], [1], [2], [0, 0, 0, 1, 1, 2], [0], [0]>} : vector<4x128x128xbf16>, vector<4x128x32xbf16>, vector<4x128x32xf32> -> vector<4x128x32xf32>
      "tpu.trace_stop"() : () -> ()
      %113 = arith.addf %109, %112 : vector<4x128x32xf32>
      %c0_68 = arith.constant 0 : index
      %c0_69 = arith.constant 0 : index
      %c0_70 = arith.constant 0 : index
      %114 = vector.load %arg26[%c0_68, %c0_69, %c0_70] : memref<4x128x32xf32, #tpu.memory_space<vmem>>, vector<4x128x32xf32>
      tpu.vector_store %arg26[%c0_68, %c0_69, %c0_70], %113 {strides = array<i32>} : memref<4x128x32xf32, #tpu.memory_space<vmem>>, vector<4x128x32xf32>,
      %c0_71 = arith.constant 0 : index
      %c0_72 = arith.constant 0 : index
      %c0_73 = arith.constant 0 : index
      %115 = vector.load %arg24[%c0_71, %c0_72, %c0_73] : memref<4x128x1xf32, #tpu.memory_space<vmem>>, vector<4x128x1xf32>
      tpu.vector_store %arg24[%c0_71, %c0_72, %c0_73], %95 {strides = array<i32>} : memref<4x128x1xf32, #tpu.memory_space<vmem>>, vector<4x128x1xf32>,
    } else {
    }
    %c1_i32_3 = arith.constant 1 : i32
    %9 = arith.cmpi eq, %arg2, %c1_i32_3 : i32
    %10 = arith.extui %9 : i1 to i32
    %c0_i32_4 = arith.constant 0 : i32
    %11 = arith.cmpi ne, %10, %c0_i32_4 : i32
    scf.if %11 {
      %c0 = arith.constant 0 : index
      %c0_5 = arith.constant 0 : index
      %c0_6 = arith.constant 0 : index
      %12 = vector.load %arg26[%c0, %c0_5, %c0_6] : memref<4x128x32xf32, #tpu.memory_space<vmem>>, vector<4x128x32xf32>
      %c0_7 = arith.constant 0 : index
      %c0_8 = arith.constant 0 : index
      %c0_9 = arith.constant 0 : index
      %13 = vector.load %arg25[%c0_7, %c0_8, %c0_9] : memref<4x128x1xf32, #tpu.memory_space<vmem>>, vector<4x128x1xf32>
      %14 = tpu.reciprocal %13 {approx = true} : vector<4x128x1xf32> -> vector<4x128x1xf32>
      %15 = vector.broadcast %14 : vector<4x128x1xf32> to vector<4x128x32xf32>
      %16 = arith.mulf %12, %15 : vector<4x128x32xf32>
      %17 = vector.extract_strided_slice %16 {offsets = [0, 0, 0], sizes = [1, 128, 32], strides = [1, 1, 1]} : vector<4x128x32xf32> to vector<1x128x32xf32>
      %18 = vector.shape_cast %17 : vector<1x128x32xf32> to vector<128x32xf32>
      %19 = arith.truncf %18 : vector<128x32xf32> to vector<128x32xbf16>
      %c0_10 = arith.constant 0 : index
      %c0_11 = arith.constant 0 : index
      %20 = vector.load %arg27[%c0_10, %c0_11] : memref<128x128xbf16, #tpu.memory_space<vmem>>, vector<128x32xbf16>
      tpu.vector_store %arg27[%c0_10, %c0_11], %19 {strides = array<i32>} : memref<128x128xbf16, #tpu.memory_space<vmem>>, vector<128x32xbf16>,
      %21 = vector.extract_strided_slice %16 {offsets = [1, 0, 0], sizes = [1, 128, 32], strides = [1, 1, 1]} : vector<4x128x32xf32> to vector<1x128x32xf32>
      %22 = vector.shape_cast %21 : vector<1x128x32xf32> to vector<128x32xf32>
      %23 = arith.truncf %22 : vector<128x32xf32> to vector<128x32xbf16>
      %c0_12 = arith.constant 0 : index
      %c32 = arith.constant 32 : index
      %24 = vector.load %arg27[%c0_12, %c32] : memref<128x128xbf16, #tpu.memory_space<vmem>>, vector<128x32xbf16>
      tpu.vector_store %arg27[%c0_12, %c32], %23 {strides = array<i32>} : memref<128x128xbf16, #tpu.memory_space<vmem>>, vector<128x32xbf16>,
      %25 = vector.extract_strided_slice %16 {offsets = [2, 0, 0], sizes = [1, 128, 32], strides = [1, 1, 1]} : vector<4x128x32xf32> to vector<1x128x32xf32>
      %26 = vector.shape_cast %25 : vector<1x128x32xf32> to vector<128x32xf32>
      %27 = arith.truncf %26 : vector<128x32xf32> to vector<128x32xbf16>
      %c0_13 = arith.constant 0 : index
      %c64 = arith.constant 64 : index
      %28 = vector.load %arg27[%c0_13, %c64] : memref<128x128xbf16, #tpu.memory_space<vmem>>, vector<128x32xbf16>
      tpu.vector_store %arg27[%c0_13, %c64], %27 {strides = array<i32>} : memref<128x128xbf16, #tpu.memory_space<vmem>>, vector<128x32xbf16>,
      %29 = vector.extract_strided_slice %16 {offsets = [3, 0, 0], sizes = [1, 128, 32], strides = [1, 1, 1]} : vector<4x128x32xf32> to vector<1x128x32xf32>
      %30 = vector.shape_cast %29 : vector<1x128x32xf32> to vector<128x32xf32>
      %31 = arith.truncf %30 : vector<128x32xf32> to vector<128x32xbf16>
      %c0_14 = arith.constant 0 : index
      %c96 = arith.constant 96 : index
      %32 = vector.load %arg27[%c0_14, %c96] : memref<128x128xbf16, #tpu.memory_space<vmem>>, vector<128x32xbf16>
      tpu.vector_store %arg27[%c0_14, %c96], %31 {strides = array<i32>} : memref<128x128xbf16, #tpu.memory_space<vmem>>, vector<128x32xbf16>,
      %c0_15 = arith.constant 0 : index
      %c0_16 = arith.constant 0 : index
      %33 = vector.load %arg27[%c0_15, %c0_16] : memref<128x128xbf16, #tpu.memory_space<vmem>>, vector<128x128xbf16>
      %c0_17 = arith.constant 0 : index
      %c0_18 = arith.constant 0 : index
      %34 = vector.load %arg12[%c0_17, %c0_18] : memref<128x128xbf16, #tpu.memory_space<vmem>>, vector<128x128xbf16>
      %cst = arith.constant dense<0.000000e+00> : vector<128x128xf32>
      %35 = tpu.matmul %33, %34, %cst {dimension_numbers = #tpu.dot_dimension_numbers<[1], [0], [0], [1], [0, 0, 1, 1], [], []>} : vector<128x128xbf16>, vector<128x128xbf16>, vector<128x128xf32> -> vector<128x128xf32>
      %c0_19 = arith.constant 0 : index
      %c0_20 = arith.constant 0 : index
      %36 = vector.load %arg13[%c0_19, %c0_20] : memref<1x128xf32, #tpu.memory_space<vmem>>, vector<1x128xf32>
      %37 = vector.broadcast %36 : vector<1x128xf32> to vector<128x128xf32>
      %38 = arith.addf %35, %37 : vector<128x128xf32>
      %c0_21 = arith.constant 0 : index
      %c0_22 = arith.constant 0 : index
      %c0_23 = arith.constant 0 : index
      %39 = vector.load %arg3[%c0_21, %c0_22, %c0_23] : memref<1x128x128xbf16, #tpu.memory_space<vmem>>, vector<1x128x128xbf16>
      %40 = vector.shape_cast %39 : vector<1x128x128xbf16> to vector<128x128xbf16>
      %41 = arith.extf %40 : vector<128x128xbf16> to vector<128x128xf32>
      %42 = arith.addf %38, %41 : vector<128x128xf32>
      %c0_24 = arith.constant 0 : index
      %c0_25 = arith.constant 0 : index
      %43 = vector.load %arg14[%c0_24, %c0_25] : memref<1x128xf32, #tpu.memory_space<vmem>>, vector<1x128xf32>
      %c0_26 = arith.constant 0 : index
      %c0_27 = arith.constant 0 : index
      %44 = vector.load %arg15[%c0_26, %c0_27] : memref<1x128xf32, #tpu.memory_space<vmem>>, vector<1x128xf32>
      %cst_28 = arith.constant dense<0.000000e+00> : vector<128xf32>
      %45 = vector.multi_reduction <add>, %42, %cst_28 [1] : vector<128x128xf32> to vector<128xf32>
      %46 = vector.shape_cast %45 : vector<128xf32> to vector<128x1xf32>
      %cst_29 = arith.constant 1.280000e+02 : f32
      %47 = vector.broadcast %cst_29 : f32 to vector<128x1xf32>
      %48 = arith.divf %46, %47 : vector<128x1xf32>
      %49 = vector.broadcast %48 : vector<128x1xf32> to vector<128x128xf32>
      %50 = arith.subf %42, %49 : vector<128x128xf32>
      %51 = arith.mulf %50, %50 : vector<128x128xf32>
      %cst_30 = arith.constant dense<0.000000e+00> : vector<128xf32>
      %52 = vector.multi_reduction <add>, %51, %cst_30 [1] : vector<128x128xf32> to vector<128xf32>
      %53 = vector.shape_cast %52 : vector<128xf32> to vector<128x1xf32>
      %cst_31 = arith.constant 1.280000e+02 : f32
      %54 = vector.broadcast %cst_31 : f32 to vector<128x1xf32>
      %55 = arith.divf %53, %54 : vector<128x1xf32>
      %56 = vector.broadcast %48 : vector<128x1xf32> to vector<128x128xf32>
      %57 = arith.subf %42, %56 : vector<128x128xf32>
      %cst_32 = arith.constant 9.99999993E-9 : f32
      %58 = vector.broadcast %cst_32 : f32 to vector<128x1xf32>
      %59 = arith.addf %55, %58 : vector<128x1xf32>
      %60 = math.rsqrt %59 : vector<128x1xf32>
      %61 = vector.broadcast %60 : vector<128x1xf32> to vector<128x128xf32>
      %62 = arith.mulf %57, %61 : vector<128x128xf32>
      %63 = vector.broadcast %43 : vector<1x128xf32> to vector<128x128xf32>
      %64 = arith.mulf %62, %63 : vector<128x128xf32>
      %65 = vector.broadcast %44 : vector<1x128xf32> to vector<128x128xf32>
      %66 = arith.addf %64, %65 : vector<128x128xf32>
      %67 = arith.truncf %66 : vector<128x128xf32> to vector<128x128xbf16>
      %c0_33 = arith.constant 0 : index
      %c0_34 = arith.constant 0 : index
      %68 = vector.load %arg16[%c0_33, %c0_34] : memref<128x128xbf16, #tpu.memory_space<vmem>>, vector<128x128xbf16>
      %cst_35 = arith.constant dense<0.000000e+00> : vector<128x128xf32>
      %69 = tpu.matmul %67, %68, %cst_35 {dimension_numbers = #tpu.dot_dimension_numbers<[1], [0], [0], [1], [0, 0, 1, 1], [], []>} : vector<128x128xbf16>, vector<128x128xbf16>, vector<128x128xf32> -> vector<128x128xf32>
      %c0_36 = arith.constant 0 : index
      %c0_37 = arith.constant 0 : index
      %70 = vector.load %arg17[%c0_36, %c0_37] : memref<1x128xf32, #tpu.memory_space<vmem>>, vector<1x128xf32>
      %71 = vector.broadcast %70 : vector<1x128xf32> to vector<128x128xf32>
      %72 = arith.addf %69, %71 : vector<128x128xf32>
      %cst_38 = arith.constant 0.000000e+00 : f32
      %73 = vector.broadcast %cst_38 : f32 to vector<128x128xf32>
      %74 = arith.maximumf %72, %73 : vector<128x128xf32>
      %75 = arith.truncf %74 : vector<128x128xf32> to vector<128x128xbf16>
      %c0_39 = arith.constant 0 : index
      %c0_40 = arith.constant 0 : index
      %76 = vector.load %arg18[%c0_39, %c0_40] : memref<128x128xbf16, #tpu.memory_space<vmem>>, vector<128x128xbf16>
      %cst_41 = arith.constant dense<0.000000e+00> : vector<128x128xf32>
      %77 = tpu.matmul %75, %76, %cst_41 {dimension_numbers = #tpu.dot_dimension_numbers<[1], [0], [0], [1], [0, 0, 1, 1], [], []>} : vector<128x128xbf16>, vector<128x128xbf16>, vector<128x128xf32> -> vector<128x128xf32>
      %c0_42 = arith.constant 0 : index
      %c0_43 = arith.constant 0 : index
      %78 = vector.load %arg19[%c0_42, %c0_43] : memref<1x128xf32, #tpu.memory_space<vmem>>, vector<1x128xf32>
      %79 = vector.broadcast %78 : vector<1x128xf32> to vector<128x128xf32>
      %80 = arith.addf %77, %79 : vector<128x128xf32>
      %81 = arith.addf %80, %66 : vector<128x128xf32>
      %82 = arith.addf %81, %42 : vector<128x128xf32>
      %c0_44 = arith.constant 0 : index
      %c0_45 = arith.constant 0 : index
      %c0_46 = arith.constant 0 : index
      %83 = vector.load %arg20[%c0_44, %c0_45, %c0_46] : memref<1x128x128xf32, #tpu.memory_space<vmem>>, vector<1x128x128xf32>
      %84 = vector.shape_cast %83 : vector<1x128x128xf32> to vector<128x128xf32>
      %85 = vector.shape_cast %82 : vector<128x128xf32> to vector<1x128x128xf32>
      tpu.vector_store %arg20[%c0_44, %c0_45, %c0_46], %85 {strides = array<i32>} : memref<1x128x128xf32, #tpu.memory_space<vmem>>, vector<1x128x128xf32>,
    } else {
    }
    return
  }
  func.func @transform_0(%arg0: i32, %arg1: i32, %arg2: i32) -> (i32, i32, i32) {
    %c0_i32 = arith.constant 0 : i32
    %c0_i32_0 = arith.constant 0 : i32
    return %arg0, %arg1, %c0_i32 : i32, i32, i32
  }
  func.func @transform_1(%arg0: i32, %arg1: i32, %arg2: i32) -> (i32, i32, i32) {
    %c0_i32 = arith.constant 0 : i32
    %c0_i32_0 = arith.constant 0 : i32
    return %arg0, %arg2, %c0_i32 : i32, i32, i32
  }
  func.func @transform_2(%arg0: i32, %arg1: i32, %arg2: i32) -> (i32, i32) {
    %c0_i32 = arith.constant 0 : i32
    return %arg1, %arg2 : i32, i32
  }
  func.func @transform_3(%arg0: i32, %arg1: i32, %arg2: i32) -> (i32, i32) {
    %c0_i32 = arith.constant 0 : i32
    %c0_i32_0 = arith.constant 0 : i32
    %c0_i32_1 = arith.constant 0 : i32
    return %c0_i32, %c0_i32_0 : i32, i32
  }
  func.func @transform_4(%arg0: i32, %arg1: i32, %arg2: i32) -> (i32, i32) {
    %c0_i32 = arith.constant 0 : i32
    %c0_i32_0 = arith.constant 0 : i32
    %c0_i32_1 = arith.constant 0 : i32
    return %c0_i32, %c0_i32_0 : i32, i32
  }
  func.func @transform_5(%arg0: i32, %arg1: i32, %arg2: i32) -> (i32, i32) {
    %c0_i32 = arith.constant 0 : i32
    %c0_i32_0 = arith.constant 0 : i32
    %c0_i32_1 = arith.constant 0 : i32
    return %c0_i32, %c0_i32_0 : i32, i32
  }
  func.func @transform_6(%arg0: i32, %arg1: i32, %arg2: i32) -> (i32, i32) {
    %c0_i32 = arith.constant 0 : i32
    %c0_i32_0 = arith.constant 0 : i32
    %c0_i32_1 = arith.constant 0 : i32
    return %c0_i32, %c0_i32_0 : i32, i32
  }
  func.func @transform_7(%arg0: i32, %arg1: i32, %arg2: i32) -> (i32, i32) {
    %c0_i32 = arith.constant 0 : i32
    %c0_i32_0 = arith.constant 0 : i32
    %c0_i32_1 = arith.constant 0 : i32
    return %c0_i32, %c0_i32_0 : i32, i32
  }
  func.func @transform_8(%arg0: i32, %arg1: i32, %arg2: i32) -> (i32, i32) {
    %c0_i32 = arith.constant 0 : i32
    %c0_i32_0 = arith.constant 0 : i32
    %c0_i32_1 = arith.constant 0 : i32
    return %c0_i32, %c0_i32_0 : i32, i32
  }
  func.func @transform_9(%arg0: i32, %arg1: i32, %arg2: i32) -> (i32, i32) {
    %c0_i32 = arith.constant 0 : i32
    %c0_i32_0 = arith.constant 0 : i32
    %c0_i32_1 = arith.constant 0 : i32
    return %c0_i32, %c0_i32_0 : i32, i32
  }
  func.func @transform_10(%arg0: i32, %arg1: i32, %arg2: i32) -> (i32, i32) {
    %c0_i32 = arith.constant 0 : i32
    %c0_i32_0 = arith.constant 0 : i32
    %c0_i32_1 = arith.constant 0 : i32
    return %c0_i32, %c0_i32_0 : i32, i32
  }
  func.func @transform_11(%arg0: i32, %arg1: i32, %arg2: i32) -> (i32, i32) {
    %c0_i32 = arith.constant 0 : i32
    %c0_i32_0 = arith.constant 0 : i32
    %c0_i32_1 = arith.constant 0 : i32
    return %c0_i32, %c0_i32_0 : i32, i32
  }
  func.func @transform_12(%arg0: i32, %arg1: i32, %arg2: i32) -> (i32, i32) {
    %c0_i32 = arith.constant 0 : i32
    %c0_i32_0 = arith.constant 0 : i32
    %c0_i32_1 = arith.constant 0 : i32
    return %c0_i32, %c0_i32_0 : i32, i32
  }
  func.func @transform_13(%arg0: i32, %arg1: i32, %arg2: i32) -> (i32, i32) {
    %c0_i32 = arith.constant 0 : i32
    %c0_i32_0 = arith.constant 0 : i32
    %c0_i32_1 = arith.constant 0 : i32
    return %c0_i32, %c0_i32_0 : i32, i32
  }
  func.func @transform_14(%arg0: i32, %arg1: i32, %arg2: i32) -> (i32, i32) {
    %c0_i32 = arith.constant 0 : i32
    %c0_i32_0 = arith.constant 0 : i32
    %c0_i32_1 = arith.constant 0 : i32
    return %c0_i32, %c0_i32_0 : i32, i32
  }
  func.func @transform_15(%arg0: i32, %arg1: i32, %arg2: i32) -> (i32, i32) {
    %c0_i32 = arith.constant 0 : i32
    %c0_i32_0 = arith.constant 0 : i32
    %c0_i32_1 = arith.constant 0 : i32
    return %c0_i32, %c0_i32_0 : i32, i32
  }
  func.func @transform_16(%arg0: i32, %arg1: i32, %arg2: i32) -> (i32, i32) {
    %c0_i32 = arith.constant 0 : i32
    %c0_i32_0 = arith.constant 0 : i32
    %c0_i32_1 = arith.constant 0 : i32
    return %c0_i32, %c0_i32_0 : i32, i32
  }
  func.func @transform_17(%arg0: i32, %arg1: i32, %arg2: i32) -> (i32, i32, i32) {
    %c0_i32 = arith.constant 0 : i32
    %c0_i32_0 = arith.constant 0 : i32
    return %arg0, %arg1, %c0_i32 : i32, i32, i32
  }
}

</mosaic_0001>

<llo_original>
// kernel: tpu_custom_call.1
$region0: #{tpu_custom_call.1}
  #allocation0 [shape = 'u32[]', space=smem, size = 0x4, offset = 0x4, fixed_abs, tag = 'smem constant byte address 0x4 - core index']
  #allocation1 [shape = 'u32[144,128]{1,0:T(1,128)}', space=vmem, size = 0x12000, scoped, tag = 'internal scratch']
  #allocation2 [shape = 'bf16[4,128,32]{2,1,0:T(16,128)(2,1)}', space=vmem, size = 0x20000, scoped, tag = 'scratch operand']
  #allocation3 [shape = 'bf16[4,128,32]{2,1,0:T(16,128)(2,1)}', space=vmem, size = 0x20000, scoped, tag = 'scratch operand']
  #allocation4 [shape = 'bf16[4,128,32]{2,1,0:T(16,128)(2,1)}', space=vmem, size = 0x20000, scoped, tag = 'scratch operand']
  #allocation5 [shape = 'f32[4,128,1]{2,1,0:T(8,128)}', space=vmem, size = 0x40000, scoped, tag = 'scratch operand']
  #allocation6 [shape = 'f32[4,128,1]{2,1,0:T(8,128)}', space=vmem, size = 0x40000, scoped, tag = 'scratch operand']
  #allocation7 [shape = 'f32[4,128,32]{2,1,0:T(8,128)}', space=vmem, size = 0x40000, scoped, tag = 'scratch operand']
  #allocation8 [shape = 'bf16[128,128]{1,0:T(16,128)(2,1)}', space=vmem, size = 0x8000, scoped, tag = 'scratch operand']
  %s0 = inlined_call_operand.hbm [shape: bf16[2,256,128], index: 0, kind: input, shape index: {}]
  %s1 = inlined_call_operand.hbm [shape: bf16[2,256,128], index: 1, kind: input, shape index: {}]
  %s2 = inlined_call_operand.hbm [shape: f32[256,256], index: 2, kind: input, shape index: {}]
  %s3 = inlined_call_operand.vmem [shape: f32[1,128], index: 3, kind: input, shape index: {}]
  %s4 = inlined_call_operand.vmem [shape: f32[1,128], index: 4, kind: input, shape index: {}]
  %s5 = inlined_call_operand.hbm [shape: bf16[128,128], index: 5, kind: input, shape index: {}]
  %s6 = inlined_call_operand.vmem [shape: f32[1,128], index: 6, kind: input, shape index: {}]
  %s7 = inlined_call_operand.hbm [shape: bf16[128,256], index: 7, kind: input, shape index: {}]
  %s8 = inlined_call_operand.vmem [shape: f32[1,256], index: 8, kind: input, shape index: {}]
  %s9 = inlined_call_operand.hbm [shape: bf16[128,128], index: 9, kind: input, shape index: {}]
  %s10 = inlined_call_operand.vmem [shape: f32[1,128], index: 10, kind: input, shape index: {}]
  %s11 = inlined_call_operand.vmem [shape: f32[1,128], index: 11, kind: input, shape index: {}]
  %s12 = inlined_call_operand.vmem [shape: f32[1,128], index: 12, kind: input, shape index: {}]
  %s13 = inlined_call_operand.hbm [shape: bf16[128,128], index: 13, kind: input, shape index: {}]
  %s14 = inlined_call_operand.vmem [shape: f32[1,128], index: 14, kind: input, shape index: {}]
  %s15 = inlined_call_operand.hbm [shape: bf16[128,128], index: 15, kind: input, shape index: {}]
  %s16 = inlined_call_operand.vmem [shape: f32[1,128], index: 16, kind: input, shape index: {}]
  %s17 = inlined_call_operand.hbm [shape: f32[2,256,128], index: 17, kind: output, shape index: {}]
  %s18 = sld [smem:[#allocation0]]
  $region145: #{tpu_custom_call.1} parent=0
    _
  %s20 = ssub.s32 1, %s18
  %s21 = scalar_select 0, %s20, %s18
  $region1: #{tpu_custom_call.1} parent=0
    #allocation9 [shape = 'u8[65536]{0}', space=vmem, size = 0x10000, scoped, tag = 'input window, operand 0']
    #allocation10 [shape = 's32[2]{0}', space=sflag, size = 0x8, scoped, tag = 'scoped memory for tpu_custom_call.1']
    #allocation11 [shape = 's32[2]{0}', space=sflag, size = 0x8, scoped, tag = 'scoped memory for tpu_custom_call.1']
    #allocation12 [shape = 'u8[65536]{0}', space=vmem, size = 0x10000, scoped, tag = 'input window, operand 1']
    #allocation13 [shape = 's32[2]{0}', space=sflag, size = 0x8, scoped, tag = 'scoped memory for tpu_custom_call.1']
    #allocation14 [shape = 'u8[131072]{0}', space=vmem, size = 0x20000, scoped, tag = 'input window, operand 2']
    #allocation15 [shape = 'u8[32768]{0}', space=vmem, size = 0x8000, scoped, tag = 'input window, operand 5, single buffered']
    #allocation16 [shape = 's32[1]{0}', space=sflag, size = 0x4, scoped, tag = 'scoped memory for tpu_custom_call.1']
    #allocation17 [shape = 'u8[65536]{0}', space=vmem, size = 0x10000, scoped, tag = 'input window, operand 7, single buffered']
    #allocation18 [shape = 'u8[32768]{0}', space=vmem, size = 0x8000, scoped, tag = 'input window, operand 9, single buffered']
    #allocation19 [shape = 's32[1]{0}', space=sflag, size = 0x4, scoped, tag = 'scoped memory for tpu_custom_call.1']
    #allocation20 [shape = 'u8[32768]{0}', space=vmem, size = 0x8000, scoped, tag = 'input window, operand 13, single buffered']
    #allocation21 [shape = 'u8[32768]{0}', space=vmem, size = 0x8000, scoped, tag = 'input window, operand 15, single buffered']
    #allocation22 [shape = 's32[1]{0}', space=sflag, size = 0x4, scoped, tag = 'scoped memory for tpu_custom_call.1']
    #allocation23 [shape = 'u8[131072]{0}', space=vmem, size = 0x20000, scoped, tag = 'output window, operand 0']
    %22 = vsyncpa [#allocation10], 0
    %s23 = scalar_lea.sflag [#allocation10], 1
    %24 = vsyncpa %s23, 0
    %25 = vsyncpa [#allocation13], 0
    %s26 = scalar_lea.sflag [#allocation13], 1
    %27 = vsyncpa %s26, 0
    %28 = vsyncpa [#allocation16], 0
    %29 = vsyncpa [#allocation19], 0
    %30 = vsyncpa [#allocation22], 0
    %31 = vsyncpa [#allocation11], 0
    %s32 = scalar_lea.sflag [#allocation11], 1
    %33 = vsyncpa %s32, 0
    loop: start=0, step=1, limit=10
    $region2: #{tpu_custom_call.1} parent=1 // loop_pre_header
      _
    $region3: #{tpu_custom_call.1} parent=1 // loop_header
      %s35 = sphi 0, %s39
      %p36 = scmp.ge.s32.totalorder %s35, 10
      %s42 = sphi 0, %s61
      %s43 = sphi 0, %s57
      %s44 = sphi 0, %s53
      %s45 = sphi 0, %s42
      %s46 = sphi 0, %s43
      %s47 = sphi 0, %s44
      %s48 = sphi 0, %s45
      %s49 = sphi 0, %s46
      %s50 = sphi 0, %s47
      %s66 = sphi 0, %s68
      %s69 = sphi 0, %s66
      %s70 = sphi 0, %s69
      %s86 = sphi 0, %s70
      %s94 = sphi 0, %s96
      %s97 = sphi 0, %s94
      %s98 = sphi 0, %s97
      %s114 = sphi 0, %s98
      %s122 = sphi 0, %s124
      %s125 = sphi 0, %s122
      %s126 = sphi 0, %s125
      %s142 = sphi 0, %s126
      %s146 = sphi 0, %s146
      %s148 = sphi 0, %s146
      %s149 = sphi 0, %s148
      %s163 = sphi 0, %s149
      %s167 = sphi 0, %s167
      %s169 = sphi 0, %s167
      %s170 = sphi 0, %s169
      %s184 = sphi 0, %s170
      %s188 = sphi 0, %s188
      %s190 = sphi 0, %s188
      %s191 = sphi 0, %s190
      %s205 = sphi 0, %s191
      %s209 = sphi 0, %s209
      %s211 = sphi 0, %s209
      %s212 = sphi 0, %s211
      %s226 = sphi 0, %s212
      %s230 = sphi 0, %s230
      %s232 = sphi 0, %s230
      %s233 = sphi 0, %s232
      %s247 = sphi 0, %s233
      %s251 = sphi 0, %s251
      %s253 = sphi 0, %s251
      %s254 = sphi 0, %s253
      %s268 = sphi 0, %s254
      %s272 = sphi 0, %s272
      %s274 = sphi 0, %s272
      %s275 = sphi 0, %s274
      %s289 = sphi 0, %s275
      %s293 = sphi 0, %s293
      %s295 = sphi 0, %s293
      %s296 = sphi 0, %s295
      %s310 = sphi 0, %s296
      %s314 = sphi 0, %s314
      %s316 = sphi 0, %s314
      %s317 = sphi 0, %s316
      %s331 = sphi 0, %s317
      %s335 = sphi 0, %s335
      %s337 = sphi 0, %s335
      %s338 = sphi 0, %s337
      %s352 = sphi 0, %s338
      %s356 = sphi 0, %s356
      %s358 = sphi 0, %s356
      %s359 = sphi 0, %s358
      %s373 = sphi 0, %s359
      %s377 = sphi 0, %s377
      %s379 = sphi 0, %s377
      %s380 = sphi 0, %s379
      %s394 = sphi 0, %s380
      %s398 = sphi 0, %s398
      %s400 = sphi 0, %s398
      %s401 = sphi 0, %s400
      %s415 = sphi 0, %s401
      %s419 = sphi 0, %s419
      %s421 = sphi 0, %s419
      %s422 = sphi 0, %s421
      %s436 = sphi 0, %s422
      %s444 = sphi 0, %s446
      %s447 = sphi 0, %s444
      %s448 = sphi 0, %s447
      %s464 = sphi 0, %s448
    $region4: #{tpu_custom_call.1} parent=1 // loop_header_branch
      %38 = sbr.rel (%p36) target = $region8
    $region5: #{tpu_custom_call.1} parent=1 // loop_body
      %s40 = ssub.s32 %s35, 1
      %s41 = ssub.s32 %s35, 2
      %s51 = sadd.s32 1, %s44
      %p52 = scmp.ge.s32.totalorder %s51, 2
      %s53 = scalar_select %p52, 0, %s51
      %s54 = sadd.s32 1, %s43
      %s55 = scalar_select %p52, %s54, %s43
      %p56 = scmp.ge.s32.totalorder %s55, 2
      %s57 = scalar_select %p56, 0, %s55
      %s58 = sadd.s32 1, %s42
      %s59 = scalar_select %p56, %s58, %s42
      %p60 = scmp.ge.s32.totalorder %s59, 2
      %s61 = scalar_select %p60, 0, %s59
      %s62 = ssub.s32 %s42, %s61
      %s63 = ssub.s32 %s43, %s57
      %s64 = sor.u32 %s62, %s63
      %p65 = scmp.eq.s32.totalorder %s64, 0
      %s67 = sadd.s32 %s66, 1
      %s68 = scalar_select %p65, %s66, %s67
      %p71 = pneg %p65
      %p72 = scmp.eq.s32.totalorder %s35, 7
      %p73 = por %p71, %p72
      %p74 = scmp.ne.s32.totalorder %s66, %s69
      %p75 = scmp.eq.s32.totalorder %s35, 0
      %p76 = por %p74, %p75
      %p77 = scmp.ne.s32.totalorder %s66, %s69
      %p78 = scmp.eq.s32.totalorder %s40, 7
      %p79 = por %p77, %p78
      %p80 = scmp.ne.s32.totalorder %s69, %s70
      %p81 = scmp.eq.s32.totalorder %s40, 0
      %p82 = por %p80, %p81
      %p83 = scmp.ne.s32.totalorder %s69, %s70
      %p84 = scmp.eq.s32.totalorder %s41, 7
      %p85 = por %p83, %p84
      %p87 = scmp.ne.s32.totalorder %s70, %s86
      %p88 = scmp.eq.s32.totalorder %s41, 0
      %p89 = por %p87, %p88
      %s90 = ssub.s32 %s42, %s61
      %s91 = ssub.s32 %s44, %s53
      %s92 = sor.u32 %s90, %s91
      %p93 = scmp.eq.s32.totalorder %s92, 0
      %s95 = sadd.s32 %s94, 1
      %s96 = scalar_select %p93, %s94, %s95
      %p99 = pneg %p93
      %p100 = scmp.eq.s32.totalorder %s35, 7
      %p101 = por %p99, %p100
      %p102 = scmp.ne.s32.totalorder %s94, %s97
      %p103 = scmp.eq.s32.totalorder %s35, 0
      %p104 = por %p102, %p103
      %p105 = scmp.ne.s32.totalorder %s94, %s97
      %p106 = scmp.eq.s32.totalorder %s40, 7
      %p107 = por %p105, %p106
      %p108 = scmp.ne.s32.totalorder %s97, %s98
      %p109 = scmp.eq.s32.totalorder %s40, 0
      %p110 = por %p108, %p109
      %p111 = scmp.ne.s32.totalorder %s97, %s98
      %p112 = scmp.eq.s32.totalorder %s41, 7
      %p113 = por %p111, %p112
      %p115 = scmp.ne.s32.totalorder %s98, %s114
      %p116 = scmp.eq.s32.totalorder %s41, 0
      %p117 = por %p115, %p116
      %s118 = ssub.s32 %s43, %s57
      %s119 = ssub.s32 %s44, %s53
      %s120 = sor.u32 %s118, %s119
      %p121 = scmp.eq.s32.totalorder %s120, 0
      %s123 = sadd.s32 %s122, 1
      %s124 = scalar_select %p121, %s122, %s123
      %p127 = pneg %p121
      %p128 = scmp.eq.s32.totalorder %s35, 7
      %p129 = por %p127, %p128
      %p130 = scmp.ne.s32.totalorder %s122, %s125
      %p131 = scmp.eq.s32.totalorder %s35, 0
      %p132 = por %p130, %p131
      %p133 = scmp.ne.s32.totalorder %s122, %s125
      %p134 = scmp.eq.s32.totalorder %s40, 7
      %p135 = por %p133, %p134
      %p136 = scmp.ne.s32.totalorder %s125, %s126
      %p137 = scmp.eq.s32.totalorder %s40, 0
      %p138 = por %p136, %p137
      %p139 = scmp.ne.s32.totalorder %s125, %s126
      %p140 = scmp.eq.s32.totalorder %s41, 7
      %p141 = por %p139, %p140
      %p143 = scmp.ne.s32.totalorder %s126, %s142
      %p144 = scmp.eq.s32.totalorder %s41, 0
      %p145 = por %p143, %p144
      %s147 = sadd.s32 %s146, 1
      %p150 = scmp.eq.s32.totalorder %s35, 7
      %p151 = scmp.ne.s32.totalorder %s146, %s148
      %p152 = scmp.eq.s32.totalorder %s35, 0
      %p153 = por %p151, %p152
      %p154 = scmp.ne.s32.totalorder %s146, %s148
      %p155 = scmp.eq.s32.totalorder %s40, 7
      %p156 = por %p154, %p155
      %p157 = scmp.ne.s32.totalorder %s148, %s149
      %p158 = scmp.eq.s32.totalorder %s40, 0
      %p159 = por %p157, %p158
      %p160 = scmp.ne.s32.totalorder %s148, %s149
      %p161 = scmp.eq.s32.totalorder %s41, 7
      %p162 = por %p160, %p161
      %p164 = scmp.ne.s32.totalorder %s149, %s163
      %p165 = scmp.eq.s32.totalorder %s41, 0
      %p166 = por %p164, %p165
      %s168 = sadd.s32 %s167, 1
      %p171 = scmp.eq.s32.totalorder %s35, 7
      %p172 = scmp.ne.s32.totalorder %s167, %s169
      %p173 = scmp.eq.s32.totalorder %s35, 0
      %p174 = por %p172, %p173
      %p175 = scmp.ne.s32.totalorder %s167, %s169
      %p176 = scmp.eq.s32.totalorder %s40, 7
      %p177 = por %p175, %p176
      %p178 = scmp.ne.s32.totalorder %s169, %s170
      %p179 = scmp.eq.s32.totalorder %s40, 0
      %p180 = por %p178, %p179
      %p181 = scmp.ne.s32.totalorder %s169, %s170
      %p182 = scmp.eq.s32.totalorder %s41, 7
      %p183 = por %p181, %p182
      %p185 = scmp.ne.s32.totalorder %s170, %s184
      %p186 = scmp.eq.s32.totalorder %s41, 0
      %p187 = por %p185, %p186
      %s189 = sadd.s32 %s188, 1
      %p192 = scmp.eq.s32.totalorder %s35, 7
      %p193 = scmp.ne.s32.totalorder %s188, %s190
      %p194 = scmp.eq.s32.totalorder %s35, 0
      %p195 = por %p193, %p194
      %p196 = scmp.ne.s32.totalorder %s188, %s190
      %p197 = scmp.eq.s32.totalorder %s40, 7
      %p198 = por %p196, %p197
      %p199 = scmp.ne.s32.totalorder %s190, %s191
      %p200 = scmp.eq.s32.totalorder %s40, 0
      %p201 = por %p199, %p200
      %p202 = scmp.ne.s32.totalorder %s190, %s191
      %p203 = scmp.eq.s32.totalorder %s41, 7
      %p204 = por %p202, %p203
      %p206 = scmp.ne.s32.totalorder %s191, %s205
      %p207 = scmp.eq.s32.totalorder %s41, 0
      %p208 = por %p206, %p207
      %s210 = sadd.s32 %s209, 1
      %p213 = scmp.eq.s32.totalorder %s35, 7
      %p214 = scmp.ne.s32.totalorder %s209, %s211
      %p215 = scmp.eq.s32.totalorder %s35, 0
      %p216 = por %p214, %p215
      %p217 = scmp.ne.s32.totalorder %s209, %s211
      %p218 = scmp.eq.s32.totalorder %s40, 7
      %p219 = por %p217, %p218
      %p220 = scmp.ne.s32.totalorder %s211, %s212
      %p221 = scmp.eq.s32.totalorder %s40, 0
      %p222 = por %p220, %p221
      %p223 = scmp.ne.s32.totalorder %s211, %s212
      %p224 = scmp.eq.s32.totalorder %s41, 7
      %p225 = por %p223, %p224
      %p227 = scmp.ne.s32.totalorder %s212, %s226
      %p228 = scmp.eq.s32.totalorder %s41, 0
      %p229 = por %p227, %p228
      %s231 = sadd.s32 %s230, 1
      %p234 = scmp.eq.s32.totalorder %s35, 7
      %p235 = scmp.ne.s32.totalorder %s230, %s232
      %p236 = scmp.eq.s32.totalorder %s35, 0
      %p237 = por %p235, %p236
      %p238 = scmp.ne.s32.totalorder %s230, %s232
      %p239 = scmp.eq.s32.totalorder %s40, 7
      %p240 = por %p238, %p239
      %p241 = scmp.ne.s32.totalorder %s232, %s233
      %p242 = scmp.eq.s32.totalorder %s40, 0
      %p243 = por %p241, %p242
      %p244 = scmp.ne.s32.totalorder %s232, %s233
      %p245 = scmp.eq.s32.totalorder %s41, 7
      %p246 = por %p244, %p245
      %p248 = scmp.ne.s32.totalorder %s233, %s247
      %p249 = scmp.eq.s32.totalorder %s41, 0
      %p250 = por %p248, %p249
      %s252 = sadd.s32 %s251, 1
      %p255 = scmp.eq.s32.totalorder %s35, 7
      %p256 = scmp.ne.s32.totalorder %s251, %s253
      %p257 = scmp.eq.s32.totalorder %s35, 0
      %p258 = por %p256, %p257
      %p259 = scmp.ne.s32.totalorder %s251, %s253
      %p260 = scmp.eq.s32.totalorder %s40, 7
      %p261 = por %p259, %p260
      %p262 = scmp.ne.s32.totalorder %s253, %s254
      %p263 = scmp.eq.s32.totalorder %s40, 0
      %p264 = por %p262, %p263
      %p265 = scmp.ne.s32.totalorder %s253, %s254
      %p266 = scmp.eq.s32.totalorder %s41, 7
      %p267 = por %p265, %p266
      %p269 = scmp.ne.s32.totalorder %s254, %s268
      %p270 = scmp.eq.s32.totalorder %s41, 0
      %p271 = por %p269, %p270
      %s273 = sadd.s32 %s272, 1
      %p276 = scmp.eq.s32.totalorder %s35, 7
      %p277 = scmp.ne.s32.totalorder %s272, %s274
      %p278 = scmp.eq.s32.totalorder %s35, 0
      %p279 = por %p277, %p278
      %p280 = scmp.ne.s32.totalorder %s272, %s274
      %p281 = scmp.eq.s32.totalorder %s40, 7
      %p282 = por %p280, %p281
      %p283 = scmp.ne.s32.totalorder %s274, %s275
      %p284 = scmp.eq.s32.totalorder %s40, 0
      %p285 = por %p283, %p284
      %p286 = scmp.ne.s32.totalorder %s274, %s275
      %p287 = scmp.eq.s32.totalorder %s41, 7
      %p288 = por %p286, %p287
      %p290 = scmp.ne.s32.totalorder %s275, %s289
      %p291 = scmp.eq.s32.totalorder %s41, 0
      %p292 = por %p290, %p291
      %s294 = sadd.s32 %s293, 1
      %p297 = scmp.eq.s32.totalorder %s35, 7
      %p298 = scmp.ne.s32.totalorder %s293, %s295
      %p299 = scmp.eq.s32.totalorder %s35, 0
      %p300 = por %p298, %p299
      %p301 = scmp.ne.s32.totalorder %s293, %s295
      %p302 = scmp.eq.s32.totalorder %s40, 7
      %p303 = por %p301, %p302
      %p304 = scmp.ne.s32.totalorder %s295, %s296
      %p305 = scmp.eq.s32.totalorder %s40, 0
      %p306 = por %p304, %p305
      %p307 = scmp.ne.s32.totalorder %s295, %s296
      %p308 = scmp.eq.s32.totalorder %s41, 7
      %p309 = por %p307, %p308
      %p311 = scmp.ne.s32.totalorder %s296, %s310
      %p312 = scmp.eq.s32.totalorder %s41, 0
      %p313 = por %p311, %p312
      %s315 = sadd.s32 %s314, 1
      %p318 = scmp.eq.s32.totalorder %s35, 7
      %p319 = scmp.ne.s32.totalorder %s314, %s316
      %p320 = scmp.eq.s32.totalorder %s35, 0
      %p321 = por %p319, %p320
      %p322 = scmp.ne.s32.totalorder %s314, %s316
      %p323 = scmp.eq.s32.totalorder %s40, 7
      %p324 = por %p322, %p323
      %p325 = scmp.ne.s32.totalorder %s316, %s317
      %p326 = scmp.eq.s32.totalorder %s40, 0
      %p327 = por %p325, %p326
      %p328 = scmp.ne.s32.totalorder %s316, %s317
      %p329 = scmp.eq.s32.totalorder %s41, 7
      %p330 = por %p328, %p329
      %p332 = scmp.ne.s32.totalorder %s317, %s331
      %p333 = scmp.eq.s32.totalorder %s41, 0
      %p334 = por %p332, %p333
      %s336 = sadd.s32 %s335, 1
      %p339 = scmp.eq.s32.totalorder %s35, 7
      %p340 = scmp.ne.s32.totalorder %s335, %s337
      %p341 = scmp.eq.s32.totalorder %s35, 0
      %p342 = por %p340, %p341
      %p343 = scmp.ne.s32.totalorder %s335, %s337
      %p344 = scmp.eq.s32.totalorder %s40, 7
      %p345 = por %p343, %p344
      %p346 = scmp.ne.s32.totalorder %s337, %s338
      %p347 = scmp.eq.s32.totalorder %s40, 0
      %p348 = por %p346, %p347
      %p349 = scmp.ne.s32.totalorder %s337, %s338
      %p350 = scmp.eq.s32.totalorder %s41, 7
      %p351 = por %p349, %p350
      %p353 = scmp.ne.s32.totalorder %s338, %s352
      %p354 = scmp.eq.s32.totalorder %s41, 0
      %p355 = por %p353, %p354
      %s357 = sadd.s32 %s356, 1
      %p360 = scmp.eq.s32.totalorder %s35, 7
      %p361 = scmp.ne.s32.totalorder %s356, %s358
      %p362 = scmp.eq.s32.totalorder %s35, 0
      %p363 = por %p361, %p362
      %p364 = scmp.ne.s32.totalorder %s356, %s358
      %p365 = scmp.eq.s32.totalorder %s40, 7
      %p366 = por %p364, %p365
      %p367 = scmp.ne.s32.totalorder %s358, %s359
      %p368 = scmp.eq.s32.totalorder %s40, 0
      %p369 = por %p367, %p368
      %p370 = scmp.ne.s32.totalorder %s358, %s359
      %p371 = scmp.eq.s32.totalorder %s41, 7
      %p372 = por %p370, %p371
      %p374 = scmp.ne.s32.totalorder %s359, %s373
      %p375 = scmp.eq.s32.totalorder %s41, 0
      %p376 = por %p374, %p375
      %s378 = sadd.s32 %s377, 1
      %p381 = scmp.eq.s32.totalorder %s35, 7
      %p382 = scmp.ne.s32.totalorder %s377, %s379
      %p383 = scmp.eq.s32.totalorder %s35, 0
      %p384 = por %p382, %p383
      %p385 = scmp.ne.s32.totalorder %s377, %s379
      %p386 = scmp.eq.s32.totalorder %s40, 7
      %p387 = por %p385, %p386
      %p388 = scmp.ne.s32.totalorder %s379, %s380
      %p389 = scmp.eq.s32.totalorder %s40, 0
      %p390 = por %p388, %p389
      %p391 = scmp.ne.s32.totalorder %s379, %s380
      %p392 = scmp.eq.s32.totalorder %s41, 7
      %p393 = por %p391, %p392
      %p395 = scmp.ne.s32.totalorder %s380, %s394
      %p396 = scmp.eq.s32.totalorder %s41, 0
      %p397 = por %p395, %p396
      %s399 = sadd.s32 %s398, 1
      %p402 = scmp.eq.s32.totalorder %s35, 7
      %p403 = scmp.ne.s32.totalorder %s398, %s400
      %p404 = scmp.eq.s32.totalorder %s35, 0
      %p405 = por %p403, %p404
      %p406 = scmp.ne.s32.totalorder %s398, %s400
      %p407 = scmp.eq.s32.totalorder %s40, 7
      %p408 = por %p406, %p407
      %p409 = scmp.ne.s32.totalorder %s400, %s401
      %p410 = scmp.eq.s32.totalorder %s40, 0
      %p411 = por %p409, %p410
      %p412 = scmp.ne.s32.totalorder %s400, %s401
      %p413 = scmp.eq.s32.totalorder %s41, 7
      %p414 = por %p412, %p413
      %p416 = scmp.ne.s32.totalorder %s401, %s415
      %p417 = scmp.eq.s32.totalorder %s41, 0
      %p418 = por %p416, %p417
      %s420 = sadd.s32 %s419, 1
      %p423 = scmp.eq.s32.totalorder %s35, 7
      %p424 = scmp.ne.s32.totalorder %s419, %s421
      %p425 = scmp.eq.s32.totalorder %s35, 0
      %p426 = por %p424, %p425
      %p427 = scmp.ne.s32.totalorder %s419, %s421
      %p428 = scmp.eq.s32.totalorder %s40, 7
      %p429 = por %p427, %p428
      %p430 = scmp.ne.s32.totalorder %s421, %s422
      %p431 = scmp.eq.s32.totalorder %s40, 0
      %p432 = por %p430, %p431
      %p433 = scmp.ne.s32.totalorder %s421, %s422
      %p434 = scmp.eq.s32.totalorder %s41, 7
      %p435 = por %p433, %p434
      %p437 = scmp.ne.s32.totalorder %s422, %s436
      %p438 = scmp.eq.s32.totalorder %s41, 0
      %p439 = por %p437, %p438
      %s440 = ssub.s32 %s42, %s61
      %s441 = ssub.s32 %s43, %s57
      %s442 = sor.u32 %s440, %s441
      %p443 = scmp.eq.s32.totalorder %s442, 0
      %s445 = sadd.s32 %s444, 1
      %s446 = scalar_select %p443, %s444, %s445
      %p449 = pneg %p443
      %p450 = scmp.eq.s32.totalorder %s35, 7
      %p451 = por %p449, %p450
      %p452 = scmp.ne.s32.totalorder %s444, %s447
      %p453 = scmp.eq.s32.totalorder %s35, 0
      %p454 = por %p452, %p453
      %p455 = scmp.ne.s32.totalorder %s444, %s447
      %p456 = scmp.eq.s32.totalorder %s40, 7
      %p457 = por %p455, %p456
      %p458 = scmp.ne.s32.totalorder %s447, %s448
      %p459 = scmp.eq.s32.totalorder %s40, 0
      %p460 = por %p458, %p459
      %p461 = scmp.ne.s32.totalorder %s447, %s448
      %p462 = scmp.eq.s32.totalorder %s41, 7
      %p463 = por %p461, %p462
      %p465 = scmp.ne.s32.totalorder %s448, %s464
      %p466 = scmp.eq.s32.totalorder %s41, 0
      %p467 = por %p465, %p466
      %p468 = scmp.le.s32.totalorder 1, %s35
      %p469 = scmp.lt.s32.totalorder %s35, 9
      %p470 = pnand %p468, %p469
      %p471 = pneg %p470
      // Predicated region
      $region9: #{tpu_custom_call.1} parent=5 // pred_check
        _
      $region10: #{tpu_custom_call.1} parent=5 // pred_check_branch
        %473 = sbr.rel (%p470) target = $region12
      $region11: #{tpu_custom_call.1} parent=5 // pred_region
        %s474 = ssub.s32 %s35, 1
        // Predicated region
        $region13: #{tpu_custom_call.1} parent=11 // pred_check
          %p475 = pneg %p159
        $region14: #{tpu_custom_call.1} parent=11 // pred_check_branch
          %477 = sbr.rel (%p475) target = $region16
        $region15: #{tpu_custom_call.1} parent=11 // pred_region
          _
        $region16: #{tpu_custom_call.1} parent=11 // pred_fallthru
          _
        // Predicated region
        $region17: #{tpu_custom_call.1} parent=11 // pred_check
          %p478 = pneg %p180
        $region18: #{tpu_custom_call.1} parent=11 // pred_check_branch
          %480 = sbr.rel (%p478) target = $region20
        $region19: #{tpu_custom_call.1} parent=11 // pred_region
          _
        $region20: #{tpu_custom_call.1} parent=11 // pred_fallthru
          _
        // Predicated region
        $region21: #{tpu_custom_call.1} parent=11 // pred_check
          %p481 = pneg %p201
        $region22: #{tpu_custom_call.1} parent=11 // pred_check_branch
          %483 = sbr.rel (%p481) target = $region24
        $region23: #{tpu_custom_call.1} parent=11 // pred_region
          %s485 = ssub.s32 1024, 1024
          %486 = vsyncadd [#allocation16], %s485
          %s487 = sshll.u32 [#allocation15], 4
          %s488 = int_to_ptr.vmem [resolvable:$true] %s487
          %493 = dma.hbm_to_vmem [thread:$0]  %s5, 1024, %s488, [#allocation16], 64, 64, 4
        $region24: #{tpu_custom_call.1} parent=11 // pred_fallthru
          _
        // Predicated region
        $region25: #{tpu_custom_call.1} parent=11 // pred_check
          %p494 = pneg %p222
        $region26: #{tpu_custom_call.1} parent=11 // pred_check_branch
          %496 = sbr.rel (%p494) target = $region28
        $region27: #{tpu_custom_call.1} parent=11 // pred_region
          _
        $region28: #{tpu_custom_call.1} parent=11 // pred_fallthru
          _
        // Predicated region
        $region29: #{tpu_custom_call.1} parent=11 // pred_check
          %p497 = pneg %p243
        $region30: #{tpu_custom_call.1} parent=11 // pred_check_branch
          %499 = sbr.rel (%p497) target = $region32
        $region31: #{tpu_custom_call.1} parent=11 // pred_region
          %s501 = ssub.s32 2048, 2048
          %502 = vsyncadd [#allocation16], %s501
          %s503 = sshll.u32 [#allocation17], 4
          %s504 = int_to_ptr.vmem [resolvable:$true] %s503
          %509 = dma.hbm_to_vmem [thread:$0]  %s7, 2048, %s504, [#allocation16], 128, 128, 8
        $region32: #{tpu_custom_call.1} parent=11 // pred_fallthru
          _
        // Predicated region
        $region33: #{tpu_custom_call.1} parent=11 // pred_check
          %p510 = pneg %p264
        $region34: #{tpu_custom_call.1} parent=11 // pred_check_branch
          %512 = sbr.rel (%p510) target = $region36
        $region35: #{tpu_custom_call.1} parent=11 // pred_region
          _
        $region36: #{tpu_custom_call.1} parent=11 // pred_fallthru
          _
        // Predicated region
        $region37: #{tpu_custom_call.1} parent=11 // pred_check
          %p513 = pneg %p285
        $region38: #{tpu_custom_call.1} parent=11 // pred_check_branch
          %515 = sbr.rel (%p513) target = $region40
        $region39: #{tpu_custom_call.1} parent=11 // pred_region
          %s517 = ssub.s32 1024, 1024
          %518 = vsyncadd [#allocation19], %s517
          %s519 = sshll.u32 [#allocation18], 4
          %s520 = int_to_ptr.vmem [resolvable:$true] %s519
          %525 = dma.hbm_to_vmem [thread:$0]  %s9, 1024, %s520, [#allocation19], 64, 64, 4
        $region40: #{tpu_custom_call.1} parent=11 // pred_fallthru
          _
        // Predicated region
        $region41: #{tpu_custom_call.1} parent=11 // pred_check
          %p526 = pneg %p306
        $region42: #{tpu_custom_call.1} parent=11 // pred_check_branch
          %528 = sbr.rel (%p526) target = $region44
        $region43: #{tpu_custom_call.1} parent=11 // pred_region
          _
        $region44: #{tpu_custom_call.1} parent=11 // pred_fallthru
          _
        // Predicated region
        $region45: #{tpu_custom_call.1} parent=11 // pred_check
          %p529 = pneg %p327
        $region46: #{tpu_custom_call.1} parent=11 // pred_check_branch
          %531 = sbr.rel (%p529) target = $region48
        $region47: #{tpu_custom_call.1} parent=11 // pred_region
          _
        $region48: #{tpu_custom_call.1} parent=11 // pred_fallthru
          _
        // Predicated region
        $region49: #{tpu_custom_call.1} parent=11 // pred_check
          %p532 = pneg %p348
        $region50: #{tpu_custom_call.1} parent=11 // pred_check_branch
          %534 = sbr.rel (%p532) target = $region52
        $region51: #{tpu_custom_call.1} parent=11 // pred_region
          _
        $region52: #{tpu_custom_call.1} parent=11 // pred_fallthru
          _
        // Predicated region
        $region53: #{tpu_custom_call.1} parent=11 // pred_check
          %p535 = pneg %p369
        $region54: #{tpu_custom_call.1} parent=11 // pred_check_branch
          %537 = sbr.rel (%p535) target = $region56
        $region55: #{tpu_custom_call.1} parent=11 // pred_region
          %s539 = ssub.s32 1024, 1024
          %540 = vsyncadd [#allocation19], %s539
          %s541 = sshll.u32 [#allocation20], 4
          %s542 = int_to_ptr.vmem [resolvable:$true] %s541
          %547 = dma.hbm_to_vmem [thread:$0]  %s13, 1024, %s542, [#allocation19], 64, 64, 4
        $region56: #{tpu_custom_call.1} parent=11 // pred_fallthru
          _
        // Predicated region
        $region57: #{tpu_custom_call.1} parent=11 // pred_check
          %p548 = pneg %p390
        $region58: #{tpu_custom_call.1} parent=11 // pred_check_branch
          %550 = sbr.rel (%p548) target = $region60
        $region59: #{tpu_custom_call.1} parent=11 // pred_region
          _
        $region60: #{tpu_custom_call.1} parent=11 // pred_fallthru
          _
        // Predicated region
        $region61: #{tpu_custom_call.1} parent=11 // pred_check
          %p551 = pneg %p411
        $region62: #{tpu_custom_call.1} parent=11 // pred_check_branch
          %553 = sbr.rel (%p551) target = $region64
        $region63: #{tpu_custom_call.1} parent=11 // pred_region
          %s555 = ssub.s32 1024, 1024
          %556 = vsyncadd [#allocation22], %s555
          %s557 = sshll.u32 [#allocation21], 4
          %s558 = int_to_ptr.vmem [resolvable:$true] %s557
          %563 = dma.hbm_to_vmem [thread:$0]  %s15, 1024, %s558, [#allocation22], 64, 64, 4
        $region64: #{tpu_custom_call.1} parent=11 // pred_fallthru
          _
        // Predicated region
        $region65: #{tpu_custom_call.1} parent=11 // pred_check
          %p564 = pneg %p432
        $region66: #{tpu_custom_call.1} parent=11 // pred_check_branch
          %566 = sbr.rel (%p564) target = $region68
        $region67: #{tpu_custom_call.1} parent=11 // pred_region
          _
        $region68: #{tpu_custom_call.1} parent=11 // pred_fallthru
          _
      $region12: #{tpu_custom_call.1} parent=5 // pred_fallthru
        _
      %p567 = scmp.lt.s32.totalorder %s35, 8
      // Predicated region
      $region69: #{tpu_custom_call.1} parent=5 // pred_check
        %p568 = pneg %p567
      $region70: #{tpu_custom_call.1} parent=5 // pred_check_branch
        %570 = sbr.rel (%p568) target = $region72
      $region71: #{tpu_custom_call.1} parent=5 // pred_region
        // Predicated region
        $region73: #{tpu_custom_call.1} parent=71 // pred_check
          %p571 = pneg %p76
        $region74: #{tpu_custom_call.1} parent=71 // pred_check_branch
          %573 = sbr.rel (%p571) target = $region76
        $region75: #{tpu_custom_call.1} parent=71 // pred_region
          %s574 = sand.u32 %s66, 1
          %s575 = scalar_lea.sflag [#allocation10], %s574
          %s576 = sand.u32 %s66, 1
          %s577 = smul.addr %s576, 64
          %s578 = scalar_lea.vmem [#allocation9], %s577
          %s579 = smul.u32 16, %s43
          %s581 = ssub.s32 1024, 1024
          %582 = vsyncadd %s575, %s581
          %s583 = smul.addr %s42, 32
          %s584 = sadd.s32 %s579, %s583
          %s585 = smul.addr %s584, 64
          %s586 = scalar_lea.hbm %s0, %s585
          %s587 = sshll.u32 %s578, 4
          %s588 = int_to_ptr.vmem [resolvable:$true] %s587
          %593 = dma.hbm_to_vmem [thread:$0]  %s586, 1024, %s588, %s575, 64, 64, 4
        $region76: #{tpu_custom_call.1} parent=71 // pred_fallthru
          _
        // Predicated region
        $region77: #{tpu_custom_call.1} parent=71 // pred_check
          %p594 = pneg %p104
        $region78: #{tpu_custom_call.1} parent=71 // pred_check_branch
          %596 = sbr.rel (%p594) target = $region80
        $region79: #{tpu_custom_call.1} parent=71 // pred_region
          %s597 = sand.u32 %s35, 1
          %s598 = scalar_lea.sflag [#allocation13], %s597
          %s599 = sand.u32 %s94, 1
          %s600 = smul.addr %s599, 64
          %s601 = scalar_lea.vmem [#allocation12], %s600
          %s602 = smul.u32 16, %s44
          %s604 = ssub.s32 1024, 1024
          %605 = vsyncadd %s598, %s604
          %s606 = smul.addr %s42, 32
          %s607 = sadd.s32 %s602, %s606
          %s608 = smul.addr %s607, 64
          %s609 = scalar_lea.hbm %s1, %s608
          %s610 = sshll.u32 %s601, 4
          %s611 = int_to_ptr.vmem [resolvable:$true] %s610
          %616 = dma.hbm_to_vmem [thread:$0]  %s609, 1024, %s611, %s598, 64, 64, 4
        $region80: #{tpu_custom_call.1} parent=71 // pred_fallthru
          _
        // Predicated region
        $region81: #{tpu_custom_call.1} parent=71 // pred_check
          %p617 = pneg %p132
        $region82: #{tpu_custom_call.1} parent=71 // pred_check_branch
          %619 = sbr.rel (%p617) target = $region84
        $region83: #{tpu_custom_call.1} parent=71 // pred_region
          %s620 = sand.u32 %s35, 1
          %s621 = scalar_lea.sflag [#allocation13], %s620
          %s622 = sand.u32 %s122, 1
          %s623 = smul.addr %s622, 128
          %s624 = scalar_lea.vmem [#allocation14], %s623
          %s625 = smul.u32 16, %s43
          %s627 = ssub.s32 2048, 2048
          %628 = vsyncadd %s621, %s627
          %s629 = smul.addr %s625, 2
          %s630 = sadd.s32 %s44, %s629
          %s631 = smul.addr %s630, 128
          %s632 = scalar_lea.hbm %s2, %s631
          %s633 = sshll.u32 %s624, 4
          %s634 = int_to_ptr.vmem [resolvable:$true] %s633
          %639 = dma.hbm_to_vmem [thread:$0]  %s632, 2048, %s634, %s621, 256, 128, 8
        $region84: #{tpu_custom_call.1} parent=71 // pred_fallthru
          _
      $region72: #{tpu_custom_call.1} parent=5 // pred_fallthru
        _
      %p640 = scmp.le.s32.totalorder 1, %s35
      %p641 = scmp.lt.s32.totalorder %s35, 9
      %p642 = pnand %p640, %p641
      %p643 = pneg %p642
      // Predicated region
      $region85: #{tpu_custom_call.1} parent=5 // pred_check
        _
      $region86: #{tpu_custom_call.1} parent=5 // pred_check_branch
        %645 = sbr.rel (%p642) target = $region88
      $region87: #{tpu_custom_call.1} parent=5 // pred_region
        %s646 = ssub.s32 %s35, 1
        %s647 = sand.u32 %s69, 1
        %s648 = scalar_lea.sflag [#allocation10], %s647
        %s649 = sand.u32 %s69, 1
        %s650 = smul.addr %s649, 64
        %s651 = scalar_lea.vmem [#allocation9], %s650
        // Predicated region
        $region89: #{tpu_custom_call.1} parent=87 // pred_check
          %p652 = pneg %p82
        $region90: #{tpu_custom_call.1} parent=87 // pred_check_branch
          %654 = sbr.rel (%p652) target = $region92
        $region91: #{tpu_custom_call.1} parent=87 // pred_region
          %655 = dma.done %s648, 1024
        $region92: #{tpu_custom_call.1} parent=87 // pred_fallthru
          _
        %s656 = sand.u32 %s40, 1
        %s657 = scalar_lea.sflag [#allocation13], %s656
        %s658 = sand.u32 %s97, 1
        %s659 = smul.addr %s658, 64
        %s660 = scalar_lea.vmem [#allocation12], %s659
        // Predicated region
        $region93: #{tpu_custom_call.1} parent=87 // pred_check
          %p661 = pneg %p110
        $region94: #{tpu_custom_call.1} parent=87 // pred_check_branch
          %663 = sbr.rel (%p661) target = $region96
        $region95: #{tpu_custom_call.1} parent=87 // pred_region
          %664 = dma.done %s657, 1024
        $region96: #{tpu_custom_call.1} parent=87 // pred_fallthru
          _
        %s665 = sand.u32 %s40, 1
        %s666 = scalar_lea.sflag [#allocation13], %s665
        %s667 = sand.u32 %s125, 1
        %s668 = smul.addr %s667, 128
        %s669 = scalar_lea.vmem [#allocation14], %s668
        // Predicated region
        $region97: #{tpu_custom_call.1} parent=87 // pred_check
          %p670 = pneg %p138
        $region98: #{tpu_custom_call.1} parent=87 // pred_check_branch
          %672 = sbr.rel (%p670) target = $region100
        $region99: #{tpu_custom_call.1} parent=87 // pred_region
          %673 = dma.done %s666, 2048
        $region100: #{tpu_custom_call.1} parent=87 // pred_fallthru
          _
        // Predicated region
        $region101: #{tpu_custom_call.1} parent=87 // pred_check
          %p674 = pneg %p201
        $region102: #{tpu_custom_call.1} parent=87 // pred_check_branch
          %676 = sbr.rel (%p674) target = $region104
        $region103: #{tpu_custom_call.1} parent=87 // pred_region
          %677 = dma.done [#allocation16], 1024
        $region104: #{tpu_custom_call.1} parent=87 // pred_fallthru
          _
        // Predicated region
        $region105: #{tpu_custom_call.1} parent=87 // pred_check
          %p678 = pneg %p243
        $region106: #{tpu_custom_call.1} parent=87 // pred_check_branch
          %680 = sbr.rel (%p678) target = $region108
        $region107: #{tpu_custom_call.1} parent=87 // pred_region
          %681 = dma.done [#allocation16], 2048
        $region108: #{tpu_custom_call.1} parent=87 // pred_fallthru
          _
        // Predicated region
        $region109: #{tpu_custom_call.1} parent=87 // pred_check
          %p682 = pneg %p285
        $region110: #{tpu_custom_call.1} parent=87 // pred_check_branch
          %684 = sbr.rel (%p682) target = $region112
        $region111: #{tpu_custom_call.1} parent=87 // pred_region
          %685 = dma.done [#allocation19], 1024
        $region112: #{tpu_custom_call.1} parent=87 // pred_fallthru
          _
        // Predicated region
        $region113: #{tpu_custom_call.1} parent=87 // pred_check
          %p686 = pneg %p369
        $region114: #{tpu_custom_call.1} parent=87 // pred_check_branch
          %688 = sbr.rel (%p686) target = $region116
        $region115: #{tpu_custom_call.1} parent=87 // pred_region
          %689 = dma.done [#allocation19], 1024
        $region116: #{tpu_custom_call.1} parent=87 // pred_fallthru
          _
        // Predicated region
        $region117: #{tpu_custom_call.1} parent=87 // pred_check
          %p690 = pneg %p411
        $region118: #{tpu_custom_call.1} parent=87 // pred_check_branch
          %692 = sbr.rel (%p690) target = $region120
        $region119: #{tpu_custom_call.1} parent=87 // pred_region
          %693 = dma.done [#allocation22], 1024
        $region120: #{tpu_custom_call.1} parent=87 // pred_fallthru
          _
        %s694 = sand.u32 %s69, 1
        %s695 = scalar_lea.sflag [#allocation10], %s694
        %s696 = sand.u32 %s69, 1
        %s697 = smul.addr %s696, 64
        %s698 = scalar_lea.vmem [#allocation9], %s697
        %p699 = pneg %p82
        %p700 = pneg %p79
        %s701 = sand.u32 %s40, 1
        %s702 = scalar_lea.sflag [#allocation13], %s701
        %s703 = sand.u32 %s97, 1
        %s704 = smul.addr %s703, 64
        %s705 = scalar_lea.vmem [#allocation12], %s704
        %p706 = pneg %p110
        %p707 = pneg %p107
        %s708 = sand.u32 %s40, 1
        %s709 = scalar_lea.sflag [#allocation13], %s708
        %s710 = sand.u32 %s125, 1
        %s711 = smul.addr %s710, 128
        %s712 = scalar_lea.vmem [#allocation14], %s711
        %p713 = pneg %p138
        %p714 = pneg %p135
        %p715 = pneg %p159
        %p716 = pneg %p156
        %p717 = pneg %p180
        %p718 = pneg %p177
        %p719 = pneg %p201
        %p720 = pneg %p198
        %p721 = pneg %p222
        %p722 = pneg %p219
        %p723 = pneg %p243
        %p724 = pneg %p240
        %p725 = pneg %p264
        %p726 = pneg %p261
        %p727 = pneg %p285
        %p728 = pneg %p282
        %p729 = pneg %p306
        %p730 = pneg %p303
        %p731 = pneg %p327
        %p732 = pneg %p324
        %p733 = pneg %p348
        %p734 = pneg %p345
        %p735 = pneg %p369
        %p736 = pneg %p366
        %p737 = pneg %p390
        %p738 = pneg %p387
        %p739 = pneg %p411
        %p740 = pneg %p408
        %p741 = pneg %p432
        %p742 = pneg %p429
        %p743 = pneg %p460
        %p744 = pneg %p457
        %s745 = sand.u32 %s447, 1
        %s746 = scalar_lea.sflag [#allocation11], %s745
        %s747 = sand.u32 %s447, 1
        %s748 = smul.addr %s747, 128
        %s749 = scalar_lea.vmem [#allocation23], %s748
        %s750 = smul.u32 16, %s46
        %s751 = smul.u32 16, %s47
        %s752 = smul.u32 16, %s46
        %s753 = smul.u32 16, %s46
        %p755 = scmp.eq.s32.totalorder %s47, 0
        // Predicated region
        $region121: #{tpu_custom_call.1} parent=87 // pred_check
          %p756 = pneg %p755
        $region122: #{tpu_custom_call.1} parent=87 // pred_check_branch
          %758 = sbr.rel (%p756) target = $region124
        $region123: #{tpu_custom_call.1} parent=87 // pred_region
          %v759 = vld [vmem:[%s651] sm:$0xf]
          %v760 = vld [vmem:[%s651 + $0x4] sm:$0xf]
          %v761 = vld [vmem:[%s651 + $0x8] sm:$0xf]
          %v762 = vld [vmem:[%s651 + $0xc] sm:$0xf]
          %v763 = vld [vmem:[%s651 + $0x10] sm:$0xf]
          %v764 = vld [vmem:[%s651 + $0x14] sm:$0xf]
          %v765 = vld [vmem:[%s651 + $0x18] sm:$0xf]
          %v766 = vld [vmem:[%s651 + $0x1c] sm:$0xf]
          %v767 = vld [vmem:[%s651 + $0x20] sm:$0xf]
          %v768 = vld [vmem:[%s651 + $0x24] sm:$0xf]
          %v769 = vld [vmem:[%s651 + $0x28] sm:$0xf]
          %v770 = vld [vmem:[%s651 + $0x2c] sm:$0xf]
          %v771 = vld [vmem:[%s651 + $0x30] sm:$0xf]
          %v772 = vld [vmem:[%s651 + $0x34] sm:$0xf]
          %v773 = vld [vmem:[%s651 + $0x38] sm:$0xf]
          %v774 = vld [vmem:[%s651 + $0x3c] sm:$0xf]
          %v775 = vunpack.c.l.bf16 %v759
          %v776 = vunpack.c.l.bf16 %v760
          %v777 = vunpack.c.l.bf16 %v761
          %v778 = vunpack.c.l.bf16 %v762
          %v779 = vunpack.c.l.bf16 %v763
          %v780 = vunpack.c.l.bf16 %v764
          %v781 = vunpack.c.l.bf16 %v765
          %v782 = vunpack.c.l.bf16 %v766
          %v783 = vunpack.c.l.bf16 %v767
          %v784 = vunpack.c.l.bf16 %v768
          %v785 = vunpack.c.l.bf16 %v769
          %v786 = vunpack.c.l.bf16 %v770
          %v787 = vunpack.c.l.bf16 %v771
          %v788 = vunpack.c.l.bf16 %v772
          %v789 = vunpack.c.l.bf16 %v773
          %v790 = vunpack.c.l.bf16 %v774
          %v791 = vld [vmem:[%s3] sm:$0x1]
          %v792 = vld [vmem:[%s4] sm:$0x1]
          %793 = vadd.xlane.f32.xlu0 %v775
          %v794 = vpop.xlane.xlu0 %793
          %795 = vadd.xlane.f32.xlu0 %v776
          %v796 = vpop.xlane.xlu0 %795
          %797 = vadd.xlane.f32.xlu0 %v777
          %v798 = vpop.xlane.xlu0 %797
          %799 = vadd.xlane.f32.xlu0 %v778
          %v800 = vpop.xlane.xlu0 %799
          %801 = vadd.xlane.f32.xlu0 %v779
          %v802 = vpop.xlane.xlu0 %801
          %803 = vadd.xlane.f32.xlu0 %v780
          %v804 = vpop.xlane.xlu0 %803
          %805 = vadd.xlane.f32.xlu0 %v781
          %v806 = vpop.xlane.xlu0 %805
          %807 = vadd.xlane.f32.xlu0 %v782
          %v808 = vpop.xlane.xlu0 %807
          %809 = vadd.xlane.f32.xlu0 %v783
          %v810 = vpop.xlane.xlu0 %809
          %811 = vadd.xlane.f32.xlu0 %v784
          %v812 = vpop.xlane.xlu0 %811
          %813 = vadd.xlane.f32.xlu0 %v785
          %v814 = vpop.xlane.xlu0 %813
          %815 = vadd.xlane.f32.xlu0 %v786
          %v816 = vpop.xlane.xlu0 %815
          %817 = vadd.xlane.f32.xlu0 %v787
          %v818 = vpop.xlane.xlu0 %817
          %819 = vadd.xlane.f32.xlu0 %v788
          %v820 = vpop.xlane.xlu0 %819
          %821 = vadd.xlane.f32.xlu0 %v789
          %v822 = vpop.xlane.xlu0 %821
          %823 = vadd.xlane.f32.xlu0 %v790
          %v824 = vpop.xlane.xlu0 %823
          %v825 = vrcp.pop 128.0
          %v826 = vmul.f32 %v794, %v825
          %v827 = vmul.f32 %v796, %v825
          %v828 = vmul.f32 %v798, %v825
          %v829 = vmul.f32 %v800, %v825
          %v830 = vmul.f32 %v802, %v825
          %v831 = vmul.f32 %v804, %v825
          %v832 = vmul.f32 %v806, %v825
          %v833 = vmul.f32 %v808, %v825
          %v834 = vmul.f32 %v810, %v825
          %v835 = vmul.f32 %v812, %v825
          %v836 = vmul.f32 %v814, %v825
          %v837 = vmul.f32 %v816, %v825
          %v838 = vmul.f32 %v818, %v825
          %v839 = vmul.f32 %v820, %v825
          %v840 = vmul.f32 %v822, %v825
          %v841 = vmul.f32 %v824, %v825
          %v842 = vsub.f32 %v775, %v826
          %v843 = vsub.f32 %v776, %v827
          %v844 = vsub.f32 %v777, %v828
          %v845 = vsub.f32 %v778, %v829
          %v846 = vsub.f32 %v779, %v830
          %v847 = vsub.f32 %v780, %v831
          %v848 = vsub.f32 %v781, %v832
          %v849 = vsub.f32 %v782, %v833
          %v850 = vsub.f32 %v783, %v834
          %v851 = vsub.f32 %v784, %v835
          %v852 = vsub.f32 %v785, %v836
          %v853 = vsub.f32 %v786, %v837
          %v854 = vsub.f32 %v787, %v838
          %v855 = vsub.f32 %v788, %v839
          %v856 = vsub.f32 %v789, %v840
          %v857 = vsub.f32 %v790, %v841
          %v858 = vmul.f32 %v842, %v842
          %v859 = vmul.f32 %v843, %v843
          %v860 = vmul.f32 %v844, %v844
          %v861 = vmul.f32 %v845, %v845
          %v862 = vmul.f32 %v846, %v846
          %v863 = vmul.f32 %v847, %v847
          %v864 = vmul.f32 %v848, %v848
          %v865 = vmul.f32 %v849, %v849
          %v866 = vmul.f32 %v850, %v850
          %v867 = vmul.f32 %v851, %v851
          %v868 = vmul.f32 %v852, %v852
          %v869 = vmul.f32 %v853, %v853
          %v870 = vmul.f32 %v854, %v854
          %v871 = vmul.f32 %v855, %v855
          %v872 = vmul.f32 %v856, %v856
          %v873 = vmul.f32 %v857, %v857
          %874 = vadd.xlane.f32.xlu0 %v858
          %v875 = vpop.xlane.xlu0 %874
          %876 = vadd.xlane.f32.xlu0 %v859
          %v877 = vpop.xlane.xlu0 %876
          %878 = vadd.xlane.f32.xlu0 %v860
          %v879 = vpop.xlane.xlu0 %878
          %880 = vadd.xlane.f32.xlu0 %v861
          %v881 = vpop.xlane.xlu0 %880
          %882 = vadd.xlane.f32.xlu0 %v862
          %v883 = vpop.xlane.xlu0 %882
          %884 = vadd.xlane.f32.xlu0 %v863
          %v885 = vpop.xlane.xlu0 %884
          %886 = vadd.xlane.f32.xlu0 %v864
          %v887 = vpop.xlane.xlu0 %886
          %888 = vadd.xlane.f32.xlu0 %v865
          %v889 = vpop.xlane.xlu0 %888
          %890 = vadd.xlane.f32.xlu0 %v866
          %v891 = vpop.xlane.xlu0 %890
          %892 = vadd.xlane.f32.xlu0 %v867
          %v893 = vpop.xlane.xlu0 %892
          %894 = vadd.xlane.f32.xlu0 %v868
          %v895 = vpop.xlane.xlu0 %894
          %896 = vadd.xlane.f32.xlu0 %v869
          %v897 = vpop.xlane.xlu0 %896
          %898 = vadd.xlane.f32.xlu0 %v870
          %v899 = vpop.xlane.xlu0 %898
          %900 = vadd.xlane.f32.xlu0 %v871
          %v901 = vpop.xlane.xlu0 %900
          %902 = vadd.xlane.f32.xlu0 %v872
          %v903 = vpop.xlane.xlu0 %902
          %904 = vadd.xlane.f32.xlu0 %v873
          %v905 = vpop.xlane.xlu0 %904
          %v906 = vmul.f32 %v875, %v825
          %v907 = vmul.f32 %v877, %v825
          %v908 = vmul.f32 %v879, %v825
          %v909 = vmul.f32 %v881, %v825
          %v910 = vmul.f32 %v883, %v825
          %v911 = vmul.f32 %v885, %v825
          %v912 = vmul.f32 %v887, %v825
          %v913 = vmul.f32 %v889, %v825
          %v914 = vmul.f32 %v891, %v825
          %v915 = vmul.f32 %v893, %v825
          %v916 = vmul.f32 %v895, %v825
          %v917 = vmul.f32 %v897, %v825
          %v918 = vmul.f32 %v899, %v825
          %v919 = vmul.f32 %v901, %v825
          %v920 = vmul.f32 %v903, %v825
          %v921 = vmul.f32 %v905, %v825
          %v922 = vadd.f32 %v906, 1e-08
          %v923 = vadd.f32 %v907, 1e-08
          %v924 = vadd.f32 %v908, 1e-08
          %v925 = vadd.f32 %v909, 1e-08
          %v926 = vadd.f32 %v910, 1e-08
          %v927 = vadd.f32 %v911, 1e-08
          %v928 = vadd.f32 %v912, 1e-08
          %v929 = vadd.f32 %v913, 1e-08
          %v930 = vadd.f32 %v914, 1e-08
          %v931 = vadd.f32 %v915, 1e-08
          %v932 = vadd.f32 %v916, 1e-08
          %v933 = vadd.f32 %v917, 1e-08
          %v934 = vadd.f32 %v918, 1e-08
          %v935 = vadd.f32 %v919, 1e-08
          %v936 = vadd.f32 %v920, 1e-08
          %v937 = vadd.f32 %v921, 1e-08
          %v938 = vrsqrt.pop %v922
          %v939 = vrsqrt.pop %v923
          %v940 = vrsqrt.pop %v924
          %v941 = vrsqrt.pop %v925
          %v942 = vrsqrt.pop %v926
          %v943 = vrsqrt.pop %v927
          %v944 = vrsqrt.pop %v928
          %v945 = vrsqrt.pop %v929
          %v946 = vrsqrt.pop %v930
          %v947 = vrsqrt.pop %v931
          %v948 = vrsqrt.pop %v932
          %v949 = vrsqrt.pop %v933
          %v950 = vrsqrt.pop %v934
          %v951 = vrsqrt.pop %v935
          %v952 = vrsqrt.pop %v936
          %v953 = vrsqrt.pop %v937
          %v954 = vmul.f32 %v842, %v938
          %v955 = vmul.f32 %v843, %v939
          %v956 = vmul.f32 %v844, %v940
          %v957 = vmul.f32 %v845, %v941
          %v958 = vmul.f32 %v846, %v942
          %v959 = vmul.f32 %v847, %v943
          %v960 = vmul.f32 %v848, %v944
          %v961 = vmul.f32 %v849, %v945
          %v962 = vmul.f32 %v850, %v946
          %v963 = vmul.f32 %v851, %v947
          %v964 = vmul.f32 %v852, %v948
          %v965 = vmul.f32 %v853, %v949
          %v966 = vmul.f32 %v854, %v950
          %v967 = vmul.f32 %v855, %v951
          %v968 = vmul.f32 %v856, %v952
          %v969 = vmul.f32 %v857, %v953
          %v971 = vlaneseq
          %v972 = vshrl.u32 %v971, 7
          %v973 = vsub.s32 0, %v972
          %v974 = vrot.slane %v791, %v973
          %v976 = vmul.f32 %v954, %v974
          %v977 = vmul.f32 %v955, %v974
          %v978 = vmul.f32 %v956, %v974
          %v979 = vmul.f32 %v957, %v974
          %v980 = vmul.f32 %v958, %v974
          %v981 = vmul.f32 %v959, %v974
          %v982 = vmul.f32 %v960, %v974
          %v983 = vmul.f32 %v961, %v974
          %v984 = vmul.f32 %v962, %v974
          %v985 = vmul.f32 %v963, %v974
          %v986 = vmul.f32 %v964, %v974
          %v987 = vmul.f32 %v965, %v974
          %v988 = vmul.f32 %v966, %v974
          %v989 = vmul.f32 %v967, %v974
          %v990 = vmul.f32 %v968, %v974
          %v991 = vmul.f32 %v969, %v974
          %v993 = vlaneseq
          %v994 = vshrl.u32 %v993, 7
          %v995 = vsub.s32 0, %v994
          %v996 = vrot.slane %v792, %v995
          %v998 = vadd.f32 %v976, %v996
          %v999 = vadd.f32 %v977, %v996
          %v1000 = vadd.f32 %v978, %v996
          %v1001 = vadd.f32 %v979, %v996
          %v1002 = vadd.f32 %v980, %v996
          %v1003 = vadd.f32 %v981, %v996
          %v1004 = vadd.f32 %v982, %v996
          %v1005 = vadd.f32 %v983, %v996
          %v1006 = vadd.f32 %v984, %v996
          %v1007 = vadd.f32 %v985, %v996
          %v1008 = vadd.f32 %v986, %v996
          %v1009 = vadd.f32 %v987, %v996
          %v1010 = vadd.f32 %v988, %v996
          %v1011 = vadd.f32 %v989, %v996
          %v1012 = vadd.f32 %v990, %v996
          %v1013 = vadd.f32 %v991, %v996
          %v1014 = vpack.c.bf16 %v999, %v998
          %v1015 = vpack.c.bf16 %v1001, %v1000
          %v1016 = vpack.c.bf16 %v1003, %v1002
          %v1017 = vpack.c.bf16 %v1005, %v1004
          %v1018 = vpack.c.bf16 %v1007, %v1006
          %v1019 = vpack.c.bf16 %v1009, %v1008
          %v1020 = vpack.c.bf16 %v1011, %v1010
          %v1021 = vpack.c.bf16 %v1013, %v1012
          %v1022 = vld [vmem:[#allocation15] sm:$0xf]
          %v1023 = vld [vmem:[#allocation15 + $0x4] sm:$0xf]
          %v1024 = vld [vmem:[#allocation15 + $0x8] sm:$0xf]
          %v1025 = vld [vmem:[#allocation15 + $0xc] sm:$0xf]
          %v1026 = vld [vmem:[#allocation15 + $0x10] sm:$0xf]
          %v1027 = vld [vmem:[#allocation15 + $0x14] sm:$0xf]
          %v1028 = vld [vmem:[#allocation15 + $0x18] sm:$0xf]
          %v1029 = vld [vmem:[#allocation15 + $0x1c] sm:$0xf]
          %v1030 = vld [vmem:[#allocation15 + $0x20] sm:$0xf]
          %v1031 = vld [vmem:[#allocation15 + $0x24] sm:$0xf]
          %v1032 = vld [vmem:[#allocation15 + $0x28] sm:$0xf]
          %v1033 = vld [vmem:[#allocation15 + $0x2c] sm:$0xf]
          %v1034 = vld [vmem:[#allocation15 + $0x30] sm:$0xf]
          %v1035 = vld [vmem:[#allocation15 + $0x34] sm:$0xf]
          %v1036 = vld [vmem:[#allocation15 + $0x38] sm:$0xf]
          %v1037 = vld [vmem:[#allocation15 + $0x3c] sm:$0xf]
          %v1038 = vld [vmem:[%s6] sm:$0x1]
          %v1040 = vlaneseq
          %v1041 = vshrl.u32 %v1040, 7
          %v1042 = vsub.s32 0, %v1041
          %v1043 = vrot.slane %v1038, %v1042
          %v1061 = vunpack.c.l.b16 %v1022
          %v1062 = vunpack.c.l.b16 %v1023
          %v1063 = vunpack.c.l.b16 %v1024
          %v1064 = vunpack.c.l.b16 %v1025
          %v1065 = vunpack.c.l.b16 %v1026
          %v1066 = vunpack.c.l.b16 %v1027
          %v1067 = vunpack.c.l.b16 %v1028
          %v1068 = vunpack.c.l.b16 %v1029
          %v1069 = vunpack.c.l.b16 %v1030
          %v1070 = vunpack.c.l.b16 %v1031
          %v1071 = vunpack.c.l.b16 %v1032
          %v1072 = vunpack.c.l.b16 %v1033
          %v1073 = vunpack.c.l.b16 %v1034
          %v1074 = vunpack.c.l.b16 %v1035
          %v1075 = vunpack.c.l.b16 %v1036
          %v1076 = vunpack.c.l.b16 %v1037
          %v1077 = vpack.c.b16 %v1062, %v1061
          %v1078 = vpack.c.b16 %v1064, %v1063
          %v1079 = vpack.c.b16 %v1066, %v1065
          %v1080 = vpack.c.b16 %v1068, %v1067
          %v1081 = vpack.c.b16 %v1070, %v1069
          %v1082 = vpack.c.b16 %v1072, %v1071
          %v1083 = vpack.c.b16 %v1074, %v1073
          %v1084 = vpack.c.b16 %v1076, %v1075
          %1093 = vmatprep.subr.bf16.mxu0 0
          %1094 = vmatpush1.bf16.msra.mxu0 %v1077
          %1095 = vmatprep.subr.bf16.mxu0 0
          %1096 = vmatpush1.bf16.msra.mxu0 %v1078
          %1097 = vmatprep.subr.bf16.mxu0 0
          %1098 = vmatpush1.bf16.msra.mxu0 %v1079
          %1099 = vmatprep.subr.bf16.mxu0 0
          %1100 = vmatpush1.bf16.msra.mxu0 %v1080
          %1101 = vmatprep.subr.bf16.mxu0 0
          %1102 = vmatpush1.bf16.msra.mxu0 %v1081
          %1103 = vmatprep.subr.bf16.mxu0 0
          %1104 = vmatpush1.bf16.msra.mxu0 %v1082
          %1105 = vmatprep.subr.bf16.mxu0 0
          %1106 = vmatpush1.bf16.msra.mxu0 %v1083
          %1107 = vmatprep.subr.bf16.mxu0 0
          %1108 = vmatpush1.bf16.msra.mxu0 %v1084
          %1109 = vmatprep.subr.bf16.mxu0 0
          %1110 = vmatpush1.bf16.msra.mxu0 0
          %1111 = vmatprep.subr.bf16.mxu0 0
          %1112 = vmatpush1.bf16.msra.mxu0 0
          %1113 = vmatprep.subr.bf16.mxu0 0
          %1114 = vmatpush1.bf16.msra.mxu0 0
          %1115 = vmatprep.subr.bf16.mxu0 0
          %1116 = vmatpush1.bf16.msra.mxu0 0
          %1117 = vmatprep.subr.bf16.mxu0 0
          %1118 = vmatpush1.bf16.msra.mxu0 0
          %1119 = vmatprep.subr.bf16.mxu0 0
          %1120 = vmatpush1.bf16.msra.mxu0 0
          %1121 = vmatprep.subr.bf16.mxu0 0
          %1122 = vmatpush1.bf16.msra.mxu0 0
          %1123 = vmatprep.subr.bf16.mxu0 0
          %1124 = vmatpush1.bf16.msra.mxu0 0
          %1125 = vmatprep.mubr.bf16.mxu0 0
          %1126 = vmatmul.mubr.bf16.gmra.mrb[0].mxu0 %v1014
          %v1127 = vpop.f32.mrb[0].mxu0
          %v1128 = vadd.f32 %v1043, %v1127
          %v1129 = vpop.f32.mrb[0].mxu0
          %v1130 = vpop.f32.mrb[0].mxu0
          %v1131 = vadd.f32 %v1043, %v1130
          %v1132 = vpop.f32.mrb[0].mxu0
          %1133 = vmatprep.mubr.bf16.mxu0 0
          %1134 = vmatmul.mubr.bf16.gmra.mrb[0].mxu0 %v1015
          %v1135 = vpop.f32.mrb[0].mxu0
          %v1136 = vadd.f32 %v1043, %v1135
          %v1137 = vpop.f32.mrb[0].mxu0
          %v1138 = vpop.f32.mrb[0].mxu0
          %v1139 = vadd.f32 %v1043, %v1138
          %v1140 = vpop.f32.mrb[0].mxu0
          %1141 = vmatprep.mubr.bf16.mxu0 0
          %1142 = vmatmul.mubr.bf16.gmra.mrb[0].mxu0 %v1016
          %v1143 = vpop.f32.mrb[0].mxu0
          %v1144 = vadd.f32 %v1043, %v1143
          %v1145 = vpop.f32.mrb[0].mxu0
          %v1146 = vpop.f32.mrb[0].mxu0
          %v1147 = vadd.f32 %v1043, %v1146
          %v1148 = vpop.f32.mrb[0].mxu0
          %1149 = vmatprep.mubr.bf16.mxu0 0
          %1150 = vmatmul.mubr.bf16.gmra.mrb[0].mxu0 %v1017
          %v1151 = vpop.f32.mrb[0].mxu0
          %v1152 = vadd.f32 %v1043, %v1151
          %v1153 = vpop.f32.mrb[0].mxu0
          %v1154 = vpop.f32.mrb[0].mxu0
          %v1155 = vadd.f32 %v1043, %v1154
          %v1156 = vpop.f32.mrb[0].mxu0
          %1157 = vmatprep.mubr.bf16.mxu0 0
          %1158 = vmatmul.mubr.bf16.gmra.mrb[0].mxu0 %v1018
          %v1159 = vpop.f32.mrb[0].mxu0
          %v1160 = vadd.f32 %v1043, %v1159
          %v1161 = vpop.f32.mrb[0].mxu0
          %v1162 = vpop.f32.mrb[0].mxu0
          %v1163 = vadd.f32 %v1043, %v1162
          %v1164 = vpop.f32.mrb[0].mxu0
          %1165 = vmatprep.mubr.bf16.mxu0 0
          %1166 = vmatmul.mubr.bf16.gmra.mrb[0].mxu0 %v1019
          %v1167 = vpop.f32.mrb[0].mxu0
          %v1168 = vadd.f32 %v1043, %v1167
          %v1169 = vpop.f32.mrb[0].mxu0
          %v1170 = vpop.f32.mrb[0].mxu0
          %v1171 = vadd.f32 %v1043, %v1170
          %v1172 = vpop.f32.mrb[0].mxu0
          %1173 = vmatprep.mubr.bf16.mxu0 0
          %1174 = vmatmul.mubr.bf16.gmra.mrb[0].mxu0 %v1020
          %v1175 = vpop.f32.mrb[0].mxu0
          %v1176 = vadd.f32 %v1043, %v1175
          %v1177 = vpop.f32.mrb[0].mxu0
          %v1178 = vpop.f32.mrb[0].mxu0
          %v1179 = vadd.f32 %v1043, %v1178
          %v1180 = vpop.f32.mrb[0].mxu0
          %1181 = vmatprep.mubr.bf16.mxu0 0
          %1182 = vmatmul.mubr.bf16.gmra.mrb[0].mxu0 %v1021
          %v1183 = vpop.f32.mrb[0].mxu0
          %v1184 = vadd.f32 %v1043, %v1183
          %v1185 = vpop.f32.mrb[0].mxu0
          %v1186 = vpop.f32.mrb[0].mxu0
          %v1187 = vadd.f32 %v1043, %v1186
          %v1188 = vpop.f32.mrb[0].mxu0
          %1189 = vdwg.mxu0
          %v1190 = vpack.c.bf16 %v1131, %v1128
          %v1191 = vpack.c.bf16 %v1139, %v1136
          %v1192 = vpack.c.bf16 %v1147, %v1144
          %v1193 = vpack.c.bf16 %v1155, %v1152
          %v1194 = vpack.c.bf16 %v1163, %v1160
          %v1195 = vpack.c.bf16 %v1171, %v1168
          %v1196 = vpack.c.bf16 %v1179, %v1176
          %v1197 = vpack.c.bf16 %v1187, %v1184
          %vm1198 = vcmask 261120
          %1199 = vst.msk [vmem:[#allocation2] sm:$0xff] %vm1198, %v1190
          %1200 = vst.msk [vmem:[#allocation2 + $0x8] sm:$0xff] %vm1198, %v1191
          %1201 = vst.msk [vmem:[#allocation2 + $0x10] sm:$0xff] %vm1198, %v1192
          %1202 = vst.msk [vmem:[#allocation2 + $0x18] sm:$0xff] %vm1198, %v1193
          %1203 = vst.msk [vmem:[#allocation2 + $0x20] sm:$0xff] %vm1198, %v1194
          %1204 = vst.msk [vmem:[#allocation2 + $0x28] sm:$0xff] %vm1198, %v1195
          %1205 = vst.msk [vmem:[#allocation2 + $0x30] sm:$0xff] %vm1198, %v1196
          %1206 = vst.msk [vmem:[#allocation2 + $0x38] sm:$0xff] %vm1198, %v1197
          %1215 = vrot.lane.b32.xlu0 %v1190, 96
          %v1216 = vpop.permute.xlu0 %1215
          %1217 = vrot.lane.b32.xlu0 %v1191, 96
          %v1218 = vpop.permute.xlu0 %1217
          %1219 = vrot.lane.b32.xlu0 %v1192, 96
          %v1220 = vpop.permute.xlu0 %1219
          %1221 = vrot.lane.b32.xlu0 %v1193, 96
          %v1222 = vpop.permute.xlu0 %1221
          %1223 = vrot.lane.b32.xlu0 %v1194, 96
          %v1224 = vpop.permute.xlu0 %1223
          %1225 = vrot.lane.b32.xlu0 %v1195, 96
          %v1226 = vpop.permute.xlu0 %1225
          %1227 = vrot.lane.b32.xlu0 %v1196, 96
          %v1228 = vpop.permute.xlu0 %1227
          %1229 = vrot.lane.b32.xlu0 %v1197, 96
          %v1230 = vpop.permute.xlu0 %1229
          %s1239 = scalar_lea.vmem [#allocation2], 64
          %1240 = vst.msk [vmem:[%s1239] sm:$0xff] %vm1198, %v1216
          %1241 = vst.msk [vmem:[%s1239 + $0x8] sm:$0xff] %vm1198, %v1218
          %1242 = vst.msk [vmem:[%s1239 + $0x10] sm:$0xff] %vm1198, %v1220
          %1243 = vst.msk [vmem:[%s1239 + $0x18] sm:$0xff] %vm1198, %v1222
          %1244 = vst.msk [vmem:[%s1239 + $0x20] sm:$0xff] %vm1198, %v1224
          %1245 = vst.msk [vmem:[%s1239 + $0x28] sm:$0xff] %vm1198, %v1226
          %1246 = vst.msk [vmem:[%s1239 + $0x30] sm:$0xff] %vm1198, %v1228
          %1247 = vst.msk [vmem:[%s1239 + $0x38] sm:$0xff] %vm1198, %v1230
          %1248 = vrot.lane.b32.xlu0 %v1190, 64
          %v1249 = vpop.permute.xlu0 %1248
          %1250 = vrot.lane.b32.xlu0 %v1191, 64
          %v1251 = vpop.permute.xlu0 %1250
          %1252 = vrot.lane.b32.xlu0 %v1192, 64
          %v1253 = vpop.permute.xlu0 %1252
          %1254 = vrot.lane.b32.xlu0 %v1193, 64
          %v1255 = vpop.permute.xlu0 %1254
          %1256 = vrot.lane.b32.xlu0 %v1194, 64
          %v1257 = vpop.permute.xlu0 %1256
          %1258 = vrot.lane.b32.xlu0 %v1195, 64
          %v1259 = vpop.permute.xlu0 %1258
          %1260 = vrot.lane.b32.xlu0 %v1196, 64
          %v1261 = vpop.permute.xlu0 %1260
          %1262 = vrot.lane.b32.xlu0 %v1197, 64
          %v1263 = vpop.permute.xlu0 %1262
          %s1272 = scalar_lea.vmem [#allocation2], 128
          %1273 = vst.msk [vmem:[%s1272] sm:$0xff] %vm1198, %v1249
          %1274 = vst.msk [vmem:[%s1272 + $0x8] sm:$0xff] %vm1198, %v1251
          %1275 = vst.msk [vmem:[%s1272 + $0x10] sm:$0xff] %vm1198, %v1253
          %1276 = vst.msk [vmem:[%s1272 + $0x18] sm:$0xff] %vm1198, %v1255
          %1277 = vst.msk [vmem:[%s1272 + $0x20] sm:$0xff] %vm1198, %v1257
          %1278 = vst.msk [vmem:[%s1272 + $0x28] sm:$0xff] %vm1198, %v1259
          %1279 = vst.msk [vmem:[%s1272 + $0x30] sm:$0xff] %vm1198, %v1261
          %1280 = vst.msk [vmem:[%s1272 + $0x38] sm:$0xff] %vm1198, %v1263
          %1281 = vrot.lane.b32.xlu0 %v1190, 32
          %v1282 = vpop.permute.xlu0 %1281
          %1283 = vrot.lane.b32.xlu0 %v1191, 32
          %v1284 = vpop.permute.xlu0 %1283
          %1285 = vrot.lane.b32.xlu0 %v1192, 32
          %v1286 = vpop.permute.xlu0 %1285
          %1287 = vrot.lane.b32.xlu0 %v1193, 32
          %v1288 = vpop.permute.xlu0 %1287
          %1289 = vrot.lane.b32.xlu0 %v1194, 32
          %v1290 = vpop.permute.xlu0 %1289
          %1291 = vrot.lane.b32.xlu0 %v1195, 32
          %v1292 = vpop.permute.xlu0 %1291
          %1293 = vrot.lane.b32.xlu0 %v1196, 32
          %v1294 = vpop.permute.xlu0 %1293
          %1295 = vrot.lane.b32.xlu0 %v1197, 32
          %v1296 = vpop.permute.xlu0 %1295
          %s1305 = scalar_lea.vmem [#allocation2], 192
          %1306 = vst.msk [vmem:[%s1305] sm:$0xff] %vm1198, %v1282
          %1307 = vst.msk [vmem:[%s1305 + $0x8] sm:$0xff] %vm1198, %v1284
          %1308 = vst.msk [vmem:[%s1305 + $0x10] sm:$0xff] %vm1198, %v1286
          %1309 = vst.msk [vmem:[%s1305 + $0x18] sm:$0xff] %vm1198, %v1288
          %1310 = vst.msk [vmem:[%s1305 + $0x20] sm:$0xff] %vm1198, %v1290
          %1311 = vst.msk [vmem:[%s1305 + $0x28] sm:$0xff] %vm1198, %v1292
          %1312 = vst.msk [vmem:[%s1305 + $0x30] sm:$0xff] %vm1198, %v1294
          %1313 = vst.msk [vmem:[%s1305 + $0x38] sm:$0xff] %vm1198, %v1296
          %vm1314 = vcmask 7168
          %1315 = vst.msk [vmem:[#allocation5] sm:$0xff] %vm1314, -1e+30
          %1316 = vst.msk [vmem:[#allocation5 + $0x8] sm:$0xff] %vm1314, -1e+30
          %1317 = vst.msk [vmem:[#allocation5 + $0x10] sm:$0xff] %vm1314, -1e+30
          %1318 = vst.msk [vmem:[#allocation5 + $0x18] sm:$0xff] %vm1314, -1e+30
          %1319 = vst.msk [vmem:[#allocation5 + $0x20] sm:$0xff] %vm1314, -1e+30
          %1320 = vst.msk [vmem:[#allocation5 + $0x28] sm:$0xff] %vm1314, -1e+30
          %1321 = vst.msk [vmem:[#allocation5 + $0x30] sm:$0xff] %vm1314, -1e+30
          %1322 = vst.msk [vmem:[#allocation5 + $0x38] sm:$0xff] %vm1314, -1e+30
          %1323 = vst.msk [vmem:[#allocation5 + $0x40] sm:$0xff] %vm1314, -1e+30
          %1324 = vst.msk [vmem:[#allocation5 + $0x48] sm:$0xff] %vm1314, -1e+30
          %1325 = vst.msk [vmem:[#allocation5 + $0x50] sm:$0xff] %vm1314, -1e+30
          %1326 = vst.msk [vmem:[#allocation5 + $0x58] sm:$0xff] %vm1314, -1e+30
          %1327 = vst.msk [vmem:[#allocation5 + $0x60] sm:$0xff] %vm1314, -1e+30
          %1328 = vst.msk [vmem:[#allocation5 + $0x68] sm:$0xff] %vm1314, -1e+30
          %1329 = vst.msk [vmem:[#allocation5 + $0x70] sm:$0xff] %vm1314, -1e+30
          %1330 = vst.msk [vmem:[#allocation5 + $0x78] sm:$0xff] %vm1314, -1e+30
          %1331 = vst.msk [vmem:[#allocation5 + $0x80] sm:$0xff] %vm1314, -1e+30
          %1332 = vst.msk [vmem:[#allocation5 + $0x88] sm:$0xff] %vm1314, -1e+30
          %1333 = vst.msk [vmem:[#allocation5 + $0x90] sm:$0xff] %vm1314, -1e+30
          %1334 = vst.msk [vmem:[#allocation5 + $0x98] sm:$0xff] %vm1314, -1e+30
          %1335 = vst.msk [vmem:[#allocation5 + $0xa0] sm:$0xff] %vm1314, -1e+30
          %1336 = vst.msk [vmem:[#allocation5 + $0xa8] sm:$0xff] %vm1314, -1e+30
          %1337 = vst.msk [vmem:[#allocation5 + $0xb0] sm:$0xff] %vm1314, -1e+30
          %1338 = vst.msk [vmem:[#allocation5 + $0xb8] sm:$0xff] %vm1314, -1e+30
          %1339 = vst.msk [vmem:[#allocation5 + $0xc0] sm:$0xff] %vm1314, -1e+30
          %1340 = vst.msk [vmem:[#allocation5 + $0xc8] sm:$0xff] %vm1314, -1e+30
          %1341 = vst.msk [vmem:[#allocation5 + $0xd0] sm:$0xff] %vm1314, -1e+30
          %1342 = vst.msk [vmem:[#allocation5 + $0xd8] sm:$0xff] %vm1314, -1e+30
          %1343 = vst.msk [vmem:[#allocation5 + $0xe0] sm:$0xff] %vm1314, -1e+30
          %1344 = vst.msk [vmem:[#allocation5 + $0xe8] sm:$0xff] %vm1314, -1e+30
          %1345 = vst.msk [vmem:[#allocation5 + $0xf0] sm:$0xff] %vm1314, -1e+30
          %1346 = vst.msk [vmem:[#allocation5 + $0xf8] sm:$0xff] %vm1314, -1e+30
          %1347 = vst.msk [vmem:[#allocation5 + $0x100] sm:$0xff] %vm1314, -1e+30
          %1348 = vst.msk [vmem:[#allocation5 + $0x108] sm:$0xff] %vm1314, -1e+30
          %1349 = vst.msk [vmem:[#allocation5 + $0x110] sm:$0xff] %vm1314, -1e+30
          %1350 = vst.msk [vmem:[#allocation5 + $0x118] sm:$0xff] %vm1314, -1e+30
          %1351 = vst.msk [vmem:[#allocation5 + $0x120] sm:$0xff] %vm1314, -1e+30
          %1352 = vst.msk [vmem:[#allocation5 + $0x128] sm:$0xff] %vm1314, -1e+30
          %1353 = vst.msk [vmem:[#allocation5 + $0x130] sm:$0xff] %vm1314, -1e+30
          %1354 = vst.msk [vmem:[#allocation5 + $0x138] sm:$0xff] %vm1314, -1e+30
          %1355 = vst.msk [vmem:[#allocation5 + $0x140] sm:$0xff] %vm1314, -1e+30
          %1356 = vst.msk [vmem:[#allocation5 + $0x148] sm:$0xff] %vm1314, -1e+30
          %1357 = vst.msk [vmem:[#allocation5 + $0x150] sm:$0xff] %vm1314, -1e+30
          %1358 = vst.msk [vmem:[#allocation5 + $0x158] sm:$0xff] %vm1314, -1e+30
          %1359 = vst.msk [vmem:[#allocation5 + $0x160] sm:$0xff] %vm1314, -1e+30
          %1360 = vst.msk [vmem:[#allocation5 + $0x168] sm:$0xff] %vm1314, -1e+30
          %1361 = vst.msk [vmem:[#allocation5 + $0x170] sm:$0xff] %vm1314, -1e+30
          %1362 = vst.msk [vmem:[#allocation5 + $0x178] sm:$0xff] %vm1314, -1e+30
          %1363 = vst.msk [vmem:[#allocation5 + $0x180] sm:$0xff] %vm1314, -1e+30
          %1364 = vst.msk [vmem:[#allocation5 + $0x188] sm:$0xff] %vm1314, -1e+30
          %1365 = vst.msk [vmem:[#allocation5 + $0x190] sm:$0xff] %vm1314, -1e+30
          %1366 = vst.msk [vmem:[#allocation5 + $0x198] sm:$0xff] %vm1314, -1e+30
          %1367 = vst.msk [vmem:[#allocation5 + $0x1a0] sm:$0xff] %vm1314, -1e+30
          %1368 = vst.msk [vmem:[#allocation5 + $0x1a8] sm:$0xff] %vm1314, -1e+30
          %1369 = vst.msk [vmem:[#allocation5 + $0x1b0] sm:$0xff] %vm1314, -1e+30
          %1370 = vst.msk [vmem:[#allocation5 + $0x1b8] sm:$0xff] %vm1314, -1e+30
          %1371 = vst.msk [vmem:[#allocation5 + $0x1c0] sm:$0xff] %vm1314, -1e+30
          %1372 = vst.msk [vmem:[#allocation5 + $0x1c8] sm:$0xff] %vm1314, -1e+30
          %1373 = vst.msk [vmem:[#allocation5 + $0x1d0] sm:$0xff] %vm1314, -1e+30
          %1374 = vst.msk [vmem:[#allocation5 + $0x1d8] sm:$0xff] %vm1314, -1e+30
          %1375 = vst.msk [vmem:[#allocation5 + $0x1e0] sm:$0xff] %vm1314, -1e+30
          %1376 = vst.msk [vmem:[#allocation5 + $0x1e8] sm:$0xff] %vm1314, -1e+30
          %1377 = vst.msk [vmem:[#allocation5 + $0x1f0] sm:$0xff] %vm1314, -1e+30
          %1378 = vst.msk [vmem:[#allocation5 + $0x1f8] sm:$0xff] %vm1314, -1e+30
          %1379 = vst.msk [vmem:[#allocation6] sm:$0xff] %vm1314, 0.0
          %1380 = vst.msk [vmem:[#allocation6 + $0x8] sm:$0xff] %vm1314, 0.0
          %1381 = vst.msk [vmem:[#allocation6 + $0x10] sm:$0xff] %vm1314, 0.0
          %1382 = vst.msk [vmem:[#allocation6 + $0x18] sm:$0xff] %vm1314, 0.0
          %1383 = vst.msk [vmem:[#allocation6 + $0x20] sm:$0xff] %vm1314, 0.0
          %1384 = vst.msk [vmem:[#allocation6 + $0x28] sm:$0xff] %vm1314, 0.0
          %1385 = vst.msk [vmem:[#allocation6 + $0x30] sm:$0xff] %vm1314, 0.0
          %1386 = vst.msk [vmem:[#allocation6 + $0x38] sm:$0xff] %vm1314, 0.0
          %1387 = vst.msk [vmem:[#allocation6 + $0x40] sm:$0xff] %vm1314, 0.0
          %1388 = vst.msk [vmem:[#allocation6 + $0x48] sm:$0xff] %vm1314, 0.0
          %1389 = vst.msk [vmem:[#allocation6 + $0x50] sm:$0xff] %vm1314, 0.0
          %1390 = vst.msk [vmem:[#allocation6 + $0x58] sm:$0xff] %vm1314, 0.0
          %1391 = vst.msk [vmem:[#allocation6 + $0x60] sm:$0xff] %vm1314, 0.0
          %1392 = vst.msk [vmem:[#allocation6 + $0x68] sm:$0xff] %vm1314, 0.0
          %1393 = vst.msk [vmem:[#allocation6 + $0x70] sm:$0xff] %vm1314, 0.0
          %1394 = vst.msk [vmem:[#allocation6 + $0x78] sm:$0xff] %vm1314, 0.0
          %1395 = vst.msk [vmem:[#allocation6 + $0x80] sm:$0xff] %vm1314, 0.0
          %1396 = vst.msk [vmem:[#allocation6 + $0x88] sm:$0xff] %vm1314, 0.0
          %1397 = vst.msk [vmem:[#allocation6 + $0x90] sm:$0xff] %vm1314, 0.0
          %1398 = vst.msk [vmem:[#allocation6 + $0x98] sm:$0xff] %vm1314, 0.0
          %1399 = vst.msk [vmem:[#allocation6 + $0xa0] sm:$0xff] %vm1314, 0.0
          %1400 = vst.msk [vmem:[#allocation6 + $0xa8] sm:$0xff] %vm1314, 0.0
          %1401 = vst.msk [vmem:[#allocation6 + $0xb0] sm:$0xff] %vm1314, 0.0
          %1402 = vst.msk [vmem:[#allocation6 + $0xb8] sm:$0xff] %vm1314, 0.0
          %1403 = vst.msk [vmem:[#allocation6 + $0xc0] sm:$0xff] %vm1314, 0.0
          %1404 = vst.msk [vmem:[#allocation6 + $0xc8] sm:$0xff] %vm1314, 0.0
          %1405 = vst.msk [vmem:[#allocation6 + $0xd0] sm:$0xff] %vm1314, 0.0
          %1406 = vst.msk [vmem:[#allocation6 + $0xd8] sm:$0xff] %vm1314, 0.0
          %1407 = vst.msk [vmem:[#allocation6 + $0xe0] sm:$0xff] %vm1314, 0.0
          %1408 = vst.msk [vmem:[#allocation6 + $0xe8] sm:$0xff] %vm1314, 0.0
          %1409 = vst.msk [vmem:[#allocation6 + $0xf0] sm:$0xff] %vm1314, 0.0
          %1410 = vst.msk [vmem:[#allocation6 + $0xf8] sm:$0xff] %vm1314, 0.0
          %1411 = vst.msk [vmem:[#allocation6 + $0x100] sm:$0xff] %vm1314, 0.0
          %1412 = vst.msk [vmem:[#allocation6 + $0x108] sm:$0xff] %vm1314, 0.0
          %1413 = vst.msk [vmem:[#allocation6 + $0x110] sm:$0xff] %vm1314, 0.0
          %1414 = vst.msk [vmem:[#allocation6 + $0x118] sm:$0xff] %vm1314, 0.0
          %1415 = vst.msk [vmem:[#allocation6 + $0x120] sm:$0xff] %vm1314, 0.0
          %1416 = vst.msk [vmem:[#allocation6 + $0x128] sm:$0xff] %vm1314, 0.0
          %1417 = vst.msk [vmem:[#allocation6 + $0x130] sm:$0xff] %vm1314, 0.0
          %1418 = vst.msk [vmem:[#allocation6 + $0x138] sm:$0xff] %vm1314, 0.0
          %1419 = vst.msk [vmem:[#allocation6 + $0x140] sm:$0xff] %vm1314, 0.0
          %1420 = vst.msk [vmem:[#allocation6 + $0x148] sm:$0xff] %vm1314, 0.0
          %1421 = vst.msk [vmem:[#allocation6 + $0x150] sm:$0xff] %vm1314, 0.0
          %1422 = vst.msk [vmem:[#allocation6 + $0x158] sm:$0xff] %vm1314, 0.0
          %1423 = vst.msk [vmem:[#allocation6 + $0x160] sm:$0xff] %vm1314, 0.0
          %1424 = vst.msk [vmem:[#allocation6 + $0x168] sm:$0xff] %vm1314, 0.0
          %1425 = vst.msk [vmem:[#allocation6 + $0x170] sm:$0xff] %vm1314, 0.0
          %1426 = vst.msk [vmem:[#allocation6 + $0x178] sm:$0xff] %vm1314, 0.0
          %1427 = vst.msk [vmem:[#allocation6 + $0x180] sm:$0xff] %vm1314, 0.0
          %1428 = vst.msk [vmem:[#allocation6 + $0x188] sm:$0xff] %vm1314, 0.0
          %1429 = vst.msk [vmem:[#allocation6 + $0x190] sm:$0xff] %vm1314, 0.0
          %1430 = vst.msk [vmem:[#allocation6 + $0x198] sm:$0xff] %vm1314, 0.0
          %1431 = vst.msk [vmem:[#allocation6 + $0x1a0] sm:$0xff] %vm1314, 0.0
          %1432 = vst.msk [vmem:[#allocation6 + $0x1a8] sm:$0xff] %vm1314, 0.0
          %1433 = vst.msk [vmem:[#allocation6 + $0x1b0] sm:$0xff] %vm1314, 0.0
          %1434 = vst.msk [vmem:[#allocation6 + $0x1b8] sm:$0xff] %vm1314, 0.0
          %1435 = vst.msk [vmem:[#allocation6 + $0x1c0] sm:$0xff] %vm1314, 0.0
          %1436 = vst.msk [vmem:[#allocation6 + $0x1c8] sm:$0xff] %vm1314, 0.0
          %1437 = vst.msk [vmem:[#allocation6 + $0x1d0] sm:$0xff] %vm1314, 0.0
          %1438 = vst.msk [vmem:[#allocation6 + $0x1d8] sm:$0xff] %vm1314, 0.0
          %1439 = vst.msk [vmem:[#allocation6 + $0x1e0] sm:$0xff] %vm1314, 0.0
          %1440 = vst.msk [vmem:[#allocation6 + $0x1e8] sm:$0xff] %vm1314, 0.0
          %1441 = vst.msk [vmem:[#allocation6 + $0x1f0] sm:$0xff] %vm1314, 0.0
          %1442 = vst.msk [vmem:[#allocation6 + $0x1f8] sm:$0xff] %vm1314, 0.0
          %1443 = vst.msk [vmem:[#allocation7] sm:$0xff] %vm1198, 0.0
          %1444 = vst.msk [vmem:[#allocation7 + $0x8] sm:$0xff] %vm1198, 0.0
          %1445 = vst.msk [vmem:[#allocation7 + $0x10] sm:$0xff] %vm1198, 0.0
          %1446 = vst.msk [vmem:[#allocation7 + $0x18] sm:$0xff] %vm1198, 0.0
          %1447 = vst.msk [vmem:[#allocation7 + $0x20] sm:$0xff] %vm1198, 0.0
          %1448 = vst.msk [vmem:[#allocation7 + $0x28] sm:$0xff] %vm1198, 0.0
          %1449 = vst.msk [vmem:[#allocation7 + $0x30] sm:$0xff] %vm1198, 0.0
          %1450 = vst.msk [vmem:[#allocation7 + $0x38] sm:$0xff] %vm1198, 0.0
          %1451 = vst.msk [vmem:[#allocation7 + $0x40] sm:$0xff] %vm1198, 0.0
          %1452 = vst.msk [vmem:[#allocation7 + $0x48] sm:$0xff] %vm1198, 0.0
          %1453 = vst.msk [vmem:[#allocation7 + $0x50] sm:$0xff] %vm1198, 0.0
          %1454 = vst.msk [vmem:[#allocation7 + $0x58] sm:$0xff] %vm1198, 0.0
          %1455 = vst.msk [vmem:[#allocation7 + $0x60] sm:$0xff] %vm1198, 0.0
          %1456 = vst.msk [vmem:[#allocation7 + $0x68] sm:$0xff] %vm1198, 0.0
          %1457 = vst.msk [vmem:[#allocation7 + $0x70] sm:$0xff] %vm1198, 0.0
          %1458 = vst.msk [vmem:[#allocation7 + $0x78] sm:$0xff] %vm1198, 0.0
          %1459 = vst.msk [vmem:[#allocation7 + $0x80] sm:$0xff] %vm1198, 0.0
          %1460 = vst.msk [vmem:[#allocation7 + $0x88] sm:$0xff] %vm1198, 0.0
          %1461 = vst.msk [vmem:[#allocation7 + $0x90] sm:$0xff] %vm1198, 0.0
          %1462 = vst.msk [vmem:[#allocation7 + $0x98] sm:$0xff] %vm1198, 0.0
          %1463 = vst.msk [vmem:[#allocation7 + $0xa0] sm:$0xff] %vm1198, 0.0
          %1464 = vst.msk [vmem:[#allocation7 + $0xa8] sm:$0xff] %vm1198, 0.0
          %1465 = vst.msk [vmem:[#allocation7 + $0xb0] sm:$0xff] %vm1198, 0.0
          %1466 = vst.msk [vmem:[#allocation7 + $0xb8] sm:$0xff] %vm1198, 0.0
          %1467 = vst.msk [vmem:[#allocation7 + $0xc0] sm:$0xff] %vm1198, 0.0
          %1468 = vst.msk [vmem:[#allocation7 + $0xc8] sm:$0xff] %vm1198, 0.0
          %1469 = vst.msk [vmem:[#allocation7 + $0xd0] sm:$0xff] %vm1198, 0.0
          %1470 = vst.msk [vmem:[#allocation7 + $0xd8] sm:$0xff] %vm1198, 0.0
          %1471 = vst.msk [vmem:[#allocation7 + $0xe0] sm:$0xff] %vm1198, 0.0
          %1472 = vst.msk [vmem:[#allocation7 + $0xe8] sm:$0xff] %vm1198, 0.0
          %1473 = vst.msk [vmem:[#allocation7 + $0xf0] sm:$0xff] %vm1198, 0.0
          %1474 = vst.msk [vmem:[#allocation7 + $0xf8] sm:$0xff] %vm1198, 0.0
          %1475 = vst.msk [vmem:[#allocation7 + $0x100] sm:$0xff] %vm1198, 0.0
          %1476 = vst.msk [vmem:[#allocation7 + $0x108] sm:$0xff] %vm1198, 0.0
          %1477 = vst.msk [vmem:[#allocation7 + $0x110] sm:$0xff] %vm1198, 0.0
          %1478 = vst.msk [vmem:[#allocation7 + $0x118] sm:$0xff] %vm1198, 0.0
          %1479 = vst.msk [vmem:[#allocation7 + $0x120] sm:$0xff] %vm1198, 0.0
          %1480 = vst.msk [vmem:[#allocation7 + $0x128] sm:$0xff] %vm1198, 0.0
          %1481 = vst.msk [vmem:[#allocation7 + $0x130] sm:$0xff] %vm1198, 0.0
          %1482 = vst.msk [vmem:[#allocation7 + $0x138] sm:$0xff] %vm1198, 0.0
          %1483 = vst.msk [vmem:[#allocation7 + $0x140] sm:$0xff] %vm1198, 0.0
          %1484 = vst.msk [vmem:[#allocation7 + $0x148] sm:$0xff] %vm1198, 0.0
          %1485 = vst.msk [vmem:[#allocation7 + $0x150] sm:$0xff] %vm1198, 0.0
          %1486 = vst.msk [vmem:[#allocation7 + $0x158] sm:$0xff] %vm1198, 0.0
          %1487 = vst.msk [vmem:[#allocation7 + $0x160] sm:$0xff] %vm1198, 0.0
          %1488 = vst.msk [vmem:[#allocation7 + $0x168] sm:$0xff] %vm1198, 0.0
          %1489 = vst.msk [vmem:[#allocation7 + $0x170] sm:$0xff] %vm1198, 0.0
          %1490 = vst.msk [vmem:[#allocation7 + $0x178] sm:$0xff] %vm1198, 0.0
          %1491 = vst.msk [vmem:[#allocation7 + $0x180] sm:$0xff] %vm1198, 0.0
          %1492 = vst.msk [vmem:[#allocation7 + $0x188] sm:$0xff] %vm1198, 0.0
          %1493 = vst.msk [vmem:[#allocation7 + $0x190] sm:$0xff] %vm1198, 0.0
          %1494 = vst.msk [vmem:[#allocation7 + $0x198] sm:$0xff] %vm1198, 0.0
          %1495 = vst.msk [vmem:[#allocation7 + $0x1a0] sm:$0xff] %vm1198, 0.0
          %1496 = vst.msk [vmem:[#allocation7 + $0x1a8] sm:$0xff] %vm1198, 0.0
          %1497 = vst.msk [vmem:[#allocation7 + $0x1b0] sm:$0xff] %vm1198, 0.0
          %1498 = vst.msk [vmem:[#allocation7 + $0x1b8] sm:$0xff] %vm1198, 0.0
          %1499 = vst.msk [vmem:[#allocation7 + $0x1c0] sm:$0xff] %vm1198, 0.0
          %1500 = vst.msk [vmem:[#allocation7 + $0x1c8] sm:$0xff] %vm1198, 0.0
          %1501 = vst.msk [vmem:[#allocation7 + $0x1d0] sm:$0xff] %vm1198, 0.0
          %1502 = vst.msk [vmem:[#allocation7 + $0x1d8] sm:$0xff] %vm1198, 0.0
          %1503 = vst.msk [vmem:[#allocation7 + $0x1e0] sm:$0xff] %vm1198, 0.0
          %1504 = vst.msk [vmem:[#allocation7 + $0x1e8] sm:$0xff] %vm1198, 0.0
          %1505 = vst.msk [vmem:[#allocation7 + $0x1f0] sm:$0xff] %vm1198, 0.0
          %1506 = vst.msk [vmem:[#allocation7 + $0x1f8] sm:$0xff] %vm1198, 0.0
        $region124: #{tpu_custom_call.1} parent=87 // pred_fallthru
          _
        %s1507 = smul.u32 %s47, 128
        %s1508 = sadd.s32 %s46, 1
        %s1509 = smul.u32 %s1508, 128
        %p1510 = scmp.lt.s32.totalorder %s1507, %s1509
        // Predicated region
        $region125: #{tpu_custom_call.1} parent=87 // pred_check
          %p1511 = pneg %p1510
        $region126: #{tpu_custom_call.1} parent=87 // pred_check_branch
          %1513 = sbr.rel (%p1511) target = $region128
        $region127: #{tpu_custom_call.1} parent=87 // pred_region
          %v1514 = vld [vmem:[%s660] sm:$0xf]
          %v1515 = vld [vmem:[%s660 + $0x4] sm:$0xf]
          %v1516 = vld [vmem:[%s660 + $0x8] sm:$0xf]
          %v1517 = vld [vmem:[%s660 + $0xc] sm:$0xf]
          %v1518 = vld [vmem:[%s660 + $0x10] sm:$0xf]
          %v1519 = vld [vmem:[%s660 + $0x14] sm:$0xf]
          %v1520 = vld [vmem:[%s660 + $0x18] sm:$0xf]
          %v1521 = vld [vmem:[%s660 + $0x1c] sm:$0xf]
          %v1522 = vld [vmem:[%s660 + $0x20] sm:$0xf]
          %v1523 = vld [vmem:[%s660 + $0x24] sm:$0xf]
          %v1524 = vld [vmem:[%s660 + $0x28] sm:$0xf]
          %v1525 = vld [vmem:[%s660 + $0x2c] sm:$0xf]
          %v1526 = vld [vmem:[%s660 + $0x30] sm:$0xf]
          %v1527 = vld [vmem:[%s660 + $0x34] sm:$0xf]
          %v1528 = vld [vmem:[%s660 + $0x38] sm:$0xf]
          %v1529 = vld [vmem:[%s660 + $0x3c] sm:$0xf]
          %v1530 = vunpack.c.l.bf16 %v1514
          %v1531 = vunpack.c.l.bf16 %v1515
          %v1532 = vunpack.c.l.bf16 %v1516
          %v1533 = vunpack.c.l.bf16 %v1517
          %v1534 = vunpack.c.l.bf16 %v1518
          %v1535 = vunpack.c.l.bf16 %v1519
          %v1536 = vunpack.c.l.bf16 %v1520
          %v1537 = vunpack.c.l.bf16 %v1521
          %v1538 = vunpack.c.l.bf16 %v1522
          %v1539 = vunpack.c.l.bf16 %v1523
          %v1540 = vunpack.c.l.bf16 %v1524
          %v1541 = vunpack.c.l.bf16 %v1525
          %v1542 = vunpack.c.l.bf16 %v1526
          %v1543 = vunpack.c.l.bf16 %v1527
          %v1544 = vunpack.c.l.bf16 %v1528
          %v1545 = vunpack.c.l.bf16 %v1529
          %v1546 = vld [vmem:[%s3] sm:$0x1]
          %v1547 = vld [vmem:[%s4] sm:$0x1]
          %1548 = vadd.xlane.f32.xlu0 %v1530
          %v1549 = vpop.xlane.xlu0 %1548
          %1550 = vadd.xlane.f32.xlu0 %v1531
          %v1551 = vpop.xlane.xlu0 %1550
          %1552 = vadd.xlane.f32.xlu0 %v1532
          %v1553 = vpop.xlane.xlu0 %1552
          %1554 = vadd.xlane.f32.xlu0 %v1533
          %v1555 = vpop.xlane.xlu0 %1554
          %1556 = vadd.xlane.f32.xlu0 %v1534
          %v1557 = vpop.xlane.xlu0 %1556
          %1558 = vadd.xlane.f32.xlu0 %v1535
          %v1559 = vpop.xlane.xlu0 %1558
          %1560 = vadd.xlane.f32.xlu0 %v1536
          %v1561 = vpop.xlane.xlu0 %1560
          %1562 = vadd.xlane.f32.xlu0 %v1537
          %v1563 = vpop.xlane.xlu0 %1562
          %1564 = vadd.xlane.f32.xlu0 %v1538
          %v1565 = vpop.xlane.xlu0 %1564
          %1566 = vadd.xlane.f32.xlu0 %v1539
          %v1567 = vpop.xlane.xlu0 %1566
          %1568 = vadd.xlane.f32.xlu0 %v1540
          %v1569 = vpop.xlane.xlu0 %1568
          %1570 = vadd.xlane.f32.xlu0 %v1541
          %v1571 = vpop.xlane.xlu0 %1570
          %1572 = vadd.xlane.f32.xlu0 %v1542
          %v1573 = vpop.xlane.xlu0 %1572
          %1574 = vadd.xlane.f32.xlu0 %v1543
          %v1575 = vpop.xlane.xlu0 %1574
          %1576 = vadd.xlane.f32.xlu0 %v1544
          %v1577 = vpop.xlane.xlu0 %1576
          %1578 = vadd.xlane.f32.xlu0 %v1545
          %v1579 = vpop.xlane.xlu0 %1578
          %v1580 = vrcp.pop 128.0
          %v1581 = vmul.f32 %v1549, %v1580
          %v1582 = vmul.f32 %v1551, %v1580
          %v1583 = vmul.f32 %v1553, %v1580
          %v1584 = vmul.f32 %v1555, %v1580
          %v1585 = vmul.f32 %v1557, %v1580
          %v1586 = vmul.f32 %v1559, %v1580
          %v1587 = vmul.f32 %v1561, %v1580
          %v1588 = vmul.f32 %v1563, %v1580
          %v1589 = vmul.f32 %v1565, %v1580
          %v1590 = vmul.f32 %v1567, %v1580
          %v1591 = vmul.f32 %v1569, %v1580
          %v1592 = vmul.f32 %v1571, %v1580
          %v1593 = vmul.f32 %v1573, %v1580
          %v1594 = vmul.f32 %v1575, %v1580
          %v1595 = vmul.f32 %v1577, %v1580
          %v1596 = vmul.f32 %v1579, %v1580
          %v1597 = vsub.f32 %v1530, %v1581
          %v1598 = vsub.f32 %v1531, %v1582
          %v1599 = vsub.f32 %v1532, %v1583
          %v1600 = vsub.f32 %v1533, %v1584
          %v1601 = vsub.f32 %v1534, %v1585
          %v1602 = vsub.f32 %v1535, %v1586
          %v1603 = vsub.f32 %v1536, %v1587
          %v1604 = vsub.f32 %v1537, %v1588
          %v1605 = vsub.f32 %v1538, %v1589
          %v1606 = vsub.f32 %v1539, %v1590
          %v1607 = vsub.f32 %v1540, %v1591
          %v1608 = vsub.f32 %v1541, %v1592
          %v1609 = vsub.f32 %v1542, %v1593
          %v1610 = vsub.f32 %v1543, %v1594
          %v1611 = vsub.f32 %v1544, %v1595
          %v1612 = vsub.f32 %v1545, %v1596
          %v1613 = vmul.f32 %v1597, %v1597
          %v1614 = vmul.f32 %v1598, %v1598
          %v1615 = vmul.f32 %v1599, %v1599
          %v1616 = vmul.f32 %v1600, %v1600
          %v1617 = vmul.f32 %v1601, %v1601
          %v1618 = vmul.f32 %v1602, %v1602
          %v1619 = vmul.f32 %v1603, %v1603
          %v1620 = vmul.f32 %v1604, %v1604
          %v1621 = vmul.f32 %v1605, %v1605
          %v1622 = vmul.f32 %v1606, %v1606
          %v1623 = vmul.f32 %v1607, %v1607
          %v1624 = vmul.f32 %v1608, %v1608
          %v1625 = vmul.f32 %v1609, %v1609
          %v1626 = vmul.f32 %v1610, %v1610
          %v1627 = vmul.f32 %v1611, %v1611
          %v1628 = vmul.f32 %v1612, %v1612
          %1629 = vadd.xlane.f32.xlu0 %v1613
          %v1630 = vpop.xlane.xlu0 %1629
          %1631 = vadd.xlane.f32.xlu0 %v1614
          %v1632 = vpop.xlane.xlu0 %1631
          %1633 = vadd.xlane.f32.xlu0 %v1615
          %v1634 = vpop.xlane.xlu0 %1633
          %1635 = vadd.xlane.f32.xlu0 %v1616
          %v1636 = vpop.xlane.xlu0 %1635
          %1637 = vadd.xlane.f32.xlu0 %v1617
          %v1638 = vpop.xlane.xlu0 %1637
          %1639 = vadd.xlane.f32.xlu0 %v1618
          %v1640 = vpop.xlane.xlu0 %1639
          %1641 = vadd.xlane.f32.xlu0 %v1619
          %v1642 = vpop.xlane.xlu0 %1641
          %1643 = vadd.xlane.f32.xlu0 %v1620
          %v1644 = vpop.xlane.xlu0 %1643
          %1645 = vadd.xlane.f32.xlu0 %v1621
          %v1646 = vpop.xlane.xlu0 %1645
          %1647 = vadd.xlane.f32.xlu0 %v1622
          %v1648 = vpop.xlane.xlu0 %1647
          %1649 = vadd.xlane.f32.xlu0 %v1623
          %v1650 = vpop.xlane.xlu0 %1649
          %1651 = vadd.xlane.f32.xlu0 %v1624
          %v1652 = vpop.xlane.xlu0 %1651
          %1653 = vadd.xlane.f32.xlu0 %v1625
          %v1654 = vpop.xlane.xlu0 %1653
          %1655 = vadd.xlane.f32.xlu0 %v1626
          %v1656 = vpop.xlane.xlu0 %1655
          %1657 = vadd.xlane.f32.xlu0 %v1627
          %v1658 = vpop.xlane.xlu0 %1657
          %1659 = vadd.xlane.f32.xlu0 %v1628
          %v1660 = vpop.xlane.xlu0 %1659
          %v1661 = vmul.f32 %v1630, %v1580
          %v1662 = vmul.f32 %v1632, %v1580
          %v1663 = vmul.f32 %v1634, %v1580
          %v1664 = vmul.f32 %v1636, %v1580
          %v1665 = vmul.f32 %v1638, %v1580
          %v1666 = vmul.f32 %v1640, %v1580
          %v1667 = vmul.f32 %v1642, %v1580
          %v1668 = vmul.f32 %v1644, %v1580
          %v1669 = vmul.f32 %v1646, %v1580
          %v1670 = vmul.f32 %v1648, %v1580
          %v1671 = vmul.f32 %v1650, %v1580
          %v1672 = vmul.f32 %v1652, %v1580
          %v1673 = vmul.f32 %v1654, %v1580
          %v1674 = vmul.f32 %v1656, %v1580
          %v1675 = vmul.f32 %v1658, %v1580
          %v1676 = vmul.f32 %v1660, %v1580
          %v1677 = vadd.f32 %v1661, 1e-08
          %v1678 = vadd.f32 %v1662, 1e-08
          %v1679 = vadd.f32 %v1663, 1e-08
          %v1680 = vadd.f32 %v1664, 1e-08
          %v1681 = vadd.f32 %v1665, 1e-08
          %v1682 = vadd.f32 %v1666, 1e-08
          %v1683 = vadd.f32 %v1667, 1e-08
          %v1684 = vadd.f32 %v1668, 1e-08
          %v1685 = vadd.f32 %v1669, 1e-08
          %v1686 = vadd.f32 %v1670, 1e-08
          %v1687 = vadd.f32 %v1671, 1e-08
          %v1688 = vadd.f32 %v1672, 1e-08
          %v1689 = vadd.f32 %v1673, 1e-08
          %v1690 = vadd.f32 %v1674, 1e-08
          %v1691 = vadd.f32 %v1675, 1e-08
          %v1692 = vadd.f32 %v1676, 1e-08
          %v1693 = vrsqrt.pop %v1677
          %v1694 = vrsqrt.pop %v1678
          %v1695 = vrsqrt.pop %v1679
          %v1696 = vrsqrt.pop %v1680
          %v1697 = vrsqrt.pop %v1681
          %v1698 = vrsqrt.pop %v1682
          %v1699 = vrsqrt.pop %v1683
          %v1700 = vrsqrt.pop %v1684
          %v1701 = vrsqrt.pop %v1685
          %v1702 = vrsqrt.pop %v1686
          %v1703 = vrsqrt.pop %v1687
          %v1704 = vrsqrt.pop %v1688
          %v1705 = vrsqrt.pop %v1689
          %v1706 = vrsqrt.pop %v1690
          %v1707 = vrsqrt.pop %v1691
          %v1708 = vrsqrt.pop %v1692
          %v1709 = vmul.f32 %v1597, %v1693
          %v1710 = vmul.f32 %v1598, %v1694
          %v1711 = vmul.f32 %v1599, %v1695
          %v1712 = vmul.f32 %v1600, %v1696
          %v1713 = vmul.f32 %v1601, %v1697
          %v1714 = vmul.f32 %v1602, %v1698
          %v1715 = vmul.f32 %v1603, %v1699
          %v1716 = vmul.f32 %v1604, %v1700
          %v1717 = vmul.f32 %v1605, %v1701
          %v1718 = vmul.f32 %v1606, %v1702
          %v1719 = vmul.f32 %v1607, %v1703
          %v1720 = vmul.f32 %v1608, %v1704
          %v1721 = vmul.f32 %v1609, %v1705
          %v1722 = vmul.f32 %v1610, %v1706
          %v1723 = vmul.f32 %v1611, %v1707
          %v1724 = vmul.f32 %v1612, %v1708
          %v1726 = vlaneseq
          %v1727 = vshrl.u32 %v1726, 7
          %v1728 = vsub.s32 0, %v1727
          %v1729 = vrot.slane %v1546, %v1728
          %v1731 = vmul.f32 %v1709, %v1729
          %v1732 = vmul.f32 %v1710, %v1729
          %v1733 = vmul.f32 %v1711, %v1729
          %v1734 = vmul.f32 %v1712, %v1729
          %v1735 = vmul.f32 %v1713, %v1729
          %v1736 = vmul.f32 %v1714, %v1729
          %v1737 = vmul.f32 %v1715, %v1729
          %v1738 = vmul.f32 %v1716, %v1729
          %v1739 = vmul.f32 %v1717, %v1729
          %v1740 = vmul.f32 %v1718, %v1729
          %v1741 = vmul.f32 %v1719, %v1729
          %v1742 = vmul.f32 %v1720, %v1729
          %v1743 = vmul.f32 %v1721, %v1729
          %v1744 = vmul.f32 %v1722, %v1729
          %v1745 = vmul.f32 %v1723, %v1729
          %v1746 = vmul.f32 %v1724, %v1729
          %v1748 = vlaneseq
          %v1749 = vshrl.u32 %v1748, 7
          %v1750 = vsub.s32 0, %v1749
          %v1751 = vrot.slane %v1547, %v1750
          %v1753 = vadd.f32 %v1731, %v1751
          %v1754 = vadd.f32 %v1732, %v1751
          %v1755 = vadd.f32 %v1733, %v1751
          %v1756 = vadd.f32 %v1734, %v1751
          %v1757 = vadd.f32 %v1735, %v1751
          %v1758 = vadd.f32 %v1736, %v1751
          %v1759 = vadd.f32 %v1737, %v1751
          %v1760 = vadd.f32 %v1738, %v1751
          %v1761 = vadd.f32 %v1739, %v1751
          %v1762 = vadd.f32 %v1740, %v1751
          %v1763 = vadd.f32 %v1741, %v1751
          %v1764 = vadd.f32 %v1742, %v1751
          %v1765 = vadd.f32 %v1743, %v1751
          %v1766 = vadd.f32 %v1744, %v1751
          %v1767 = vadd.f32 %v1745, %v1751
          %v1768 = vadd.f32 %v1746, %v1751
          %v1769 = vpack.c.bf16 %v1754, %v1753
          %v1770 = vpack.c.bf16 %v1756, %v1755
          %v1771 = vpack.c.bf16 %v1758, %v1757
          %v1772 = vpack.c.bf16 %v1760, %v1759
          %v1773 = vpack.c.bf16 %v1762, %v1761
          %v1774 = vpack.c.bf16 %v1764, %v1763
          %v1775 = vpack.c.bf16 %v1766, %v1765
          %v1776 = vpack.c.bf16 %v1768, %v1767
          %v1777 = vld [vmem:[#allocation17] sm:$0xff]
          %v1778 = vld [vmem:[#allocation17 + $0x8] sm:$0xff]
          %v1779 = vld [vmem:[#allocation17 + $0x10] sm:$0xff]
          %v1780 = vld [vmem:[#allocation17 + $0x18] sm:$0xff]
          %v1781 = vld [vmem:[#allocation17 + $0x20] sm:$0xff]
          %v1782 = vld [vmem:[#allocation17 + $0x28] sm:$0xff]
          %v1783 = vld [vmem:[#allocation17 + $0x30] sm:$0xff]
          %v1784 = vld [vmem:[#allocation17 + $0x38] sm:$0xff]
          %v1785 = vld [vmem:[#allocation17 + $0x40] sm:$0xff]
          %v1786 = vld [vmem:[#allocation17 + $0x48] sm:$0xff]
          %v1787 = vld [vmem:[#allocation17 + $0x50] sm:$0xff]
          %v1788 = vld [vmem:[#allocation17 + $0x58] sm:$0xff]
          %v1789 = vld [vmem:[#allocation17 + $0x60] sm:$0xff]
          %v1790 = vld [vmem:[#allocation17 + $0x68] sm:$0xff]
          %v1791 = vld [vmem:[#allocation17 + $0x70] sm:$0xff]
          %v1792 = vld [vmem:[#allocation17 + $0x78] sm:$0xff]
          %v1793 = vld [vmem:[%s8] sm:$0x3]
          %v1795 = vlaneseq
          %v1796 = vshrl.u32 %v1795, 7
          %v1797 = vsub.s32 0, %v1796
          %v1798 = vrot.slane %v1793, %v1797
          %v1799 = vlaneseq
          %v1800 = vshrl.u32 %v1799, 7
          %v1801 = vsub.s32 1, %v1800
          %v1802 = vrot.slane %v1793, %v1801
          %v1821 = vunpack.c.l.b16 %v1777
          %v1822 = vunpack.c.h.b16 %v1777
          %v1823 = vunpack.c.l.b16 %v1778
          %v1824 = vunpack.c.h.b16 %v1778
          %v1825 = vunpack.c.l.b16 %v1779
          %v1826 = vunpack.c.h.b16 %v1779
          %v1827 = vunpack.c.l.b16 %v1780
          %v1828 = vunpack.c.h.b16 %v1780
          %v1829 = vunpack.c.l.b16 %v1781
          %v1830 = vunpack.c.h.b16 %v1781
          %v1831 = vunpack.c.l.b16 %v1782
          %v1832 = vunpack.c.h.b16 %v1782
          %v1833 = vunpack.c.l.b16 %v1783
          %v1834 = vunpack.c.h.b16 %v1783
          %v1835 = vunpack.c.l.b16 %v1784
          %v1836 = vunpack.c.h.b16 %v1784
          %v1837 = vunpack.c.l.b16 %v1785
          %v1838 = vunpack.c.h.b16 %v1785
          %v1839 = vunpack.c.l.b16 %v1786
          %v1840 = vunpack.c.h.b16 %v1786
          %v1841 = vunpack.c.l.b16 %v1787
          %v1842 = vunpack.c.h.b16 %v1787
          %v1843 = vunpack.c.l.b16 %v1788
          %v1844 = vunpack.c.h.b16 %v1788
          %v1845 = vunpack.c.l.b16 %v1789
          %v1846 = vunpack.c.h.b16 %v1789
          %v1847 = vunpack.c.l.b16 %v1790
          %v1848 = vunpack.c.h.b16 %v1790
          %v1849 = vunpack.c.l.b16 %v1791
          %v1850 = vunpack.c.h.b16 %v1791
          %v1851 = vunpack.c.l.b16 %v1792
          %v1852 = vunpack.c.h.b16 %v1792
          %v1853 = vpack.c.b16 %v1823, %v1821
          %v1854 = vpack.c.b16 %v1824, %v1822
          %v1855 = vpack.c.b16 %v1827, %v1825
          %v1856 = vpack.c.b16 %v1828, %v1826
          %v1857 = vpack.c.b16 %v1831, %v1829
          %v1858 = vpack.c.b16 %v1832, %v1830
          %v1859 = vpack.c.b16 %v1835, %v1833
          %v1860 = vpack.c.b16 %v1836, %v1834
          %v1861 = vpack.c.b16 %v1839, %v1837
          %v1862 = vpack.c.b16 %v1840, %v1838
          %v1863 = vpack.c.b16 %v1843, %v1841
          %v1864 = vpack.c.b16 %v1844, %v1842
          %v1865 = vpack.c.b16 %v1847, %v1845
          %v1866 = vpack.c.b16 %v1848, %v1846
          %v1867 = vpack.c.b16 %v1851, %v1849
          %v1868 = vpack.c.b16 %v1852, %v1850
          %1885 = vmatprep.subr.bf16.mxu0 %v1854
          %1886 = vmatpush1.bf16.msra.mxu0 %v1853
          %1887 = vmatprep.subr.bf16.mxu0 %v1856
          %1888 = vmatpush1.bf16.msra.mxu0 %v1855
          %1889 = vmatprep.subr.bf16.mxu0 %v1858
          %1890 = vmatpush1.bf16.msra.mxu0 %v1857
          %1891 = vmatprep.subr.bf16.mxu0 %v1860
          %1892 = vmatpush1.bf16.msra.mxu0 %v1859
          %1893 = vmatprep.subr.bf16.mxu0 %v1862
          %1894 = vmatpush1.bf16.msra.mxu0 %v1861
          %1895 = vmatprep.subr.bf16.mxu0 %v1864
          %1896 = vmatpush1.bf16.msra.mxu0 %v1863
          %1897 = vmatprep.subr.bf16.mxu0 %v1866
          %1898 = vmatpush1.bf16.msra.mxu0 %v1865
          %1899 = vmatprep.subr.bf16.mxu0 %v1868
          %1900 = vmatpush1.bf16.msra.mxu0 %v1867
          %1901 = vmatprep.subr.bf16.mxu0 0
          %1902 = vmatpush1.bf16.msra.mxu0 0
          %1903 = vmatprep.subr.bf16.mxu0 0
          %1904 = vmatpush1.bf16.msra.mxu0 0
          %1905 = vmatprep.subr.bf16.mxu0 0
          %1906 = vmatpush1.bf16.msra.mxu0 0
          %1907 = vmatprep.subr.bf16.mxu0 0
          %1908 = vmatpush1.bf16.msra.mxu0 0
          %1909 = vmatprep.subr.bf16.mxu0 0
          %1910 = vmatpush1.bf16.msra.mxu0 0
          %1911 = vmatprep.subr.bf16.mxu0 0
          %1912 = vmatpush1.bf16.msra.mxu0 0
          %1913 = vmatprep.subr.bf16.mxu0 0
          %1914 = vmatpush1.bf16.msra.mxu0 0
          %1915 = vmatprep.subr.bf16.mxu0 0
          %1916 = vmatpush1.bf16.msra.mxu0 0
          %1917 = vmatprep.mubr.bf16.mxu0 0
          %1918 = vmatmul.mubr.bf16.gmra.mrb[0].mxu0 %v1769
          %v1919 = vpop.f32.mrb[0].mxu0
          %v1920 = vadd.f32 %v1798, %v1919
          %v1921 = vpop.f32.mrb[0].mxu0
          %v1922 = vadd.f32 %v1802, %v1921
          %v1923 = vpop.f32.mrb[0].mxu0
          %v1924 = vadd.f32 %v1798, %v1923
          %v1925 = vpop.f32.mrb[0].mxu0
          %v1926 = vadd.f32 %v1802, %v1925
          %1927 = vmatprep.mubr.bf16.mxu0 0
          %1928 = vmatmul.mubr.bf16.gmra.mrb[0].mxu0 %v1770
          %v1929 = vpop.f32.mrb[0].mxu0
          %v1930 = vadd.f32 %v1798, %v1929
          %v1931 = vpop.f32.mrb[0].mxu0
          %v1932 = vadd.f32 %v1802, %v1931
          %v1933 = vpop.f32.mrb[0].mxu0
          %v1934 = vadd.f32 %v1798, %v1933
          %v1935 = vpop.f32.mrb[0].mxu0
          %v1936 = vadd.f32 %v1802, %v1935
          %1937 = vmatprep.mubr.bf16.mxu0 0
          %1938 = vmatmul.mubr.bf16.gmra.mrb[0].mxu0 %v1771
          %v1939 = vpop.f32.mrb[0].mxu0
          %v1940 = vadd.f32 %v1798, %v1939
          %v1941 = vpop.f32.mrb[0].mxu0
          %v1942 = vadd.f32 %v1802, %v1941
          %v1943 = vpop.f32.mrb[0].mxu0
          %v1944 = vadd.f32 %v1798, %v1943
          %v1945 = vpop.f32.mrb[0].mxu0
          %v1946 = vadd.f32 %v1802, %v1945
          %1947 = vmatprep.mubr.bf16.mxu0 0
          %1948 = vmatmul.mubr.bf16.gmra.mrb[0].mxu0 %v1772
          %v1949 = vpop.f32.mrb[0].mxu0
          %v1950 = vadd.f32 %v1798, %v1949
          %v1951 = vpop.f32.mrb[0].mxu0
          %v1952 = vadd.f32 %v1802, %v1951
          %v1953 = vpop.f32.mrb[0].mxu0
          %v1954 = vadd.f32 %v1798, %v1953
          %v1955 = vpop.f32.mrb[0].mxu0
          %v1956 = vadd.f32 %v1802, %v1955
          %1957 = vmatprep.mubr.bf16.mxu0 0
          %1958 = vmatmul.mubr.bf16.gmra.mrb[0].mxu0 %v1773
          %v1959 = vpop.f32.mrb[0].mxu0
          %v1960 = vadd.f32 %v1798, %v1959
          %v1961 = vpop.f32.mrb[0].mxu0
          %v1962 = vadd.f32 %v1802, %v1961
          %v1963 = vpop.f32.mrb[0].mxu0
          %v1964 = vadd.f32 %v1798, %v1963
          %v1965 = vpop.f32.mrb[0].mxu0
          %v1966 = vadd.f32 %v1802, %v1965
          %1967 = vmatprep.mubr.bf16.mxu0 0
          %1968 = vmatmul.mubr.bf16.gmra.mrb[0].mxu0 %v1774
          %v1969 = vpop.f32.mrb[0].mxu0
          %v1970 = vadd.f32 %v1798, %v1969
          %v1971 = vpop.f32.mrb[0].mxu0
          %v1972 = vadd.f32 %v1802, %v1971
          %v1973 = vpop.f32.mrb[0].mxu0
          %v1974 = vadd.f32 %v1798, %v1973
          %v1975 = vpop.f32.mrb[0].mxu0
          %v1976 = vadd.f32 %v1802, %v1975
          %1977 = vmatprep.mubr.bf16.mxu0 0
          %1978 = vmatmul.mubr.bf16.gmra.mrb[0].mxu0 %v1775
          %v1979 = vpop.f32.mrb[0].mxu0
          %v1980 = vadd.f32 %v1798, %v1979
          %v1981 = vpop.f32.mrb[0].mxu0
          %v1982 = vadd.f32 %v1802, %v1981
          %v1983 = vpop.f32.mrb[0].mxu0
          %v1984 = vadd.f32 %v1798, %v1983
          %v1985 = vpop.f32.mrb[0].mxu0
          %v1986 = vadd.f32 %v1802, %v1985
          %1987 = vmatprep.mubr.bf16.mxu0 0
          %1988 = vmatmul.mubr.bf16.gmra.mrb[0].mxu0 %v1776
          %v1989 = vpop.f32.mrb[0].mxu0
          %v1990 = vadd.f32 %v1798, %v1989
          %v1991 = vpop.f32.mrb[0].mxu0
          %v1992 = vadd.f32 %v1802, %v1991
          %v1993 = vpop.f32.mrb[0].mxu0
          %v1994 = vadd.f32 %v1798, %v1993
          %v1995 = vpop.f32.mrb[0].mxu0
          %v1996 = vadd.f32 %v1802, %v1995
          %1997 = vdwg.mxu0
          %v1998 = vpack.c.bf16 %v1924, %v1920
          %v1999 = vpack.c.bf16 %v1934, %v1930
          %v2000 = vpack.c.bf16 %v1944, %v1940
          %v2001 = vpack.c.bf16 %v1954, %v1950
          %v2002 = vpack.c.bf16 %v1964, %v1960
          %v2003 = vpack.c.bf16 %v1974, %v1970
          %v2004 = vpack.c.bf16 %v1984, %v1980
          %v2005 = vpack.c.bf16 %v1994, %v1990
          %vm2006 = vcmask 261120
          %2007 = vst.msk [vmem:[#allocation3] sm:$0xff] %vm2006, %v1998
          %2008 = vst.msk [vmem:[#allocation3 + $0x8] sm:$0xff] %vm2006, %v1999
          %2009 = vst.msk [vmem:[#allocation3 + $0x10] sm:$0xff] %vm2006, %v2000
          %2010 = vst.msk [vmem:[#allocation3 + $0x18] sm:$0xff] %vm2006, %v2001
          %2011 = vst.msk [vmem:[#allocation3 + $0x20] sm:$0xff] %vm2006, %v2002
          %2012 = vst.msk [vmem:[#allocation3 + $0x28] sm:$0xff] %vm2006, %v2003
          %2013 = vst.msk [vmem:[#allocation3 + $0x30] sm:$0xff] %vm2006, %v2004
          %2014 = vst.msk [vmem:[#allocation3 + $0x38] sm:$0xff] %vm2006, %v2005
          %v2015 = vpack.c.bf16 %v1926, %v1922
          %v2016 = vpack.c.bf16 %v1936, %v1932
          %v2017 = vpack.c.bf16 %v1946, %v1942
          %v2018 = vpack.c.bf16 %v1956, %v1952
          %v2019 = vpack.c.bf16 %v1966, %v1962
          %v2020 = vpack.c.bf16 %v1976, %v1972
          %v2021 = vpack.c.bf16 %v1986, %v1982
          %v2022 = vpack.c.bf16 %v1996, %v1992
          %2023 = vst.msk [vmem:[#allocation4] sm:$0xff] %vm2006, %v2015
          %2024 = vst.msk [vmem:[#allocation4 + $0x8] sm:$0xff] %vm2006, %v2016
          %2025 = vst.msk [vmem:[#allocation4 + $0x10] sm:$0xff] %vm2006, %v2017
          %2026 = vst.msk [vmem:[#allocation4 + $0x18] sm:$0xff] %vm2006, %v2018
          %2027 = vst.msk [vmem:[#allocation4 + $0x20] sm:$0xff] %vm2006, %v2019
          %2028 = vst.msk [vmem:[#allocation4 + $0x28] sm:$0xff] %vm2006, %v2020
          %2029 = vst.msk [vmem:[#allocation4 + $0x30] sm:$0xff] %vm2006, %v2021
          %2030 = vst.msk [vmem:[#allocation4 + $0x38] sm:$0xff] %vm2006, %v2022
          %2039 = vrot.lane.b32.xlu0 %v1998, 96
          %v2040 = vpop.permute.xlu0 %2039
          %2041 = vrot.lane.b32.xlu0 %v1999, 96
          %v2042 = vpop.permute.xlu0 %2041
          %2043 = vrot.lane.b32.xlu0 %v2000, 96
          %v2044 = vpop.permute.xlu0 %2043
          %2045 = vrot.lane.b32.xlu0 %v2001, 96
          %v2046 = vpop.permute.xlu0 %2045
          %2047 = vrot.lane.b32.xlu0 %v2002, 96
          %v2048 = vpop.permute.xlu0 %2047
          %2049 = vrot.lane.b32.xlu0 %v2003, 96
          %v2050 = vpop.permute.xlu0 %2049
          %2051 = vrot.lane.b32.xlu0 %v2004, 96
          %v2052 = vpop.permute.xlu0 %2051
          %2053 = vrot.lane.b32.xlu0 %v2005, 96
          %v2054 = vpop.permute.xlu0 %2053
          %s2063 = scalar_lea.vmem [#allocation3], 64
          %2064 = vst.msk [vmem:[%s2063] sm:$0xff] %vm2006, %v2040
          %2065 = vst.msk [vmem:[%s2063 + $0x8] sm:$0xff] %vm2006, %v2042
          %2066 = vst.msk [vmem:[%s2063 + $0x10] sm:$0xff] %vm2006, %v2044
          %2067 = vst.msk [vmem:[%s2063 + $0x18] sm:$0xff] %vm2006, %v2046
          %2068 = vst.msk [vmem:[%s2063 + $0x20] sm:$0xff] %vm2006, %v2048
          %2069 = vst.msk [vmem:[%s2063 + $0x28] sm:$0xff] %vm2006, %v2050
          %2070 = vst.msk [vmem:[%s2063 + $0x30] sm:$0xff] %vm2006, %v2052
          %2071 = vst.msk [vmem:[%s2063 + $0x38] sm:$0xff] %vm2006, %v2054
          %2080 = vrot.lane.b32.xlu0 %v2015, 96
          %v2081 = vpop.permute.xlu0 %2080
          %2082 = vrot.lane.b32.xlu0 %v2016, 96
          %v2083 = vpop.permute.xlu0 %2082
          %2084 = vrot.lane.b32.xlu0 %v2017, 96
          %v2085 = vpop.permute.xlu0 %2084
          %2086 = vrot.lane.b32.xlu0 %v2018, 96
          %v2087 = vpop.permute.xlu0 %2086
          %2088 = vrot.lane.b32.xlu0 %v2019, 96
          %v2089 = vpop.permute.xlu0 %2088
          %2090 = vrot.lane.b32.xlu0 %v2020, 96
          %v2091 = vpop.permute.xlu0 %2090
          %2092 = vrot.lane.b32.xlu0 %v2021, 96
          %v2093 = vpop.permute.xlu0 %2092
          %2094 = vrot.lane.b32.xlu0 %v2022, 96
          %v2095 = vpop.permute.xlu0 %2094
          %s2104 = scalar_lea.vmem [#allocation4], 64
          %2105 = vst.msk [vmem:[%s2104] sm:$0xff] %vm2006, %v2081
          %2106 = vst.msk [vmem:[%s2104 + $0x8] sm:$0xff] %vm2006, %v2083
          %2107 = vst.msk [vmem:[%s2104 + $0x10] sm:$0xff] %vm2006, %v2085
          %2108 = vst.msk [vmem:[%s2104 + $0x18] sm:$0xff] %vm2006, %v2087
          %2109 = vst.msk [vmem:[%s2104 + $0x20] sm:$0xff] %vm2006, %v2089
          %2110 = vst.msk [vmem:[%s2104 + $0x28] sm:$0xff] %vm2006, %v2091
          %2111 = vst.msk [vmem:[%s2104 + $0x30] sm:$0xff] %vm2006, %v2093
          %2112 = vst.msk [vmem:[%s2104 + $0x38] sm:$0xff] %vm2006, %v2095
          %2113 = vrot.lane.b32.xlu0 %v1998, 64
          %v2114 = vpop.permute.xlu0 %2113
          %2115 = vrot.lane.b32.xlu0 %v1999, 64
          %v2116 = vpop.permute.xlu0 %2115
          %2117 = vrot.lane.b32.xlu0 %v2000, 64
          %v2118 = vpop.permute.xlu0 %2117
          %2119 = vrot.lane.b32.xlu0 %v2001, 64
          %v2120 = vpop.permute.xlu0 %2119
          %2121 = vrot.lane.b32.xlu0 %v2002, 64
          %v2122 = vpop.permute.xlu0 %2121
          %2123 = vrot.lane.b32.xlu0 %v2003, 64
          %v2124 = vpop.permute.xlu0 %2123
          %2125 = vrot.lane.b32.xlu0 %v2004, 64
          %v2126 = vpop.permute.xlu0 %2125
          %2127 = vrot.lane.b32.xlu0 %v2005, 64
          %v2128 = vpop.permute.xlu0 %2127
          %s2137 = scalar_lea.vmem [#allocation3], 128
          %2138 = vst.msk [vmem:[%s2137] sm:$0xff] %vm2006, %v2114
          %2139 = vst.msk [vmem:[%s2137 + $0x8] sm:$0xff] %vm2006, %v2116
          %2140 = vst.msk [vmem:[%s2137 + $0x10] sm:$0xff] %vm2006, %v2118
          %2141 = vst.msk [vmem:[%s2137 + $0x18] sm:$0xff] %vm2006, %v2120
          %2142 = vst.msk [vmem:[%s2137 + $0x20] sm:$0xff] %vm2006, %v2122
          %2143 = vst.msk [vmem:[%s2137 + $0x28] sm:$0xff] %vm2006, %v2124
          %2144 = vst.msk [vmem:[%s2137 + $0x30] sm:$0xff] %vm2006, %v2126
          %2145 = vst.msk [vmem:[%s2137 + $0x38] sm:$0xff] %vm2006, %v2128
          %2146 = vrot.lane.b32.xlu0 %v2015, 64
          %v2147 = vpop.permute.xlu0 %2146
          %2148 = vrot.lane.b32.xlu0 %v2016, 64
          %v2149 = vpop.permute.xlu0 %2148
          %2150 = vrot.lane.b32.xlu0 %v2017, 64
          %v2151 = vpop.permute.xlu0 %2150
          %2152 = vrot.lane.b32.xlu0 %v2018, 64
          %v2153 = vpop.permute.xlu0 %2152
          %2154 = vrot.lane.b32.xlu0 %v2019, 64
          %v2155 = vpop.permute.xlu0 %2154
          %2156 = vrot.lane.b32.xlu0 %v2020, 64
          %v2157 = vpop.permute.xlu0 %2156
          %2158 = vrot.lane.b32.xlu0 %v2021, 64
          %v2159 = vpop.permute.xlu0 %2158
          %2160 = vrot.lane.b32.xlu0 %v2022, 64
          %v2161 = vpop.permute.xlu0 %2160
          %s2170 = scalar_lea.vmem [#allocation4], 128
          %2171 = vst.msk [vmem:[%s2170] sm:$0xff] %vm2006, %v2147
          %2172 = vst.msk [vmem:[%s2170 + $0x8] sm:$0xff] %vm2006, %v2149
          %2173 = vst.msk [vmem:[%s2170 + $0x10] sm:$0xff] %vm2006, %v2151
          %2174 = vst.msk [vmem:[%s2170 + $0x18] sm:$0xff] %vm2006, %v2153
          %2175 = vst.msk [vmem:[%s2170 + $0x20] sm:$0xff] %vm2006, %v2155
          %2176 = vst.msk [vmem:[%s2170 + $0x28] sm:$0xff] %vm2006, %v2157
          %2177 = vst.msk [vmem:[%s2170 + $0x30] sm:$0xff] %vm2006, %v2159
          %2178 = vst.msk [vmem:[%s2170 + $0x38] sm:$0xff] %vm2006, %v2161
          %2179 = vrot.lane.b32.xlu0 %v1998, 32
          %v2180 = vpop.permute.xlu0 %2179
          %2181 = vrot.lane.b32.xlu0 %v1999, 32
          %v2182 = vpop.permute.xlu0 %2181
          %2183 = vrot.lane.b32.xlu0 %v2000, 32
          %v2184 = vpop.permute.xlu0 %2183
          %2185 = vrot.lane.b32.xlu0 %v2001, 32
          %v2186 = vpop.permute.xlu0 %2185
          %2187 = vrot.lane.b32.xlu0 %v2002, 32
          %v2188 = vpop.permute.xlu0 %2187
          %2189 = vrot.lane.b32.xlu0 %v2003, 32
          %v2190 = vpop.permute.xlu0 %2189
          %2191 = vrot.lane.b32.xlu0 %v2004, 32
          %v2192 = vpop.permute.xlu0 %2191
          %2193 = vrot.lane.b32.xlu0 %v2005, 32
          %v2194 = vpop.permute.xlu0 %2193
          %s2203 = scalar_lea.vmem [#allocation3], 192
          %2204 = vst.msk [vmem:[%s2203] sm:$0xff] %vm2006, %v2180
          %2205 = vst.msk [vmem:[%s2203 + $0x8] sm:$0xff] %vm2006, %v2182
          %2206 = vst.msk [vmem:[%s2203 + $0x10] sm:$0xff] %vm2006, %v2184
          %2207 = vst.msk [vmem:[%s2203 + $0x18] sm:$0xff] %vm2006, %v2186
          %2208 = vst.msk [vmem:[%s2203 + $0x20] sm:$0xff] %vm2006, %v2188
          %2209 = vst.msk [vmem:[%s2203 + $0x28] sm:$0xff] %vm2006, %v2190
          %2210 = vst.msk [vmem:[%s2203 + $0x30] sm:$0xff] %vm2006, %v2192
          %2211 = vst.msk [vmem:[%s2203 + $0x38] sm:$0xff] %vm2006, %v2194
          %2212 = vrot.lane.b32.xlu0 %v2015, 32
          %v2213 = vpop.permute.xlu0 %2212
          %2214 = vrot.lane.b32.xlu0 %v2016, 32
          %v2215 = vpop.permute.xlu0 %2214
          %2216 = vrot.lane.b32.xlu0 %v2017, 32
          %v2217 = vpop.permute.xlu0 %2216
          %2218 = vrot.lane.b32.xlu0 %v2018, 32
          %v2219 = vpop.permute.xlu0 %2218
          %2220 = vrot.lane.b32.xlu0 %v2019, 32
          %v2221 = vpop.permute.xlu0 %2220
          %2222 = vrot.lane.b32.xlu0 %v2020, 32
          %v2223 = vpop.permute.xlu0 %2222
          %2224 = vrot.lane.b32.xlu0 %v2021, 32
          %v2225 = vpop.permute.xlu0 %2224
          %2226 = vrot.lane.b32.xlu0 %v2022, 32
          %v2227 = vpop.permute.xlu0 %2226
          %s2236 = scalar_lea.vmem [#allocation4], 192
          %2237 = vst.msk [vmem:[%s2236] sm:$0xff] %vm2006, %v2213
          %2238 = vst.msk [vmem:[%s2236 + $0x8] sm:$0xff] %vm2006, %v2215
          %2239 = vst.msk [vmem:[%s2236 + $0x10] sm:$0xff] %vm2006, %v2217
          %2240 = vst.msk [vmem:[%s2236 + $0x18] sm:$0xff] %vm2006, %v2219
          %2241 = vst.msk [vmem:[%s2236 + $0x20] sm:$0xff] %vm2006, %v2221
          %2242 = vst.msk [vmem:[%s2236 + $0x28] sm:$0xff] %vm2006, %v2223
          %2243 = vst.msk [vmem:[%s2236 + $0x30] sm:$0xff] %vm2006, %v2225
          %2244 = vst.msk [vmem:[%s2236 + $0x38] sm:$0xff] %vm2006, %v2227
          %v2245 = vld [vmem:[#allocation2] sm:$0xff]
          %v2246 = vld [vmem:[#allocation2 + $0x8] sm:$0xff]
          %v2247 = vld [vmem:[#allocation2 + $0x10] sm:$0xff]
          %v2248 = vld [vmem:[#allocation2 + $0x18] sm:$0xff]
          %v2249 = vld [vmem:[#allocation2 + $0x20] sm:$0xff]
          %v2250 = vld [vmem:[#allocation2 + $0x28] sm:$0xff]
          %v2251 = vld [vmem:[#allocation2 + $0x30] sm:$0xff]
          %v2252 = vld [vmem:[#allocation2 + $0x38] sm:$0xff]
          %v2253 = vld [vmem:[#allocation2 + $0x40] sm:$0xff]
          %v2254 = vld [vmem:[#allocation2 + $0x48] sm:$0xff]
          %v2255 = vld [vmem:[#allocation2 + $0x50] sm:$0xff]
          %v2256 = vld [vmem:[#allocation2 + $0x58] sm:$0xff]
          %v2257 = vld [vmem:[#allocation2 + $0x60] sm:$0xff]
          %v2258 = vld [vmem:[#allocation2 + $0x68] sm:$0xff]
          %v2259 = vld [vmem:[#allocation2 + $0x70] sm:$0xff]
          %v2260 = vld [vmem:[#allocation2 + $0x78] sm:$0xff]
          %v2261 = vld [vmem:[#allocation2 + $0x80] sm:$0xff]
          %v2262 = vld [vmem:[#allocation2 + $0x88] sm:$0xff]
          %v2263 = vld [vmem:[#allocation2 + $0x90] sm:$0xff]
          %v2264 = vld [vmem:[#allocation2 + $0x98] sm:$0xff]
          %v2265 = vld [vmem:[#allocation2 + $0xa0] sm:$0xff]
          %v2266 = vld [vmem:[#allocation2 + $0xa8] sm:$0xff]
          %v2267 = vld [vmem:[#allocation2 + $0xb0] sm:$0xff]
          %v2268 = vld [vmem:[#allocation2 + $0xb8] sm:$0xff]
          %v2269 = vld [vmem:[#allocation2 + $0xc0] sm:$0xff]
          %v2270 = vld [vmem:[#allocation2 + $0xc8] sm:$0xff]
          %v2271 = vld [vmem:[#allocation2 + $0xd0] sm:$0xff]
          %v2272 = vld [vmem:[#allocation2 + $0xd8] sm:$0xff]
          %v2273 = vld [vmem:[#allocation2 + $0xe0] sm:$0xff]
          %v2274 = vld [vmem:[#allocation2 + $0xe8] sm:$0xff]
          %v2275 = vld [vmem:[#allocation2 + $0xf0] sm:$0xff]
          %v2276 = vld [vmem:[#allocation2 + $0xf8] sm:$0xff]
          %v2277 = vld [vmem:[#allocation3] sm:$0xff]
          %v2278 = vld [vmem:[#allocation3 + $0x8] sm:$0xff]
          %v2279 = vld [vmem:[#allocation3 + $0x10] sm:$0xff]
          %v2280 = vld [vmem:[#allocation3 + $0x18] sm:$0xff]
          %v2281 = vld [vmem:[#allocation3 + $0x20] sm:$0xff]
          %v2282 = vld [vmem:[#allocation3 + $0x28] sm:$0xff]
          %v2283 = vld [vmem:[#allocation3 + $0x30] sm:$0xff]
          %v2284 = vld [vmem:[#allocation3 + $0x38] sm:$0xff]
          %v2285 = vld [vmem:[#allocation3 + $0x40] sm:$0xff]
          %v2286 = vld [vmem:[#allocation3 + $0x48] sm:$0xff]
          %v2287 = vld [vmem:[#allocation3 + $0x50] sm:$0xff]
          %v2288 = vld [vmem:[#allocation3 + $0x58] sm:$0xff]
          %v2289 = vld [vmem:[#allocation3 + $0x60] sm:$0xff]
          %v2290 = vld [vmem:[#allocation3 + $0x68] sm:$0xff]
          %v2291 = vld [vmem:[#allocation3 + $0x70] sm:$0xff]
          %v2292 = vld [vmem:[#allocation3 + $0x78] sm:$0xff]
          %v2293 = vld [vmem:[#allocation3 + $0x80] sm:$0xff]
          %v2294 = vld [vmem:[#allocation3 + $0x88] sm:$0xff]
          %v2295 = vld [vmem:[#allocation3 + $0x90] sm:$0xff]
          %v2296 = vld [vmem:[#allocation3 + $0x98] sm:$0xff]
          %v2297 = vld [vmem:[#allocation3 + $0xa0] sm:$0xff]
          %v2298 = vld [vmem:[#allocation3 + $0xa8] sm:$0xff]
          %v2299 = vld [vmem:[#allocation3 + $0xb0] sm:$0xff]
          %v2300 = vld [vmem:[#allocation3 + $0xb8] sm:$0xff]
          %v2301 = vld [vmem:[#allocation3 + $0xc0] sm:$0xff]
          %v2302 = vld [vmem:[#allocation3 + $0xc8] sm:$0xff]
          %v2303 = vld [vmem:[#allocation3 + $0xd0] sm:$0xff]
          %v2304 = vld [vmem:[#allocation3 + $0xd8] sm:$0xff]
          %v2305 = vld [vmem:[#allocation3 + $0xe0] sm:$0xff]
          %v2306 = vld [vmem:[#allocation3 + $0xe8] sm:$0xff]
          %v2307 = vld [vmem:[#allocation3 + $0xf0] sm:$0xff]
          %v2308 = vld [vmem:[#allocation3 + $0xf8] sm:$0xff]
          %v2309 = vld [vmem:[%s669] sm:$0xff]
          %v2310 = vld [vmem:[%s669 + $0x8] sm:$0xff]
          %v2311 = vld [vmem:[%s669 + $0x10] sm:$0xff]
          %v2312 = vld [vmem:[%s669 + $0x18] sm:$0xff]
          %v2313 = vld [vmem:[%s669 + $0x20] sm:$0xff]
          %v2314 = vld [vmem:[%s669 + $0x28] sm:$0xff]
          %v2315 = vld [vmem:[%s669 + $0x30] sm:$0xff]
          %v2316 = vld [vmem:[%s669 + $0x38] sm:$0xff]
          %v2317 = vld [vmem:[%s669 + $0x40] sm:$0xff]
          %v2318 = vld [vmem:[%s669 + $0x48] sm:$0xff]
          %v2319 = vld [vmem:[%s669 + $0x50] sm:$0xff]
          %v2320 = vld [vmem:[%s669 + $0x58] sm:$0xff]
          %v2321 = vld [vmem:[%s669 + $0x60] sm:$0xff]
          %v2322 = vld [vmem:[%s669 + $0x68] sm:$0xff]
          %v2323 = vld [vmem:[%s669 + $0x70] sm:$0xff]
          %v2324 = vld [vmem:[%s669 + $0x78] sm:$0xff]
          %v2326 = vsel %vm2006, %v2245, 0
          %v2329 = vsel %vm2006, %v2246, 0
          %v2332 = vsel %vm2006, %v2247, 0
          %v2335 = vsel %vm2006, %v2248, 0
          %v2338 = vsel %vm2006, %v2249, 0
          %v2341 = vsel %vm2006, %v2250, 0
          %v2344 = vsel %vm2006, %v2251, 0
          %v2347 = vsel %vm2006, %v2252, 0
          %v2350 = vsel %vm2006, %v2277, 0
          %v2353 = vsel %vm2006, %v2278, 0
          %v2356 = vsel %vm2006, %v2279, 0
          %v2359 = vsel %vm2006, %v2280, 0
          %v2362 = vsel %vm2006, %v2281, 0
          %v2365 = vsel %vm2006, %v2282, 0
          %v2368 = vsel %vm2006, %v2283, 0
          %v2371 = vsel %vm2006, %v2284, 0
          %2373 = vmatprep.subr.bf16.mxu0 0
          %2374 = vmatpush1.bf16.xpose.msra.mxu0 %v2350
          %2375 = vmatprep.subr.bf16.mxu0 0
          %2376 = vmatpush1.bf16.xpose.msra.mxu0 %v2353
          %2377 = vmatprep.subr.bf16.mxu0 0
          %2378 = vmatpush1.bf16.xpose.msra.mxu0 %v2356
          %2379 = vmatprep.subr.bf16.mxu0 0
          %2380 = vmatpush1.bf16.xpose.msra.mxu0 %v2359
          %2381 = vmatprep.subr.bf16.mxu0 0
          %2382 = vmatpush1.bf16.xpose.msra.mxu0 %v2362
          %2383 = vmatprep.subr.bf16.mxu0 0
          %2384 = vmatpush1.bf16.xpose.msra.mxu0 %v2365
          %2385 = vmatprep.subr.bf16.mxu0 0
          %2386 = vmatpush1.bf16.xpose.msra.mxu0 %v2368
          %2387 = vmatprep.subr.bf16.mxu0 0
          %2388 = vmatpush1.bf16.xpose.msra.mxu0 %v2371
          %2389 = vmatprep.subr.bf16.mxu0 0
          %2390 = vmatpush1.bf16.xpose.msra.mxu0 0
          %2391 = vmatprep.subr.bf16.mxu0 0
          %2392 = vmatpush1.bf16.xpose.msra.mxu0 0
          %2393 = vmatprep.subr.bf16.mxu0 0
          %2394 = vmatpush1.bf16.xpose.msra.mxu0 0
          %2395 = vmatprep.subr.bf16.mxu0 0
          %2396 = vmatpush1.bf16.xpose.msra.mxu0 0
          %2397 = vmatprep.subr.bf16.mxu0 0
          %2398 = vmatpush1.bf16.xpose.msra.mxu0 0
          %2399 = vmatprep.subr.bf16.mxu0 0
          %2400 = vmatpush1.bf16.xpose.msra.mxu0 0
          %2401 = vmatprep.subr.bf16.mxu0 0
          %2402 = vmatpush1.bf16.xpose.msra.mxu0 0
          %2403 = vmatprep.subr.bf16.mxu0 0
          %2404 = vmatpush1.bf16.xpose.msra.mxu0 0
          %2405 = vmatprep.mubr.bf16.mxu0 0
          %2406 = vmatmul.mubr.bf16.gmra.mrb[0].mxu0 %v2326
          %v2407 = vpop.f32.mrb[0].mxu0
          %v2408 = vadd.f32 %v2309, %v2407
          %v2409 = vpop.f32.mrb[0].mxu0
          %v2410 = vpop.f32.mrb[0].mxu0
          %v2411 = vadd.f32 %v2310, %v2410
          %v2412 = vpop.f32.mrb[0].mxu0
          %2413 = vmatprep.mubr.bf16.mxu0 0
          %2414 = vmatmul.mubr.bf16.gmra.mrb[0].mxu0 %v2329
          %v2415 = vpop.f32.mrb[0].mxu0
          %v2416 = vadd.f32 %v2311, %v2415
          %v2417 = vpop.f32.mrb[0].mxu0
          %v2418 = vpop.f32.mrb[0].mxu0
          %v2419 = vadd.f32 %v2312, %v2418
          %v2420 = vpop.f32.mrb[0].mxu0
          %2421 = vmatprep.mubr.bf16.mxu0 0
          %2422 = vmatmul.mubr.bf16.gmra.mrb[0].mxu0 %v2332
          %v2423 = vpop.f32.mrb[0].mxu0
          %v2424 = vadd.f32 %v2313, %v2423
          %v2425 = vpop.f32.mrb[0].mxu0
          %v2426 = vpop.f32.mrb[0].mxu0
          %v2427 = vadd.f32 %v2314, %v2426
          %v2428 = vpop.f32.mrb[0].mxu0
          %2429 = vmatprep.mubr.bf16.mxu0 0
          %2430 = vmatmul.mubr.bf16.gmra.mrb[0].mxu0 %v2335
          %v2431 = vpop.f32.mrb[0].mxu0
          %v2432 = vadd.f32 %v2315, %v2431
          %v2433 = vpop.f32.mrb[0].mxu0
          %v2434 = vpop.f32.mrb[0].mxu0
          %v2435 = vadd.f32 %v2316, %v2434
          %v2436 = vpop.f32.mrb[0].mxu0
          %2437 = vmatprep.mubr.bf16.mxu0 0
          %2438 = vmatmul.mubr.bf16.gmra.mrb[0].mxu0 %v2338
          %v2439 = vpop.f32.mrb[0].mxu0
          %v2440 = vadd.f32 %v2317, %v2439
          %v2441 = vpop.f32.mrb[0].mxu0
          %v2442 = vpop.f32.mrb[0].mxu0
          %v2443 = vadd.f32 %v2318, %v2442
          %v2444 = vpop.f32.mrb[0].mxu0
          %2445 = vmatprep.mubr.bf16.mxu0 0
          %2446 = vmatmul.mubr.bf16.gmra.mrb[0].mxu0 %v2341
          %v2447 = vpop.f32.mrb[0].mxu0
          %v2448 = vadd.f32 %v2319, %v2447
          %v2449 = vpop.f32.mrb[0].mxu0
          %v2450 = vpop.f32.mrb[0].mxu0
          %v2451 = vadd.f32 %v2320, %v2450
          %v2452 = vpop.f32.mrb[0].mxu0
          %2453 = vmatprep.mubr.bf16.mxu0 0
          %2454 = vmatmul.mubr.bf16.gmra.mrb[0].mxu0 %v2344
          %v2455 = vpop.f32.mrb[0].mxu0
          %v2456 = vadd.f32 %v2321, %v2455
          %v2457 = vpop.f32.mrb[0].mxu0
          %v2458 = vpop.f32.mrb[0].mxu0
          %v2459 = vadd.f32 %v2322, %v2458
          %v2460 = vpop.f32.mrb[0].mxu0
          %2461 = vmatprep.mubr.bf16.mxu0 0
          %2462 = vmatmul.mubr.bf16.gmra.mrb[0].mxu0 %v2347
          %v2463 = vpop.f32.mrb[0].mxu0
          %v2464 = vadd.f32 %v2323, %v2463
          %v2465 = vpop.f32.mrb[0].mxu0
          %v2466 = vpop.f32.mrb[0].mxu0
          %v2467 = vadd.f32 %v2324, %v2466
          %v2468 = vpop.f32.mrb[0].mxu0
          %2469 = vdwg.mxu0
          %v2471 = vsel %vm2006, %v2253, 0
          %v2474 = vsel %vm2006, %v2254, 0
          %v2477 = vsel %vm2006, %v2255, 0
          %v2480 = vsel %vm2006, %v2256, 0
          %v2483 = vsel %vm2006, %v2257, 0
          %v2486 = vsel %vm2006, %v2258, 0
          %v2489 = vsel %vm2006, %v2259, 0
          %v2492 = vsel %vm2006, %v2260, 0
          %v2495 = vsel %vm2006, %v2285, 0
          %v2498 = vsel %vm2006, %v2286, 0
          %v2501 = vsel %vm2006, %v2287, 0
          %v2504 = vsel %vm2006, %v2288, 0
          %v2507 = vsel %vm2006, %v2289, 0
          %v2510 = vsel %vm2006, %v2290, 0
          %v2513 = vsel %vm2006, %v2291, 0
          %v2516 = vsel %vm2006, %v2292, 0
          %2518 = vmatprep.subr.bf16.mxu0 0
          %2519 = vmatpush1.bf16.xpose.msra.mxu0 %v2495
          %2520 = vmatprep.subr.bf16.mxu0 0
          %2521 = vmatpush1.bf16.xpose.msra.mxu0 %v2498
          %2522 = vmatprep.subr.bf16.mxu0 0
          %2523 = vmatpush1.bf16.xpose.msra.mxu0 %v2501
          %2524 = vmatprep.subr.bf16.mxu0 0
          %2525 = vmatpush1.bf16.xpose.msra.mxu0 %v2504
          %2526 = vmatprep.subr.bf16.mxu0 0
          %2527 = vmatpush1.bf16.xpose.msra.mxu0 %v2507
          %2528 = vmatprep.subr.bf16.mxu0 0
          %2529 = vmatpush1.bf16.xpose.msra.mxu0 %v2510
          %2530 = vmatprep.subr.bf16.mxu0 0
          %2531 = vmatpush1.bf16.xpose.msra.mxu0 %v2513
          %2532 = vmatprep.subr.bf16.mxu0 0
          %2533 = vmatpush1.bf16.xpose.msra.mxu0 %v2516
          %2534 = vmatprep.subr.bf16.mxu0 0
          %2535 = vmatpush1.bf16.xpose.msra.mxu0 0
          %2536 = vmatprep.subr.bf16.mxu0 0
          %2537 = vmatpush1.bf16.xpose.msra.mxu0 0
          %2538 = vmatprep.subr.bf16.mxu0 0
          %2539 = vmatpush1.bf16.xpose.msra.mxu0 0
          %2540 = vmatprep.subr.bf16.mxu0 0
          %2541 = vmatpush1.bf16.xpose.msra.mxu0 0
          %2542 = vmatprep.subr.bf16.mxu0 0
          %2543 = vmatpush1.bf16.xpose.msra.mxu0 0
          %2544 = vmatprep.subr.bf16.mxu0 0
          %2545 = vmatpush1.bf16.xpose.msra.mxu0 0
          %2546 = vmatprep.subr.bf16.mxu0 0
          %2547 = vmatpush1.bf16.xpose.msra.mxu0 0
          %2548 = vmatprep.subr.bf16.mxu0 0
          %2549 = vmatpush1.bf16.xpose.msra.mxu0 0
          %2550 = vmatprep.mubr.bf16.mxu0 0
          %2551 = vmatmul.mubr.bf16.gmra.mrb[0].mxu0 %v2471
          %v2552 = vpop.f32.mrb[0].mxu0
          %v2553 = vadd.f32 %v2309, %v2552
          %v2554 = vpop.f32.mrb[0].mxu0
          %v2555 = vpop.f32.mrb[0].mxu0
          %v2556 = vadd.f32 %v2310, %v2555
          %v2557 = vpop.f32.mrb[0].mxu0
          %2558 = vmatprep.mubr.bf16.mxu0 0
          %2559 = vmatmul.mubr.bf16.gmra.mrb[0].mxu0 %v2474
          %v2560 = vpop.f32.mrb[0].mxu0
          %v2561 = vadd.f32 %v2311, %v2560
          %v2562 = vpop.f32.mrb[0].mxu0
          %v2563 = vpop.f32.mrb[0].mxu0
          %v2564 = vadd.f32 %v2312, %v2563
          %v2565 = vpop.f32.mrb[0].mxu0
          %2566 = vmatprep.mubr.bf16.mxu0 0
          %2567 = vmatmul.mubr.bf16.gmra.mrb[0].mxu0 %v2477
          %v2568 = vpop.f32.mrb[0].mxu0
          %v2569 = vadd.f32 %v2313, %v2568
          %v2570 = vpop.f32.mrb[0].mxu0
          %v2571 = vpop.f32.mrb[0].mxu0
          %v2572 = vadd.f32 %v2314, %v2571
          %v2573 = vpop.f32.mrb[0].mxu0
          %2574 = vmatprep.mubr.bf16.mxu0 0
          %2575 = vmatmul.mubr.bf16.gmra.mrb[0].mxu0 %v2480
          %v2576 = vpop.f32.mrb[0].mxu0
          %v2577 = vadd.f32 %v2315, %v2576
          %v2578 = vpop.f32.mrb[0].mxu0
          %v2579 = vpop.f32.mrb[0].mxu0
          %v2580 = vadd.f32 %v2316, %v2579
          %v2581 = vpop.f32.mrb[0].mxu0
          %2582 = vmatprep.mubr.bf16.mxu0 0
          %2583 = vmatmul.mubr.bf16.gmra.mrb[0].mxu0 %v2483
          %v2584 = vpop.f32.mrb[0].mxu0
          %v2585 = vadd.f32 %v2317, %v2584
          %v2586 = vpop.f32.mrb[0].mxu0
          %v2587 = vpop.f32.mrb[0].mxu0
          %v2588 = vadd.f32 %v2318, %v2587
          %v2589 = vpop.f32.mrb[0].mxu0
          %2590 = vmatprep.mubr.bf16.mxu0 0
          %2591 = vmatmul.mubr.bf16.gmra.mrb[0].mxu0 %v2486
          %v2592 = vpop.f32.mrb[0].mxu0
          %v2593 = vadd.f32 %v2319, %v2592
          %v2594 = vpop.f32.mrb[0].mxu0
          %v2595 = vpop.f32.mrb[0].mxu0
          %v2596 = vadd.f32 %v2320, %v2595
          %v2597 = vpop.f32.mrb[0].mxu0
          %2598 = vmatprep.mubr.bf16.mxu0 0
          %2599 = vmatmul.mubr.bf16.gmra.mrb[0].mxu0 %v2489
          %v2600 = vpop.f32.mrb[0].mxu0
          %v2601 = vadd.f32 %v2321, %v2600
          %v2602 = vpop.f32.mrb[0].mxu0
          %v2603 = vpop.f32.mrb[0].mxu0
          %v2604 = vadd.f32 %v2322, %v2603
          %v2605 = vpop.f32.mrb[0].mxu0
          %2606 = vmatprep.mubr.bf16.mxu0 0
          %2607 = vmatmul.mubr.bf16.gmra.mrb[0].mxu0 %v2492
          %v2608 = vpop.f32.mrb[0].mxu0
          %v2609 = vadd.f32 %v2323, %v2608
          %v2610 = vpop.f32.mrb[0].mxu0
          %v2611 = vpop.f32.mrb[0].mxu0
          %v2612 = vadd.f32 %v2324, %v2611
          %v2613 = vpop.f32.mrb[0].mxu0
          %2614 = vdwg.mxu0
          %v2616 = vsel %vm2006, %v2261, 0
          %v2619 = vsel %vm2006, %v2262, 0
          %v2622 = vsel %vm2006, %v2263, 0
          %v2625 = vsel %vm2006, %v2264, 0
          %v2628 = vsel %vm2006, %v2265, 0
          %v2631 = vsel %vm2006, %v2266, 0
          %v2634 = vsel %vm2006, %v2267, 0
          %v2637 = vsel %vm2006, %v2268, 0
          %v2640 = vsel %vm2006, %v2293, 0
          %v2643 = vsel %vm2006, %v2294, 0
          %v2646 = vsel %vm2006, %v2295, 0
          %v2649 = vsel %vm2006, %v2296, 0
          %v2652 = vsel %vm2006, %v2297, 0
          %v2655 = vsel %vm2006, %v2298, 0
          %v2658 = vsel %vm2006, %v2299, 0
          %v2661 = vsel %vm2006, %v2300, 0
          %2663 = vmatprep.subr.bf16.mxu0 0
          %2664 = vmatpush1.bf16.xpose.msra.mxu0 %v2640
          %2665 = vmatprep.subr.bf16.mxu0 0
          %2666 = vmatpush1.bf16.xpose.msra.mxu0 %v2643
          %2667 = vmatprep.subr.bf16.mxu0 0
          %2668 = vmatpush1.bf16.xpose.msra.mxu0 %v2646
          %2669 = vmatprep.subr.bf16.mxu0 0
          %2670 = vmatpush1.bf16.xpose.msra.mxu0 %v2649
          %2671 = vmatprep.subr.bf16.mxu0 0
          %2672 = vmatpush1.bf16.xpose.msra.mxu0 %v2652
          %2673 = vmatprep.subr.bf16.mxu0 0
          %2674 = vmatpush1.bf16.xpose.msra.mxu0 %v2655
          %2675 = vmatprep.subr.bf16.mxu0 0
          %2676 = vmatpush1.bf16.xpose.msra.mxu0 %v2658
          %2677 = vmatprep.subr.bf16.mxu0 0
          %2678 = vmatpush1.bf16.xpose.msra.mxu0 %v2661
          %2679 = vmatprep.subr.bf16.mxu0 0
          %2680 = vmatpush1.bf16.xpose.msra.mxu0 0
          %2681 = vmatprep.subr.bf16.mxu0 0
          %2682 = vmatpush1.bf16.xpose.msra.mxu0 0
          %2683 = vmatprep.subr.bf16.mxu0 0
          %2684 = vmatpush1.bf16.xpose.msra.mxu0 0
          %2685 = vmatprep.subr.bf16.mxu0 0
          %2686 = vmatpush1.bf16.xpose.msra.mxu0 0
          %2687 = vmatprep.subr.bf16.mxu0 0
          %2688 = vmatpush1.bf16.xpose.msra.mxu0 0
          %2689 = vmatprep.subr.bf16.mxu0 0
          %2690 = vmatpush1.bf16.xpose.msra.mxu0 0
          %2691 = vmatprep.subr.bf16.mxu0 0
          %2692 = vmatpush1.bf16.xpose.msra.mxu0 0
          %2693 = vmatprep.subr.bf16.mxu0 0
          %2694 = vmatpush1.bf16.xpose.msra.mxu0 0
          %2695 = vmatprep.mubr.bf16.mxu0 0
          %2696 = vmatmul.mubr.bf16.gmra.mrb[0].mxu0 %v2616
          %v2697 = vpop.f32.mrb[0].mxu0
          %v2698 = vadd.f32 %v2309, %v2697
          %v2699 = vpop.f32.mrb[0].mxu0
          %v2700 = vpop.f32.mrb[0].mxu0
          %v2701 = vadd.f32 %v2310, %v2700
          %v2702 = vpop.f32.mrb[0].mxu0
          %2703 = vmatprep.mubr.bf16.mxu0 0
          %2704 = vmatmul.mubr.bf16.gmra.mrb[0].mxu0 %v2619
          %v2705 = vpop.f32.mrb[0].mxu0
          %v2706 = vadd.f32 %v2311, %v2705
          %v2707 = vpop.f32.mrb[0].mxu0
          %v2708 = vpop.f32.mrb[0].mxu0
          %v2709 = vadd.f32 %v2312, %v2708
          %v2710 = vpop.f32.mrb[0].mxu0
          %2711 = vmatprep.mubr.bf16.mxu0 0
          %2712 = vmatmul.mubr.bf16.gmra.mrb[0].mxu0 %v2622
          %v2713 = vpop.f32.mrb[0].mxu0
          %v2714 = vadd.f32 %v2313, %v2713
          %v2715 = vpop.f32.mrb[0].mxu0
          %v2716 = vpop.f32.mrb[0].mxu0
          %v2717 = vadd.f32 %v2314, %v2716
          %v2718 = vpop.f32.mrb[0].mxu0
          %2719 = vmatprep.mubr.bf16.mxu0 0
          %2720 = vmatmul.mubr.bf16.gmra.mrb[0].mxu0 %v2625
          %v2721 = vpop.f32.mrb[0].mxu0
          %v2722 = vadd.f32 %v2315, %v2721
          %v2723 = vpop.f32.mrb[0].mxu0
          %v2724 = vpop.f32.mrb[0].mxu0
          %v2725 = vadd.f32 %v2316, %v2724
          %v2726 = vpop.f32.mrb[0].mxu0
          %2727 = vmatprep.mubr.bf16.mxu0 0
          %2728 = vmatmul.mubr.bf16.gmra.mrb[0].mxu0 %v2628
          %v2729 = vpop.f32.mrb[0].mxu0
          %v2730 = vadd.f32 %v2317, %v2729
          %v2731 = vpop.f32.mrb[0].mxu0
          %v2732 = vpop.f32.mrb[0].mxu0
          %v2733 = vadd.f32 %v2318, %v2732
          %v2734 = vpop.f32.mrb[0].mxu0
          %2735 = vmatprep.mubr.bf16.mxu0 0
          %2736 = vmatmul.mubr.bf16.gmra.mrb[0].mxu0 %v2631
          %v2737 = vpop.f32.mrb[0].mxu0
          %v2738 = vadd.f32 %v2319, %v2737
          %v2739 = vpop.f32.mrb[0].mxu0
          %v2740 = vpop.f32.mrb[0].mxu0
          %v2741 = vadd.f32 %v2320, %v2740
          %v2742 = vpop.f32.mrb[0].mxu0
          %2743 = vmatprep.mubr.bf16.mxu0 0
          %2744 = vmatmul.mubr.bf16.gmra.mrb[0].mxu0 %v2634
          %v2745 = vpop.f32.mrb[0].mxu0
          %v2746 = vadd.f32 %v2321, %v2745
          %v2747 = vpop.f32.mrb[0].mxu0
          %v2748 = vpop.f32.mrb[0].mxu0
          %v2749 = vadd.f32 %v2322, %v2748
          %v2750 = vpop.f32.mrb[0].mxu0
          %2751 = vmatprep.mubr.bf16.mxu0 0
          %2752 = vmatmul.mubr.bf16.gmra.mrb[0].mxu0 %v2637
          %v2753 = vpop.f32.mrb[0].mxu0
          %v2754 = vadd.f32 %v2323, %v2753
          %v2755 = vpop.f32.mrb[0].mxu0
          %v2756 = vpop.f32.mrb[0].mxu0
          %v2757 = vadd.f32 %v2324, %v2756
          %v2758 = vpop.f32.mrb[0].mxu0
          %2759 = vdwg.mxu0
          %v2761 = vsel %vm2006, %v2269, 0
          %v2764 = vsel %vm2006, %v2270, 0
          %v2767 = vsel %vm2006, %v2271, 0
          %v2770 = vsel %vm2006, %v2272, 0
          %v2773 = vsel %vm2006, %v2273, 0
          %v2776 = vsel %vm2006, %v2274, 0
          %v2779 = vsel %vm2006, %v2275, 0
          %v2782 = vsel %vm2006, %v2276, 0
          %v2785 = vsel %vm2006, %v2301, 0
          %v2788 = vsel %vm2006, %v2302, 0
          %v2791 = vsel %vm2006, %v2303, 0
          %v2794 = vsel %vm2006, %v2304, 0
          %v2797 = vsel %vm2006, %v2305, 0
          %v2800 = vsel %vm2006, %v2306, 0
          %v2803 = vsel %vm2006, %v2307, 0
          %v2806 = vsel %vm2006, %v2308, 0
          %2808 = vmatprep.subr.bf16.mxu0 0
          %2809 = vmatpush1.bf16.xpose.msra.mxu0 %v2785
          %2810 = vmatprep.subr.bf16.mxu0 0
          %2811 = vmatpush1.bf16.xpose.msra.mxu0 %v2788
          %2812 = vmatprep.subr.bf16.mxu0 0
          %2813 = vmatpush1.bf16.xpose.msra.mxu0 %v2791
          %2814 = vmatprep.subr.bf16.mxu0 0
          %2815 = vmatpush1.bf16.xpose.msra.mxu0 %v2794
          %2816 = vmatprep.subr.bf16.mxu0 0
          %2817 = vmatpush1.bf16.xpose.msra.mxu0 %v2797
          %2818 = vmatprep.subr.bf16.mxu0 0
          %2819 = vmatpush1.bf16.xpose.msra.mxu0 %v2800
          %2820 = vmatprep.subr.bf16.mxu0 0
          %2821 = vmatpush1.bf16.xpose.msra.mxu0 %v2803
          %2822 = vmatprep.subr.bf16.mxu0 0
          %2823 = vmatpush1.bf16.xpose.msra.mxu0 %v2806
          %2824 = vmatprep.subr.bf16.mxu0 0
          %2825 = vmatpush1.bf16.xpose.msra.mxu0 0
          %2826 = vmatprep.subr.bf16.mxu0 0
          %2827 = vmatpush1.bf16.xpose.msra.mxu0 0
          %2828 = vmatprep.subr.bf16.mxu0 0
          %2829 = vmatpush1.bf16.xpose.msra.mxu0 0
          %2830 = vmatprep.subr.bf16.mxu0 0
          %2831 = vmatpush1.bf16.xpose.msra.mxu0 0
          %2832 = vmatprep.subr.bf16.mxu0 0
          %2833 = vmatpush1.bf16.xpose.msra.mxu0 0
          %2834 = vmatprep.subr.bf16.mxu0 0
          %2835 = vmatpush1.bf16.xpose.msra.mxu0 0
          %2836 = vmatprep.subr.bf16.mxu0 0
          %2837 = vmatpush1.bf16.xpose.msra.mxu0 0
          %2838 = vmatprep.subr.bf16.mxu0 0
          %2839 = vmatpush1.bf16.xpose.msra.mxu0 0
          %2840 = vmatprep.mubr.bf16.mxu0 0
          %2841 = vmatmul.mubr.bf16.gmra.mrb[0].mxu0 %v2761
          %v2842 = vpop.f32.mrb[0].mxu0
          %v2843 = vadd.f32 %v2309, %v2842
          %v2844 = vpop.f32.mrb[0].mxu0
          %v2845 = vpop.f32.mrb[0].mxu0
          %v2846 = vadd.f32 %v2310, %v2845
          %v2847 = vpop.f32.mrb[0].mxu0
          %2848 = vmatprep.mubr.bf16.mxu0 0
          %2849 = vmatmul.mubr.bf16.gmra.mrb[0].mxu0 %v2764
          %v2850 = vpop.f32.mrb[0].mxu0
          %v2851 = vadd.f32 %v2311, %v2850
          %v2852 = vpop.f32.mrb[0].mxu0
          %v2853 = vpop.f32.mrb[0].mxu0
          %v2854 = vadd.f32 %v2312, %v2853
          %v2855 = vpop.f32.mrb[0].mxu0
          %2856 = vmatprep.mubr.bf16.mxu0 0
          %2857 = vmatmul.mubr.bf16.gmra.mrb[0].mxu0 %v2767
          %v2858 = vpop.f32.mrb[0].mxu0
          %v2859 = vadd.f32 %v2313, %v2858
          %v2860 = vpop.f32.mrb[0].mxu0
          %v2861 = vpop.f32.mrb[0].mxu0
          %v2862 = vadd.f32 %v2314, %v2861
          %v2863 = vpop.f32.mrb[0].mxu0
          %2864 = vmatprep.mubr.bf16.mxu0 0
          %2865 = vmatmul.mubr.bf16.gmra.mrb[0].mxu0 %v2770
          %v2866 = vpop.f32.mrb[0].mxu0
          %v2867 = vadd.f32 %v2315, %v2866
          %v2868 = vpop.f32.mrb[0].mxu0
          %v2869 = vpop.f32.mrb[0].mxu0
          %v2870 = vadd.f32 %v2316, %v2869
          %v2871 = vpop.f32.mrb[0].mxu0
          %2872 = vmatprep.mubr.bf16.mxu0 0
          %2873 = vmatmul.mubr.bf16.gmra.mrb[0].mxu0 %v2773
          %v2874 = vpop.f32.mrb[0].mxu0
          %v2875 = vadd.f32 %v2317, %v2874
          %v2876 = vpop.f32.mrb[0].mxu0
          %v2877 = vpop.f32.mrb[0].mxu0
          %v2878 = vadd.f32 %v2318, %v2877
          %v2879 = vpop.f32.mrb[0].mxu0
          %2880 = vmatprep.mubr.bf16.mxu0 0
          %2881 = vmatmul.mubr.bf16.gmra.mrb[0].mxu0 %v2776
          %v2882 = vpop.f32.mrb[0].mxu0
          %v2883 = vadd.f32 %v2319, %v2882
          %v2884 = vpop.f32.mrb[0].mxu0
          %v2885 = vpop.f32.mrb[0].mxu0
          %v2886 = vadd.f32 %v2320, %v2885
          %v2887 = vpop.f32.mrb[0].mxu0
          %2888 = vmatprep.mubr.bf16.mxu0 0
          %2889 = vmatmul.mubr.bf16.gmra.mrb[0].mxu0 %v2779
          %v2890 = vpop.f32.mrb[0].mxu0
          %v2891 = vadd.f32 %v2321, %v2890
          %v2892 = vpop.f32.mrb[0].mxu0
          %v2893 = vpop.f32.mrb[0].mxu0
          %v2894 = vadd.f32 %v2322, %v2893
          %v2895 = vpop.f32.mrb[0].mxu0
          %2896 = vmatprep.mubr.bf16.mxu0 0
          %2897 = vmatmul.mubr.bf16.gmra.mrb[0].mxu0 %v2782
          %v2898 = vpop.f32.mrb[0].mxu0
          %v2899 = vadd.f32 %v2323, %v2898
          %v2900 = vpop.f32.mrb[0].mxu0
          %v2901 = vpop.f32.mrb[0].mxu0
          %v2902 = vadd.f32 %v2324, %v2901
          %v2903 = vpop.f32.mrb[0].mxu0
          %2904 = vdwg.mxu0
          %v2905 = vld [vmem:[#allocation5] sm:$0xff]
          %v2906 = vld [vmem:[#allocation5 + $0x8] sm:$0xff]
          %v2907 = vld [vmem:[#allocation5 + $0x10] sm:$0xff]
          %v2908 = vld [vmem:[#allocation5 + $0x18] sm:$0xff]
          %v2909 = vld [vmem:[#allocation5 + $0x20] sm:$0xff]
          %v2910 = vld [vmem:[#allocation5 + $0x28] sm:$0xff]
          %v2911 = vld [vmem:[#allocation5 + $0x30] sm:$0xff]
          %v2912 = vld [vmem:[#allocation5 + $0x38] sm:$0xff]
          %v2913 = vld [vmem:[#allocation5 + $0x40] sm:$0xff]
          %v2914 = vld [vmem:[#allocation5 + $0x48] sm:$0xff]
          %v2915 = vld [vmem:[#allocation5 + $0x50] sm:$0xff]
          %v2916 = vld [vmem:[#allocation5 + $0x58] sm:$0xff]
          %v2917 = vld [vmem:[#allocation5 + $0x60] sm:$0xff]
          %v2918 = vld [vmem:[#allocation5 + $0x68] sm:$0xff]
          %v2919 = vld [vmem:[#allocation5 + $0x70] sm:$0xff]
          %v2920 = vld [vmem:[#allocation5 + $0x78] sm:$0xff]
          %v2921 = vld [vmem:[#allocation5 + $0x80] sm:$0xff]
          %v2922 = vld [vmem:[#allocation5 + $0x88] sm:$0xff]
          %v2923 = vld [vmem:[#allocation5 + $0x90] sm:$0xff]
          %v2924 = vld [vmem:[#allocation5 + $0x98] sm:$0xff]
          %v2925 = vld [vmem:[#allocation5 + $0xa0] sm:$0xff]
          %v2926 = vld [vmem:[#allocation5 + $0xa8] sm:$0xff]
          %v2927 = vld [vmem:[#allocation5 + $0xb0] sm:$0xff]
          %v2928 = vld [vmem:[#allocation5 + $0xb8] sm:$0xff]
          %v2929 = vld [vmem:[#allocation5 + $0xc0] sm:$0xff]
          %v2930 = vld [vmem:[#allocation5 + $0xc8] sm:$0xff]
          %v2931 = vld [vmem:[#allocation5 + $0xd0] sm:$0xff]
          %v2932 = vld [vmem:[#allocation5 + $0xd8] sm:$0xff]
          %v2933 = vld [vmem:[#allocation5 + $0xe0] sm:$0xff]
          %v2934 = vld [vmem:[#allocation5 + $0xe8] sm:$0xff]
          %v2935 = vld [vmem:[#allocation5 + $0xf0] sm:$0xff]
          %v2936 = vld [vmem:[#allocation5 + $0xf8] sm:$0xff]
          %v2937 = vld [vmem:[#allocation5 + $0x100] sm:$0xff]
          %v2938 = vld [vmem:[#allocation5 + $0x108] sm:$0xff]
          %v2939 = vld [vmem:[#allocation5 + $0x110] sm:$0xff]
          %v2940 = vld [vmem:[#allocation5 + $0x118] sm:$0xff]
          %v2941 = vld [vmem:[#allocation5 + $0x120] sm:$0xff]
          %v2942 = vld [vmem:[#allocation5 + $0x128] sm:$0xff]
          %v2943 = vld [vmem:[#allocation5 + $0x130] sm:$0xff]
          %v2944 = vld [vmem:[#allocation5 + $0x138] sm:$0xff]
          %v2945 = vld [vmem:[#allocation5 + $0x140] sm:$0xff]
          %v2946 = vld [vmem:[#allocation5 + $0x148] sm:$0xff]
          %v2947 = vld [vmem:[#allocation5 + $0x150] sm:$0xff]
          %v2948 = vld [vmem:[#allocation5 + $0x158] sm:$0xff]
          %v2949 = vld [vmem:[#allocation5 + $0x160] sm:$0xff]
          %v2950 = vld [vmem:[#allocation5 + $0x168] sm:$0xff]
          %v2951 = vld [vmem:[#allocation5 + $0x170] sm:$0xff]
          %v2952 = vld [vmem:[#allocation5 + $0x178] sm:$0xff]
          %v2953 = vld [vmem:[#allocation5 + $0x180] sm:$0xff]
          %v2954 = vld [vmem:[#allocation5 + $0x188] sm:$0xff]
          %v2955 = vld [vmem:[#allocation5 + $0x190] sm:$0xff]
          %v2956 = vld [vmem:[#allocation5 + $0x198] sm:$0xff]
          %v2957 = vld [vmem:[#allocation5 + $0x1a0] sm:$0xff]
          %v2958 = vld [vmem:[#allocation5 + $0x1a8] sm:$0xff]
          %v2959 = vld [vmem:[#allocation5 + $0x1b0] sm:$0xff]
          %v2960 = vld [vmem:[#allocation5 + $0x1b8] sm:$0xff]
          %v2961 = vld [vmem:[#allocation5 + $0x1c0] sm:$0xff]
          %v2962 = vld [vmem:[#allocation5 + $0x1c8] sm:$0xff]
          %v2963 = vld [vmem:[#allocation5 + $0x1d0] sm:$0xff]
          %v2964 = vld [vmem:[#allocation5 + $0x1d8] sm:$0xff]
          %v2965 = vld [vmem:[#allocation5 + $0x1e0] sm:$0xff]
          %v2966 = vld [vmem:[#allocation5 + $0x1e8] sm:$0xff]
          %v2967 = vld [vmem:[#allocation5 + $0x1f0] sm:$0xff]
          %v2968 = vld [vmem:[#allocation5 + $0x1f8] sm:$0xff]
          %2969 = vmax.xlane.f32.xlu0 %v2408
          %v2970 = vpop.xlane.xlu0 %2969
          %2971 = vmax.xlane.f32.xlu0 %v2411
          %v2972 = vpop.xlane.xlu0 %2971
          %2973 = vmax.xlane.f32.xlu0 %v2416
          %v2974 = vpop.xlane.xlu0 %2973
          %2975 = vmax.xlane.f32.xlu0 %v2419
          %v2976 = vpop.xlane.xlu0 %2975
          %2977 = vmax.xlane.f32.xlu0 %v2424
          %v2978 = vpop.xlane.xlu0 %2977
          %2979 = vmax.xlane.f32.xlu0 %v2427
          %v2980 = vpop.xlane.xlu0 %2979
          %2981 = vmax.xlane.f32.xlu0 %v2432
          %v2982 = vpop.xlane.xlu0 %2981
          %2983 = vmax.xlane.f32.xlu0 %v2435
          %v2984 = vpop.xlane.xlu0 %2983
          %2985 = vmax.xlane.f32.xlu0 %v2440
          %v2986 = vpop.xlane.xlu0 %2985
          %2987 = vmax.xlane.f32.xlu0 %v2443
          %v2988 = vpop.xlane.xlu0 %2987
          %2989 = vmax.xlane.f32.xlu0 %v2448
          %v2990 = vpop.xlane.xlu0 %2989
          %2991 = vmax.xlane.f32.xlu0 %v2451
          %v2992 = vpop.xlane.xlu0 %2991
          %2993 = vmax.xlane.f32.xlu0 %v2456
          %v2994 = vpop.xlane.xlu0 %2993
          %2995 = vmax.xlane.f32.xlu0 %v2459
          %v2996 = vpop.xlane.xlu0 %2995
          %2997 = vmax.xlane.f32.xlu0 %v2464
          %v2998 = vpop.xlane.xlu0 %2997
          %2999 = vmax.xlane.f32.xlu0 %v2467
          %v3000 = vpop.xlane.xlu0 %2999
          %3001 = vmax.xlane.f32.xlu0 %v2553
          %v3002 = vpop.xlane.xlu0 %3001
          %3003 = vmax.xlane.f32.xlu0 %v2556
          %v3004 = vpop.xlane.xlu0 %3003
          %3005 = vmax.xlane.f32.xlu0 %v2561
          %v3006 = vpop.xlane.xlu0 %3005
          %3007 = vmax.xlane.f32.xlu0 %v2564
          %v3008 = vpop.xlane.xlu0 %3007
          %3009 = vmax.xlane.f32.xlu0 %v2569
          %v3010 = vpop.xlane.xlu0 %3009
          %3011 = vmax.xlane.f32.xlu0 %v2572
          %v3012 = vpop.xlane.xlu0 %3011
          %3013 = vmax.xlane.f32.xlu0 %v2577
          %v3014 = vpop.xlane.xlu0 %3013
          %3015 = vmax.xlane.f32.xlu0 %v2580
          %v3016 = vpop.xlane.xlu0 %3015
          %3017 = vmax.xlane.f32.xlu0 %v2585
          %v3018 = vpop.xlane.xlu0 %3017
          %3019 = vmax.xlane.f32.xlu0 %v2588
          %v3020 = vpop.xlane.xlu0 %3019
          %3021 = vmax.xlane.f32.xlu0 %v2593
          %v3022 = vpop.xlane.xlu0 %3021
          %3023 = vmax.xlane.f32.xlu0 %v2596
          %v3024 = vpop.xlane.xlu0 %3023
          %3025 = vmax.xlane.f32.xlu0 %v2601
          %v3026 = vpop.xlane.xlu0 %3025
          %3027 = vmax.xlane.f32.xlu0 %v2604
          %v3028 = vpop.xlane.xlu0 %3027
          %3029 = vmax.xlane.f32.xlu0 %v2609
          %v3030 = vpop.xlane.xlu0 %3029
          %3031 = vmax.xlane.f32.xlu0 %v2612
          %v3032 = vpop.xlane.xlu0 %3031
          %3033 = vmax.xlane.f32.xlu0 %v2698
          %v3034 = vpop.xlane.xlu0 %3033
          %3035 = vmax.xlane.f32.xlu0 %v2701
          %v3036 = vpop.xlane.xlu0 %3035
          %3037 = vmax.xlane.f32.xlu0 %v2706
          %v3038 = vpop.xlane.xlu0 %3037
          %3039 = vmax.xlane.f32.xlu0 %v2709
          %v3040 = vpop.xlane.xlu0 %3039
          %3041 = vmax.xlane.f32.xlu0 %v2714
          %v3042 = vpop.xlane.xlu0 %3041
          %3043 = vmax.xlane.f32.xlu0 %v2717
          %v3044 = vpop.xlane.xlu0 %3043
          %3045 = vmax.xlane.f32.xlu0 %v2722
          %v3046 = vpop.xlane.xlu0 %3045
          %3047 = vmax.xlane.f32.xlu0 %v2725
          %v3048 = vpop.xlane.xlu0 %3047
          %3049 = vmax.xlane.f32.xlu0 %v2730
          %v3050 = vpop.xlane.xlu0 %3049
          %3051 = vmax.xlane.f32.xlu0 %v2733
          %v3052 = vpop.xlane.xlu0 %3051
          %3053 = vmax.xlane.f32.xlu0 %v2738
          %v3054 = vpop.xlane.xlu0 %3053
          %3055 = vmax.xlane.f32.xlu0 %v2741
          %v3056 = vpop.xlane.xlu0 %3055
          %3057 = vmax.xlane.f32.xlu0 %v2746
          %v3058 = vpop.xlane.xlu0 %3057
          %3059 = vmax.xlane.f32.xlu0 %v2749
          %v3060 = vpop.xlane.xlu0 %3059
          %3061 = vmax.xlane.f32.xlu0 %v2754
          %v3062 = vpop.xlane.xlu0 %3061
          %3063 = vmax.xlane.f32.xlu0 %v2757
          %v3064 = vpop.xlane.xlu0 %3063
          %3065 = vmax.xlane.f32.xlu0 %v2843
          %v3066 = vpop.xlane.xlu0 %3065
          %3067 = vmax.xlane.f32.xlu0 %v2846
          %v3068 = vpop.xlane.xlu0 %3067
          %3069 = vmax.xlane.f32.xlu0 %v2851
          %v3070 = vpop.xlane.xlu0 %3069
          %3071 = vmax.xlane.f32.xlu0 %v2854
          %v3072 = vpop.xlane.xlu0 %3071
          %3073 = vmax.xlane.f32.xlu0 %v2859
          %v3074 = vpop.xlane.xlu0 %3073
          %3075 = vmax.xlane.f32.xlu0 %v2862
          %v3076 = vpop.xlane.xlu0 %3075
          %3077 = vmax.xlane.f32.xlu0 %v2867
          %v3078 = vpop.xlane.xlu0 %3077
          %3079 = vmax.xlane.f32.xlu0 %v2870
          %v3080 = vpop.xlane.xlu0 %3079
          %3081 = vmax.xlane.f32.xlu0 %v2875
          %v3082 = vpop.xlane.xlu0 %3081
          %3083 = vmax.xlane.f32.xlu0 %v2878
          %v3084 = vpop.xlane.xlu0 %3083
          %3085 = vmax.xlane.f32.xlu0 %v2883
          %v3086 = vpop.xlane.xlu0 %3085
          %3087 = vmax.xlane.f32.xlu0 %v2886
          %v3088 = vpop.xlane.xlu0 %3087
          %3089 = vmax.xlane.f32.xlu0 %v2891
          %v3090 = vpop.xlane.xlu0 %3089
          %3091 = vmax.xlane.f32.xlu0 %v2894
          %v3092 = vpop.xlane.xlu0 %3091
          %3093 = vmax.xlane.f32.xlu0 %v2899
          %v3094 = vpop.xlane.xlu0 %3093
          %3095 = vmax.xlane.f32.xlu0 %v2902
          %v3096 = vpop.xlane.xlu0 %3095
          %v3097 = vmax.f32 %v2905, %v2970
          %v3098 = vmax.f32 %v2906, %v2972
          %v3099 = vmax.f32 %v2907, %v2974
          %v3100 = vmax.f32 %v2908, %v2976
          %v3101 = vmax.f32 %v2909, %v2978
          %v3102 = vmax.f32 %v2910, %v2980
          %v3103 = vmax.f32 %v2911, %v2982
          %v3104 = vmax.f32 %v2912, %v2984
          %v3105 = vmax.f32 %v2913, %v2986
          %v3106 = vmax.f32 %v2914, %v2988
          %v3107 = vmax.f32 %v2915, %v2990
          %v3108 = vmax.f32 %v2916, %v2992
          %v3109 = vmax.f32 %v2917, %v2994
          %v3110 = vmax.f32 %v2918, %v2996
          %v3111 = vmax.f32 %v2919, %v2998
          %v3112 = vmax.f32 %v2920, %v3000
          %v3113 = vmax.f32 %v2921, %v3002
          %v3114 = vmax.f32 %v2922, %v3004
          %v3115 = vmax.f32 %v2923, %v3006
          %v3116 = vmax.f32 %v2924, %v3008
          %v3117 = vmax.f32 %v2925, %v3010
          %v3118 = vmax.f32 %v2926, %v3012
          %v3119 = vmax.f32 %v2927, %v3014
          %v3120 = vmax.f32 %v2928, %v3016
          %v3121 = vmax.f32 %v2929, %v3018
          %v3122 = vmax.f32 %v2930, %v3020
          %v3123 = vmax.f32 %v2931, %v3022
          %v3124 = vmax.f32 %v2932, %v3024
          %v3125 = vmax.f32 %v2933, %v3026
          %v3126 = vmax.f32 %v2934, %v3028
          %v3127 = vmax.f32 %v2935, %v3030
          %v3128 = vmax.f32 %v2936, %v3032
          %v3129 = vmax.f32 %v2937, %v3034
          %v3130 = vmax.f32 %v2938, %v3036
          %v3131 = vmax.f32 %v2939, %v3038
          %v3132 = vmax.f32 %v2940, %v3040
          %v3133 = vmax.f32 %v2941, %v3042
          %v3134 = vmax.f32 %v2942, %v3044
          %v3135 = vmax.f32 %v2943, %v3046
          %v3136 = vmax.f32 %v2944, %v3048
          %v3137 = vmax.f32 %v2945, %v3050
          %v3138 = vmax.f32 %v2946, %v3052
          %v3139 = vmax.f32 %v2947, %v3054
          %v3140 = vmax.f32 %v2948, %v3056
          %v3141 = vmax.f32 %v2949, %v3058
          %v3142 = vmax.f32 %v2950, %v3060
          %v3143 = vmax.f32 %v2951, %v3062
          %v3144 = vmax.f32 %v2952, %v3064
          %v3145 = vmax.f32 %v2953, %v3066
          %v3146 = vmax.f32 %v2954, %v3068
          %v3147 = vmax.f32 %v2955, %v3070
          %v3148 = vmax.f32 %v2956, %v3072
          %v3149 = vmax.f32 %v2957, %v3074
          %v3150 = vmax.f32 %v2958, %v3076
          %v3151 = vmax.f32 %v2959, %v3078
          %v3152 = vmax.f32 %v2960, %v3080
          %v3153 = vmax.f32 %v2961, %v3082
          %v3154 = vmax.f32 %v2962, %v3084
          %v3155 = vmax.f32 %v2963, %v3086
          %v3156 = vmax.f32 %v2964, %v3088
          %v3157 = vmax.f32 %v2965, %v3090
          %v3158 = vmax.f32 %v2966, %v3092
          %v3159 = vmax.f32 %v2967, %v3094
          %v3160 = vmax.f32 %v2968, %v3096
          %v3161 = vsub.f32 %v2905, %v3097
          %v3162 = vsub.f32 %v2906, %v3098
          %v3163 = vsub.f32 %v2907, %v3099
          %v3164 = vsub.f32 %v2908, %v3100
          %v3165 = vsub.f32 %v2909, %v3101
          %v3166 = vsub.f32 %v2910, %v3102
          %v3167 = vsub.f32 %v2911, %v3103
          %v3168 = vsub.f32 %v2912, %v3104
          %v3169 = vsub.f32 %v2913, %v3105
          %v3170 = vsub.f32 %v2914, %v3106
          %v3171 = vsub.f32 %v2915, %v3107
          %v3172 = vsub.f32 %v2916, %v3108
          %v3173 = vsub.f32 %v2917, %v3109
          %v3174 = vsub.f32 %v2918, %v3110
          %v3175 = vsub.f32 %v2919, %v3111
          %v3176 = vsub.f32 %v2920, %v3112
          %v3177 = vsub.f32 %v2921, %v3113
          %v3178 = vsub.f32 %v2922, %v3114
          %v3179 = vsub.f32 %v2923, %v3115
          %v3180 = vsub.f32 %v2924, %v3116
          %v3181 = vsub.f32 %v2925, %v3117
          %v3182 = vsub.f32 %v2926, %v3118
          %v3183 = vsub.f32 %v2927, %v3119
          %v3184 = vsub.f32 %v2928, %v3120
          %v3185 = vsub.f32 %v2929, %v3121
          %v3186 = vsub.f32 %v2930, %v3122
          %v3187 = vsub.f32 %v2931, %v3123
          %v3188 = vsub.f32 %v2932, %v3124
          %v3189 = vsub.f32 %v2933, %v3125
          %v3190 = vsub.f32 %v2934, %v3126
          %v3191 = vsub.f32 %v2935, %v3127
          %v3192 = vsub.f32 %v2936, %v3128
          %v3193 = vsub.f32 %v2937, %v3129
          %v3194 = vsub.f32 %v2938, %v3130
          %v3195 = vsub.f32 %v2939, %v3131
          %v3196 = vsub.f32 %v2940, %v3132
          %v3197 = vsub.f32 %v2941, %v3133
          %v3198 = vsub.f32 %v2942, %v3134
          %v3199 = vsub.f32 %v2943, %v3135
          %v3200 = vsub.f32 %v2944, %v3136
          %v3201 = vsub.f32 %v2945, %v3137
          %v3202 = vsub.f32 %v2946, %v3138
          %v3203 = vsub.f32 %v2947, %v3139
          %v3204 = vsub.f32 %v2948, %v3140
          %v3205 = vsub.f32 %v2949, %v3141
          %v3206 = vsub.f32 %v2950, %v3142
          %v3207 = vsub.f32 %v2951, %v3143
          %v3208 = vsub.f32 %v2952, %v3144
          %v3209 = vsub.f32 %v2953, %v3145
          %v3210 = vsub.f32 %v2954, %v3146
          %v3211 = vsub.f32 %v2955, %v3147
          %v3212 = vsub.f32 %v2956, %v3148
          %v3213 = vsub.f32 %v2957, %v3149
          %v3214 = vsub.f32 %v2958, %v3150
          %v3215 = vsub.f32 %v2959, %v3151
          %v3216 = vsub.f32 %v2960, %v3152
          %v3217 = vsub.f32 %v2961, %v3153
          %v3218 = vsub.f32 %v2962, %v3154
          %v3219 = vsub.f32 %v2963, %v3155
          %v3220 = vsub.f32 %v2964, %v3156
          %v3221 = vsub.f32 %v2965, %v3157
          %v3222 = vsub.f32 %v2966, %v3158
          %v3223 = vsub.f32 %v2967, %v3159
          %v3224 = vsub.f32 %v2968, %v3160
          %v3225 = vmul.f32 %v3161, 1.442695
          %v3226 = vpow.pop %v3225
          %v3227 = vmul.f32 %v3162, 1.442695
          %v3228 = vpow.pop %v3227
          %v3229 = vmul.f32 %v3163, 1.442695
          %v3230 = vpow.pop %v3229
          %v3231 = vmul.f32 %v3164, 1.442695
          %v3232 = vpow.pop %v3231
          %v3233 = vmul.f32 %v3165, 1.442695
          %v3234 = vpow.pop %v3233
          %v3235 = vmul.f32 %v3166, 1.442695
          %v3236 = vpow.pop %v3235
          %v3237 = vmul.f32 %v3167, 1.442695
          %v3238 = vpow.pop %v3237
          %v3239 = vmul.f32 %v3168, 1.442695
          %v3240 = vpow.pop %v3239
          %v3241 = vmul.f32 %v3169, 1.442695
          %v3242 = vpow.pop %v3241
          %v3243 = vmul.f32 %v3170, 1.442695
          %v3244 = vpow.pop %v3243
          %v3245 = vmul.f32 %v3171, 1.442695
          %v3246 = vpow.pop %v3245
          %v3247 = vmul.f32 %v3172, 1.442695
          %v3248 = vpow.pop %v3247
          %v3249 = vmul.f32 %v3173, 1.442695
          %v3250 = vpow.pop %v3249
          %v3251 = vmul.f32 %v3174, 1.442695
          %v3252 = vpow.pop %v3251
          %v3253 = vmul.f32 %v3175, 1.442695
          %v3254 = vpow.pop %v3253
          %v3255 = vmul.f32 %v3176, 1.442695
          %v3256 = vpow.pop %v3255
          %v3257 = vmul.f32 %v3177, 1.442695
          %v3258 = vpow.pop %v3257
          %v3259 = vmul.f32 %v3178, 1.442695
          %v3260 = vpow.pop %v3259
          %v3261 = vmul.f32 %v3179, 1.442695
          %v3262 = vpow.pop %v3261
          %v3263 = vmul.f32 %v3180, 1.442695
          %v3264 = vpow.pop %v3263
          %v3265 = vmul.f32 %v3181, 1.442695
          %v3266 = vpow.pop %v3265
          %v3267 = vmul.f32 %v3182, 1.442695
          %v3268 = vpow.pop %v3267
          %v3269 = vmul.f32 %v3183, 1.442695
          %v3270 = vpow.pop %v3269
          %v3271 = vmul.f32 %v3184, 1.442695
          %v3272 = vpow.pop %v3271
          %v3273 = vmul.f32 %v3185, 1.442695
          %v3274 = vpow.pop %v3273
          %v3275 = vmul.f32 %v3186, 1.442695
          %v3276 = vpow.pop %v3275
          %v3277 = vmul.f32 %v3187, 1.442695
          %v3278 = vpow.pop %v3277
          %v3279 = vmul.f32 %v3188, 1.442695
          %v3280 = vpow.pop %v3279
          %v3281 = vmul.f32 %v3189, 1.442695
          %v3282 = vpow.pop %v3281
          %v3283 = vmul.f32 %v3190, 1.442695
          %v3284 = vpow.pop %v3283
          %v3285 = vmul.f32 %v3191, 1.442695
          %v3286 = vpow.pop %v3285
          %v3287 = vmul.f32 %v3192, 1.442695
          %v3288 = vpow.pop %v3287
          %v3289 = vmul.f32 %v3193, 1.442695
          %v3290 = vpow.pop %v3289
          %v3291 = vmul.f32 %v3194, 1.442695
          %v3292 = vpow.pop %v3291
          %v3293 = vmul.f32 %v3195, 1.442695
          %v3294 = vpow.pop %v3293
          %v3295 = vmul.f32 %v3196, 1.442695
          %v3296 = vpow.pop %v3295
          %v3297 = vmul.f32 %v3197, 1.442695
          %v3298 = vpow.pop %v3297
          %v3299 = vmul.f32 %v3198, 1.442695
          %v3300 = vpow.pop %v3299
          %v3301 = vmul.f32 %v3199, 1.442695
          %v3302 = vpow.pop %v3301
          %v3303 = vmul.f32 %v3200, 1.442695
          %v3304 = vpow.pop %v3303
          %v3305 = vmul.f32 %v3201, 1.442695
          %v3306 = vpow.pop %v3305
          %v3307 = vmul.f32 %v3202, 1.442695
          %v3308 = vpow.pop %v3307
          %v3309 = vmul.f32 %v3203, 1.442695
          %v3310 = vpow.pop %v3309
          %v3311 = vmul.f32 %v3204, 1.442695
          %v3312 = vpow.pop %v3311
          %v3313 = vmul.f32 %v3205, 1.442695
          %v3314 = vpow.pop %v3313
          %v3315 = vmul.f32 %v3206, 1.442695
          %v3316 = vpow.pop %v3315
          %v3317 = vmul.f32 %v3207, 1.442695
          %v3318 = vpow.pop %v3317
          %v3319 = vmul.f32 %v3208, 1.442695
          %v3320 = vpow.pop %v3319
          %v3321 = vmul.f32 %v3209, 1.442695
          %v3322 = vpow.pop %v3321
          %v3323 = vmul.f32 %v3210, 1.442695
          %v3324 = vpow.pop %v3323
          %v3325 = vmul.f32 %v3211, 1.442695
          %v3326 = vpow.pop %v3325
          %v3327 = vmul.f32 %v3212, 1.442695
          %v3328 = vpow.pop %v3327
          %v3329 = vmul.f32 %v3213, 1.442695
          %v3330 = vpow.pop %v3329
          %v3331 = vmul.f32 %v3214, 1.442695
          %v3332 = vpow.pop %v3331
          %v3333 = vmul.f32 %v3215, 1.442695
          %v3334 = vpow.pop %v3333
          %v3335 = vmul.f32 %v3216, 1.442695
          %v3336 = vpow.pop %v3335
          %v3337 = vmul.f32 %v3217, 1.442695
          %v3338 = vpow.pop %v3337
          %v3339 = vmul.f32 %v3218, 1.442695
          %v3340 = vpow.pop %v3339
          %v3341 = vmul.f32 %v3219, 1.442695
          %v3342 = vpow.pop %v3341
          %v3343 = vmul.f32 %v3220, 1.442695
          %v3344 = vpow.pop %v3343
          %v3345 = vmul.f32 %v3221, 1.442695
          %v3346 = vpow.pop %v3345
          %v3347 = vmul.f32 %v3222, 1.442695
          %v3348 = vpow.pop %v3347
          %v3349 = vmul.f32 %v3223, 1.442695
          %v3350 = vpow.pop %v3349
          %v3351 = vmul.f32 %v3224, 1.442695
          %v3352 = vpow.pop %v3351
          %3354 = vset.pattern.permute.xlu0 0
          %3355 = vperm.xlu0 %3354, %v3097
          %v3356 = vpop.permute.xlu0 %3355
          %3359 = vset.pattern.permute.xlu0 0
          %3360 = vperm.xlu0 %3359, %v3098
          %v3361 = vpop.permute.xlu0 %3360
          %3364 = vset.pattern.permute.xlu0 0
          %3365 = vperm.xlu0 %3364, %v3099
          %v3366 = vpop.permute.xlu0 %3365
          %3369 = vset.pattern.permute.xlu0 0
          %3370 = vperm.xlu0 %3369, %v3100
          %v3371 = vpop.permute.xlu0 %3370
          %3374 = vset.pattern.permute.xlu0 0
          %3375 = vperm.xlu0 %3374, %v3101
          %v3376 = vpop.permute.xlu0 %3375
          %3379 = vset.pattern.permute.xlu0 0
          %3380 = vperm.xlu0 %3379, %v3102
          %v3381 = vpop.permute.xlu0 %3380
          %3384 = vset.pattern.permute.xlu0 0
          %3385 = vperm.xlu0 %3384, %v3103
          %v3386 = vpop.permute.xlu0 %3385
          %3389 = vset.pattern.permute.xlu0 0
          %3390 = vperm.xlu0 %3389, %v3104
          %v3391 = vpop.permute.xlu0 %3390
          %3394 = vset.pattern.permute.xlu0 0
          %3395 = vperm.xlu0 %3394, %v3105
          %v3396 = vpop.permute.xlu0 %3395
          %3399 = vset.pattern.permute.xlu0 0
          %3400 = vperm.xlu0 %3399, %v3106
          %v3401 = vpop.permute.xlu0 %3400
          %3404 = vset.pattern.permute.xlu0 0
          %3405 = vperm.xlu0 %3404, %v3107
          %v3406 = vpop.permute.xlu0 %3405
          %3409 = vset.pattern.permute.xlu0 0
          %3410 = vperm.xlu0 %3409, %v3108
          %v3411 = vpop.permute.xlu0 %3410
          %3414 = vset.pattern.permute.xlu0 0
          %3415 = vperm.xlu0 %3414, %v3109
          %v3416 = vpop.permute.xlu0 %3415
          %3419 = vset.pattern.permute.xlu0 0
          %3420 = vperm.xlu0 %3419, %v3110
          %v3421 = vpop.permute.xlu0 %3420
          %3424 = vset.pattern.permute.xlu0 0
          %3425 = vperm.xlu0 %3424, %v3111
          %v3426 = vpop.permute.xlu0 %3425
          %3429 = vset.pattern.permute.xlu0 0
          %3430 = vperm.xlu0 %3429, %v3112
          %v3431 = vpop.permute.xlu0 %3430
          %3434 = vset.pattern.permute.xlu0 0
          %3435 = vperm.xlu0 %3434, %v3113
          %v3436 = vpop.permute.xlu0 %3435
          %3439 = vset.pattern.permute.xlu0 0
          %3440 = vperm.xlu0 %3439, %v3114
          %v3441 = vpop.permute.xlu0 %3440
          %3444 = vset.pattern.permute.xlu0 0
          %3445 = vperm.xlu0 %3444, %v3115
          %v3446 = vpop.permute.xlu0 %3445
          %3449 = vset.pattern.permute.xlu0 0
          %3450 = vperm.xlu0 %3449, %v3116
          %v3451 = vpop.permute.xlu0 %3450
          %3454 = vset.pattern.permute.xlu0 0
          %3455 = vperm.xlu0 %3454, %v3117
          %v3456 = vpop.permute.xlu0 %3455
          %3459 = vset.pattern.permute.xlu0 0
          %3460 = vperm.xlu0 %3459, %v3118
          %v3461 = vpop.permute.xlu0 %3460
          %3464 = vset.pattern.permute.xlu0 0
          %3465 = vperm.xlu0 %3464, %v3119
          %v3466 = vpop.permute.xlu0 %3465
          %3469 = vset.pattern.permute.xlu0 0
          %3470 = vperm.xlu0 %3469, %v3120
          %v3471 = vpop.permute.xlu0 %3470
          %3474 = vset.pattern.permute.xlu0 0
          %3475 = vperm.xlu0 %3474, %v3121
          %v3476 = vpop.permute.xlu0 %3475
          %3479 = vset.pattern.permute.xlu0 0
          %3480 = vperm.xlu0 %3479, %v3122
          %v3481 = vpop.permute.xlu0 %3480
          %3484 = vset.pattern.permute.xlu0 0
          %3485 = vperm.xlu0 %3484, %v3123
          %v3486 = vpop.permute.xlu0 %3485
          %3489 = vset.pattern.permute.xlu0 0
          %3490 = vperm.xlu0 %3489, %v3124
          %v3491 = vpop.permute.xlu0 %3490
          %3494 = vset.pattern.permute.xlu0 0
          %3495 = vperm.xlu0 %3494, %v3125
          %v3496 = vpop.permute.xlu0 %3495
          %3499 = vset.pattern.permute.xlu0 0
          %3500 = vperm.xlu0 %3499, %v3126
          %v3501 = vpop.permute.xlu0 %3500
          %3504 = vset.pattern.permute.xlu0 0
          %3505 = vperm.xlu0 %3504, %v3127
          %v3506 = vpop.permute.xlu0 %3505
          %3509 = vset.pattern.permute.xlu0 0
          %3510 = vperm.xlu0 %3509, %v3128
          %v3511 = vpop.permute.xlu0 %3510
          %3514 = vset.pattern.permute.xlu0 0
          %3515 = vperm.xlu0 %3514, %v3129
          %v3516 = vpop.permute.xlu0 %3515
          %3519 = vset.pattern.permute.xlu0 0
          %3520 = vperm.xlu0 %3519, %v3130
          %v3521 = vpop.permute.xlu0 %3520
          %3524 = vset.pattern.permute.xlu0 0
          %3525 = vperm.xlu0 %3524, %v3131
          %v3526 = vpop.permute.xlu0 %3525
          %3529 = vset.pattern.permute.xlu0 0
          %3530 = vperm.xlu0 %3529, %v3132
          %v3531 = vpop.permute.xlu0 %3530
          %3534 = vset.pattern.permute.xlu0 0
          %3535 = vperm.xlu0 %3534, %v3133
          %v3536 = vpop.permute.xlu0 %3535
          %3539 = vset.pattern.permute.xlu0 0
          %3540 = vperm.xlu0 %3539, %v3134
          %v3541 = vpop.permute.xlu0 %3540
          %3544 = vset.pattern.permute.xlu0 0
          %3545 = vperm.xlu0 %3544, %v3135
          %v3546 = vpop.permute.xlu0 %3545
          %3549 = vset.pattern.permute.xlu0 0
          %3550 = vperm.xlu0 %3549, %v3136
          %v3551 = vpop.permute.xlu0 %3550
          %3554 = vset.pattern.permute.xlu0 0
          %3555 = vperm.xlu0 %3554, %v3137
          %v3556 = vpop.permute.xlu0 %3555
          %3559 = vset.pattern.permute.xlu0 0
          %3560 = vperm.xlu0 %3559, %v3138
          %v3561 = vpop.permute.xlu0 %3560
          %3564 = vset.pattern.permute.xlu0 0
          %3565 = vperm.xlu0 %3564, %v3139
          %v3566 = vpop.permute.xlu0 %3565
          %3569 = vset.pattern.permute.xlu0 0
          %3570 = vperm.xlu0 %3569, %v3140
          %v3571 = vpop.permute.xlu0 %3570
          %3574 = vset.pattern.permute.xlu0 0
          %3575 = vperm.xlu0 %3574, %v3141
          %v3576 = vpop.permute.xlu0 %3575
          %3579 = vset.pattern.permute.xlu0 0
          %3580 = vperm.xlu0 %3579, %v3142
          %v3581 = vpop.permute.xlu0 %3580
          %3584 = vset.pattern.permute.xlu0 0
          %3585 = vperm.xlu0 %3584, %v3143
          %v3586 = vpop.permute.xlu0 %3585
          %3589 = vset.pattern.permute.xlu0 0
          %3590 = vperm.xlu0 %3589, %v3144
          %v3591 = vpop.permute.xlu0 %3590
          %3594 = vset.pattern.permute.xlu0 0
          %3595 = vperm.xlu0 %3594, %v3145
          %v3596 = vpop.permute.xlu0 %3595
          %3599 = vset.pattern.permute.xlu0 0
          %3600 = vperm.xlu0 %3599, %v3146
          %v3601 = vpop.permute.xlu0 %3600
          %3604 = vset.pattern.permute.xlu0 0
          %3605 = vperm.xlu0 %3604, %v3147
          %v3606 = vpop.permute.xlu0 %3605
          %3609 = vset.pattern.permute.xlu0 0
          %3610 = vperm.xlu0 %3609, %v3148
          %v3611 = vpop.permute.xlu0 %3610
          %3614 = vset.pattern.permute.xlu0 0
          %3615 = vperm.xlu0 %3614, %v3149
          %v3616 = vpop.permute.xlu0 %3615
          %3619 = vset.pattern.permute.xlu0 0
          %3620 = vperm.xlu0 %3619, %v3150
          %v3621 = vpop.permute.xlu0 %3620
          %3624 = vset.pattern.permute.xlu0 0
          %3625 = vperm.xlu0 %3624, %v3151
          %v3626 = vpop.permute.xlu0 %3625
          %3629 = vset.pattern.permute.xlu0 0
          %3630 = vperm.xlu0 %3629, %v3152
          %v3631 = vpop.permute.xlu0 %3630
          %3634 = vset.pattern.permute.xlu0 0
          %3635 = vperm.xlu0 %3634, %v3153
          %v3636 = vpop.permute.xlu0 %3635
          %3639 = vset.pattern.permute.xlu0 0
          %3640 = vperm.xlu0 %3639, %v3154
          %v3641 = vpop.permute.xlu0 %3640
          %3644 = vset.pattern.permute.xlu0 0
          %3645 = vperm.xlu0 %3644, %v3155
          %v3646 = vpop.permute.xlu0 %3645
          %3649 = vset.pattern.permute.xlu0 0
          %3650 = vperm.xlu0 %3649, %v3156
          %v3651 = vpop.permute.xlu0 %3650
          %3654 = vset.pattern.permute.xlu0 0
          %3655 = vperm.xlu0 %3654, %v3157
          %v3656 = vpop.permute.xlu0 %3655
          %3659 = vset.pattern.permute.xlu0 0
          %3660 = vperm.xlu0 %3659, %v3158
          %v3661 = vpop.permute.xlu0 %3660
          %3664 = vset.pattern.permute.xlu0 0
          %3665 = vperm.xlu0 %3664, %v3159
          %v3666 = vpop.permute.xlu0 %3665
          %3669 = vset.pattern.permute.xlu0 0
          %3670 = vperm.xlu0 %3669, %v3160
          %v3671 = vpop.permute.xlu0 %3670
          %v3673 = vsub.f32 %v2408, %v3356
          %v3674 = vsub.f32 %v2411, %v3361
          %v3675 = vsub.f32 %v2416, %v3366
          %v3676 = vsub.f32 %v2419, %v3371
          %v3677 = vsub.f32 %v2424, %v3376
          %v3678 = vsub.f32 %v2427, %v3381
          %v3679 = vsub.f32 %v2432, %v3386
          %v3680 = vsub.f32 %v2435, %v3391
          %v3681 = vsub.f32 %v2440, %v3396
          %v3682 = vsub.f32 %v2443, %v3401
          %v3683 = vsub.f32 %v2448, %v3406
          %v3684 = vsub.f32 %v2451, %v3411
          %v3685 = vsub.f32 %v2456, %v3416
          %v3686 = vsub.f32 %v2459, %v3421
          %v3687 = vsub.f32 %v2464, %v3426
          %v3688 = vsub.f32 %v2467, %v3431
          %v3689 = vsub.f32 %v2553, %v3436
          %v3690 = vsub.f32 %v2556, %v3441
          %v3691 = vsub.f32 %v2561, %v3446
          %v3692 = vsub.f32 %v2564, %v3451
          %v3693 = vsub.f32 %v2569, %v3456
          %v3694 = vsub.f32 %v2572, %v3461
          %v3695 = vsub.f32 %v2577, %v3466
          %v3696 = vsub.f32 %v2580, %v3471
          %v3697 = vsub.f32 %v2585, %v3476
          %v3698 = vsub.f32 %v2588, %v3481
          %v3699 = vsub.f32 %v2593, %v3486
          %v3700 = vsub.f32 %v2596, %v3491
          %v3701 = vsub.f32 %v2601, %v3496
          %v3702 = vsub.f32 %v2604, %v3501
          %v3703 = vsub.f32 %v2609, %v3506
          %v3704 = vsub.f32 %v2612, %v3511
          %v3705 = vsub.f32 %v2698, %v3516
          %v3706 = vsub.f32 %v2701, %v3521
          %v3707 = vsub.f32 %v2706, %v3526
          %v3708 = vsub.f32 %v2709, %v3531
          %v3709 = vsub.f32 %v2714, %v3536
          %v3710 = vsub.f32 %v2717, %v3541
          %v3711 = vsub.f32 %v2722, %v3546
          %v3712 = vsub.f32 %v2725, %v3551
          %v3713 = vsub.f32 %v2730, %v3556
          %v3714 = vsub.f32 %v2733, %v3561
          %v3715 = vsub.f32 %v2738, %v3566
          %v3716 = vsub.f32 %v2741, %v3571
          %v3717 = vsub.f32 %v2746, %v3576
          %v3718 = vsub.f32 %v2749, %v3581
          %v3719 = vsub.f32 %v2754, %v3586
          %v3720 = vsub.f32 %v2757, %v3591
          %v3721 = vsub.f32 %v2843, %v3596
          %v3722 = vsub.f32 %v2846, %v3601
          %v3723 = vsub.f32 %v2851, %v3606
          %v3724 = vsub.f32 %v2854, %v3611
          %v3725 = vsub.f32 %v2859, %v3616
          %v3726 = vsub.f32 %v2862, %v3621
          %v3727 = vsub.f32 %v2867, %v3626
          %v3728 = vsub.f32 %v2870, %v3631
          %v3729 = vsub.f32 %v2875, %v3636
          %v3730 = vsub.f32 %v2878, %v3641
          %v3731 = vsub.f32 %v2883, %v3646
          %v3732 = vsub.f32 %v2886, %v3651
          %v3733 = vsub.f32 %v2891, %v3656
          %v3734 = vsub.f32 %v2894, %v3661
          %v3735 = vsub.f32 %v2899, %v3666
          %v3736 = vsub.f32 %v2902, %v3671
          %v3737 = vmul.f32 %v3673, 1.442695
          %v3738 = vpow.pop %v3737
          %v3739 = vmul.f32 %v3674, 1.442695
          %v3740 = vpow.pop %v3739
          %v3741 = vmul.f32 %v3675, 1.442695
          %v3742 = vpow.pop %v3741
          %v3743 = vmul.f32 %v3676, 1.442695
          %v3744 = vpow.pop %v3743
          %v3745 = vmul.f32 %v3677, 1.442695
          %v3746 = vpow.pop %v3745
          %v3747 = vmul.f32 %v3678, 1.442695
          %v3748 = vpow.pop %v3747
          %v3749 = vmul.f32 %v3679, 1.442695
          %v3750 = vpow.pop %v3749
          %v3751 = vmul.f32 %v3680, 1.442695
          %v3752 = vpow.pop %v3751
          %v3753 = vmul.f32 %v3681, 1.442695
          %v3754 = vpow.pop %v3753
          %v3755 = vmul.f32 %v3682, 1.442695
          %v3756 = vpow.pop %v3755
          %v3757 = vmul.f32 %v3683, 1.442695
          %v3758 = vpow.pop %v3757
          %v3759 = vmul.f32 %v3684, 1.442695
          %v3760 = vpow.pop %v3759
          %v3761 = vmul.f32 %v3685, 1.442695
          %v3762 = vpow.pop %v3761
          %v3763 = vmul.f32 %v3686, 1.442695
          %v3764 = vpow.pop %v3763
          %v3765 = vmul.f32 %v3687, 1.442695
          %v3766 = vpow.pop %v3765
          %v3767 = vmul.f32 %v3688, 1.442695
          %v3768 = vpow.pop %v3767
          %v3769 = vmul.f32 %v3689, 1.442695
          %v3770 = vpow.pop %v3769
          %v3771 = vmul.f32 %v3690, 1.442695
          %v3772 = vpow.pop %v3771
          %v3773 = vmul.f32 %v3691, 1.442695
          %v3774 = vpow.pop %v3773
          %v3775 = vmul.f32 %v3692, 1.442695
          %v3776 = vpow.pop %v3775
          %v3777 = vmul.f32 %v3693, 1.442695
          %v3778 = vpow.pop %v3777
          %v3779 = vmul.f32 %v3694, 1.442695
          %v3780 = vpow.pop %v3779
          %v3781 = vmul.f32 %v3695, 1.442695
          %v3782 = vpow.pop %v3781
          %v3783 = vmul.f32 %v3696, 1.442695
          %v3784 = vpow.pop %v3783
          %v3785 = vmul.f32 %v3697, 1.442695
          %v3786 = vpow.pop %v3785
          %v3787 = vmul.f32 %v3698, 1.442695
          %v3788 = vpow.pop %v3787
          %v3789 = vmul.f32 %v3699, 1.442695
          %v3790 = vpow.pop %v3789
          %v3791 = vmul.f32 %v3700, 1.442695
          %v3792 = vpow.pop %v3791
          %v3793 = vmul.f32 %v3701, 1.442695
          %v3794 = vpow.pop %v3793
          %v3795 = vmul.f32 %v3702, 1.442695
          %v3796 = vpow.pop %v3795
          %v3797 = vmul.f32 %v3703, 1.442695
          %v3798 = vpow.pop %v3797
          %v3799 = vmul.f32 %v3704, 1.442695
          %v3800 = vpow.pop %v3799
          %v3801 = vmul.f32 %v3705, 1.442695
          %v3802 = vpow.pop %v3801
          %v3803 = vmul.f32 %v3706, 1.442695
          %v3804 = vpow.pop %v3803
          %v3805 = vmul.f32 %v3707, 1.442695
          %v3806 = vpow.pop %v3805
          %v3807 = vmul.f32 %v3708, 1.442695
          %v3808 = vpow.pop %v3807
          %v3809 = vmul.f32 %v3709, 1.442695
          %v3810 = vpow.pop %v3809
          %v3811 = vmul.f32 %v3710, 1.442695
          %v3812 = vpow.pop %v3811
          %v3813 = vmul.f32 %v3711, 1.442695
          %v3814 = vpow.pop %v3813
          %v3815 = vmul.f32 %v3712, 1.442695
          %v3816 = vpow.pop %v3815
          %v3817 = vmul.f32 %v3713, 1.442695
          %v3818 = vpow.pop %v3817
          %v3819 = vmul.f32 %v3714, 1.442695
          %v3820 = vpow.pop %v3819
          %v3821 = vmul.f32 %v3715, 1.442695
          %v3822 = vpow.pop %v3821
          %v3823 = vmul.f32 %v3716, 1.442695
          %v3824 = vpow.pop %v3823
          %v3825 = vmul.f32 %v3717, 1.442695
          %v3826 = vpow.pop %v3825
          %v3827 = vmul.f32 %v3718, 1.442695
          %v3828 = vpow.pop %v3827
          %v3829 = vmul.f32 %v3719, 1.442695
          %v3830 = vpow.pop %v3829
          %v3831 = vmul.f32 %v3720, 1.442695
          %v3832 = vpow.pop %v3831
          %v3833 = vmul.f32 %v3721, 1.442695
          %v3834 = vpow.pop %v3833
          %v3835 = vmul.f32 %v3722, 1.442695
          %v3836 = vpow.pop %v3835
          %v3837 = vmul.f32 %v3723, 1.442695
          %v3838 = vpow.pop %v3837
          %v3839 = vmul.f32 %v3724, 1.442695
          %v3840 = vpow.pop %v3839
          %v3841 = vmul.f32 %v3725, 1.442695
          %v3842 = vpow.pop %v3841
          %v3843 = vmul.f32 %v3726, 1.442695
          %v3844 = vpow.pop %v3843
          %v3845 = vmul.f32 %v3727, 1.442695
          %v3846 = vpow.pop %v3845
          %v3847 = vmul.f32 %v3728, 1.442695
          %v3848 = vpow.pop %v3847
          %v3849 = vmul.f32 %v3729, 1.442695
          %v3850 = vpow.pop %v3849
          %v3851 = vmul.f32 %v3730, 1.442695
          %v3852 = vpow.pop %v3851
          %v3853 = vmul.f32 %v3731, 1.442695
          %v3854 = vpow.pop %v3853
          %v3855 = vmul.f32 %v3732, 1.442695
          %v3856 = vpow.pop %v3855
          %v3857 = vmul.f32 %v3733, 1.442695
          %v3858 = vpow.pop %v3857
          %v3859 = vmul.f32 %v3734, 1.442695
          %v3860 = vpow.pop %v3859
          %v3861 = vmul.f32 %v3735, 1.442695
          %v3862 = vpow.pop %v3861
          %v3863 = vmul.f32 %v3736, 1.442695
          %v3864 = vpow.pop %v3863
          %v3865 = vld [vmem:[#allocation6] sm:$0xff]
          %v3866 = vld [vmem:[#allocation6 + $0x8] sm:$0xff]
          %v3867 = vld [vmem:[#allocation6 + $0x10] sm:$0xff]
          %v3868 = vld [vmem:[#allocation6 + $0x18] sm:$0xff]
          %v3869 = vld [vmem:[#allocation6 + $0x20] sm:$0xff]
          %v3870 = vld [vmem:[#allocation6 + $0x28] sm:$0xff]
          %v3871 = vld [vmem:[#allocation6 + $0x30] sm:$0xff]
          %v3872 = vld [vmem:[#allocation6 + $0x38] sm:$0xff]
          %v3873 = vld [vmem:[#allocation6 + $0x40] sm:$0xff]
          %v3874 = vld [vmem:[#allocation6 + $0x48] sm:$0xff]
          %v3875 = vld [vmem:[#allocation6 + $0x50] sm:$0xff]
          %v3876 = vld [vmem:[#allocation6 + $0x58] sm:$0xff]
          %v3877 = vld [vmem:[#allocation6 + $0x60] sm:$0xff]
          %v3878 = vld [vmem:[#allocation6 + $0x68] sm:$0xff]
          %v3879 = vld [vmem:[#allocation6 + $0x70] sm:$0xff]
          %v3880 = vld [vmem:[#allocation6 + $0x78] sm:$0xff]
          %v3881 = vld [vmem:[#allocation6 + $0x80] sm:$0xff]
          %v3882 = vld [vmem:[#allocation6 + $0x88] sm:$0xff]
          %v3883 = vld [vmem:[#allocation6 + $0x90] sm:$0xff]
          %v3884 = vld [vmem:[#allocation6 + $0x98] sm:$0xff]
          %v3885 = vld [vmem:[#allocation6 + $0xa0] sm:$0xff]
          %v3886 = vld [vmem:[#allocation6 + $0xa8] sm:$0xff]
          %v3887 = vld [vmem:[#allocation6 + $0xb0] sm:$0xff]
          %v3888 = vld [vmem:[#allocation6 + $0xb8] sm:$0xff]
          %v3889 = vld [vmem:[#allocation6 + $0xc0] sm:$0xff]
          %v3890 = vld [vmem:[#allocation6 + $0xc8] sm:$0xff]
          %v3891 = vld [vmem:[#allocation6 + $0xd0] sm:$0xff]
          %v3892 = vld [vmem:[#allocation6 + $0xd8] sm:$0xff]
          %v3893 = vld [vmem:[#allocation6 + $0xe0] sm:$0xff]
          %v3894 = vld [vmem:[#allocation6 + $0xe8] sm:$0xff]
          %v3895 = vld [vmem:[#allocation6 + $0xf0] sm:$0xff]
          %v3896 = vld [vmem:[#allocation6 + $0xf8] sm:$0xff]
          %v3897 = vld [vmem:[#allocation6 + $0x100] sm:$0xff]
          %v3898 = vld [vmem:[#allocation6 + $0x108] sm:$0xff]
          %v3899 = vld [vmem:[#allocation6 + $0x110] sm:$0xff]
          %v3900 = vld [vmem:[#allocation6 + $0x118] sm:$0xff]
          %v3901 = vld [vmem:[#allocation6 + $0x120] sm:$0xff]
          %v3902 = vld [vmem:[#allocation6 + $0x128] sm:$0xff]
          %v3903 = vld [vmem:[#allocation6 + $0x130] sm:$0xff]
          %v3904 = vld [vmem:[#allocation6 + $0x138] sm:$0xff]
          %v3905 = vld [vmem:[#allocation6 + $0x140] sm:$0xff]
          %v3906 = vld [vmem:[#allocation6 + $0x148] sm:$0xff]
          %v3907 = vld [vmem:[#allocation6 + $0x150] sm:$0xff]
          %v3908 = vld [vmem:[#allocation6 + $0x158] sm:$0xff]
          %v3909 = vld [vmem:[#allocation6 + $0x160] sm:$0xff]
          %v3910 = vld [vmem:[#allocation6 + $0x168] sm:$0xff]
          %v3911 = vld [vmem:[#allocation6 + $0x170] sm:$0xff]
          %v3912 = vld [vmem:[#allocation6 + $0x178] sm:$0xff]
          %v3913 = vld [vmem:[#allocation6 + $0x180] sm:$0xff]
          %v3914 = vld [vmem:[#allocation6 + $0x188] sm:$0xff]
          %v3915 = vld [vmem:[#allocation6 + $0x190] sm:$0xff]
          %v3916 = vld [vmem:[#allocation6 + $0x198] sm:$0xff]
          %v3917 = vld [vmem:[#allocation6 + $0x1a0] sm:$0xff]
          %v3918 = vld [vmem:[#allocation6 + $0x1a8] sm:$0xff]
          %v3919 = vld [vmem:[#allocation6 + $0x1b0] sm:$0xff]
          %v3920 = vld [vmem:[#allocation6 + $0x1b8] sm:$0xff]
          %v3921 = vld [vmem:[#allocation6 + $0x1c0] sm:$0xff]
          %v3922 = vld [vmem:[#allocation6 + $0x1c8] sm:$0xff]
          %v3923 = vld [vmem:[#allocation6 + $0x1d0] sm:$0xff]
          %v3924 = vld [vmem:[#allocation6 + $0x1d8] sm:$0xff]
          %v3925 = vld [vmem:[#allocation6 + $0x1e0] sm:$0xff]
          %v3926 = vld [vmem:[#allocation6 + $0x1e8] sm:$0xff]
          %v3927 = vld [vmem:[#allocation6 + $0x1f0] sm:$0xff]
          %v3928 = vld [vmem:[#allocation6 + $0x1f8] sm:$0xff]
          %v3929 = vmul.f32 %v3226, %v3865
          %v3930 = vmul.f32 %v3228, %v3866
          %v3931 = vmul.f32 %v3230, %v3867
          %v3932 = vmul.f32 %v3232, %v3868
          %v3933 = vmul.f32 %v3234, %v3869
          %v3934 = vmul.f32 %v3236, %v3870
          %v3935 = vmul.f32 %v3238, %v3871
          %v3936 = vmul.f32 %v3240, %v3872
          %v3937 = vmul.f32 %v3242, %v3873
          %v3938 = vmul.f32 %v3244, %v3874
          %v3939 = vmul.f32 %v3246, %v3875
          %v3940 = vmul.f32 %v3248, %v3876
          %v3941 = vmul.f32 %v3250, %v3877
          %v3942 = vmul.f32 %v3252, %v3878
          %v3943 = vmul.f32 %v3254, %v3879
          %v3944 = vmul.f32 %v3256, %v3880
          %v3945 = vmul.f32 %v3258, %v3881
          %v3946 = vmul.f32 %v3260, %v3882
          %v3947 = vmul.f32 %v3262, %v3883
          %v3948 = vmul.f32 %v3264, %v3884
          %v3949 = vmul.f32 %v3266, %v3885
          %v3950 = vmul.f32 %v3268, %v3886
          %v3951 = vmul.f32 %v3270, %v3887
          %v3952 = vmul.f32 %v3272, %v3888
          %v3953 = vmul.f32 %v3274, %v3889
          %v3954 = vmul.f32 %v3276, %v3890
          %v3955 = vmul.f32 %v3278, %v3891
          %v3956 = vmul.f32 %v3280, %v3892
          %v3957 = vmul.f32 %v3282, %v3893
          %v3958 = vmul.f32 %v3284, %v3894
          %v3959 = vmul.f32 %v3286, %v3895
          %v3960 = vmul.f32 %v3288, %v3896
          %v3961 = vmul.f32 %v3290, %v3897
          %v3962 = vmul.f32 %v3292, %v3898
          %v3963 = vmul.f32 %v3294, %v3899
          %v3964 = vmul.f32 %v3296, %v3900
          %v3965 = vmul.f32 %v3298, %v3901
          %v3966 = vmul.f32 %v3300, %v3902
          %v3967 = vmul.f32 %v3302, %v3903
          %v3968 = vmul.f32 %v3304, %v3904
          %v3969 = vmul.f32 %v3306, %v3905
          %v3970 = vmul.f32 %v3308, %v3906
          %v3971 = vmul.f32 %v3310, %v3907
          %v3972 = vmul.f32 %v3312, %v3908
          %v3973 = vmul.f32 %v3314, %v3909
          %v3974 = vmul.f32 %v3316, %v3910
          %v3975 = vmul.f32 %v3318, %v3911
          %v3976 = vmul.f32 %v3320, %v3912
          %v3977 = vmul.f32 %v3322, %v3913
          %v3978 = vmul.f32 %v3324, %v3914
          %v3979 = vmul.f32 %v3326, %v3915
          %v3980 = vmul.f32 %v3328, %v3916
          %v3981 = vmul.f32 %v3330, %v3917
          %v3982 = vmul.f32 %v3332, %v3918
          %v3983 = vmul.f32 %v3334, %v3919
          %v3984 = vmul.f32 %v3336, %v3920
          %v3985 = vmul.f32 %v3338, %v3921
          %v3986 = vmul.f32 %v3340, %v3922
          %v3987 = vmul.f32 %v3342, %v3923
          %v3988 = vmul.f32 %v3344, %v3924
          %v3989 = vmul.f32 %v3346, %v3925
          %v3990 = vmul.f32 %v3348, %v3926
          %v3991 = vmul.f32 %v3350, %v3927
          %v3992 = vmul.f32 %v3352, %v3928
          %3993 = vadd.xlane.f32.xlu0 %v3738
          %v3994 = vpop.xlane.xlu0 %3993
          %3995 = vadd.xlane.f32.xlu0 %v3740
          %v3996 = vpop.xlane.xlu0 %3995
          %3997 = vadd.xlane.f32.xlu0 %v3742
          %v3998 = vpop.xlane.xlu0 %3997
          %3999 = vadd.xlane.f32.xlu0 %v3744
          %v4000 = vpop.xlane.xlu0 %3999
          %4001 = vadd.xlane.f32.xlu0 %v3746
          %v4002 = vpop.xlane.xlu0 %4001
          %4003 = vadd.xlane.f32.xlu0 %v3748
          %v4004 = vpop.xlane.xlu0 %4003
          %4005 = vadd.xlane.f32.xlu0 %v3750
          %v4006 = vpop.xlane.xlu0 %4005
          %4007 = vadd.xlane.f32.xlu0 %v3752
          %v4008 = vpop.xlane.xlu0 %4007
          %4009 = vadd.xlane.f32.xlu0 %v3754
          %v4010 = vpop.xlane.xlu0 %4009
          %4011 = vadd.xlane.f32.xlu0 %v3756
          %v4012 = vpop.xlane.xlu0 %4011
          %4013 = vadd.xlane.f32.xlu0 %v3758
          %v4014 = vpop.xlane.xlu0 %4013
          %4015 = vadd.xlane.f32.xlu0 %v3760
          %v4016 = vpop.xlane.xlu0 %4015
          %4017 = vadd.xlane.f32.xlu0 %v3762
          %v4018 = vpop.xlane.xlu0 %4017
          %4019 = vadd.xlane.f32.xlu0 %v3764
          %v4020 = vpop.xlane.xlu0 %4019
          %4021 = vadd.xlane.f32.xlu0 %v3766
          %v4022 = vpop.xlane.xlu0 %4021
          %4023 = vadd.xlane.f32.xlu0 %v3768
          %v4024 = vpop.xlane.xlu0 %4023
          %4025 = vadd.xlane.f32.xlu0 %v3770
          %v4026 = vpop.xlane.xlu0 %4025
          %4027 = vadd.xlane.f32.xlu0 %v3772
          %v4028 = vpop.xlane.xlu0 %4027
          %4029 = vadd.xlane.f32.xlu0 %v3774
          %v4030 = vpop.xlane.xlu0 %4029
          %4031 = vadd.xlane.f32.xlu0 %v3776
          %v4032 = vpop.xlane.xlu0 %4031
          %4033 = vadd.xlane.f32.xlu0 %v3778
          %v4034 = vpop.xlane.xlu0 %4033
          %4035 = vadd.xlane.f32.xlu0 %v3780
          %v4036 = vpop.xlane.xlu0 %4035
          %4037 = vadd.xlane.f32.xlu0 %v3782
          %v4038 = vpop.xlane.xlu0 %4037
          %4039 = vadd.xlane.f32.xlu0 %v3784
          %v4040 = vpop.xlane.xlu0 %4039
          %4041 = vadd.xlane.f32.xlu0 %v3786
          %v4042 = vpop.xlane.xlu0 %4041
          %4043 = vadd.xlane.f32.xlu0 %v3788
          %v4044 = vpop.xlane.xlu0 %4043
          %4045 = vadd.xlane.f32.xlu0 %v3790
          %v4046 = vpop.xlane.xlu0 %4045
          %4047 = vadd.xlane.f32.xlu0 %v3792
          %v4048 = vpop.xlane.xlu0 %4047
          %4049 = vadd.xlane.f32.xlu0 %v3794
          %v4050 = vpop.xlane.xlu0 %4049
          %4051 = vadd.xlane.f32.xlu0 %v3796
          %v4052 = vpop.xlane.xlu0 %4051
          %4053 = vadd.xlane.f32.xlu0 %v3798
          %v4054 = vpop.xlane.xlu0 %4053
          %4055 = vadd.xlane.f32.xlu0 %v3800
          %v4056 = vpop.xlane.xlu0 %4055
          %4057 = vadd.xlane.f32.xlu0 %v3802
          %v4058 = vpop.xlane.xlu0 %4057
          %4059 = vadd.xlane.f32.xlu0 %v3804
          %v4060 = vpop.xlane.xlu0 %4059
          %4061 = vadd.xlane.f32.xlu0 %v3806
          %v4062 = vpop.xlane.xlu0 %4061
          %4063 = vadd.xlane.f32.xlu0 %v3808
          %v4064 = vpop.xlane.xlu0 %4063
          %4065 = vadd.xlane.f32.xlu0 %v3810
          %v4066 = vpop.xlane.xlu0 %4065
          %4067 = vadd.xlane.f32.xlu0 %v3812
          %v4068 = vpop.xlane.xlu0 %4067
          %4069 = vadd.xlane.f32.xlu0 %v3814
          %v4070 = vpop.xlane.xlu0 %4069
          %4071 = vadd.xlane.f32.xlu0 %v3816
          %v4072 = vpop.xlane.xlu0 %4071
          %4073 = vadd.xlane.f32.xlu0 %v3818
          %v4074 = vpop.xlane.xlu0 %4073
          %4075 = vadd.xlane.f32.xlu0 %v3820
          %v4076 = vpop.xlane.xlu0 %4075
          %4077 = vadd.xlane.f32.xlu0 %v3822
          %v4078 = vpop.xlane.xlu0 %4077
          %4079 = vadd.xlane.f32.xlu0 %v3824
          %v4080 = vpop.xlane.xlu0 %4079
          %4081 = vadd.xlane.f32.xlu0 %v3826
          %v4082 = vpop.xlane.xlu0 %4081
          %4083 = vadd.xlane.f32.xlu0 %v3828
          %v4084 = vpop.xlane.xlu0 %4083
          %4085 = vadd.xlane.f32.xlu0 %v3830
          %v4086 = vpop.xlane.xlu0 %4085
          %4087 = vadd.xlane.f32.xlu0 %v3832
          %v4088 = vpop.xlane.xlu0 %4087
          %4089 = vadd.xlane.f32.xlu0 %v3834
          %v4090 = vpop.xlane.xlu0 %4089
          %4091 = vadd.xlane.f32.xlu0 %v3836
          %v4092 = vpop.xlane.xlu0 %4091
          %4093 = vadd.xlane.f32.xlu0 %v3838
          %v4094 = vpop.xlane.xlu0 %4093
          %4095 = vadd.xlane.f32.xlu0 %v3840
          %v4096 = vpop.xlane.xlu0 %4095
          %4097 = vadd.xlane.f32.xlu0 %v3842
          %v4098 = vpop.xlane.xlu0 %4097
          %4099 = vadd.xlane.f32.xlu0 %v3844
          %v4100 = vpop.xlane.xlu0 %4099
          %4101 = vadd.xlane.f32.xlu0 %v3846
          %v4102 = vpop.xlane.xlu0 %4101
          %4103 = vadd.xlane.f32.xlu0 %v3848
          %v4104 = vpop.xlane.xlu0 %4103
          %4105 = vadd.xlane.f32.xlu0 %v3850
          %v4106 = vpop.xlane.xlu0 %4105
          %4107 = vadd.xlane.f32.xlu0 %v3852
          %v4108 = vpop.xlane.xlu0 %4107
          %4109 = vadd.xlane.f32.xlu0 %v3854
          %v4110 = vpop.xlane.xlu0 %4109
          %4111 = vadd.xlane.f32.xlu0 %v3856
          %v4112 = vpop.xlane.xlu0 %4111
          %4113 = vadd.xlane.f32.xlu0 %v3858
          %v4114 = vpop.xlane.xlu0 %4113
          %4115 = vadd.xlane.f32.xlu0 %v3860
          %v4116 = vpop.xlane.xlu0 %4115
          %4117 = vadd.xlane.f32.xlu0 %v3862
          %v4118 = vpop.xlane.xlu0 %4117
          %4119 = vadd.xlane.f32.xlu0 %v3864
          %v4120 = vpop.xlane.xlu0 %4119
          %v4121 = vadd.f32 %v3929, %v3994
          %v4122 = vadd.f32 %v3930, %v3996
          %v4123 = vadd.f32 %v3931, %v3998
          %v4124 = vadd.f32 %v3932, %v4000
          %v4125 = vadd.f32 %v3933, %v4002
          %v4126 = vadd.f32 %v3934, %v4004
          %v4127 = vadd.f32 %v3935, %v4006
          %v4128 = vadd.f32 %v3936, %v4008
          %v4129 = vadd.f32 %v3937, %v4010
          %v4130 = vadd.f32 %v3938, %v4012
          %v4131 = vadd.f32 %v3939, %v4014
          %v4132 = vadd.f32 %v3940, %v4016
          %v4133 = vadd.f32 %v3941, %v4018
          %v4134 = vadd.f32 %v3942, %v4020
          %v4135 = vadd.f32 %v3943, %v4022
          %v4136 = vadd.f32 %v3944, %v4024
          %v4137 = vadd.f32 %v3945, %v4026
          %v4138 = vadd.f32 %v3946, %v4028
          %v4139 = vadd.f32 %v3947, %v4030
          %v4140 = vadd.f32 %v3948, %v4032
          %v4141 = vadd.f32 %v3949, %v4034
          %v4142 = vadd.f32 %v3950, %v4036
          %v4143 = vadd.f32 %v3951, %v4038
          %v4144 = vadd.f32 %v3952, %v4040
          %v4145 = vadd.f32 %v3953, %v4042
          %v4146 = vadd.f32 %v3954, %v4044
          %v4147 = vadd.f32 %v3955, %v4046
          %v4148 = vadd.f32 %v3956, %v4048
          %v4149 = vadd.f32 %v3957, %v4050
          %v4150 = vadd.f32 %v3958, %v4052
          %v4151 = vadd.f32 %v3959, %v4054
          %v4152 = vadd.f32 %v3960, %v4056
          %v4153 = vadd.f32 %v3961, %v4058
          %v4154 = vadd.f32 %v3962, %v4060
          %v4155 = vadd.f32 %v3963, %v4062
          %v4156 = vadd.f32 %v3964, %v4064
          %v4157 = vadd.f32 %v3965, %v4066
          %v4158 = vadd.f32 %v3966, %v4068
          %v4159 = vadd.f32 %v3967, %v4070
          %v4160 = vadd.f32 %v3968, %v4072
          %v4161 = vadd.f32 %v3969, %v4074
          %v4162 = vadd.f32 %v3970, %v4076
          %v4163 = vadd.f32 %v3971, %v4078
          %v4164 = vadd.f32 %v3972, %v4080
          %v4165 = vadd.f32 %v3973, %v4082
          %v4166 = vadd.f32 %v3974, %v4084
          %v4167 = vadd.f32 %v3975, %v4086
          %v4168 = vadd.f32 %v3976, %v4088
          %v4169 = vadd.f32 %v3977, %v4090
          %v4170 = vadd.f32 %v3978, %v4092
          %v4171 = vadd.f32 %v3979, %v4094
          %v4172 = vadd.f32 %v3980, %v4096
          %v4173 = vadd.f32 %v3981, %v4098
          %v4174 = vadd.f32 %v3982, %v4100
          %v4175 = vadd.f32 %v3983, %v4102
          %v4176 = vadd.f32 %v3984, %v4104
          %v4177 = vadd.f32 %v3985, %v4106
          %v4178 = vadd.f32 %v3986, %v4108
          %v4179 = vadd.f32 %v3987, %v4110
          %v4180 = vadd.f32 %v3988, %v4112
          %v4181 = vadd.f32 %v3989, %v4114
          %v4182 = vadd.f32 %v3990, %v4116
          %v4183 = vadd.f32 %v3991, %v4118
          %v4184 = vadd.f32 %v3992, %v4120
          %vm4185 = vcmask 7168
          %4186 = vst.msk [vmem:[#allocation6] sm:$0xff] %vm4185, %v4121
          %4187 = vst.msk [vmem:[#allocation6 + $0x8] sm:$0xff] %vm4185, %v4122
          %4188 = vst.msk [vmem:[#allocation6 + $0x10] sm:$0xff] %vm4185, %v4123
          %4189 = vst.msk [vmem:[#allocation6 + $0x18] sm:$0xff] %vm4185, %v4124
          %4190 = vst.msk [vmem:[#allocation6 + $0x20] sm:$0xff] %vm4185, %v4125
          %4191 = vst.msk [vmem:[#allocation6 + $0x28] sm:$0xff] %vm4185, %v4126
          %4192 = vst.msk [vmem:[#allocation6 + $0x30] sm:$0xff] %vm4185, %v4127
          %4193 = vst.msk [vmem:[#allocation6 + $0x38] sm:$0xff] %vm4185, %v4128
          %4194 = vst.msk [vmem:[#allocation6 + $0x40] sm:$0xff] %vm4185, %v4129
          %4195 = vst.msk [vmem:[#allocation6 + $0x48] sm:$0xff] %vm4185, %v4130
          %4196 = vst.msk [vmem:[#allocation6 + $0x50] sm:$0xff] %vm4185, %v4131
          %4197 = vst.msk [vmem:[#allocation6 + $0x58] sm:$0xff] %vm4185, %v4132
          %4198 = vst.msk [vmem:[#allocation6 + $0x60] sm:$0xff] %vm4185, %v4133
          %4199 = vst.msk [vmem:[#allocation6 + $0x68] sm:$0xff] %vm4185, %v4134
          %4200 = vst.msk [vmem:[#allocation6 + $0x70] sm:$0xff] %vm4185, %v4135
          %4201 = vst.msk [vmem:[#allocation6 + $0x78] sm:$0xff] %vm4185, %v4136
          %4202 = vst.msk [vmem:[#allocation6 + $0x80] sm:$0xff] %vm4185, %v4137
          %4203 = vst.msk [vmem:[#allocation6 + $0x88] sm:$0xff] %vm4185, %v4138
          %4204 = vst.msk [vmem:[#allocation6 + $0x90] sm:$0xff] %vm4185, %v4139
          %4205 = vst.msk [vmem:[#allocation6 + $0x98] sm:$0xff] %vm4185, %v4140
          %4206 = vst.msk [vmem:[#allocation6 + $0xa0] sm:$0xff] %vm4185, %v4141
          %4207 = vst.msk [vmem:[#allocation6 + $0xa8] sm:$0xff] %vm4185, %v4142
          %4208 = vst.msk [vmem:[#allocation6 + $0xb0] sm:$0xff] %vm4185, %v4143
          %4209 = vst.msk [vmem:[#allocation6 + $0xb8] sm:$0xff] %vm4185, %v4144
          %4210 = vst.msk [vmem:[#allocation6 + $0xc0] sm:$0xff] %vm4185, %v4145
          %4211 = vst.msk [vmem:[#allocation6 + $0xc8] sm:$0xff] %vm4185, %v4146
          %4212 = vst.msk [vmem:[#allocation6 + $0xd0] sm:$0xff] %vm4185, %v4147
          %4213 = vst.msk [vmem:[#allocation6 + $0xd8] sm:$0xff] %vm4185, %v4148
          %4214 = vst.msk [vmem:[#allocation6 + $0xe0] sm:$0xff] %vm4185, %v4149
          %4215 = vst.msk [vmem:[#allocation6 + $0xe8] sm:$0xff] %vm4185, %v4150
          %4216 = vst.msk [vmem:[#allocation6 + $0xf0] sm:$0xff] %vm4185, %v4151
          %4217 = vst.msk [vmem:[#allocation6 + $0xf8] sm:$0xff] %vm4185, %v4152
          %4218 = vst.msk [vmem:[#allocation6 + $0x100] sm:$0xff] %vm4185, %v4153
          %4219 = vst.msk [vmem:[#allocation6 + $0x108] sm:$0xff] %vm4185, %v4154
          %4220 = vst.msk [vmem:[#allocation6 + $0x110] sm:$0xff] %vm4185, %v4155
          %4221 = vst.msk [vmem:[#allocation6 + $0x118] sm:$0xff] %vm4185, %v4156
          %4222 = vst.msk [vmem:[#allocation6 + $0x120] sm:$0xff] %vm4185, %v4157
          %4223 = vst.msk [vmem:[#allocation6 + $0x128] sm:$0xff] %vm4185, %v4158
          %4224 = vst.msk [vmem:[#allocation6 + $0x130] sm:$0xff] %vm4185, %v4159
          %4225 = vst.msk [vmem:[#allocation6 + $0x138] sm:$0xff] %vm4185, %v4160
          %4226 = vst.msk [vmem:[#allocation6 + $0x140] sm:$0xff] %vm4185, %v4161
          %4227 = vst.msk [vmem:[#allocation6 + $0x148] sm:$0xff] %vm4185, %v4162
          %4228 = vst.msk [vmem:[#allocation6 + $0x150] sm:$0xff] %vm4185, %v4163
          %4229 = vst.msk [vmem:[#allocation6 + $0x158] sm:$0xff] %vm4185, %v4164
          %4230 = vst.msk [vmem:[#allocation6 + $0x160] sm:$0xff] %vm4185, %v4165
          %4231 = vst.msk [vmem:[#allocation6 + $0x168] sm:$0xff] %vm4185, %v4166
          %4232 = vst.msk [vmem:[#allocation6 + $0x170] sm:$0xff] %vm4185, %v4167
          %4233 = vst.msk [vmem:[#allocation6 + $0x178] sm:$0xff] %vm4185, %v4168
          %4234 = vst.msk [vmem:[#allocation6 + $0x180] sm:$0xff] %vm4185, %v4169
          %4235 = vst.msk [vmem:[#allocation6 + $0x188] sm:$0xff] %vm4185, %v4170
          %4236 = vst.msk [vmem:[#allocation6 + $0x190] sm:$0xff] %vm4185, %v4171
          %4237 = vst.msk [vmem:[#allocation6 + $0x198] sm:$0xff] %vm4185, %v4172
          %4238 = vst.msk [vmem:[#allocation6 + $0x1a0] sm:$0xff] %vm4185, %v4173
          %4239 = vst.msk [vmem:[#allocation6 + $0x1a8] sm:$0xff] %vm4185, %v4174
          %4240 = vst.msk [vmem:[#allocation6 + $0x1b0] sm:$0xff] %vm4185, %v4175
          %4241 = vst.msk [vmem:[#allocation6 + $0x1b8] sm:$0xff] %vm4185, %v4176
          %4242 = vst.msk [vmem:[#allocation6 + $0x1c0] sm:$0xff] %vm4185, %v4177
          %4243 = vst.msk [vmem:[#allocation6 + $0x1c8] sm:$0xff] %vm4185, %v4178
          %4244 = vst.msk [vmem:[#allocation6 + $0x1d0] sm:$0xff] %vm4185, %v4179
          %4245 = vst.msk [vmem:[#allocation6 + $0x1d8] sm:$0xff] %vm4185, %v4180
          %4246 = vst.msk [vmem:[#allocation6 + $0x1e0] sm:$0xff] %vm4185, %v4181
          %4247 = vst.msk [vmem:[#allocation6 + $0x1e8] sm:$0xff] %vm4185, %v4182
          %4248 = vst.msk [vmem:[#allocation6 + $0x1f0] sm:$0xff] %vm4185, %v4183
          %4249 = vst.msk [vmem:[#allocation6 + $0x1f8] sm:$0xff] %vm4185, %v4184
          %v4250 = vld [vmem:[#allocation7] sm:$0xff]
          %v4251 = vld [vmem:[#allocation7 + $0x8] sm:$0xff]
          %v4252 = vld [vmem:[#allocation7 + $0x10] sm:$0xff]
          %v4253 = vld [vmem:[#allocation7 + $0x18] sm:$0xff]
          %v4254 = vld [vmem:[#allocation7 + $0x20] sm:$0xff]
          %v4255 = vld [vmem:[#allocation7 + $0x28] sm:$0xff]
          %v4256 = vld [vmem:[#allocation7 + $0x30] sm:$0xff]
          %v4257 = vld [vmem:[#allocation7 + $0x38] sm:$0xff]
          %v4258 = vld [vmem:[#allocation7 + $0x40] sm:$0xff]
          %v4259 = vld [vmem:[#allocation7 + $0x48] sm:$0xff]
          %v4260 = vld [vmem:[#allocation7 + $0x50] sm:$0xff]
          %v4261 = vld [vmem:[#allocation7 + $0x58] sm:$0xff]
          %v4262 = vld [vmem:[#allocation7 + $0x60] sm:$0xff]
          %v4263 = vld [vmem:[#allocation7 + $0x68] sm:$0xff]
          %v4264 = vld [vmem:[#allocation7 + $0x70] sm:$0xff]
          %v4265 = vld [vmem:[#allocation7 + $0x78] sm:$0xff]
          %v4266 = vld [vmem:[#allocation7 + $0x80] sm:$0xff]
          %v4267 = vld [vmem:[#allocation7 + $0x88] sm:$0xff]
          %v4268 = vld [vmem:[#allocation7 + $0x90] sm:$0xff]
          %v4269 = vld [vmem:[#allocation7 + $0x98] sm:$0xff]
          %v4270 = vld [vmem:[#allocation7 + $0xa0] sm:$0xff]
          %v4271 = vld [vmem:[#allocation7 + $0xa8] sm:$0xff]
          %v4272 = vld [vmem:[#allocation7 + $0xb0] sm:$0xff]
          %v4273 = vld [vmem:[#allocation7 + $0xb8] sm:$0xff]
          %v4274 = vld [vmem:[#allocation7 + $0xc0] sm:$0xff]
          %v4275 = vld [vmem:[#allocation7 + $0xc8] sm:$0xff]
          %v4276 = vld [vmem:[#allocation7 + $0xd0] sm:$0xff]
          %v4277 = vld [vmem:[#allocation7 + $0xd8] sm:$0xff]
          %v4278 = vld [vmem:[#allocation7 + $0xe0] sm:$0xff]
          %v4279 = vld [vmem:[#allocation7 + $0xe8] sm:$0xff]
          %v4280 = vld [vmem:[#allocation7 + $0xf0] sm:$0xff]
          %v4281 = vld [vmem:[#allocation7 + $0xf8] sm:$0xff]
          %v4282 = vld [vmem:[#allocation7 + $0x100] sm:$0xff]
          %v4283 = vld [vmem:[#allocation7 + $0x108] sm:$0xff]
          %v4284 = vld [vmem:[#allocation7 + $0x110] sm:$0xff]
          %v4285 = vld [vmem:[#allocation7 + $0x118] sm:$0xff]
          %v4286 = vld [vmem:[#allocation7 + $0x120] sm:$0xff]
          %v4287 = vld [vmem:[#allocation7 + $0x128] sm:$0xff]
          %v4288 = vld [vmem:[#allocation7 + $0x130] sm:$0xff]
          %v4289 = vld [vmem:[#allocation7 + $0x138] sm:$0xff]
          %v4290 = vld [vmem:[#allocation7 + $0x140] sm:$0xff]
          %v4291 = vld [vmem:[#allocation7 + $0x148] sm:$0xff]
          %v4292 = vld [vmem:[#allocation7 + $0x150] sm:$0xff]
          %v4293 = vld [vmem:[#allocation7 + $0x158] sm:$0xff]
          %v4294 = vld [vmem:[#allocation7 + $0x160] sm:$0xff]
          %v4295 = vld [vmem:[#allocation7 + $0x168] sm:$0xff]
          %v4296 = vld [vmem:[#allocation7 + $0x170] sm:$0xff]
          %v4297 = vld [vmem:[#allocation7 + $0x178] sm:$0xff]
          %v4298 = vld [vmem:[#allocation7 + $0x180] sm:$0xff]
          %v4299 = vld [vmem:[#allocation7 + $0x188] sm:$0xff]
          %v4300 = vld [vmem:[#allocation7 + $0x190] sm:$0xff]
          %v4301 = vld [vmem:[#allocation7 + $0x198] sm:$0xff]
          %v4302 = vld [vmem:[#allocation7 + $0x1a0] sm:$0xff]
          %v4303 = vld [vmem:[#allocation7 + $0x1a8] sm:$0xff]
          %v4304 = vld [vmem:[#allocation7 + $0x1b0] sm:$0xff]
          %v4305 = vld [vmem:[#allocation7 + $0x1b8] sm:$0xff]
          %v4306 = vld [vmem:[#allocation7 + $0x1c0] sm:$0xff]
          %v4307 = vld [vmem:[#allocation7 + $0x1c8] sm:$0xff]
          %v4308 = vld [vmem:[#allocation7 + $0x1d0] sm:$0xff]
          %v4309 = vld [vmem:[#allocation7 + $0x1d8] sm:$0xff]
          %v4310 = vld [vmem:[#allocation7 + $0x1e0] sm:$0xff]
          %v4311 = vld [vmem:[#allocation7 + $0x1e8] sm:$0xff]
          %v4312 = vld [vmem:[#allocation7 + $0x1f0] sm:$0xff]
          %v4313 = vld [vmem:[#allocation7 + $0x1f8] sm:$0xff]
          %4315 = vset.pattern.permute.xlu0 0
          %4316 = vperm.xlu0 %4315, %v3226
          %v4317 = vpop.permute.xlu0 %4316
          %4320 = vset.pattern.permute.xlu0 0
          %4321 = vperm.xlu0 %4320, %v3228
          %v4322 = vpop.permute.xlu0 %4321
          %4325 = vset.pattern.permute.xlu0 0
          %4326 = vperm.xlu0 %4325, %v3230
          %v4327 = vpop.permute.xlu0 %4326
          %4330 = vset.pattern.permute.xlu0 0
          %4331 = vperm.xlu0 %4330, %v3232
          %v4332 = vpop.permute.xlu0 %4331
          %4335 = vset.pattern.permute.xlu0 0
          %4336 = vperm.xlu0 %4335, %v3234
          %v4337 = vpop.permute.xlu0 %4336
          %4340 = vset.pattern.permute.xlu0 0
          %4341 = vperm.xlu0 %4340, %v3236
          %v4342 = vpop.permute.xlu0 %4341
          %4345 = vset.pattern.permute.xlu0 0
          %4346 = vperm.xlu0 %4345, %v3238
          %v4347 = vpop.permute.xlu0 %4346
          %4350 = vset.pattern.permute.xlu0 0
          %4351 = vperm.xlu0 %4350, %v3240
          %v4352 = vpop.permute.xlu0 %4351
          %4355 = vset.pattern.permute.xlu0 0
          %4356 = vperm.xlu0 %4355, %v3242
          %v4357 = vpop.permute.xlu0 %4356
          %4360 = vset.pattern.permute.xlu0 0
          %4361 = vperm.xlu0 %4360, %v3244
          %v4362 = vpop.permute.xlu0 %4361
          %4365 = vset.pattern.permute.xlu0 0
          %4366 = vperm.xlu0 %4365, %v3246
          %v4367 = vpop.permute.xlu0 %4366
          %4370 = vset.pattern.permute.xlu0 0
          %4371 = vperm.xlu0 %4370, %v3248
          %v4372 = vpop.permute.xlu0 %4371
          %4375 = vset.pattern.permute.xlu0 0
          %4376 = vperm.xlu0 %4375, %v3250
          %v4377 = vpop.permute.xlu0 %4376
          %4380 = vset.pattern.permute.xlu0 0
          %4381 = vperm.xlu0 %4380, %v3252
          %v4382 = vpop.permute.xlu0 %4381
          %4385 = vset.pattern.permute.xlu0 0
          %4386 = vperm.xlu0 %4385, %v3254
          %v4387 = vpop.permute.xlu0 %4386
          %4390 = vset.pattern.permute.xlu0 0
          %4391 = vperm.xlu0 %4390, %v3256
          %v4392 = vpop.permute.xlu0 %4391
          %4395 = vset.pattern.permute.xlu0 0
          %4396 = vperm.xlu0 %4395, %v3258
          %v4397 = vpop.permute.xlu0 %4396
          %4400 = vset.pattern.permute.xlu0 0
          %4401 = vperm.xlu0 %4400, %v3260
          %v4402 = vpop.permute.xlu0 %4401
          %4405 = vset.pattern.permute.xlu0 0
          %4406 = vperm.xlu0 %4405, %v3262
          %v4407 = vpop.permute.xlu0 %4406
          %4410 = vset.pattern.permute.xlu0 0
          %4411 = vperm.xlu0 %4410, %v3264
          %v4412 = vpop.permute.xlu0 %4411
          %4415 = vset.pattern.permute.xlu0 0
          %4416 = vperm.xlu0 %4415, %v3266
          %v4417 = vpop.permute.xlu0 %4416
          %4420 = vset.pattern.permute.xlu0 0
          %4421 = vperm.xlu0 %4420, %v3268
          %v4422 = vpop.permute.xlu0 %4421
          %4425 = vset.pattern.permute.xlu0 0
          %4426 = vperm.xlu0 %4425, %v3270
          %v4427 = vpop.permute.xlu0 %4426
          %4430 = vset.pattern.permute.xlu0 0
          %4431 = vperm.xlu0 %4430, %v3272
          %v4432 = vpop.permute.xlu0 %4431
          %4435 = vset.pattern.permute.xlu0 0
          %4436 = vperm.xlu0 %4435, %v3274
          %v4437 = vpop.permute.xlu0 %4436
          %4440 = vset.pattern.permute.xlu0 0
          %4441 = vperm.xlu0 %4440, %v3276
          %v4442 = vpop.permute.xlu0 %4441
          %4445 = vset.pattern.permute.xlu0 0
          %4446 = vperm.xlu0 %4445, %v3278
          %v4447 = vpop.permute.xlu0 %4446
          %4450 = vset.pattern.permute.xlu0 0
          %4451 = vperm.xlu0 %4450, %v3280
          %v4452 = vpop.permute.xlu0 %4451
          %4455 = vset.pattern.permute.xlu0 0
          %4456 = vperm.xlu0 %4455, %v3282
          %v4457 = vpop.permute.xlu0 %4456
          %4460 = vset.pattern.permute.xlu0 0
          %4461 = vperm.xlu0 %4460, %v3284
          %v4462 = vpop.permute.xlu0 %4461
          %4465 = vset.pattern.permute.xlu0 0
          %4466 = vperm.xlu0 %4465, %v3286
          %v4467 = vpop.permute.xlu0 %4466
          %4470 = vset.pattern.permute.xlu0 0
          %4471 = vperm.xlu0 %4470, %v3288
          %v4472 = vpop.permute.xlu0 %4471
          %4475 = vset.pattern.permute.xlu0 0
          %4476 = vperm.xlu0 %4475, %v3290
          %v4477 = vpop.permute.xlu0 %4476
          %4480 = vset.pattern.permute.xlu0 0
          %4481 = vperm.xlu0 %4480, %v3292
          %v4482 = vpop.permute.xlu0 %4481
          %4485 = vset.pattern.permute.xlu0 0
          %4486 = vperm.xlu0 %4485, %v3294
          %v4487 = vpop.permute.xlu0 %4486
          %4490 = vset.pattern.permute.xlu0 0
          %4491 = vperm.xlu0 %4490, %v3296
          %v4492 = vpop.permute.xlu0 %4491
          %4495 = vset.pattern.permute.xlu0 0
          %4496 = vperm.xlu0 %4495, %v3298
          %v4497 = vpop.permute.xlu0 %4496
          %4500 = vset.pattern.permute.xlu0 0
          %4501 = vperm.xlu0 %4500, %v3300
          %v4502 = vpop.permute.xlu0 %4501
          %4505 = vset.pattern.permute.xlu0 0
          %4506 = vperm.xlu0 %4505, %v3302
          %v4507 = vpop.permute.xlu0 %4506
          %4510 = vset.pattern.permute.xlu0 0
          %4511 = vperm.xlu0 %4510, %v3304
          %v4512 = vpop.permute.xlu0 %4511
          %4515 = vset.pattern.permute.xlu0 0
          %4516 = vperm.xlu0 %4515, %v3306
          %v4517 = vpop.permute.xlu0 %4516
          %4520 = vset.pattern.permute.xlu0 0
          %4521 = vperm.xlu0 %4520, %v3308
          %v4522 = vpop.permute.xlu0 %4521
          %4525 = vset.pattern.permute.xlu0 0
          %4526 = vperm.xlu0 %4525, %v3310
          %v4527 = vpop.permute.xlu0 %4526
          %4530 = vset.pattern.permute.xlu0 0
          %4531 = vperm.xlu0 %4530, %v3312
          %v4532 = vpop.permute.xlu0 %4531
          %4535 = vset.pattern.permute.xlu0 0
          %4536 = vperm.xlu0 %4535, %v3314
          %v4537 = vpop.permute.xlu0 %4536
          %4540 = vset.pattern.permute.xlu0 0
          %4541 = vperm.xlu0 %4540, %v3316
          %v4542 = vpop.permute.xlu0 %4541
          %4545 = vset.pattern.permute.xlu0 0
          %4546 = vperm.xlu0 %4545, %v3318
          %v4547 = vpop.permute.xlu0 %4546
          %4550 = vset.pattern.permute.xlu0 0
          %4551 = vperm.xlu0 %4550, %v3320
          %v4552 = vpop.permute.xlu0 %4551
          %4555 = vset.pattern.permute.xlu0 0
          %4556 = vperm.xlu0 %4555, %v3322
          %v4557 = vpop.permute.xlu0 %4556
          %4560 = vset.pattern.permute.xlu0 0
          %4561 = vperm.xlu0 %4560, %v3324
          %v4562 = vpop.permute.xlu0 %4561
          %4565 = vset.pattern.permute.xlu0 0
          %4566 = vperm.xlu0 %4565, %v3326
          %v4567 = vpop.permute.xlu0 %4566
          %4570 = vset.pattern.permute.xlu0 0
          %4571 = vperm.xlu0 %4570, %v3328
          %v4572 = vpop.permute.xlu0 %4571
          %4575 = vset.pattern.permute.xlu0 0
          %4576 = vperm.xlu0 %4575, %v3330
          %v4577 = vpop.permute.xlu0 %4576
          %4580 = vset.pattern.permute.xlu0 0
          %4581 = vperm.xlu0 %4580, %v3332
          %v4582 = vpop.permute.xlu0 %4581
          %4585 = vset.pattern.permute.xlu0 0
          %4586 = vperm.xlu0 %4585, %v3334
          %v4587 = vpop.permute.xlu0 %4586
          %4590 = vset.pattern.permute.xlu0 0
          %4591 = vperm.xlu0 %4590, %v3336
          %v4592 = vpop.permute.xlu0 %4591
          %4595 = vset.pattern.permute.xlu0 0
          %4596 = vperm.xlu0 %4595, %v3338
          %v4597 = vpop.permute.xlu0 %4596
          %4600 = vset.pattern.permute.xlu0 0
          %4601 = vperm.xlu0 %4600, %v3340
          %v4602 = vpop.permute.xlu0 %4601
          %4605 = vset.pattern.permute.xlu0 0
          %4606 = vperm.xlu0 %4605, %v3342
          %v4607 = vpop.permute.xlu0 %4606
          %4610 = vset.pattern.permute.xlu0 0
          %4611 = vperm.xlu0 %4610, %v3344
          %v4612 = vpop.permute.xlu0 %4611
          %4615 = vset.pattern.permute.xlu0 0
          %4616 = vperm.xlu0 %4615, %v3346
          %v4617 = vpop.permute.xlu0 %4616
          %4620 = vset.pattern.permute.xlu0 0
          %4621 = vperm.xlu0 %4620, %v3348
          %v4622 = vpop.permute.xlu0 %4621
          %4625 = vset.pattern.permute.xlu0 0
          %4626 = vperm.xlu0 %4625, %v3350
          %v4627 = vpop.permute.xlu0 %4626
          %4630 = vset.pattern.permute.xlu0 0
          %4631 = vperm.xlu0 %4630, %v3352
          %v4632 = vpop.permute.xlu0 %4631
          %v4634 = vmul.f32 %v4317, %v4250
          %v4635 = vmul.f32 %v4322, %v4251
          %v4636 = vmul.f32 %v4327, %v4252
          %v4637 = vmul.f32 %v4332, %v4253
          %v4638 = vmul.f32 %v4337, %v4254
          %v4639 = vmul.f32 %v4342, %v4255
          %v4640 = vmul.f32 %v4347, %v4256
          %v4641 = vmul.f32 %v4352, %v4257
          %v4642 = vmul.f32 %v4357, %v4258
          %v4643 = vmul.f32 %v4362, %v4259
          %v4644 = vmul.f32 %v4367, %v4260
          %v4645 = vmul.f32 %v4372, %v4261
          %v4646 = vmul.f32 %v4377, %v4262
          %v4647 = vmul.f32 %v4382, %v4263
          %v4648 = vmul.f32 %v4387, %v4264
          %v4649 = vmul.f32 %v4392, %v4265
          %v4650 = vmul.f32 %v4397, %v4266
          %v4651 = vmul.f32 %v4402, %v4267
          %v4652 = vmul.f32 %v4407, %v4268
          %v4653 = vmul.f32 %v4412, %v4269
          %v4654 = vmul.f32 %v4417, %v4270
          %v4655 = vmul.f32 %v4422, %v4271
          %v4656 = vmul.f32 %v4427, %v4272
          %v4657 = vmul.f32 %v4432, %v4273
          %v4658 = vmul.f32 %v4437, %v4274
          %v4659 = vmul.f32 %v4442, %v4275
          %v4660 = vmul.f32 %v4447, %v4276
          %v4661 = vmul.f32 %v4452, %v4277
          %v4662 = vmul.f32 %v4457, %v4278
          %v4663 = vmul.f32 %v4462, %v4279
          %v4664 = vmul.f32 %v4467, %v4280
          %v4665 = vmul.f32 %v4472, %v4281
          %v4666 = vmul.f32 %v4477, %v4282
          %v4667 = vmul.f32 %v4482, %v4283
          %v4668 = vmul.f32 %v4487, %v4284
          %v4669 = vmul.f32 %v4492, %v4285
          %v4670 = vmul.f32 %v4497, %v4286
          %v4671 = vmul.f32 %v4502, %v4287
          %v4672 = vmul.f32 %v4507, %v4288
          %v4673 = vmul.f32 %v4512, %v4289
          %v4674 = vmul.f32 %v4517, %v4290
          %v4675 = vmul.f32 %v4522, %v4291
          %v4676 = vmul.f32 %v4527, %v4292
          %v4677 = vmul.f32 %v4532, %v4293
          %v4678 = vmul.f32 %v4537, %v4294
          %v4679 = vmul.f32 %v4542, %v4295
          %v4680 = vmul.f32 %v4547, %v4296
          %v4681 = vmul.f32 %v4552, %v4297
          %v4682 = vmul.f32 %v4557, %v4298
          %v4683 = vmul.f32 %v4562, %v4299
          %v4684 = vmul.f32 %v4567, %v4300
          %v4685 = vmul.f32 %v4572, %v4301
          %v4686 = vmul.f32 %v4577, %v4302
          %v4687 = vmul.f32 %v4582, %v4303
          %v4688 = vmul.f32 %v4587, %v4304
          %v4689 = vmul.f32 %v4592, %v4305
          %v4690 = vmul.f32 %v4597, %v4306
          %v4691 = vmul.f32 %v4602, %v4307
          %v4692 = vmul.f32 %v4607, %v4308
          %v4693 = vmul.f32 %v4612, %v4309
          %v4694 = vmul.f32 %v4617, %v4310
          %v4695 = vmul.f32 %v4622, %v4311
          %v4696 = vmul.f32 %v4627, %v4312
          %v4697 = vmul.f32 %v4632, %v4313
          %v4698 = vpack.c.bf16 %v3740, %v3738
          %v4699 = vpack.c.bf16 %v3744, %v3742
          %v4700 = vpack.c.bf16 %v3748, %v3746
          %v4701 = vpack.c.bf16 %v3752, %v3750
          %v4702 = vpack.c.bf16 %v3756, %v3754
          %v4703 = vpack.c.bf16 %v3760, %v3758
          %v4704 = vpack.c.bf16 %v3764, %v3762
          %v4705 = vpack.c.bf16 %v3768, %v3766
          %v4706 = vpack.c.bf16 %v3772, %v3770
          %v4707 = vpack.c.bf16 %v3776, %v3774
          %v4708 = vpack.c.bf16 %v3780, %v3778
          %v4709 = vpack.c.bf16 %v3784, %v3782
          %v4710 = vpack.c.bf16 %v3788, %v3786
          %v4711 = vpack.c.bf16 %v3792, %v3790
          %v4712 = vpack.c.bf16 %v3796, %v3794
          %v4713 = vpack.c.bf16 %v3800, %v3798
          %v4714 = vpack.c.bf16 %v3804, %v3802
          %v4715 = vpack.c.bf16 %v3808, %v3806
          %v4716 = vpack.c.bf16 %v3812, %v3810
          %v4717 = vpack.c.bf16 %v3816, %v3814
          %v4718 = vpack.c.bf16 %v3820, %v3818
          %v4719 = vpack.c.bf16 %v3824, %v3822
          %v4720 = vpack.c.bf16 %v3828, %v3826
          %v4721 = vpack.c.bf16 %v3832, %v3830
          %v4722 = vpack.c.bf16 %v3836, %v3834
          %v4723 = vpack.c.bf16 %v3840, %v3838
          %v4724 = vpack.c.bf16 %v3844, %v3842
          %v4725 = vpack.c.bf16 %v3848, %v3846
          %v4726 = vpack.c.bf16 %v3852, %v3850
          %v4727 = vpack.c.bf16 %v3856, %v3854
          %v4728 = vpack.c.bf16 %v3860, %v3858
          %v4729 = vpack.c.bf16 %v3864, %v3862
          %v4730 = vld [vmem:[#allocation4] sm:$0xff]
          %v4731 = vld [vmem:[#allocation4 + $0x8] sm:$0xff]
          %v4732 = vld [vmem:[#allocation4 + $0x10] sm:$0xff]
          %v4733 = vld [vmem:[#allocation4 + $0x18] sm:$0xff]
          %v4734 = vld [vmem:[#allocation4 + $0x20] sm:$0xff]
          %v4735 = vld [vmem:[#allocation4 + $0x28] sm:$0xff]
          %v4736 = vld [vmem:[#allocation4 + $0x30] sm:$0xff]
          %v4737 = vld [vmem:[#allocation4 + $0x38] sm:$0xff]
          %v4738 = vld [vmem:[#allocation4 + $0x40] sm:$0xff]
          %v4739 = vld [vmem:[#allocation4 + $0x48] sm:$0xff]
          %v4740 = vld [vmem:[#allocation4 + $0x50] sm:$0xff]
          %v4741 = vld [vmem:[#allocation4 + $0x58] sm:$0xff]
          %v4742 = vld [vmem:[#allocation4 + $0x60] sm:$0xff]
          %v4743 = vld [vmem:[#allocation4 + $0x68] sm:$0xff]
          %v4744 = vld [vmem:[#allocation4 + $0x70] sm:$0xff]
          %v4745 = vld [vmem:[#allocation4 + $0x78] sm:$0xff]
          %v4746 = vld [vmem:[#allocation4 + $0x80] sm:$0xff]
          %v4747 = vld [vmem:[#allocation4 + $0x88] sm:$0xff]
          %v4748 = vld [vmem:[#allocation4 + $0x90] sm:$0xff]
          %v4749 = vld [vmem:[#allocation4 + $0x98] sm:$0xff]
          %v4750 = vld [vmem:[#allocation4 + $0xa0] sm:$0xff]
          %v4751 = vld [vmem:[#allocation4 + $0xa8] sm:$0xff]
          %v4752 = vld [vmem:[#allocation4 + $0xb0] sm:$0xff]
          %v4753 = vld [vmem:[#allocation4 + $0xb8] sm:$0xff]
          %v4754 = vld [vmem:[#allocation4 + $0xc0] sm:$0xff]
          %v4755 = vld [vmem:[#allocation4 + $0xc8] sm:$0xff]
          %v4756 = vld [vmem:[#allocation4 + $0xd0] sm:$0xff]
          %v4757 = vld [vmem:[#allocation4 + $0xd8] sm:$0xff]
          %v4758 = vld [vmem:[#allocation4 + $0xe0] sm:$0xff]
          %v4759 = vld [vmem:[#allocation4 + $0xe8] sm:$0xff]
          %v4760 = vld [vmem:[#allocation4 + $0xf0] sm:$0xff]
          %v4761 = vld [vmem:[#allocation4 + $0xf8] sm:$0xff]
          %4762 = vmatprep.subr.bf16.mxu0 0
          %4763 = vmatpush1.bf16.msra.mxu0 %v4730
          %4764 = vmatprep.subr.bf16.mxu0 0
          %4765 = vmatpush1.bf16.msra.mxu0 %v4731
          %4766 = vmatprep.subr.bf16.mxu0 0
          %4767 = vmatpush1.bf16.msra.mxu0 %v4732
          %4768 = vmatprep.subr.bf16.mxu0 0
          %4769 = vmatpush1.bf16.msra.mxu0 %v4733
          %4770 = vmatprep.subr.bf16.mxu0 0
          %4771 = vmatpush1.bf16.msra.mxu0 %v4734
          %4772 = vmatprep.subr.bf16.mxu0 0
          %4773 = vmatpush1.bf16.msra.mxu0 %v4735
          %4774 = vmatprep.subr.bf16.mxu0 0
          %4775 = vmatpush1.bf16.msra.mxu0 %v4736
          %4776 = vmatprep.subr.bf16.mxu0 0
          %4777 = vmatpush1.bf16.msra.mxu0 %v4737
          %4778 = vmatprep.subr.bf16.mxu0 0
          %4779 = vmatpush1.bf16.msra.mxu0 0
          %4780 = vmatprep.subr.bf16.mxu0 0
          %4781 = vmatpush1.bf16.msra.mxu0 0
          %4782 = vmatprep.subr.bf16.mxu0 0
          %4783 = vmatpush1.bf16.msra.mxu0 0
          %4784 = vmatprep.subr.bf16.mxu0 0
          %4785 = vmatpush1.bf16.msra.mxu0 0
          %4786 = vmatprep.subr.bf16.mxu0 0
          %4787 = vmatpush1.bf16.msra.mxu0 0
          %4788 = vmatprep.subr.bf16.mxu0 0
          %4789 = vmatpush1.bf16.msra.mxu0 0
          %4790 = vmatprep.subr.bf16.mxu0 0
          %4791 = vmatpush1.bf16.msra.mxu0 0
          %4792 = vmatprep.subr.bf16.mxu0 0
          %4793 = vmatpush1.bf16.msra.mxu0 0
          %4794 = vmatprep.mubr.bf16.mxu0 0
          %4795 = vmatmul.mubr.bf16.gmra.mrb[0].mxu0 %v4698
          %v4796 = vpop.f32.mrb[0].mxu0
          %v4797 = vadd.f32 0.0, %v4796
          %v4798 = vpop.f32.mrb[0].mxu0
          %v4799 = vpop.f32.mrb[0].mxu0
          %v4800 = vadd.f32 0.0, %v4799
          %v4801 = vpop.f32.mrb[0].mxu0
          %4802 = vmatprep.mubr.bf16.mxu0 0
          %4803 = vmatmul.mubr.bf16.gmra.mrb[0].mxu0 %v4699
          %v4804 = vpop.f32.mrb[0].mxu0
          %v4805 = vadd.f32 0.0, %v4804
          %v4806 = vpop.f32.mrb[0].mxu0
          %v4807 = vpop.f32.mrb[0].mxu0
          %v4808 = vadd.f32 0.0, %v4807
          %v4809 = vpop.f32.mrb[0].mxu0
          %4810 = vmatprep.mubr.bf16.mxu0 0
          %4811 = vmatmul.mubr.bf16.gmra.mrb[0].mxu0 %v4700
          %v4812 = vpop.f32.mrb[0].mxu0
          %v4813 = vadd.f32 0.0, %v4812
          %v4814 = vpop.f32.mrb[0].mxu0
          %v4815 = vpop.f32.mrb[0].mxu0
          %v4816 = vadd.f32 0.0, %v4815
          %v4817 = vpop.f32.mrb[0].mxu0
          %4818 = vmatprep.mubr.bf16.mxu0 0
          %4819 = vmatmul.mubr.bf16.gmra.mrb[0].mxu0 %v4701
          %v4820 = vpop.f32.mrb[0].mxu0
          %v4821 = vadd.f32 0.0, %v4820
          %v4822 = vpop.f32.mrb[0].mxu0
          %v4823 = vpop.f32.mrb[0].mxu0
          %v4824 = vadd.f32 0.0, %v4823
          %v4825 = vpop.f32.mrb[0].mxu0
          %4826 = vmatprep.mubr.bf16.mxu0 0
          %4827 = vmatmul.mubr.bf16.gmra.mrb[0].mxu0 %v4702
          %v4828 = vpop.f32.mrb[0].mxu0
          %v4829 = vadd.f32 0.0, %v4828
          %v4830 = vpop.f32.mrb[0].mxu0
          %v4831 = vpop.f32.mrb[0].mxu0
          %v4832 = vadd.f32 0.0, %v4831
          %v4833 = vpop.f32.mrb[0].mxu0
          %4834 = vmatprep.mubr.bf16.mxu0 0
          %4835 = vmatmul.mubr.bf16.gmra.mrb[0].mxu0 %v4703
          %v4836 = vpop.f32.mrb[0].mxu0
          %v4837 = vadd.f32 0.0, %v4836
          %v4838 = vpop.f32.mrb[0].mxu0
          %v4839 = vpop.f32.mrb[0].mxu0
          %v4840 = vadd.f32 0.0, %v4839
          %v4841 = vpop.f32.mrb[0].mxu0
          %4842 = vmatprep.mubr.bf16.mxu0 0
          %4843 = vmatmul.mubr.bf16.gmra.mrb[0].mxu0 %v4704
          %v4844 = vpop.f32.mrb[0].mxu0
          %v4845 = vadd.f32 0.0, %v4844
          %v4846 = vpop.f32.mrb[0].mxu0
          %v4847 = vpop.f32.mrb[0].mxu0
          %v4848 = vadd.f32 0.0, %v4847
          %v4849 = vpop.f32.mrb[0].mxu0
          %4850 = vmatprep.mubr.bf16.mxu0 0
          %4851 = vmatmul.mubr.bf16.gmra.mrb[0].mxu0 %v4705
          %v4852 = vpop.f32.mrb[0].mxu0
          %v4853 = vadd.f32 0.0, %v4852
          %v4854 = vpop.f32.mrb[0].mxu0
          %v4855 = vpop.f32.mrb[0].mxu0
          %v4856 = vadd.f32 0.0, %v4855
          %v4857 = vpop.f32.mrb[0].mxu0
          %4858 = vdwg.mxu0
          %4859 = vmatprep.subr.bf16.mxu0 0
          %4860 = vmatpush1.bf16.msra.mxu0 %v4738
          %4861 = vmatprep.subr.bf16.mxu0 0
          %4862 = vmatpush1.bf16.msra.mxu0 %v4739
          %4863 = vmatprep.subr.bf16.mxu0 0
          %4864 = vmatpush1.bf16.msra.mxu0 %v4740
          %4865 = vmatprep.subr.bf16.mxu0 0
          %4866 = vmatpush1.bf16.msra.mxu0 %v4741
          %4867 = vmatprep.subr.bf16.mxu0 0
          %4868 = vmatpush1.bf16.msra.mxu0 %v4742
          %4869 = vmatprep.subr.bf16.mxu0 0
          %4870 = vmatpush1.bf16.msra.mxu0 %v4743
          %4871 = vmatprep.subr.bf16.mxu0 0
          %4872 = vmatpush1.bf16.msra.mxu0 %v4744
          %4873 = vmatprep.subr.bf16.mxu0 0
          %4874 = vmatpush1.bf16.msra.mxu0 %v4745
          %4875 = vmatprep.subr.bf16.mxu0 0
          %4876 = vmatpush1.bf16.msra.mxu0 0
          %4877 = vmatprep.subr.bf16.mxu0 0
          %4878 = vmatpush1.bf16.msra.mxu0 0
          %4879 = vmatprep.subr.bf16.mxu0 0
          %4880 = vmatpush1.bf16.msra.mxu0 0
          %4881 = vmatprep.subr.bf16.mxu0 0
          %4882 = vmatpush1.bf16.msra.mxu0 0
          %4883 = vmatprep.subr.bf16.mxu0 0
          %4884 = vmatpush1.bf16.msra.mxu0 0
          %4885 = vmatprep.subr.bf16.mxu0 0
          %4886 = vmatpush1.bf16.msra.mxu0 0
          %4887 = vmatprep.subr.bf16.mxu0 0
          %4888 = vmatpush1.bf16.msra.mxu0 0
          %4889 = vmatprep.subr.bf16.mxu0 0
          %4890 = vmatpush1.bf16.msra.mxu0 0
          %4891 = vmatprep.mubr.bf16.mxu0 0
          %4892 = vmatmul.mubr.bf16.gmra.mrb[0].mxu0 %v4706
          %v4893 = vpop.f32.mrb[0].mxu0
          %v4894 = vadd.f32 0.0, %v4893
          %v4895 = vpop.f32.mrb[0].mxu0
          %v4896 = vpop.f32.mrb[0].mxu0
          %v4897 = vadd.f32 0.0, %v4896
          %v4898 = vpop.f32.mrb[0].mxu0
          %4899 = vmatprep.mubr.bf16.mxu0 0
          %4900 = vmatmul.mubr.bf16.gmra.mrb[0].mxu0 %v4707
          %v4901 = vpop.f32.mrb[0].mxu0
          %v4902 = vadd.f32 0.0, %v4901
          %v4903 = vpop.f32.mrb[0].mxu0
          %v4904 = vpop.f32.mrb[0].mxu0
          %v4905 = vadd.f32 0.0, %v4904
          %v4906 = vpop.f32.mrb[0].mxu0
          %4907 = vmatprep.mubr.bf16.mxu0 0
          %4908 = vmatmul.mubr.bf16.gmra.mrb[0].mxu0 %v4708
          %v4909 = vpop.f32.mrb[0].mxu0
          %v4910 = vadd.f32 0.0, %v4909
          %v4911 = vpop.f32.mrb[0].mxu0
          %v4912 = vpop.f32.mrb[0].mxu0
          %v4913 = vadd.f32 0.0, %v4912
          %v4914 = vpop.f32.mrb[0].mxu0
          %4915 = vmatprep.mubr.bf16.mxu0 0
          %4916 = vmatmul.mubr.bf16.gmra.mrb[0].mxu0 %v4709
          %v4917 = vpop.f32.mrb[0].mxu0
          %v4918 = vadd.f32 0.0, %v4917
          %v4919 = vpop.f32.mrb[0].mxu0
          %v4920 = vpop.f32.mrb[0].mxu0
          %v4921 = vadd.f32 0.0, %v4920
          %v4922 = vpop.f32.mrb[0].mxu0
          %4923 = vmatprep.mubr.bf16.mxu0 0
          %4924 = vmatmul.mubr.bf16.gmra.mrb[0].mxu0 %v4710
          %v4925 = vpop.f32.mrb[0].mxu0
          %v4926 = vadd.f32 0.0, %v4925
          %v4927 = vpop.f32.mrb[0].mxu0
          %v4928 = vpop.f32.mrb[0].mxu0
          %v4929 = vadd.f32 0.0, %v4928
          %v4930 = vpop.f32.mrb[0].mxu0
          %4931 = vmatprep.mubr.bf16.mxu0 0
          %4932 = vmatmul.mubr.bf16.gmra.mrb[0].mxu0 %v4711
          %v4933 = vpop.f32.mrb[0].mxu0
          %v4934 = vadd.f32 0.0, %v4933
          %v4935 = vpop.f32.mrb[0].mxu0
          %v4936 = vpop.f32.mrb[0].mxu0
          %v4937 = vadd.f32 0.0, %v4936
          %v4938 = vpop.f32.mrb[0].mxu0
          %4939 = vmatprep.mubr.bf16.mxu0 0
          %4940 = vmatmul.mubr.bf16.gmra.mrb[0].mxu0 %v4712
          %v4941 = vpop.f32.mrb[0].mxu0
          %v4942 = vadd.f32 0.0, %v4941
          %v4943 = vpop.f32.mrb[0].mxu0
          %v4944 = vpop.f32.mrb[0].mxu0
          %v4945 = vadd.f32 0.0, %v4944
          %v4946 = vpop.f32.mrb[0].mxu0
          %4947 = vmatprep.mubr.bf16.mxu0 0
          %4948 = vmatmul.mubr.bf16.gmra.mrb[0].mxu0 %v4713
          %v4949 = vpop.f32.mrb[0].mxu0
          %v4950 = vadd.f32 0.0, %v4949
          %v4951 = vpop.f32.mrb[0].mxu0
          %v4952 = vpop.f32.mrb[0].mxu0
          %v4953 = vadd.f32 0.0, %v4952
          %v4954 = vpop.f32.mrb[0].mxu0
          %4955 = vdwg.mxu0
          %4956 = vmatprep.subr.bf16.mxu0 0
          %4957 = vmatpush1.bf16.msra.mxu0 %v4746
          %4958 = vmatprep.subr.bf16.mxu0 0
          %4959 = vmatpush1.bf16.msra.mxu0 %v4747
          %4960 = vmatprep.subr.bf16.mxu0 0
          %4961 = vmatpush1.bf16.msra.mxu0 %v4748
          %4962 = vmatprep.subr.bf16.mxu0 0
          %4963 = vmatpush1.bf16.msra.mxu0 %v4749
          %4964 = vmatprep.subr.bf16.mxu0 0
          %4965 = vmatpush1.bf16.msra.mxu0 %v4750
          %4966 = vmatprep.subr.bf16.mxu0 0
          %4967 = vmatpush1.bf16.msra.mxu0 %v4751
          %4968 = vmatprep.subr.bf16.mxu0 0
          %4969 = vmatpush1.bf16.msra.mxu0 %v4752
          %4970 = vmatprep.subr.bf16.mxu0 0
          %4971 = vmatpush1.bf16.msra.mxu0 %v4753
          %4972 = vmatprep.subr.bf16.mxu0 0
          %4973 = vmatpush1.bf16.msra.mxu0 0
          %4974 = vmatprep.subr.bf16.mxu0 0
          %4975 = vmatpush1.bf16.msra.mxu0 0
          %4976 = vmatprep.subr.bf16.mxu0 0
          %4977 = vmatpush1.bf16.msra.mxu0 0
          %4978 = vmatprep.subr.bf16.mxu0 0
          %4979 = vmatpush1.bf16.msra.mxu0 0
          %4980 = vmatprep.subr.bf16.mxu0 0
          %4981 = vmatpush1.bf16.msra.mxu0 0
          %4982 = vmatprep.subr.bf16.mxu0 0
          %4983 = vmatpush1.bf16.msra.mxu0 0
          %4984 = vmatprep.subr.bf16.mxu0 0
          %4985 = vmatpush1.bf16.msra.mxu0 0
          %4986 = vmatprep.subr.bf16.mxu0 0
          %4987 = vmatpush1.bf16.msra.mxu0 0
          %4988 = vmatprep.mubr.bf16.mxu0 0
          %4989 = vmatmul.mubr.bf16.gmra.mrb[0].mxu0 %v4714
          %v4990 = vpop.f32.mrb[0].mxu0
          %v4991 = vadd.f32 0.0, %v4990
          %v4992 = vpop.f32.mrb[0].mxu0
          %v4993 = vpop.f32.mrb[0].mxu0
          %v4994 = vadd.f32 0.0, %v4993
          %v4995 = vpop.f32.mrb[0].mxu0
          %4996 = vmatprep.mubr.bf16.mxu0 0
          %4997 = vmatmul.mubr.bf16.gmra.mrb[0].mxu0 %v4715
          %v4998 = vpop.f32.mrb[0].mxu0
          %v4999 = vadd.f32 0.0, %v4998
          %v5000 = vpop.f32.mrb[0].mxu0
          %v5001 = vpop.f32.mrb[0].mxu0
          %v5002 = vadd.f32 0.0, %v5001
          %v5003 = vpop.f32.mrb[0].mxu0
          %5004 = vmatprep.mubr.bf16.mxu0 0
          %5005 = vmatmul.mubr.bf16.gmra.mrb[0].mxu0 %v4716
          %v5006 = vpop.f32.mrb[0].mxu0
          %v5007 = vadd.f32 0.0, %v5006
          %v5008 = vpop.f32.mrb[0].mxu0
          %v5009 = vpop.f32.mrb[0].mxu0
          %v5010 = vadd.f32 0.0, %v5009
          %v5011 = vpop.f32.mrb[0].mxu0
          %5012 = vmatprep.mubr.bf16.mxu0 0
          %5013 = vmatmul.mubr.bf16.gmra.mrb[0].mxu0 %v4717
          %v5014 = vpop.f32.mrb[0].mxu0
          %v5015 = vadd.f32 0.0, %v5014
          %v5016 = vpop.f32.mrb[0].mxu0
          %v5017 = vpop.f32.mrb[0].mxu0
          %v5018 = vadd.f32 0.0, %v5017
          %v5019 = vpop.f32.mrb[0].mxu0
          %5020 = vmatprep.mubr.bf16.mxu0 0
          %5021 = vmatmul.mubr.bf16.gmra.mrb[0].mxu0 %v4718
          %v5022 = vpop.f32.mrb[0].mxu0
          %v5023 = vadd.f32 0.0, %v5022
          %v5024 = vpop.f32.mrb[0].mxu0
          %v5025 = vpop.f32.mrb[0].mxu0
          %v5026 = vadd.f32 0.0, %v5025
          %v5027 = vpop.f32.mrb[0].mxu0
          %5028 = vmatprep.mubr.bf16.mxu0 0
          %5029 = vmatmul.mubr.bf16.gmra.mrb[0].mxu0 %v4719
          %v5030 = vpop.f32.mrb[0].mxu0
          %v5031 = vadd.f32 0.0, %v5030
          %v5032 = vpop.f32.mrb[0].mxu0
          %v5033 = vpop.f32.mrb[0].mxu0
          %v5034 = vadd.f32 0.0, %v5033
          %v5035 = vpop.f32.mrb[0].mxu0
          %5036 = vmatprep.mubr.bf16.mxu0 0
          %5037 = vmatmul.mubr.bf16.gmra.mrb[0].mxu0 %v4720
          %v5038 = vpop.f32.mrb[0].mxu0
          %v5039 = vadd.f32 0.0, %v5038
          %v5040 = vpop.f32.mrb[0].mxu0
          %v5041 = vpop.f32.mrb[0].mxu0
          %v5042 = vadd.f32 0.0, %v5041
          %v5043 = vpop.f32.mrb[0].mxu0
          %5044 = vmatprep.mubr.bf16.mxu0 0
          %5045 = vmatmul.mubr.bf16.gmra.mrb[0].mxu0 %v4721
          %v5046 = vpop.f32.mrb[0].mxu0
          %v5047 = vadd.f32 0.0, %v5046
          %v5048 = vpop.f32.mrb[0].mxu0
          %v5049 = vpop.f32.mrb[0].mxu0
          %v5050 = vadd.f32 0.0, %v5049
          %v5051 = vpop.f32.mrb[0].mxu0
          %5052 = vdwg.mxu0
          %5053 = vmatprep.subr.bf16.mxu0 0
          %5054 = vmatpush1.bf16.msra.mxu0 %v4754
          %5055 = vmatprep.subr.bf16.mxu0 0
          %5056 = vmatpush1.bf16.msra.mxu0 %v4755
          %5057 = vmatprep.subr.bf16.mxu0 0
          %5058 = vmatpush1.bf16.msra.mxu0 %v4756
          %5059 = vmatprep.subr.bf16.mxu0 0
          %5060 = vmatpush1.bf16.msra.mxu0 %v4757
          %5061 = vmatprep.subr.bf16.mxu0 0
          %5062 = vmatpush1.bf16.msra.mxu0 %v4758
          %5063 = vmatprep.subr.bf16.mxu0 0
          %5064 = vmatpush1.bf16.msra.mxu0 %v4759
          %5065 = vmatprep.subr.bf16.mxu0 0
          %5066 = vmatpush1.bf16.msra.mxu0 %v4760
          %5067 = vmatprep.subr.bf16.mxu0 0
          %5068 = vmatpush1.bf16.msra.mxu0 %v4761
          %5069 = vmatprep.subr.bf16.mxu0 0
          %5070 = vmatpush1.bf16.msra.mxu0 0
          %5071 = vmatprep.subr.bf16.mxu0 0
          %5072 = vmatpush1.bf16.msra.mxu0 0
          %5073 = vmatprep.subr.bf16.mxu0 0
          %5074 = vmatpush1.bf16.msra.mxu0 0
          %5075 = vmatprep.subr.bf16.mxu0 0
          %5076 = vmatpush1.bf16.msra.mxu0 0
          %5077 = vmatprep.subr.bf16.mxu0 0
          %5078 = vmatpush1.bf16.msra.mxu0 0
          %5079 = vmatprep.subr.bf16.mxu0 0
          %5080 = vmatpush1.bf16.msra.mxu0 0
          %5081 = vmatprep.subr.bf16.mxu0 0
          %5082 = vmatpush1.bf16.msra.mxu0 0
          %5083 = vmatprep.subr.bf16.mxu0 0
          %5084 = vmatpush1.bf16.msra.mxu0 0
          %5085 = vmatprep.mubr.bf16.mxu0 0
          %5086 = vmatmul.mubr.bf16.gmra.mrb[0].mxu0 %v4722
          %v5087 = vpop.f32.mrb[0].mxu0
          %v5088 = vadd.f32 0.0, %v5087
          %v5089 = vpop.f32.mrb[0].mxu0
          %v5090 = vpop.f32.mrb[0].mxu0
          %v5091 = vadd.f32 0.0, %v5090
          %v5092 = vpop.f32.mrb[0].mxu0
          %5093 = vmatprep.mubr.bf16.mxu0 0
          %5094 = vmatmul.mubr.bf16.gmra.mrb[0].mxu0 %v4723
          %v5095 = vpop.f32.mrb[0].mxu0
          %v5096 = vadd.f32 0.0, %v5095
          %v5097 = vpop.f32.mrb[0].mxu0
          %v5098 = vpop.f32.mrb[0].mxu0
          %v5099 = vadd.f32 0.0, %v5098
          %v5100 = vpop.f32.mrb[0].mxu0
          %5101 = vmatprep.mubr.bf16.mxu0 0
          %5102 = vmatmul.mubr.bf16.gmra.mrb[0].mxu0 %v4724
          %v5103 = vpop.f32.mrb[0].mxu0
          %v5104 = vadd.f32 0.0, %v5103
          %v5105 = vpop.f32.mrb[0].mxu0
          %v5106 = vpop.f32.mrb[0].mxu0
          %v5107 = vadd.f32 0.0, %v5106
          %v5108 = vpop.f32.mrb[0].mxu0
          %5109 = vmatprep.mubr.bf16.mxu0 0
          %5110 = vmatmul.mubr.bf16.gmra.mrb[0].mxu0 %v4725
          %v5111 = vpop.f32.mrb[0].mxu0
          %v5112 = vadd.f32 0.0, %v5111
          %v5113 = vpop.f32.mrb[0].mxu0
          %v5114 = vpop.f32.mrb[0].mxu0
          %v5115 = vadd.f32 0.0, %v5114
          %v5116 = vpop.f32.mrb[0].mxu0
          %5117 = vmatprep.mubr.bf16.mxu0 0
          %5118 = vmatmul.mubr.bf16.gmra.mrb[0].mxu0 %v4726
          %v5119 = vpop.f32.mrb[0].mxu0
          %v5120 = vadd.f32 0.0, %v5119
          %v5121 = vpop.f32.mrb[0].mxu0
          %v5122 = vpop.f32.mrb[0].mxu0
          %v5123 = vadd.f32 0.0, %v5122
          %v5124 = vpop.f32.mrb[0].mxu0
          %5125 = vmatprep.mubr.bf16.mxu0 0
          %5126 = vmatmul.mubr.bf16.gmra.mrb[0].mxu0 %v4727
          %v5127 = vpop.f32.mrb[0].mxu0
          %v5128 = vadd.f32 0.0, %v5127
          %v5129 = vpop.f32.mrb[0].mxu0
          %v5130 = vpop.f32.mrb[0].mxu0
          %v5131 = vadd.f32 0.0, %v5130
          %v5132 = vpop.f32.mrb[0].mxu0
          %5133 = vmatprep.mubr.bf16.mxu0 0
          %5134 = vmatmul.mubr.bf16.gmra.mrb[0].mxu0 %v4728
          %v5135 = vpop.f32.mrb[0].mxu0
          %v5136 = vadd.f32 0.0, %v5135
          %v5137 = vpop.f32.mrb[0].mxu0
          %v5138 = vpop.f32.mrb[0].mxu0
          %v5139 = vadd.f32 0.0, %v5138
          %v5140 = vpop.f32.mrb[0].mxu0
          %5141 = vmatprep.mubr.bf16.mxu0 0
          %5142 = vmatmul.mubr.bf16.gmra.mrb[0].mxu0 %v4729
          %v5143 = vpop.f32.mrb[0].mxu0
          %v5144 = vadd.f32 0.0, %v5143
          %v5145 = vpop.f32.mrb[0].mxu0
          %v5146 = vpop.f32.mrb[0].mxu0
          %v5147 = vadd.f32 0.0, %v5146
          %v5148 = vpop.f32.mrb[0].mxu0
          %5149 = vdwg.mxu0
          %v5150 = vadd.f32 %v4634, %v4797
          %v5151 = vadd.f32 %v4635, %v4800
          %v5152 = vadd.f32 %v4636, %v4805
          %v5153 = vadd.f32 %v4637, %v4808
          %v5154 = vadd.f32 %v4638, %v4813
          %v5155 = vadd.f32 %v4639, %v4816
          %v5156 = vadd.f32 %v4640, %v4821
          %v5157 = vadd.f32 %v4641, %v4824
          %v5158 = vadd.f32 %v4642, %v4829
          %v5159 = vadd.f32 %v4643, %v4832
          %v5160 = vadd.f32 %v4644, %v4837
          %v5161 = vadd.f32 %v4645, %v4840
          %v5162 = vadd.f32 %v4646, %v4845
          %v5163 = vadd.f32 %v4647, %v4848
          %v5164 = vadd.f32 %v4648, %v4853
          %v5165 = vadd.f32 %v4649, %v4856
          %v5166 = vadd.f32 %v4650, %v4894
          %v5167 = vadd.f32 %v4651, %v4897
          %v5168 = vadd.f32 %v4652, %v4902
          %v5169 = vadd.f32 %v4653, %v4905
          %v5170 = vadd.f32 %v4654, %v4910
          %v5171 = vadd.f32 %v4655, %v4913
          %v5172 = vadd.f32 %v4656, %v4918
          %v5173 = vadd.f32 %v4657, %v4921
          %v5174 = vadd.f32 %v4658, %v4926
          %v5175 = vadd.f32 %v4659, %v4929
          %v5176 = vadd.f32 %v4660, %v4934
          %v5177 = vadd.f32 %v4661, %v4937
          %v5178 = vadd.f32 %v4662, %v4942
          %v5179 = vadd.f32 %v4663, %v4945
          %v5180 = vadd.f32 %v4664, %v4950
          %v5181 = vadd.f32 %v4665, %v4953
          %v5182 = vadd.f32 %v4666, %v4991
          %v5183 = vadd.f32 %v4667, %v4994
          %v5184 = vadd.f32 %v4668, %v4999
          %v5185 = vadd.f32 %v4669, %v5002
          %v5186 = vadd.f32 %v4670, %v5007
          %v5187 = vadd.f32 %v4671, %v5010
          %v5188 = vadd.f32 %v4672, %v5015
          %v5189 = vadd.f32 %v4673, %v5018
          %v5190 = vadd.f32 %v4674, %v5023
          %v5191 = vadd.f32 %v4675, %v5026
          %v5192 = vadd.f32 %v4676, %v5031
          %v5193 = vadd.f32 %v4677, %v5034
          %v5194 = vadd.f32 %v4678, %v5039
          %v5195 = vadd.f32 %v4679, %v5042
          %v5196 = vadd.f32 %v4680, %v5047
          %v5197 = vadd.f32 %v4681, %v5050
          %v5198 = vadd.f32 %v4682, %v5088
          %v5199 = vadd.f32 %v4683, %v5091
          %v5200 = vadd.f32 %v4684, %v5096
          %v5201 = vadd.f32 %v4685, %v5099
          %v5202 = vadd.f32 %v4686, %v5104
          %v5203 = vadd.f32 %v4687, %v5107
          %v5204 = vadd.f32 %v4688, %v5112
          %v5205 = vadd.f32 %v4689, %v5115
          %v5206 = vadd.f32 %v4690, %v5120
          %v5207 = vadd.f32 %v4691, %v5123
          %v5208 = vadd.f32 %v4692, %v5128
          %v5209 = vadd.f32 %v4693, %v5131
          %v5210 = vadd.f32 %v4694, %v5136
          %v5211 = vadd.f32 %v4695, %v5139
          %v5212 = vadd.f32 %v4696, %v5144
          %v5213 = vadd.f32 %v4697, %v5147
          %5214 = vst.msk [vmem:[#allocation7] sm:$0xff] %vm2006, %v5150
          %5215 = vst.msk [vmem:[#allocation7 + $0x8] sm:$0xff] %vm2006, %v5151
          %5216 = vst.msk [vmem:[#allocation7 + $0x10] sm:$0xff] %vm2006, %v5152
          %5217 = vst.msk [vmem:[#allocation7 + $0x18] sm:$0xff] %vm2006, %v5153
          %5218 = vst.msk [vmem:[#allocation7 + $0x20] sm:$0xff] %vm2006, %v5154
          %5219 = vst.msk [vmem:[#allocation7 + $0x28] sm:$0xff] %vm2006, %v5155
          %5220 = vst.msk [vmem:[#allocation7 + $0x30] sm:$0xff] %vm2006, %v5156
          %5221 = vst.msk [vmem:[#allocation7 + $0x38] sm:$0xff] %vm2006, %v5157
          %5222 = vst.msk [vmem:[#allocation7 + $0x40] sm:$0xff] %vm2006, %v5158
          %5223 = vst.msk [vmem:[#allocation7 + $0x48] sm:$0xff] %vm2006, %v5159
          %5224 = vst.msk [vmem:[#allocation7 + $0x50] sm:$0xff] %vm2006, %v5160
          %5225 = vst.msk [vmem:[#allocation7 + $0x58] sm:$0xff] %vm2006, %v5161
          %5226 = vst.msk [vmem:[#allocation7 + $0x60] sm:$0xff] %vm2006, %v5162
          %5227 = vst.msk [vmem:[#allocation7 + $0x68] sm:$0xff] %vm2006, %v5163
          %5228 = vst.msk [vmem:[#allocation7 + $0x70] sm:$0xff] %vm2006, %v5164
          %5229 = vst.msk [vmem:[#allocation7 + $0x78] sm:$0xff] %vm2006, %v5165
          %5230 = vst.msk [vmem:[#allocation7 + $0x80] sm:$0xff] %vm2006, %v5166
          %5231 = vst.msk [vmem:[#allocation7 + $0x88] sm:$0xff] %vm2006, %v5167
          %5232 = vst.msk [vmem:[#allocation7 + $0x90] sm:$0xff] %vm2006, %v5168
          %5233 = vst.msk [vmem:[#allocation7 + $0x98] sm:$0xff] %vm2006, %v5169
          %5234 = vst.msk [vmem:[#allocation7 + $0xa0] sm:$0xff] %vm2006, %v5170
          %5235 = vst.msk [vmem:[#allocation7 + $0xa8] sm:$0xff] %vm2006, %v5171
          %5236 = vst.msk [vmem:[#allocation7 + $0xb0] sm:$0xff] %vm2006, %v5172
          %5237 = vst.msk [vmem:[#allocation7 + $0xb8] sm:$0xff] %vm2006, %v5173
          %5238 = vst.msk [vmem:[#allocation7 + $0xc0] sm:$0xff] %vm2006, %v5174
          %5239 = vst.msk [vmem:[#allocation7 + $0xc8] sm:$0xff] %vm2006, %v5175
          %5240 = vst.msk [vmem:[#allocation7 + $0xd0] sm:$0xff] %vm2006, %v5176
          %5241 = vst.msk [vmem:[#allocation7 + $0xd8] sm:$0xff] %vm2006, %v5177
          %5242 = vst.msk [vmem:[#allocation7 + $0xe0] sm:$0xff] %vm2006, %v5178
          %5243 = vst.msk [vmem:[#allocation7 + $0xe8] sm:$0xff] %vm2006, %v5179
          %5244 = vst.msk [vmem:[#allocation7 + $0xf0] sm:$0xff] %vm2006, %v5180
          %5245 = vst.msk [vmem:[#allocation7 + $0xf8] sm:$0xff] %vm2006, %v5181
          %5246 = vst.msk [vmem:[#allocation7 + $0x100] sm:$0xff] %vm2006, %v5182
          %5247 = vst.msk [vmem:[#allocation7 + $0x108] sm:$0xff] %vm2006, %v5183
          %5248 = vst.msk [vmem:[#allocation7 + $0x110] sm:$0xff] %vm2006, %v5184
          %5249 = vst.msk [vmem:[#allocation7 + $0x118] sm:$0xff] %vm2006, %v5185
          %5250 = vst.msk [vmem:[#allocation7 + $0x120] sm:$0xff] %vm2006, %v5186
          %5251 = vst.msk [vmem:[#allocation7 + $0x128] sm:$0xff] %vm2006, %v5187
          %5252 = vst.msk [vmem:[#allocation7 + $0x130] sm:$0xff] %vm2006, %v5188
          %5253 = vst.msk [vmem:[#allocation7 + $0x138] sm:$0xff] %vm2006, %v5189
          %5254 = vst.msk [vmem:[#allocation7 + $0x140] sm:$0xff] %vm2006, %v5190
          %5255 = vst.msk [vmem:[#allocation7 + $0x148] sm:$0xff] %vm2006, %v5191
          %5256 = vst.msk [vmem:[#allocation7 + $0x150] sm:$0xff] %vm2006, %v5192
          %5257 = vst.msk [vmem:[#allocation7 + $0x158] sm:$0xff] %vm2006, %v5193
          %5258 = vst.msk [vmem:[#allocation7 + $0x160] sm:$0xff] %vm2006, %v5194
          %5259 = vst.msk [vmem:[#allocation7 + $0x168] sm:$0xff] %vm2006, %v5195
          %5260 = vst.msk [vmem:[#allocation7 + $0x170] sm:$0xff] %vm2006, %v5196
          %5261 = vst.msk [vmem:[#allocation7 + $0x178] sm:$0xff] %vm2006, %v5197
          %5262 = vst.msk [vmem:[#allocation7 + $0x180] sm:$0xff] %vm2006, %v5198
          %5263 = vst.msk [vmem:[#allocation7 + $0x188] sm:$0xff] %vm2006, %v5199
          %5264 = vst.msk [vmem:[#allocation7 + $0x190] sm:$0xff] %vm2006, %v5200
          %5265 = vst.msk [vmem:[#allocation7 + $0x198] sm:$0xff] %vm2006, %v5201
          %5266 = vst.msk [vmem:[#allocation7 + $0x1a0] sm:$0xff] %vm2006, %v5202
          %5267 = vst.msk [vmem:[#allocation7 + $0x1a8] sm:$0xff] %vm2006, %v5203
          %5268 = vst.msk [vmem:[#allocation7 + $0x1b0] sm:$0xff] %vm2006, %v5204
          %5269 = vst.msk [vmem:[#allocation7 + $0x1b8] sm:$0xff] %vm2006, %v5205
          %5270 = vst.msk [vmem:[#allocation7 + $0x1c0] sm:$0xff] %vm2006, %v5206
          %5271 = vst.msk [vmem:[#allocation7 + $0x1c8] sm:$0xff] %vm2006, %v5207
          %5272 = vst.msk [vmem:[#allocation7 + $0x1d0] sm:$0xff] %vm2006, %v5208
          %5273 = vst.msk [vmem:[#allocation7 + $0x1d8] sm:$0xff] %vm2006, %v5209
          %5274 = vst.msk [vmem:[#allocation7 + $0x1e0] sm:$0xff] %vm2006, %v5210
          %5275 = vst.msk [vmem:[#allocation7 + $0x1e8] sm:$0xff] %vm2006, %v5211
          %5276 = vst.msk [vmem:[#allocation7 + $0x1f0] sm:$0xff] %vm2006, %v5212
          %5277 = vst.msk [vmem:[#allocation7 + $0x1f8] sm:$0xff] %vm2006, %v5213
          %5278 = vst.msk [vmem:[#allocation5] sm:$0xff] %vm4185, %v3097
          %5279 = vst.msk [vmem:[#allocation5 + $0x8] sm:$0xff] %vm4185, %v3098
          %5280 = vst.msk [vmem:[#allocation5 + $0x10] sm:$0xff] %vm4185, %v3099
          %5281 = vst.msk [vmem:[#allocation5 + $0x18] sm:$0xff] %vm4185, %v3100
          %5282 = vst.msk [vmem:[#allocation5 + $0x20] sm:$0xff] %vm4185, %v3101
          %5283 = vst.msk [vmem:[#allocation5 + $0x28] sm:$0xff] %vm4185, %v3102
          %5284 = vst.msk [vmem:[#allocation5 + $0x30] sm:$0xff] %vm4185, %v3103
          %5285 = vst.msk [vmem:[#allocation5 + $0x38] sm:$0xff] %vm4185, %v3104
          %5286 = vst.msk [vmem:[#allocation5 + $0x40] sm:$0xff] %vm4185, %v3105
          %5287 = vst.msk [vmem:[#allocation5 + $0x48] sm:$0xff] %vm4185, %v3106
          %5288 = vst.msk [vmem:[#allocation5 + $0x50] sm:$0xff] %vm4185, %v3107
          %5289 = vst.msk [vmem:[#allocation5 + $0x58] sm:$0xff] %vm4185, %v3108
          %5290 = vst.msk [vmem:[#allocation5 + $0x60] sm:$0xff] %vm4185, %v3109
          %5291 = vst.msk [vmem:[#allocation5 + $0x68] sm:$0xff] %vm4185, %v3110
          %5292 = vst.msk [vmem:[#allocation5 + $0x70] sm:$0xff] %vm4185, %v3111
          %5293 = vst.msk [vmem:[#allocation5 + $0x78] sm:$0xff] %vm4185, %v3112
          %5294 = vst.msk [vmem:[#allocation5 + $0x80] sm:$0xff] %vm4185, %v3113
          %5295 = vst.msk [vmem:[#allocation5 + $0x88] sm:$0xff] %vm4185, %v3114
          %5296 = vst.msk [vmem:[#allocation5 + $0x90] sm:$0xff] %vm4185, %v3115
          %5297 = vst.msk [vmem:[#allocation5 + $0x98] sm:$0xff] %vm4185, %v3116
          %5298 = vst.msk [vmem:[#allocation5 + $0xa0] sm:$0xff] %vm4185, %v3117
          %5299 = vst.msk [vmem:[#allocation5 + $0xa8] sm:$0xff] %vm4185, %v3118
          %5300 = vst.msk [vmem:[#allocation5 + $0xb0] sm:$0xff] %vm4185, %v3119
          %5301 = vst.msk [vmem:[#allocation5 + $0xb8] sm:$0xff] %vm4185, %v3120
          %5302 = vst.msk [vmem:[#allocation5 + $0xc0] sm:$0xff] %vm4185, %v3121
          %5303 = vst.msk [vmem:[#allocation5 + $0xc8] sm:$0xff] %vm4185, %v3122
          %5304 = vst.msk [vmem:[#allocation5 + $0xd0] sm:$0xff] %vm4185, %v3123
          %5305 = vst.msk [vmem:[#allocation5 + $0xd8] sm:$0xff] %vm4185, %v3124
          %5306 = vst.msk [vmem:[#allocation5 + $0xe0] sm:$0xff] %vm4185, %v3125
          %5307 = vst.msk [vmem:[#allocation5 + $0xe8] sm:$0xff] %vm4185, %v3126
          %5308 = vst.msk [vmem:[#allocation5 + $0xf0] sm:$0xff] %vm4185, %v3127
          %5309 = vst.msk [vmem:[#allocation5 + $0xf8] sm:$0xff] %vm4185, %v3128
          %5310 = vst.msk [vmem:[#allocation5 + $0x100] sm:$0xff] %vm4185, %v3129
          %5311 = vst.msk [vmem:[#allocation5 + $0x108] sm:$0xff] %vm4185, %v3130
          %5312 = vst.msk [vmem:[#allocation5 + $0x110] sm:$0xff] %vm4185, %v3131
          %5313 = vst.msk [vmem:[#allocation5 + $0x118] sm:$0xff] %vm4185, %v3132
          %5314 = vst.msk [vmem:[#allocation5 + $0x120] sm:$0xff] %vm4185, %v3133
          %5315 = vst.msk [vmem:[#allocation5 + $0x128] sm:$0xff] %vm4185, %v3134
          %5316 = vst.msk [vmem:[#allocation5 + $0x130] sm:$0xff] %vm4185, %v3135
          %5317 = vst.msk [vmem:[#allocation5 + $0x138] sm:$0xff] %vm4185, %v3136
          %5318 = vst.msk [vmem:[#allocation5 + $0x140] sm:$0xff] %vm4185, %v3137
          %5319 = vst.msk [vmem:[#allocation5 + $0x148] sm:$0xff] %vm4185, %v3138
          %5320 = vst.msk [vmem:[#allocation5 + $0x150] sm:$0xff] %vm4185, %v3139
          %5321 = vst.msk [vmem:[#allocation5 + $0x158] sm:$0xff] %vm4185, %v3140
          %5322 = vst.msk [vmem:[#allocation5 + $0x160] sm:$0xff] %vm4185, %v3141
          %5323 = vst.msk [vmem:[#allocation5 + $0x168] sm:$0xff] %vm4185, %v3142
          %5324 = vst.msk [vmem:[#allocation5 + $0x170] sm:$0xff] %vm4185, %v3143
          %5325 = vst.msk [vmem:[#allocation5 + $0x178] sm:$0xff] %vm4185, %v3144
          %5326 = vst.msk [vmem:[#allocation5 + $0x180] sm:$0xff] %vm4185, %v3145
          %5327 = vst.msk [vmem:[#allocation5 + $0x188] sm:$0xff] %vm4185, %v3146
          %5328 = vst.msk [vmem:[#allocation5 + $0x190] sm:$0xff] %vm4185, %v3147
          %5329 = vst.msk [vmem:[#allocation5 + $0x198] sm:$0xff] %vm4185, %v3148
          %5330 = vst.msk [vmem:[#allocation5 + $0x1a0] sm:$0xff] %vm4185, %v3149
          %5331 = vst.msk [vmem:[#allocation5 + $0x1a8] sm:$0xff] %vm4185, %v3150
          %5332 = vst.msk [vmem:[#allocation5 + $0x1b0] sm:$0xff] %vm4185, %v3151
          %5333 = vst.msk [vmem:[#allocation5 + $0x1b8] sm:$0xff] %vm4185, %v3152
          %5334 = vst.msk [vmem:[#allocation5 + $0x1c0] sm:$0xff] %vm4185, %v3153
          %5335 = vst.msk [vmem:[#allocation5 + $0x1c8] sm:$0xff] %vm4185, %v3154
          %5336 = vst.msk [vmem:[#allocation5 + $0x1d0] sm:$0xff] %vm4185, %v3155
          %5337 = vst.msk [vmem:[#allocation5 + $0x1d8] sm:$0xff] %vm4185, %v3156
          %5338 = vst.msk [vmem:[#allocation5 + $0x1e0] sm:$0xff] %vm4185, %v3157
          %5339 = vst.msk [vmem:[#allocation5 + $0x1e8] sm:$0xff] %vm4185, %v3158
          %5340 = vst.msk [vmem:[#allocation5 + $0x1f0] sm:$0xff] %vm4185, %v3159
          %5341 = vst.msk [vmem:[#allocation5 + $0x1f8] sm:$0xff] %vm4185, %v3160
        $region128: #{tpu_custom_call.1} parent=87 // pred_fallthru
          _
        %p5342 = scmp.eq.s32.totalorder %s47, 1
        // Predicated region
        $region129: #{tpu_custom_call.1} parent=87 // pred_check
          %p5343 = pneg %p5342
        $region130: #{tpu_custom_call.1} parent=87 // pred_check_branch
          %5345 = sbr.rel (%p5343) target = $region132
        $region131: #{tpu_custom_call.1} parent=87 // pred_region
          %v5346 = vld [vmem:[#allocation7] sm:$0xff]
          %v5347 = vld [vmem:[#allocation7 + $0x8] sm:$0xff]
          %v5348 = vld [vmem:[#allocation7 + $0x10] sm:$0xff]
          %v5349 = vld [vmem:[#allocation7 + $0x18] sm:$0xff]
          %v5350 = vld [vmem:[#allocation7 + $0x20] sm:$0xff]
          %v5351 = vld [vmem:[#allocation7 + $0x28] sm:$0xff]
          %v5352 = vld [vmem:[#allocation7 + $0x30] sm:$0xff]
          %v5353 = vld [vmem:[#allocation7 + $0x38] sm:$0xff]
          %v5354 = vld [vmem:[#allocation7 + $0x40] sm:$0xff]
          %v5355 = vld [vmem:[#allocation7 + $0x48] sm:$0xff]
          %v5356 = vld [vmem:[#allocation7 + $0x50] sm:$0xff]
          %v5357 = vld [vmem:[#allocation7 + $0x58] sm:$0xff]
          %v5358 = vld [vmem:[#allocation7 + $0x60] sm:$0xff]
          %v5359 = vld [vmem:[#allocation7 + $0x68] sm:$0xff]
          %v5360 = vld [vmem:[#allocation7 + $0x70] sm:$0xff]
          %v5361 = vld [vmem:[#allocation7 + $0x78] sm:$0xff]
          %v5362 = vld [vmem:[#allocation7 + $0x80] sm:$0xff]
          %v5363 = vld [vmem:[#allocation7 + $0x88] sm:$0xff]
          %v5364 = vld [vmem:[#allocation7 + $0x90] sm:$0xff]
          %v5365 = vld [vmem:[#allocation7 + $0x98] sm:$0xff]
          %v5366 = vld [vmem:[#allocation7 + $0xa0] sm:$0xff]
          %v5367 = vld [vmem:[#allocation7 + $0xa8] sm:$0xff]
          %v5368 = vld [vmem:[#allocation7 + $0xb0] sm:$0xff]
          %v5369 = vld [vmem:[#allocation7 + $0xb8] sm:$0xff]
          %v5370 = vld [vmem:[#allocation7 + $0xc0] sm:$0xff]
          %v5371 = vld [vmem:[#allocation7 + $0xc8] sm:$0xff]
          %v5372 = vld [vmem:[#allocation7 + $0xd0] sm:$0xff]
          %v5373 = vld [vmem:[#allocation7 + $0xd8] sm:$0xff]
          %v5374 = vld [vmem:[#allocation7 + $0xe0] sm:$0xff]
          %v5375 = vld [vmem:[#allocation7 + $0xe8] sm:$0xff]
          %v5376 = vld [vmem:[#allocation7 + $0xf0] sm:$0xff]
          %v5377 = vld [vmem:[#allocation7 + $0xf8] sm:$0xff]
          %v5378 = vld [vmem:[#allocation7 + $0x100] sm:$0xff]
          %v5379 = vld [vmem:[#allocation7 + $0x108] sm:$0xff]
          %v5380 = vld [vmem:[#allocation7 + $0x110] sm:$0xff]
          %v5381 = vld [vmem:[#allocation7 + $0x118] sm:$0xff]
          %v5382 = vld [vmem:[#allocation7 + $0x120] sm:$0xff]
          %v5383 = vld [vmem:[#allocation7 + $0x128] sm:$0xff]
          %v5384 = vld [vmem:[#allocation7 + $0x130] sm:$0xff]
          %v5385 = vld [vmem:[#allocation7 + $0x138] sm:$0xff]
          %v5386 = vld [vmem:[#allocation7 + $0x140] sm:$0xff]
          %v5387 = vld [vmem:[#allocation7 + $0x148] sm:$0xff]
          %v5388 = vld [vmem:[#allocation7 + $0x150] sm:$0xff]
          %v5389 = vld [vmem:[#allocation7 + $0x158] sm:$0xff]
          %v5390 = vld [vmem:[#allocation7 + $0x160] sm:$0xff]
          %v5391 = vld [vmem:[#allocation7 + $0x168] sm:$0xff]
          %v5392 = vld [vmem:[#allocation7 + $0x170] sm:$0xff]
          %v5393 = vld [vmem:[#allocation7 + $0x178] sm:$0xff]
          %v5394 = vld [vmem:[#allocation7 + $0x180] sm:$0xff]
          %v5395 = vld [vmem:[#allocation7 + $0x188] sm:$0xff]
          %v5396 = vld [vmem:[#allocation7 + $0x190] sm:$0xff]
          %v5397 = vld [vmem:[#allocation7 + $0x198] sm:$0xff]
          %v5398 = vld [vmem:[#allocation7 + $0x1a0] sm:$0xff]
          %v5399 = vld [vmem:[#allocation7 + $0x1a8] sm:$0xff]
          %v5400 = vld [vmem:[#allocation7 + $0x1b0] sm:$0xff]
          %v5401 = vld [vmem:[#allocation7 + $0x1b8] sm:$0xff]
          %v5402 = vld [vmem:[#allocation7 + $0x1c0] sm:$0xff]
          %v5403 = vld [vmem:[#allocation7 + $0x1c8] sm:$0xff]
          %v5404 = vld [vmem:[#allocation7 + $0x1d0] sm:$0xff]
          %v5405 = vld [vmem:[#allocation7 + $0x1d8] sm:$0xff]
          %v5406 = vld [vmem:[#allocation7 + $0x1e0] sm:$0xff]
          %v5407 = vld [vmem:[#allocation7 + $0x1e8] sm:$0xff]
          %v5408 = vld [vmem:[#allocation7 + $0x1f0] sm:$0xff]
          %v5409 = vld [vmem:[#allocation7 + $0x1f8] sm:$0xff]
          %v5410 = vld [vmem:[#allocation6] sm:$0xff]
          %v5411 = vld [vmem:[#allocation6 + $0x8] sm:$0xff]
          %v5412 = vld [vmem:[#allocation6 + $0x10] sm:$0xff]
          %v5413 = vld [vmem:[#allocation6 + $0x18] sm:$0xff]
          %v5414 = vld [vmem:[#allocation6 + $0x20] sm:$0xff]
          %v5415 = vld [vmem:[#allocation6 + $0x28] sm:$0xff]
          %v5416 = vld [vmem:[#allocation6 + $0x30] sm:$0xff]
          %v5417 = vld [vmem:[#allocation6 + $0x38] sm:$0xff]
          %v5418 = vld [vmem:[#allocation6 + $0x40] sm:$0xff]
          %v5419 = vld [vmem:[#allocation6 + $0x48] sm:$0xff]
          %v5420 = vld [vmem:[#allocation6 + $0x50] sm:$0xff]
          %v5421 = vld [vmem:[#allocation6 + $0x58] sm:$0xff]
          %v5422 = vld [vmem:[#allocation6 + $0x60] sm:$0xff]
          %v5423 = vld [vmem:[#allocation6 + $0x68] sm:$0xff]
          %v5424 = vld [vmem:[#allocation6 + $0x70] sm:$0xff]
          %v5425 = vld [vmem:[#allocation6 + $0x78] sm:$0xff]
          %v5426 = vld [vmem:[#allocation6 + $0x80] sm:$0xff]
          %v5427 = vld [vmem:[#allocation6 + $0x88] sm:$0xff]
          %v5428 = vld [vmem:[#allocation6 + $0x90] sm:$0xff]
          %v5429 = vld [vmem:[#allocation6 + $0x98] sm:$0xff]
          %v5430 = vld [vmem:[#allocation6 + $0xa0] sm:$0xff]
          %v5431 = vld [vmem:[#allocation6 + $0xa8] sm:$0xff]
          %v5432 = vld [vmem:[#allocation6 + $0xb0] sm:$0xff]
          %v5433 = vld [vmem:[#allocation6 + $0xb8] sm:$0xff]
          %v5434 = vld [vmem:[#allocation6 + $0xc0] sm:$0xff]
          %v5435 = vld [vmem:[#allocation6 + $0xc8] sm:$0xff]
          %v5436 = vld [vmem:[#allocation6 + $0xd0] sm:$0xff]
          %v5437 = vld [vmem:[#allocation6 + $0xd8] sm:$0xff]
          %v5438 = vld [vmem:[#allocation6 + $0xe0] sm:$0xff]
          %v5439 = vld [vmem:[#allocation6 + $0xe8] sm:$0xff]
          %v5440 = vld [vmem:[#allocation6 + $0xf0] sm:$0xff]
          %v5441 = vld [vmem:[#allocation6 + $0xf8] sm:$0xff]
          %v5442 = vld [vmem:[#allocation6 + $0x100] sm:$0xff]
          %v5443 = vld [vmem:[#allocation6 + $0x108] sm:$0xff]
          %v5444 = vld [vmem:[#allocation6 + $0x110] sm:$0xff]
          %v5445 = vld [vmem:[#allocation6 + $0x118] sm:$0xff]
          %v5446 = vld [vmem:[#allocation6 + $0x120] sm:$0xff]
          %v5447 = vld [vmem:[#allocation6 + $0x128] sm:$0xff]
          %v5448 = vld [vmem:[#allocation6 + $0x130] sm:$0xff]
          %v5449 = vld [vmem:[#allocation6 + $0x138] sm:$0xff]
          %v5450 = vld [vmem:[#allocation6 + $0x140] sm:$0xff]
          %v5451 = vld [vmem:[#allocation6 + $0x148] sm:$0xff]
          %v5452 = vld [vmem:[#allocation6 + $0x150] sm:$0xff]
          %v5453 = vld [vmem:[#allocation6 + $0x158] sm:$0xff]
          %v5454 = vld [vmem:[#allocation6 + $0x160] sm:$0xff]
          %v5455 = vld [vmem:[#allocation6 + $0x168] sm:$0xff]
          %v5456 = vld [vmem:[#allocation6 + $0x170] sm:$0xff]
          %v5457 = vld [vmem:[#allocation6 + $0x178] sm:$0xff]
          %v5458 = vld [vmem:[#allocation6 + $0x180] sm:$0xff]
          %v5459 = vld [vmem:[#allocation6 + $0x188] sm:$0xff]
          %v5460 = vld [vmem:[#allocation6 + $0x190] sm:$0xff]
          %v5461 = vld [vmem:[#allocation6 + $0x198] sm:$0xff]
          %v5462 = vld [vmem:[#allocation6 + $0x1a0] sm:$0xff]
          %v5463 = vld [vmem:[#allocation6 + $0x1a8] sm:$0xff]
          %v5464 = vld [vmem:[#allocation6 + $0x1b0] sm:$0xff]
          %v5465 = vld [vmem:[#allocation6 + $0x1b8] sm:$0xff]
          %v5466 = vld [vmem:[#allocation6 + $0x1c0] sm:$0xff]
          %v5467 = vld [vmem:[#allocation6 + $0x1c8] sm:$0xff]
          %v5468 = vld [vmem:[#allocation6 + $0x1d0] sm:$0xff]
          %v5469 = vld [vmem:[#allocation6 + $0x1d8] sm:$0xff]
          %v5470 = vld [vmem:[#allocation6 + $0x1e0] sm:$0xff]
          %v5471 = vld [vmem:[#allocation6 + $0x1e8] sm:$0xff]
          %v5472 = vld [vmem:[#allocation6 + $0x1f0] sm:$0xff]
          %v5473 = vld [vmem:[#allocation6 + $0x1f8] sm:$0xff]
          %v5474 = vrcp.pop %v5410
          %v5475 = vrcp.pop %v5411
          %v5476 = vrcp.pop %v5412
          %v5477 = vrcp.pop %v5413
          %v5478 = vrcp.pop %v5414
          %v5479 = vrcp.pop %v5415
          %v5480 = vrcp.pop %v5416
          %v5481 = vrcp.pop %v5417
          %v5482 = vrcp.pop %v5418
          %v5483 = vrcp.pop %v5419
          %v5484 = vrcp.pop %v5420
          %v5485 = vrcp.pop %v5421
          %v5486 = vrcp.pop %v5422
          %v5487 = vrcp.pop %v5423
          %v5488 = vrcp.pop %v5424
          %v5489 = vrcp.pop %v5425
          %v5490 = vrcp.pop %v5426
          %v5491 = vrcp.pop %v5427
          %v5492 = vrcp.pop %v5428
          %v5493 = vrcp.pop %v5429
          %v5494 = vrcp.pop %v5430
          %v5495 = vrcp.pop %v5431
          %v5496 = vrcp.pop %v5432
          %v5497 = vrcp.pop %v5433
          %v5498 = vrcp.pop %v5434
          %v5499 = vrcp.pop %v5435
          %v5500 = vrcp.pop %v5436
          %v5501 = vrcp.pop %v5437
          %v5502 = vrcp.pop %v5438
          %v5503 = vrcp.pop %v5439
          %v5504 = vrcp.pop %v5440
          %v5505 = vrcp.pop %v5441
          %v5506 = vrcp.pop %v5442
          %v5507 = vrcp.pop %v5443
          %v5508 = vrcp.pop %v5444
          %v5509 = vrcp.pop %v5445
          %v5510 = vrcp.pop %v5446
          %v5511 = vrcp.pop %v5447
          %v5512 = vrcp.pop %v5448
          %v5513 = vrcp.pop %v5449
          %v5514 = vrcp.pop %v5450
          %v5515 = vrcp.pop %v5451
          %v5516 = vrcp.pop %v5452
          %v5517 = vrcp.pop %v5453
          %v5518 = vrcp.pop %v5454
          %v5519 = vrcp.pop %v5455
          %v5520 = vrcp.pop %v5456
          %v5521 = vrcp.pop %v5457
          %v5522 = vrcp.pop %v5458
          %v5523 = vrcp.pop %v5459
          %v5524 = vrcp.pop %v5460
          %v5525 = vrcp.pop %v5461
          %v5526 = vrcp.pop %v5462
          %v5527 = vrcp.pop %v5463
          %v5528 = vrcp.pop %v5464
          %v5529 = vrcp.pop %v5465
          %v5530 = vrcp.pop %v5466
          %v5531 = vrcp.pop %v5467
          %v5532 = vrcp.pop %v5468
          %v5533 = vrcp.pop %v5469
          %v5534 = vrcp.pop %v5470
          %v5535 = vrcp.pop %v5471
          %v5536 = vrcp.pop %v5472
          %v5537 = vrcp.pop %v5473
          %5539 = vset.pattern.permute.xlu0 0
          %5540 = vperm.xlu0 %5539, %v5474
          %v5541 = vpop.permute.xlu0 %5540
          %5544 = vset.pattern.permute.xlu0 0
          %5545 = vperm.xlu0 %5544, %v5475
          %v5546 = vpop.permute.xlu0 %5545
          %5549 = vset.pattern.permute.xlu0 0
          %5550 = vperm.xlu0 %5549, %v5476
          %v5551 = vpop.permute.xlu0 %5550
          %5554 = vset.pattern.permute.xlu0 0
          %5555 = vperm.xlu0 %5554, %v5477
          %v5556 = vpop.permute.xlu0 %5555
          %5559 = vset.pattern.permute.xlu0 0
          %5560 = vperm.xlu0 %5559, %v5478
          %v5561 = vpop.permute.xlu0 %5560
          %5564 = vset.pattern.permute.xlu0 0
          %5565 = vperm.xlu0 %5564, %v5479
          %v5566 = vpop.permute.xlu0 %5565
          %5569 = vset.pattern.permute.xlu0 0
          %5570 = vperm.xlu0 %5569, %v5480
          %v5571 = vpop.permute.xlu0 %5570
          %5574 = vset.pattern.permute.xlu0 0
          %5575 = vperm.xlu0 %5574, %v5481
          %v5576 = vpop.permute.xlu0 %5575
          %5579 = vset.pattern.permute.xlu0 0
          %5580 = vperm.xlu0 %5579, %v5482
          %v5581 = vpop.permute.xlu0 %5580
          %5584 = vset.pattern.permute.xlu0 0
          %5585 = vperm.xlu0 %5584, %v5483
          %v5586 = vpop.permute.xlu0 %5585
          %5589 = vset.pattern.permute.xlu0 0
          %5590 = vperm.xlu0 %5589, %v5484
          %v5591 = vpop.permute.xlu0 %5590
          %5594 = vset.pattern.permute.xlu0 0
          %5595 = vperm.xlu0 %5594, %v5485
          %v5596 = vpop.permute.xlu0 %5595
          %5599 = vset.pattern.permute.xlu0 0
          %5600 = vperm.xlu0 %5599, %v5486
          %v5601 = vpop.permute.xlu0 %5600
          %5604 = vset.pattern.permute.xlu0 0
          %5605 = vperm.xlu0 %5604, %v5487
          %v5606 = vpop.permute.xlu0 %5605
          %5609 = vset.pattern.permute.xlu0 0
          %5610 = vperm.xlu0 %5609, %v5488
          %v5611 = vpop.permute.xlu0 %5610
          %5614 = vset.pattern.permute.xlu0 0
          %5615 = vperm.xlu0 %5614, %v5489
          %v5616 = vpop.permute.xlu0 %5615
          %5619 = vset.pattern.permute.xlu0 0
          %5620 = vperm.xlu0 %5619, %v5490
          %v5621 = vpop.permute.xlu0 %5620
          %5624 = vset.pattern.permute.xlu0 0
          %5625 = vperm.xlu0 %5624, %v5491
          %v5626 = vpop.permute.xlu0 %5625
          %5629 = vset.pattern.permute.xlu0 0
          %5630 = vperm.xlu0 %5629, %v5492
          %v5631 = vpop.permute.xlu0 %5630
          %5634 = vset.pattern.permute.xlu0 0
          %5635 = vperm.xlu0 %5634, %v5493
          %v5636 = vpop.permute.xlu0 %5635
          %5639 = vset.pattern.permute.xlu0 0
          %5640 = vperm.xlu0 %5639, %v5494
          %v5641 = vpop.permute.xlu0 %5640
          %5644 = vset.pattern.permute.xlu0 0
          %5645 = vperm.xlu0 %5644, %v5495
          %v5646 = vpop.permute.xlu0 %5645
          %5649 = vset.pattern.permute.xlu0 0
          %5650 = vperm.xlu0 %5649, %v5496
          %v5651 = vpop.permute.xlu0 %5650
          %5654 = vset.pattern.permute.xlu0 0
          %5655 = vperm.xlu0 %5654, %v5497
          %v5656 = vpop.permute.xlu0 %5655
          %5659 = vset.pattern.permute.xlu0 0
          %5660 = vperm.xlu0 %5659, %v5498
          %v5661 = vpop.permute.xlu0 %5660
          %5664 = vset.pattern.permute.xlu0 0
          %5665 = vperm.xlu0 %5664, %v5499
          %v5666 = vpop.permute.xlu0 %5665
          %5669 = vset.pattern.permute.xlu0 0
          %5670 = vperm.xlu0 %5669, %v5500
          %v5671 = vpop.permute.xlu0 %5670
          %5674 = vset.pattern.permute.xlu0 0
          %5675 = vperm.xlu0 %5674, %v5501
          %v5676 = vpop.permute.xlu0 %5675
          %5679 = vset.pattern.permute.xlu0 0
          %5680 = vperm.xlu0 %5679, %v5502
          %v5681 = vpop.permute.xlu0 %5680
          %5684 = vset.pattern.permute.xlu0 0
          %5685 = vperm.xlu0 %5684, %v5503
          %v5686 = vpop.permute.xlu0 %5685
          %5689 = vset.pattern.permute.xlu0 0
          %5690 = vperm.xlu0 %5689, %v5504
          %v5691 = vpop.permute.xlu0 %5690
          %5694 = vset.pattern.permute.xlu0 0
          %5695 = vperm.xlu0 %5694, %v5505
          %v5696 = vpop.permute.xlu0 %5695
          %5699 = vset.pattern.permute.xlu0 0
          %5700 = vperm.xlu0 %5699, %v5506
          %v5701 = vpop.permute.xlu0 %5700
          %5704 = vset.pattern.permute.xlu0 0
          %5705 = vperm.xlu0 %5704, %v5507
          %v5706 = vpop.permute.xlu0 %5705
          %5709 = vset.pattern.permute.xlu0 0
          %5710 = vperm.xlu0 %5709, %v5508
          %v5711 = vpop.permute.xlu0 %5710
          %5714 = vset.pattern.permute.xlu0 0
          %5715 = vperm.xlu0 %5714, %v5509
          %v5716 = vpop.permute.xlu0 %5715
          %5719 = vset.pattern.permute.xlu0 0
          %5720 = vperm.xlu0 %5719, %v5510
          %v5721 = vpop.permute.xlu0 %5720
          %5724 = vset.pattern.permute.xlu0 0
          %5725 = vperm.xlu0 %5724, %v5511
          %v5726 = vpop.permute.xlu0 %5725
          %5729 = vset.pattern.permute.xlu0 0
          %5730 = vperm.xlu0 %5729, %v5512
          %v5731 = vpop.permute.xlu0 %5730
          %5734 = vset.pattern.permute.xlu0 0
          %5735 = vperm.xlu0 %5734, %v5513
          %v5736 = vpop.permute.xlu0 %5735
          %5739 = vset.pattern.permute.xlu0 0
          %5740 = vperm.xlu0 %5739, %v5514
          %v5741 = vpop.permute.xlu0 %5740
          %5744 = vset.pattern.permute.xlu0 0
          %5745 = vperm.xlu0 %5744, %v5515
          %v5746 = vpop.permute.xlu0 %5745
          %5749 = vset.pattern.permute.xlu0 0
          %5750 = vperm.xlu0 %5749, %v5516
          %v5751 = vpop.permute.xlu0 %5750
          %5754 = vset.pattern.permute.xlu0 0
          %5755 = vperm.xlu0 %5754, %v5517
          %v5756 = vpop.permute.xlu0 %5755
          %5759 = vset.pattern.permute.xlu0 0
          %5760 = vperm.xlu0 %5759, %v5518
          %v5761 = vpop.permute.xlu0 %5760
          %5764 = vset.pattern.permute.xlu0 0
          %5765 = vperm.xlu0 %5764, %v5519
          %v5766 = vpop.permute.xlu0 %5765
          %5769 = vset.pattern.permute.xlu0 0
          %5770 = vperm.xlu0 %5769, %v5520
          %v5771 = vpop.permute.xlu0 %5770
          %5774 = vset.pattern.permute.xlu0 0
          %5775 = vperm.xlu0 %5774, %v5521
          %v5776 = vpop.permute.xlu0 %5775
          %5779 = vset.pattern.permute.xlu0 0
          %5780 = vperm.xlu0 %5779, %v5522
          %v5781 = vpop.permute.xlu0 %5780
          %5784 = vset.pattern.permute.xlu0 0
          %5785 = vperm.xlu0 %5784, %v5523
          %v5786 = vpop.permute.xlu0 %5785
          %5789 = vset.pattern.permute.xlu0 0
          %5790 = vperm.xlu0 %5789, %v5524
          %v5791 = vpop.permute.xlu0 %5790
          %5794 = vset.pattern.permute.xlu0 0
          %5795 = vperm.xlu0 %5794, %v5525
          %v5796 = vpop.permute.xlu0 %5795
          %5799 = vset.pattern.permute.xlu0 0
          %5800 = vperm.xlu0 %5799, %v5526
          %v5801 = vpop.permute.xlu0 %5800
          %5804 = vset.pattern.permute.xlu0 0
          %5805 = vperm.xlu0 %5804, %v5527
          %v5806 = vpop.permute.xlu0 %5805
          %5809 = vset.pattern.permute.xlu0 0
          %5810 = vperm.xlu0 %5809, %v5528
          %v5811 = vpop.permute.xlu0 %5810
          %5814 = vset.pattern.permute.xlu0 0
          %5815 = vperm.xlu0 %5814, %v5529
          %v5816 = vpop.permute.xlu0 %5815
          %5819 = vset.pattern.permute.xlu0 0
          %5820 = vperm.xlu0 %5819, %v5530
          %v5821 = vpop.permute.xlu0 %5820
          %5824 = vset.pattern.permute.xlu0 0
          %5825 = vperm.xlu0 %5824, %v5531
          %v5826 = vpop.permute.xlu0 %5825
          %5829 = vset.pattern.permute.xlu0 0
          %5830 = vperm.xlu0 %5829, %v5532
          %v5831 = vpop.permute.xlu0 %5830
          %5834 = vset.pattern.permute.xlu0 0
          %5835 = vperm.xlu0 %5834, %v5533
          %v5836 = vpop.permute.xlu0 %5835
          %5839 = vset.pattern.permute.xlu0 0
          %5840 = vperm.xlu0 %5839, %v5534
          %v5841 = vpop.permute.xlu0 %5840
          %5844 = vset.pattern.permute.xlu0 0
          %5845 = vperm.xlu0 %5844, %v5535
          %v5846 = vpop.permute.xlu0 %5845
          %5849 = vset.pattern.permute.xlu0 0
          %5850 = vperm.xlu0 %5849, %v5536
          %v5851 = vpop.permute.xlu0 %5850
          %5854 = vset.pattern.permute.xlu0 0
          %5855 = vperm.xlu0 %5854, %v5537
          %v5856 = vpop.permute.xlu0 %5855
          %v5858 = vmul.f32 %v5346, %v5541
          %v5859 = vmul.f32 %v5347, %v5546
          %v5860 = vmul.f32 %v5348, %v5551
          %v5861 = vmul.f32 %v5349, %v5556
          %v5862 = vmul.f32 %v5350, %v5561
          %v5863 = vmul.f32 %v5351, %v5566
          %v5864 = vmul.f32 %v5352, %v5571
          %v5865 = vmul.f32 %v5353, %v5576
          %v5866 = vmul.f32 %v5354, %v5581
          %v5867 = vmul.f32 %v5355, %v5586
          %v5868 = vmul.f32 %v5356, %v5591
          %v5869 = vmul.f32 %v5357, %v5596
          %v5870 = vmul.f32 %v5358, %v5601
          %v5871 = vmul.f32 %v5359, %v5606
          %v5872 = vmul.f32 %v5360, %v5611
          %v5873 = vmul.f32 %v5361, %v5616
          %v5874 = vmul.f32 %v5362, %v5621
          %v5875 = vmul.f32 %v5363, %v5626
          %v5876 = vmul.f32 %v5364, %v5631
          %v5877 = vmul.f32 %v5365, %v5636
          %v5878 = vmul.f32 %v5366, %v5641
          %v5879 = vmul.f32 %v5367, %v5646
          %v5880 = vmul.f32 %v5368, %v5651
          %v5881 = vmul.f32 %v5369, %v5656
          %v5882 = vmul.f32 %v5370, %v5661
          %v5883 = vmul.f32 %v5371, %v5666
          %v5884 = vmul.f32 %v5372, %v5671
          %v5885 = vmul.f32 %v5373, %v5676
          %v5886 = vmul.f32 %v5374, %v5681
          %v5887 = vmul.f32 %v5375, %v5686
          %v5888 = vmul.f32 %v5376, %v5691
          %v5889 = vmul.f32 %v5377, %v5696
          %v5890 = vmul.f32 %v5378, %v5701
          %v5891 = vmul.f32 %v5379, %v5706
          %v5892 = vmul.f32 %v5380, %v5711
          %v5893 = vmul.f32 %v5381, %v5716
          %v5894 = vmul.f32 %v5382, %v5721
          %v5895 = vmul.f32 %v5383, %v5726
          %v5896 = vmul.f32 %v5384, %v5731
          %v5897 = vmul.f32 %v5385, %v5736
          %v5898 = vmul.f32 %v5386, %v5741
          %v5899 = vmul.f32 %v5387, %v5746
          %v5900 = vmul.f32 %v5388, %v5751
          %v5901 = vmul.f32 %v5389, %v5756
          %v5902 = vmul.f32 %v5390, %v5761
          %v5903 = vmul.f32 %v5391, %v5766
          %v5904 = vmul.f32 %v5392, %v5771
          %v5905 = vmul.f32 %v5393, %v5776
          %v5906 = vmul.f32 %v5394, %v5781
          %v5907 = vmul.f32 %v5395, %v5786
          %v5908 = vmul.f32 %v5396, %v5791
          %v5909 = vmul.f32 %v5397, %v5796
          %v5910 = vmul.f32 %v5398, %v5801
          %v5911 = vmul.f32 %v5399, %v5806
          %v5912 = vmul.f32 %v5400, %v5811
          %v5913 = vmul.f32 %v5401, %v5816
          %v5914 = vmul.f32 %v5402, %v5821
          %v5915 = vmul.f32 %v5403, %v5826
          %v5916 = vmul.f32 %v5404, %v5831
          %v5917 = vmul.f32 %v5405, %v5836
          %v5918 = vmul.f32 %v5406, %v5841
          %v5919 = vmul.f32 %v5407, %v5846
          %v5920 = vmul.f32 %v5408, %v5851
          %v5921 = vmul.f32 %v5409, %v5856
          %v5922 = vpack.c.bf16 %v5859, %v5858
          %v5923 = vpack.c.bf16 %v5861, %v5860
          %v5924 = vpack.c.bf16 %v5863, %v5862
          %v5925 = vpack.c.bf16 %v5865, %v5864
          %v5926 = vpack.c.bf16 %v5867, %v5866
          %v5927 = vpack.c.bf16 %v5869, %v5868
          %v5928 = vpack.c.bf16 %v5871, %v5870
          %v5929 = vpack.c.bf16 %v5873, %v5872
          %vm5930 = vcmask 261120
          %5931 = vst.msk [vmem:[#allocation8] sm:$0xff] %vm5930, %v5922
          %5932 = vst.msk [vmem:[#allocation8 + $0x8] sm:$0xff] %vm5930, %v5923
          %5933 = vst.msk [vmem:[#allocation8 + $0x10] sm:$0xff] %vm5930, %v5924
          %5934 = vst.msk [vmem:[#allocation8 + $0x18] sm:$0xff] %vm5930, %v5925
          %5935 = vst.msk [vmem:[#allocation8 + $0x20] sm:$0xff] %vm5930, %v5926
          %5936 = vst.msk [vmem:[#allocation8 + $0x28] sm:$0xff] %vm5930, %v5927
          %5937 = vst.msk [vmem:[#allocation8 + $0x30] sm:$0xff] %vm5930, %v5928
          %5938 = vst.msk [vmem:[#allocation8 + $0x38] sm:$0xff] %vm5930, %v5929
          %v5939 = vpack.c.bf16 %v5875, %v5874
          %v5940 = vpack.c.bf16 %v5877, %v5876
          %v5941 = vpack.c.bf16 %v5879, %v5878
          %v5942 = vpack.c.bf16 %v5881, %v5880
          %v5943 = vpack.c.bf16 %v5883, %v5882
          %v5944 = vpack.c.bf16 %v5885, %v5884
          %v5945 = vpack.c.bf16 %v5887, %v5886
          %v5946 = vpack.c.bf16 %v5889, %v5888
          %5955 = vrot.lane.b32.xlu0 %v5939, 32
          %v5956 = vpop.permute.xlu0 %5955
          %5957 = vrot.lane.b32.xlu0 %v5940, 32
          %v5958 = vpop.permute.xlu0 %5957
          %5959 = vrot.lane.b32.xlu0 %v5941, 32
          %v5960 = vpop.permute.xlu0 %5959
          %5961 = vrot.lane.b32.xlu0 %v5942, 32
          %v5962 = vpop.permute.xlu0 %5961
          %5963 = vrot.lane.b32.xlu0 %v5943, 32
          %v5964 = vpop.permute.xlu0 %5963
          %5965 = vrot.lane.b32.xlu0 %v5944, 32
          %v5966 = vpop.permute.xlu0 %5965
          %5967 = vrot.lane.b32.xlu0 %v5945, 32
          %v5968 = vpop.permute.xlu0 %5967
          %5969 = vrot.lane.b32.xlu0 %v5946, 32
          %v5970 = vpop.permute.xlu0 %5969
          %vm5979 = vcmask 523520
          %5980 = vst.msk [vmem:[#allocation8] sm:$0xff] %vm5979, %v5956
          %5981 = vst.msk [vmem:[#allocation8 + $0x8] sm:$0xff] %vm5979, %v5958
          %5982 = vst.msk [vmem:[#allocation8 + $0x10] sm:$0xff] %vm5979, %v5960
          %5983 = vst.msk [vmem:[#allocation8 + $0x18] sm:$0xff] %vm5979, %v5962
          %5984 = vst.msk [vmem:[#allocation8 + $0x20] sm:$0xff] %vm5979, %v5964
          %5985 = vst.msk [vmem:[#allocation8 + $0x28] sm:$0xff] %vm5979, %v5966
          %5986 = vst.msk [vmem:[#allocation8 + $0x30] sm:$0xff] %vm5979, %v5968
          %5987 = vst.msk [vmem:[#allocation8 + $0x38] sm:$0xff] %vm5979, %v5970
          %v5988 = vpack.c.bf16 %v5891, %v5890
          %v5989 = vpack.c.bf16 %v5893, %v5892
          %v5990 = vpack.c.bf16 %v5895, %v5894
          %v5991 = vpack.c.bf16 %v5897, %v5896
          %v5992 = vpack.c.bf16 %v5899, %v5898
          %v5993 = vpack.c.bf16 %v5901, %v5900
          %v5994 = vpack.c.bf16 %v5903, %v5902
          %v5995 = vpack.c.bf16 %v5905, %v5904
          %6004 = vrot.lane.b32.xlu0 %v5988, 64
          %v6005 = vpop.permute.xlu0 %6004
          %6006 = vrot.lane.b32.xlu0 %v5989, 64
          %v6007 = vpop.permute.xlu0 %6006
          %6008 = vrot.lane.b32.xlu0 %v5990, 64
          %v6009 = vpop.permute.xlu0 %6008
          %6010 = vrot.lane.b32.xlu0 %v5991, 64
          %v6011 = vpop.permute.xlu0 %6010
          %6012 = vrot.lane.b32.xlu0 %v5992, 64
          %v6013 = vpop.permute.xlu0 %6012
          %6014 = vrot.lane.b32.xlu0 %v5993, 64
          %v6015 = vpop.permute.xlu0 %6014
          %6016 = vrot.lane.b32.xlu0 %v5994, 64
          %v6017 = vpop.permute.xlu0 %6016
          %6018 = vrot.lane.b32.xlu0 %v5995, 64
          %v6019 = vpop.permute.xlu0 %6018
          %vm6028 = vcmask 785920
          %6029 = vst.msk [vmem:[#allocation8] sm:$0xff] %vm6028, %v6005
          %6030 = vst.msk [vmem:[#allocation8 + $0x8] sm:$0xff] %vm6028, %v6007
          %6031 = vst.msk [vmem:[#allocation8 + $0x10] sm:$0xff] %vm6028, %v6009
          %6032 = vst.msk [vmem:[#allocation8 + $0x18] sm:$0xff] %vm6028, %v6011
          %6033 = vst.msk [vmem:[#allocation8 + $0x20] sm:$0xff] %vm6028, %v6013
          %6034 = vst.msk [vmem:[#allocation8 + $0x28] sm:$0xff] %vm6028, %v6015
          %6035 = vst.msk [vmem:[#allocation8 + $0x30] sm:$0xff] %vm6028, %v6017
          %6036 = vst.msk [vmem:[#allocation8 + $0x38] sm:$0xff] %vm6028, %v6019
          %v6037 = vpack.c.bf16 %v5907, %v5906
          %v6038 = vpack.c.bf16 %v5909, %v5908
          %v6039 = vpack.c.bf16 %v5911, %v5910
          %v6040 = vpack.c.bf16 %v5913, %v5912
          %v6041 = vpack.c.bf16 %v5915, %v5914
          %v6042 = vpack.c.bf16 %v5917, %v5916
          %v6043 = vpack.c.bf16 %v5919, %v5918
          %v6044 = vpack.c.bf16 %v5921, %v5920
          %6053 = vrot.lane.b32.xlu0 %v6037, 96
          %v6054 = vpop.permute.xlu0 %6053
          %6055 = vrot.lane.b32.xlu0 %v6038, 96
          %v6056 = vpop.permute.xlu0 %6055
          %6057 = vrot.lane.b32.xlu0 %v6039, 96
          %v6058 = vpop.permute.xlu0 %6057
          %6059 = vrot.lane.b32.xlu0 %v6040, 96
          %v6060 = vpop.permute.xlu0 %6059
          %6061 = vrot.lane.b32.xlu0 %v6041, 96
          %v6062 = vpop.permute.xlu0 %6061
          %6063 = vrot.lane.b32.xlu0 %v6042, 96
          %v6064 = vpop.permute.xlu0 %6063
          %6065 = vrot.lane.b32.xlu0 %v6043, 96
          %v6066 = vpop.permute.xlu0 %6065
          %6067 = vrot.lane.b32.xlu0 %v6044, 96
          %v6068 = vpop.permute.xlu0 %6067
          %vm6077 = vcmask 1048320
          %6078 = vst.msk [vmem:[#allocation8] sm:$0xff] %vm6077, %v6054
          %6079 = vst.msk [vmem:[#allocation8 + $0x8] sm:$0xff] %vm6077, %v6056
          %6080 = vst.msk [vmem:[#allocation8 + $0x10] sm:$0xff] %vm6077, %v6058
          %6081 = vst.msk [vmem:[#allocation8 + $0x18] sm:$0xff] %vm6077, %v6060
          %6082 = vst.msk [vmem:[#allocation8 + $0x20] sm:$0xff] %vm6077, %v6062
          %6083 = vst.msk [vmem:[#allocation8 + $0x28] sm:$0xff] %vm6077, %v6064
          %6084 = vst.msk [vmem:[#allocation8 + $0x30] sm:$0xff] %vm6077, %v6066
          %6085 = vst.msk [vmem:[#allocation8 + $0x38] sm:$0xff] %vm6077, %v6068
          %v6086 = vld [vmem:[#allocation8] sm:$0xff]
          %v6087 = vld [vmem:[#allocation8 + $0x8] sm:$0xff]
          %v6088 = vld [vmem:[#allocation8 + $0x10] sm:$0xff]
          %v6089 = vld [vmem:[#allocation8 + $0x18] sm:$0xff]
          %v6090 = vld [vmem:[#allocation8 + $0x20] sm:$0xff]
          %v6091 = vld [vmem:[#allocation8 + $0x28] sm:$0xff]
          %v6092 = vld [vmem:[#allocation8 + $0x30] sm:$0xff]
          %v6093 = vld [vmem:[#allocation8 + $0x38] sm:$0xff]
          %v6094 = vld [vmem:[#allocation18] sm:$0xf]
          %v6095 = vld [vmem:[#allocation18 + $0x4] sm:$0xf]
          %v6096 = vld [vmem:[#allocation18 + $0x8] sm:$0xf]
          %v6097 = vld [vmem:[#allocation18 + $0xc] sm:$0xf]
          %v6098 = vld [vmem:[#allocation18 + $0x10] sm:$0xf]
          %v6099 = vld [vmem:[#allocation18 + $0x14] sm:$0xf]
          %v6100 = vld [vmem:[#allocation18 + $0x18] sm:$0xf]
          %v6101 = vld [vmem:[#allocation18 + $0x1c] sm:$0xf]
          %v6102 = vld [vmem:[#allocation18 + $0x20] sm:$0xf]
          %v6103 = vld [vmem:[#allocation18 + $0x24] sm:$0xf]
          %v6104 = vld [vmem:[#allocation18 + $0x28] sm:$0xf]
          %v6105 = vld [vmem:[#allocation18 + $0x2c] sm:$0xf]
          %v6106 = vld [vmem:[#allocation18 + $0x30] sm:$0xf]
          %v6107 = vld [vmem:[#allocation18 + $0x34] sm:$0xf]
          %v6108 = vld [vmem:[#allocation18 + $0x38] sm:$0xf]
          %v6109 = vld [vmem:[#allocation18 + $0x3c] sm:$0xf]
          %v6110 = vld [vmem:[%s10] sm:$0x1]
          %v6112 = vlaneseq
          %v6113 = vshrl.u32 %v6112, 7
          %v6114 = vsub.s32 0, %v6113
          %v6115 = vrot.slane %v6110, %v6114
          %v6133 = vunpack.c.l.b16 %v6094
          %v6134 = vunpack.c.l.b16 %v6095
          %v6135 = vunpack.c.l.b16 %v6096
          %v6136 = vunpack.c.l.b16 %v6097
          %v6137 = vunpack.c.l.b16 %v6098
          %v6138 = vunpack.c.l.b16 %v6099
          %v6139 = vunpack.c.l.b16 %v6100
          %v6140 = vunpack.c.l.b16 %v6101
          %v6141 = vunpack.c.l.b16 %v6102
          %v6142 = vunpack.c.l.b16 %v6103
          %v6143 = vunpack.c.l.b16 %v6104
          %v6144 = vunpack.c.l.b16 %v6105
          %v6145 = vunpack.c.l.b16 %v6106
          %v6146 = vunpack.c.l.b16 %v6107
          %v6147 = vunpack.c.l.b16 %v6108
          %v6148 = vunpack.c.l.b16 %v6109
          %v6149 = vpack.c.b16 %v6134, %v6133
          %v6150 = vpack.c.b16 %v6136, %v6135
          %v6151 = vpack.c.b16 %v6138, %v6137
          %v6152 = vpack.c.b16 %v6140, %v6139
          %v6153 = vpack.c.b16 %v6142, %v6141
          %v6154 = vpack.c.b16 %v6144, %v6143
          %v6155 = vpack.c.b16 %v6146, %v6145
          %v6156 = vpack.c.b16 %v6148, %v6147
          %6165 = vmatprep.subr.bf16.mxu0 0
          %6166 = vmatpush1.bf16.msra.mxu0 %v6149
          %6167 = vmatprep.subr.bf16.mxu0 0
          %6168 = vmatpush1.bf16.msra.mxu0 %v6150
          %6169 = vmatprep.subr.bf16.mxu0 0
          %6170 = vmatpush1.bf16.msra.mxu0 %v6151
          %6171 = vmatprep.subr.bf16.mxu0 0
          %6172 = vmatpush1.bf16.msra.mxu0 %v6152
          %6173 = vmatprep.subr.bf16.mxu0 0
          %6174 = vmatpush1.bf16.msra.mxu0 %v6153
          %6175 = vmatprep.subr.bf16.mxu0 0
          %6176 = vmatpush1.bf16.msra.mxu0 %v6154
          %6177 = vmatprep.subr.bf16.mxu0 0
          %6178 = vmatpush1.bf16.msra.mxu0 %v6155
          %6179 = vmatprep.subr.bf16.mxu0 0
          %6180 = vmatpush1.bf16.msra.mxu0 %v6156
          %6181 = vmatprep.subr.bf16.mxu0 0
          %6182 = vmatpush1.bf16.msra.mxu0 0
          %6183 = vmatprep.subr.bf16.mxu0 0
          %6184 = vmatpush1.bf16.msra.mxu0 0
          %6185 = vmatprep.subr.bf16.mxu0 0
          %6186 = vmatpush1.bf16.msra.mxu0 0
          %6187 = vmatprep.subr.bf16.mxu0 0
          %6188 = vmatpush1.bf16.msra.mxu0 0
          %6189 = vmatprep.subr.bf16.mxu0 0
          %6190 = vmatpush1.bf16.msra.mxu0 0
          %6191 = vmatprep.subr.bf16.mxu0 0
          %6192 = vmatpush1.bf16.msra.mxu0 0
          %6193 = vmatprep.subr.bf16.mxu0 0
          %6194 = vmatpush1.bf16.msra.mxu0 0
          %6195 = vmatprep.subr.bf16.mxu0 0
          %6196 = vmatpush1.bf16.msra.mxu0 0
          %6197 = vmatprep.mubr.bf16.mxu0 0
          %6198 = vmatmul.mubr.bf16.gmra.mrb[0].mxu0 %v6086
          %v6199 = vpop.f32.mrb[0].mxu0
          %v6200 = vadd.f32 %v6115, %v6199
          %v6201 = vpop.f32.mrb[0].mxu0
          %v6202 = vpop.f32.mrb[0].mxu0
          %v6203 = vadd.f32 %v6115, %v6202
          %v6204 = vpop.f32.mrb[0].mxu0
          %6205 = vmatprep.mubr.bf16.mxu0 0
          %6206 = vmatmul.mubr.bf16.gmra.mrb[0].mxu0 %v6087
          %v6207 = vpop.f32.mrb[0].mxu0
          %v6208 = vadd.f32 %v6115, %v6207
          %v6209 = vpop.f32.mrb[0].mxu0
          %v6210 = vpop.f32.mrb[0].mxu0
          %v6211 = vadd.f32 %v6115, %v6210
          %v6212 = vpop.f32.mrb[0].mxu0
          %6213 = vmatprep.mubr.bf16.mxu0 0
          %6214 = vmatmul.mubr.bf16.gmra.mrb[0].mxu0 %v6088
          %v6215 = vpop.f32.mrb[0].mxu0
          %v6216 = vadd.f32 %v6115, %v6215
          %v6217 = vpop.f32.mrb[0].mxu0
          %v6218 = vpop.f32.mrb[0].mxu0
          %v6219 = vadd.f32 %v6115, %v6218
          %v6220 = vpop.f32.mrb[0].mxu0
          %6221 = vmatprep.mubr.bf16.mxu0 0
          %6222 = vmatmul.mubr.bf16.gmra.mrb[0].mxu0 %v6089
          %v6223 = vpop.f32.mrb[0].mxu0
          %v6224 = vadd.f32 %v6115, %v6223
          %v6225 = vpop.f32.mrb[0].mxu0
          %v6226 = vpop.f32.mrb[0].mxu0
          %v6227 = vadd.f32 %v6115, %v6226
          %v6228 = vpop.f32.mrb[0].mxu0
          %6229 = vmatprep.mubr.bf16.mxu0 0
          %6230 = vmatmul.mubr.bf16.gmra.mrb[0].mxu0 %v6090
          %v6231 = vpop.f32.mrb[0].mxu0
          %v6232 = vadd.f32 %v6115, %v6231
          %v6233 = vpop.f32.mrb[0].mxu0
          %v6234 = vpop.f32.mrb[0].mxu0
          %v6235 = vadd.f32 %v6115, %v6234
          %v6236 = vpop.f32.mrb[0].mxu0
          %6237 = vmatprep.mubr.bf16.mxu0 0
          %6238 = vmatmul.mubr.bf16.gmra.mrb[0].mxu0 %v6091
          %v6239 = vpop.f32.mrb[0].mxu0
          %v6240 = vadd.f32 %v6115, %v6239
          %v6241 = vpop.f32.mrb[0].mxu0
          %v6242 = vpop.f32.mrb[0].mxu0
          %v6243 = vadd.f32 %v6115, %v6242
          %v6244 = vpop.f32.mrb[0].mxu0
          %6245 = vmatprep.mubr.bf16.mxu0 0
          %6246 = vmatmul.mubr.bf16.gmra.mrb[0].mxu0 %v6092
          %v6247 = vpop.f32.mrb[0].mxu0
          %v6248 = vadd.f32 %v6115, %v6247
          %v6249 = vpop.f32.mrb[0].mxu0
          %v6250 = vpop.f32.mrb[0].mxu0
          %v6251 = vadd.f32 %v6115, %v6250
          %v6252 = vpop.f32.mrb[0].mxu0
          %6253 = vmatprep.mubr.bf16.mxu0 0
          %6254 = vmatmul.mubr.bf16.gmra.mrb[0].mxu0 %v6093
          %v6255 = vpop.f32.mrb[0].mxu0
          %v6256 = vadd.f32 %v6115, %v6255
          %v6257 = vpop.f32.mrb[0].mxu0
          %v6258 = vpop.f32.mrb[0].mxu0
          %v6259 = vadd.f32 %v6115, %v6258
          %v6260 = vpop.f32.mrb[0].mxu0
          %6261 = vdwg.mxu0
          %v6262 = vld [vmem:[%s651] sm:$0xf]
          %v6263 = vld [vmem:[%s651 + $0x4] sm:$0xf]
          %v6264 = vld [vmem:[%s651 + $0x8] sm:$0xf]
          %v6265 = vld [vmem:[%s651 + $0xc] sm:$0xf]
          %v6266 = vld [vmem:[%s651 + $0x10] sm:$0xf]
          %v6267 = vld [vmem:[%s651 + $0x14] sm:$0xf]
          %v6268 = vld [vmem:[%s651 + $0x18] sm:$0xf]
          %v6269 = vld [vmem:[%s651 + $0x1c] sm:$0xf]
          %v6270 = vld [vmem:[%s651 + $0x20] sm:$0xf]
          %v6271 = vld [vmem:[%s651 + $0x24] sm:$0xf]
          %v6272 = vld [vmem:[%s651 + $0x28] sm:$0xf]
          %v6273 = vld [vmem:[%s651 + $0x2c] sm:$0xf]
          %v6274 = vld [vmem:[%s651 + $0x30] sm:$0xf]
          %v6275 = vld [vmem:[%s651 + $0x34] sm:$0xf]
          %v6276 = vld [vmem:[%s651 + $0x38] sm:$0xf]
          %v6277 = vld [vmem:[%s651 + $0x3c] sm:$0xf]
          %v6278 = vunpack.c.l.bf16 %v6262
          %v6279 = vunpack.c.l.bf16 %v6263
          %v6280 = vunpack.c.l.bf16 %v6264
          %v6281 = vunpack.c.l.bf16 %v6265
          %v6282 = vunpack.c.l.bf16 %v6266
          %v6283 = vunpack.c.l.bf16 %v6267
          %v6284 = vunpack.c.l.bf16 %v6268
          %v6285 = vunpack.c.l.bf16 %v6269
          %v6286 = vunpack.c.l.bf16 %v6270
          %v6287 = vunpack.c.l.bf16 %v6271
          %v6288 = vunpack.c.l.bf16 %v6272
          %v6289 = vunpack.c.l.bf16 %v6273
          %v6290 = vunpack.c.l.bf16 %v6274
          %v6291 = vunpack.c.l.bf16 %v6275
          %v6292 = vunpack.c.l.bf16 %v6276
          %v6293 = vunpack.c.l.bf16 %v6277
          %v6294 = vadd.f32 %v6200, %v6278
          %v6295 = vadd.f32 %v6203, %v6279
          %v6296 = vadd.f32 %v6208, %v6280
          %v6297 = vadd.f32 %v6211, %v6281
          %v6298 = vadd.f32 %v6216, %v6282
          %v6299 = vadd.f32 %v6219, %v6283
          %v6300 = vadd.f32 %v6224, %v6284
          %v6301 = vadd.f32 %v6227, %v6285
          %v6302 = vadd.f32 %v6232, %v6286
          %v6303 = vadd.f32 %v6235, %v6287
          %v6304 = vadd.f32 %v6240, %v6288
          %v6305 = vadd.f32 %v6243, %v6289
          %v6306 = vadd.f32 %v6248, %v6290
          %v6307 = vadd.f32 %v6251, %v6291
          %v6308 = vadd.f32 %v6256, %v6292
          %v6309 = vadd.f32 %v6259, %v6293
          %v6310 = vld [vmem:[%s11] sm:$0x1]
          %v6311 = vld [vmem:[%s12] sm:$0x1]
          %6312 = vadd.xlane.f32.xlu0 %v6294
          %v6313 = vpop.xlane.xlu0 %6312
          %6314 = vadd.xlane.f32.xlu0 %v6295
          %v6315 = vpop.xlane.xlu0 %6314
          %6316 = vadd.xlane.f32.xlu0 %v6296
          %v6317 = vpop.xlane.xlu0 %6316
          %6318 = vadd.xlane.f32.xlu0 %v6297
          %v6319 = vpop.xlane.xlu0 %6318
          %6320 = vadd.xlane.f32.xlu0 %v6298
          %v6321 = vpop.xlane.xlu0 %6320
          %6322 = vadd.xlane.f32.xlu0 %v6299
          %v6323 = vpop.xlane.xlu0 %6322
          %6324 = vadd.xlane.f32.xlu0 %v6300
          %v6325 = vpop.xlane.xlu0 %6324
          %6326 = vadd.xlane.f32.xlu0 %v6301
          %v6327 = vpop.xlane.xlu0 %6326
          %6328 = vadd.xlane.f32.xlu0 %v6302
          %v6329 = vpop.xlane.xlu0 %6328
          %6330 = vadd.xlane.f32.xlu0 %v6303
          %v6331 = vpop.xlane.xlu0 %6330
          %6332 = vadd.xlane.f32.xlu0 %v6304
          %v6333 = vpop.xlane.xlu0 %6332
          %6334 = vadd.xlane.f32.xlu0 %v6305
          %v6335 = vpop.xlane.xlu0 %6334
          %6336 = vadd.xlane.f32.xlu0 %v6306
          %v6337 = vpop.xlane.xlu0 %6336
          %6338 = vadd.xlane.f32.xlu0 %v6307
          %v6339 = vpop.xlane.xlu0 %6338
          %6340 = vadd.xlane.f32.xlu0 %v6308
          %v6341 = vpop.xlane.xlu0 %6340
          %6342 = vadd.xlane.f32.xlu0 %v6309
          %v6343 = vpop.xlane.xlu0 %6342
          %v6344 = vrcp.pop 128.0
          %v6345 = vmul.f32 %v6313, %v6344
          %v6346 = vmul.f32 %v6315, %v6344
          %v6347 = vmul.f32 %v6317, %v6344
          %v6348 = vmul.f32 %v6319, %v6344
          %v6349 = vmul.f32 %v6321, %v6344
          %v6350 = vmul.f32 %v6323, %v6344
          %v6351 = vmul.f32 %v6325, %v6344
          %v6352 = vmul.f32 %v6327, %v6344
          %v6353 = vmul.f32 %v6329, %v6344
          %v6354 = vmul.f32 %v6331, %v6344
          %v6355 = vmul.f32 %v6333, %v6344
          %v6356 = vmul.f32 %v6335, %v6344
          %v6357 = vmul.f32 %v6337, %v6344
          %v6358 = vmul.f32 %v6339, %v6344
          %v6359 = vmul.f32 %v6341, %v6344
          %v6360 = vmul.f32 %v6343, %v6344
          %v6361 = vsub.f32 %v6294, %v6345
          %v6362 = vsub.f32 %v6295, %v6346
          %v6363 = vsub.f32 %v6296, %v6347
          %v6364 = vsub.f32 %v6297, %v6348
          %v6365 = vsub.f32 %v6298, %v6349
          %v6366 = vsub.f32 %v6299, %v6350
          %v6367 = vsub.f32 %v6300, %v6351
          %v6368 = vsub.f32 %v6301, %v6352
          %v6369 = vsub.f32 %v6302, %v6353
          %v6370 = vsub.f32 %v6303, %v6354
          %v6371 = vsub.f32 %v6304, %v6355
          %v6372 = vsub.f32 %v6305, %v6356
          %v6373 = vsub.f32 %v6306, %v6357
          %v6374 = vsub.f32 %v6307, %v6358
          %v6375 = vsub.f32 %v6308, %v6359
          %v6376 = vsub.f32 %v6309, %v6360
          %v6377 = vmul.f32 %v6361, %v6361
          %v6378 = vmul.f32 %v6362, %v6362
          %v6379 = vmul.f32 %v6363, %v6363
          %v6380 = vmul.f32 %v6364, %v6364
          %v6381 = vmul.f32 %v6365, %v6365
          %v6382 = vmul.f32 %v6366, %v6366
          %v6383 = vmul.f32 %v6367, %v6367
          %v6384 = vmul.f32 %v6368, %v6368
          %v6385 = vmul.f32 %v6369, %v6369
          %v6386 = vmul.f32 %v6370, %v6370
          %v6387 = vmul.f32 %v6371, %v6371
          %v6388 = vmul.f32 %v6372, %v6372
          %v6389 = vmul.f32 %v6373, %v6373
          %v6390 = vmul.f32 %v6374, %v6374
          %v6391 = vmul.f32 %v6375, %v6375
          %v6392 = vmul.f32 %v6376, %v6376
          %6393 = vadd.xlane.f32.xlu0 %v6377
          %v6394 = vpop.xlane.xlu0 %6393
          %6395 = vadd.xlane.f32.xlu0 %v6378
          %v6396 = vpop.xlane.xlu0 %6395
          %6397 = vadd.xlane.f32.xlu0 %v6379
          %v6398 = vpop.xlane.xlu0 %6397
          %6399 = vadd.xlane.f32.xlu0 %v6380
          %v6400 = vpop.xlane.xlu0 %6399
          %6401 = vadd.xlane.f32.xlu0 %v6381
          %v6402 = vpop.xlane.xlu0 %6401
          %6403 = vadd.xlane.f32.xlu0 %v6382
          %v6404 = vpop.xlane.xlu0 %6403
          %6405 = vadd.xlane.f32.xlu0 %v6383
          %v6406 = vpop.xlane.xlu0 %6405
          %6407 = vadd.xlane.f32.xlu0 %v6384
          %v6408 = vpop.xlane.xlu0 %6407
          %6409 = vadd.xlane.f32.xlu0 %v6385
          %v6410 = vpop.xlane.xlu0 %6409
          %6411 = vadd.xlane.f32.xlu0 %v6386
          %v6412 = vpop.xlane.xlu0 %6411
          %6413 = vadd.xlane.f32.xlu0 %v6387
          %v6414 = vpop.xlane.xlu0 %6413
          %6415 = vadd.xlane.f32.xlu0 %v6388
          %v6416 = vpop.xlane.xlu0 %6415
          %6417 = vadd.xlane.f32.xlu0 %v6389
          %v6418 = vpop.xlane.xlu0 %6417
          %6419 = vadd.xlane.f32.xlu0 %v6390
          %v6420 = vpop.xlane.xlu0 %6419
          %6421 = vadd.xlane.f32.xlu0 %v6391
          %v6422 = vpop.xlane.xlu0 %6421
          %6423 = vadd.xlane.f32.xlu0 %v6392
          %v6424 = vpop.xlane.xlu0 %6423
          %v6425 = vmul.f32 %v6394, %v6344
          %v6426 = vmul.f32 %v6396, %v6344
          %v6427 = vmul.f32 %v6398, %v6344
          %v6428 = vmul.f32 %v6400, %v6344
          %v6429 = vmul.f32 %v6402, %v6344
          %v6430 = vmul.f32 %v6404, %v6344
          %v6431 = vmul.f32 %v6406, %v6344
          %v6432 = vmul.f32 %v6408, %v6344
          %v6433 = vmul.f32 %v6410, %v6344
          %v6434 = vmul.f32 %v6412, %v6344
          %v6435 = vmul.f32 %v6414, %v6344
          %v6436 = vmul.f32 %v6416, %v6344
          %v6437 = vmul.f32 %v6418, %v6344
          %v6438 = vmul.f32 %v6420, %v6344
          %v6439 = vmul.f32 %v6422, %v6344
          %v6440 = vmul.f32 %v6424, %v6344
          %v6441 = vadd.f32 %v6425, 1e-08
          %v6442 = vadd.f32 %v6426, 1e-08
          %v6443 = vadd.f32 %v6427, 1e-08
          %v6444 = vadd.f32 %v6428, 1e-08
          %v6445 = vadd.f32 %v6429, 1e-08
          %v6446 = vadd.f32 %v6430, 1e-08
          %v6447 = vadd.f32 %v6431, 1e-08
          %v6448 = vadd.f32 %v6432, 1e-08
          %v6449 = vadd.f32 %v6433, 1e-08
          %v6450 = vadd.f32 %v6434, 1e-08
          %v6451 = vadd.f32 %v6435, 1e-08
          %v6452 = vadd.f32 %v6436, 1e-08
          %v6453 = vadd.f32 %v6437, 1e-08
          %v6454 = vadd.f32 %v6438, 1e-08
          %v6455 = vadd.f32 %v6439, 1e-08
          %v6456 = vadd.f32 %v6440, 1e-08
          %v6457 = vrsqrt.pop %v6441
          %v6458 = vrsqrt.pop %v6442
          %v6459 = vrsqrt.pop %v6443
          %v6460 = vrsqrt.pop %v6444
          %v6461 = vrsqrt.pop %v6445
          %v6462 = vrsqrt.pop %v6446
          %v6463 = vrsqrt.pop %v6447
          %v6464 = vrsqrt.pop %v6448
          %v6465 = vrsqrt.pop %v6449
          %v6466 = vrsqrt.pop %v6450
          %v6467 = vrsqrt.pop %v6451
          %v6468 = vrsqrt.pop %v6452
          %v6469 = vrsqrt.pop %v6453
          %v6470 = vrsqrt.pop %v6454
          %v6471 = vrsqrt.pop %v6455
          %v6472 = vrsqrt.pop %v6456
          %v6473 = vmul.f32 %v6361, %v6457
          %v6474 = vmul.f32 %v6362, %v6458
          %v6475 = vmul.f32 %v6363, %v6459
          %v6476 = vmul.f32 %v6364, %v6460
          %v6477 = vmul.f32 %v6365, %v6461
          %v6478 = vmul.f32 %v6366, %v6462
          %v6479 = vmul.f32 %v6367, %v6463
          %v6480 = vmul.f32 %v6368, %v6464
          %v6481 = vmul.f32 %v6369, %v6465
          %v6482 = vmul.f32 %v6370, %v6466
          %v6483 = vmul.f32 %v6371, %v6467
          %v6484 = vmul.f32 %v6372, %v6468
          %v6485 = vmul.f32 %v6373, %v6469
          %v6486 = vmul.f32 %v6374, %v6470
          %v6487 = vmul.f32 %v6375, %v6471
          %v6488 = vmul.f32 %v6376, %v6472
          %v6490 = vlaneseq
          %v6491 = vshrl.u32 %v6490, 7
          %v6492 = vsub.s32 0, %v6491
          %v6493 = vrot.slane %v6310, %v6492
          %v6495 = vmul.f32 %v6473, %v6493
          %v6496 = vmul.f32 %v6474, %v6493
          %v6497 = vmul.f32 %v6475, %v6493
          %v6498 = vmul.f32 %v6476, %v6493
          %v6499 = vmul.f32 %v6477, %v6493
          %v6500 = vmul.f32 %v6478, %v6493
          %v6501 = vmul.f32 %v6479, %v6493
          %v6502 = vmul.f32 %v6480, %v6493
          %v6503 = vmul.f32 %v6481, %v6493
          %v6504 = vmul.f32 %v6482, %v6493
          %v6505 = vmul.f32 %v6483, %v6493
          %v6506 = vmul.f32 %v6484, %v6493
          %v6507 = vmul.f32 %v6485, %v6493
          %v6508 = vmul.f32 %v6486, %v6493
          %v6509 = vmul.f32 %v6487, %v6493
          %v6510 = vmul.f32 %v6488, %v6493
          %v6512 = vlaneseq
          %v6513 = vshrl.u32 %v6512, 7
          %v6514 = vsub.s32 0, %v6513
          %v6515 = vrot.slane %v6311, %v6514
          %v6517 = vadd.f32 %v6495, %v6515
          %v6518 = vadd.f32 %v6496, %v6515
          %v6519 = vadd.f32 %v6497, %v6515
          %v6520 = vadd.f32 %v6498, %v6515
          %v6521 = vadd.f32 %v6499, %v6515
          %v6522 = vadd.f32 %v6500, %v6515
          %v6523 = vadd.f32 %v6501, %v6515
          %v6524 = vadd.f32 %v6502, %v6515
          %v6525 = vadd.f32 %v6503, %v6515
          %v6526 = vadd.f32 %v6504, %v6515
          %v6527 = vadd.f32 %v6505, %v6515
          %v6528 = vadd.f32 %v6506, %v6515
          %v6529 = vadd.f32 %v6507, %v6515
          %v6530 = vadd.f32 %v6508, %v6515
          %v6531 = vadd.f32 %v6509, %v6515
          %v6532 = vadd.f32 %v6510, %v6515
          %v6533 = vpack.c.bf16 %v6518, %v6517
          %v6534 = vpack.c.bf16 %v6520, %v6519
          %v6535 = vpack.c.bf16 %v6522, %v6521
          %v6536 = vpack.c.bf16 %v6524, %v6523
          %v6537 = vpack.c.bf16 %v6526, %v6525
          %v6538 = vpack.c.bf16 %v6528, %v6527
          %v6539 = vpack.c.bf16 %v6530, %v6529
          %v6540 = vpack.c.bf16 %v6532, %v6531
          %v6541 = vld [vmem:[#allocation20] sm:$0xf]
          %v6542 = vld [vmem:[#allocation20 + $0x4] sm:$0xf]
          %v6543 = vld [vmem:[#allocation20 + $0x8] sm:$0xf]
          %v6544 = vld [vmem:[#allocation20 + $0xc] sm:$0xf]
          %v6545 = vld [vmem:[#allocation20 + $0x10] sm:$0xf]
          %v6546 = vld [vmem:[#allocation20 + $0x14] sm:$0xf]
          %v6547 = vld [vmem:[#allocation20 + $0x18] sm:$0xf]
          %v6548 = vld [vmem:[#allocation20 + $0x1c] sm:$0xf]
          %v6549 = vld [vmem:[#allocation20 + $0x20] sm:$0xf]
          %v6550 = vld [vmem:[#allocation20 + $0x24] sm:$0xf]
          %v6551 = vld [vmem:[#allocation20 + $0x28] sm:$0xf]
          %v6552 = vld [vmem:[#allocation20 + $0x2c] sm:$0xf]
          %v6553 = vld [vmem:[#allocation20 + $0x30] sm:$0xf]
          %v6554 = vld [vmem:[#allocation20 + $0x34] sm:$0xf]
          %v6555 = vld [vmem:[#allocation20 + $0x38] sm:$0xf]
          %v6556 = vld [vmem:[#allocation20 + $0x3c] sm:$0xf]
          %v6557 = vld [vmem:[%s14] sm:$0x1]
          %v6559 = vlaneseq
          %v6560 = vshrl.u32 %v6559, 7
          %v6561 = vsub.s32 0, %v6560
          %v6562 = vrot.slane %v6557, %v6561
          %v6580 = vunpack.c.l.b16 %v6541
          %v6581 = vunpack.c.l.b16 %v6542
          %v6582 = vunpack.c.l.b16 %v6543
          %v6583 = vunpack.c.l.b16 %v6544
          %v6584 = vunpack.c.l.b16 %v6545
          %v6585 = vunpack.c.l.b16 %v6546
          %v6586 = vunpack.c.l.b16 %v6547
          %v6587 = vunpack.c.l.b16 %v6548
          %v6588 = vunpack.c.l.b16 %v6549
          %v6589 = vunpack.c.l.b16 %v6550
          %v6590 = vunpack.c.l.b16 %v6551
          %v6591 = vunpack.c.l.b16 %v6552
          %v6592 = vunpack.c.l.b16 %v6553
          %v6593 = vunpack.c.l.b16 %v6554
          %v6594 = vunpack.c.l.b16 %v6555
          %v6595 = vunpack.c.l.b16 %v6556
          %v6596 = vpack.c.b16 %v6581, %v6580
          %v6597 = vpack.c.b16 %v6583, %v6582
          %v6598 = vpack.c.b16 %v6585, %v6584
          %v6599 = vpack.c.b16 %v6587, %v6586
          %v6600 = vpack.c.b16 %v6589, %v6588
          %v6601 = vpack.c.b16 %v6591, %v6590
          %v6602 = vpack.c.b16 %v6593, %v6592
          %v6603 = vpack.c.b16 %v6595, %v6594
          %6612 = vmatprep.subr.bf16.mxu0 0
          %6613 = vmatpush1.bf16.msra.mxu0 %v6596
          %6614 = vmatprep.subr.bf16.mxu0 0
          %6615 = vmatpush1.bf16.msra.mxu0 %v6597
          %6616 = vmatprep.subr.bf16.mxu0 0
          %6617 = vmatpush1.bf16.msra.mxu0 %v6598
          %6618 = vmatprep.subr.bf16.mxu0 0
          %6619 = vmatpush1.bf16.msra.mxu0 %v6599
          %6620 = vmatprep.subr.bf16.mxu0 0
          %6621 = vmatpush1.bf16.msra.mxu0 %v6600
          %6622 = vmatprep.subr.bf16.mxu0 0
          %6623 = vmatpush1.bf16.msra.mxu0 %v6601
          %6624 = vmatprep.subr.bf16.mxu0 0
          %6625 = vmatpush1.bf16.msra.mxu0 %v6602
          %6626 = vmatprep.subr.bf16.mxu0 0
          %6627 = vmatpush1.bf16.msra.mxu0 %v6603
          %6628 = vmatprep.subr.bf16.mxu0 0
          %6629 = vmatpush1.bf16.msra.mxu0 0
          %6630 = vmatprep.subr.bf16.mxu0 0
          %6631 = vmatpush1.bf16.msra.mxu0 0
          %6632 = vmatprep.subr.bf16.mxu0 0
          %6633 = vmatpush1.bf16.msra.mxu0 0
          %6634 = vmatprep.subr.bf16.mxu0 0
          %6635 = vmatpush1.bf16.msra.mxu0 0
          %6636 = vmatprep.subr.bf16.mxu0 0
          %6637 = vmatpush1.bf16.msra.mxu0 0
          %6638 = vmatprep.subr.bf16.mxu0 0
          %6639 = vmatpush1.bf16.msra.mxu0 0
          %6640 = vmatprep.subr.bf16.mxu0 0
          %6641 = vmatpush1.bf16.msra.mxu0 0
          %6642 = vmatprep.subr.bf16.mxu0 0
          %6643 = vmatpush1.bf16.msra.mxu0 0
          %6644 = vmatprep.mubr.bf16.mxu0 0
          %6645 = vmatmul.mubr.bf16.gmra.mrb[0].mxu0 %v6533
          %v6646 = vpop.f32.mrb[0].mxu0
          %v6647 = vadd.f32 %v6562, %v6646
          %v6648 = vpop.f32.mrb[0].mxu0
          %v6649 = vpop.f32.mrb[0].mxu0
          %v6650 = vadd.f32 %v6562, %v6649
          %v6651 = vpop.f32.mrb[0].mxu0
          %6652 = vmatprep.mubr.bf16.mxu0 0
          %6653 = vmatmul.mubr.bf16.gmra.mrb[0].mxu0 %v6534
          %v6654 = vpop.f32.mrb[0].mxu0
          %v6655 = vadd.f32 %v6562, %v6654
          %v6656 = vpop.f32.mrb[0].mxu0
          %v6657 = vpop.f32.mrb[0].mxu0
          %v6658 = vadd.f32 %v6562, %v6657
          %v6659 = vpop.f32.mrb[0].mxu0
          %6660 = vmatprep.mubr.bf16.mxu0 0
          %6661 = vmatmul.mubr.bf16.gmra.mrb[0].mxu0 %v6535
          %v6662 = vpop.f32.mrb[0].mxu0
          %v6663 = vadd.f32 %v6562, %v6662
          %v6664 = vpop.f32.mrb[0].mxu0
          %v6665 = vpop.f32.mrb[0].mxu0
          %v6666 = vadd.f32 %v6562, %v6665
          %v6667 = vpop.f32.mrb[0].mxu0
          %6668 = vmatprep.mubr.bf16.mxu0 0
          %6669 = vmatmul.mubr.bf16.gmra.mrb[0].mxu0 %v6536
          %v6670 = vpop.f32.mrb[0].mxu0
          %v6671 = vadd.f32 %v6562, %v6670
          %v6672 = vpop.f32.mrb[0].mxu0
          %v6673 = vpop.f32.mrb[0].mxu0
          %v6674 = vadd.f32 %v6562, %v6673
          %v6675 = vpop.f32.mrb[0].mxu0
          %6676 = vmatprep.mubr.bf16.mxu0 0
          %6677 = vmatmul.mubr.bf16.gmra.mrb[0].mxu0 %v6537
          %v6678 = vpop.f32.mrb[0].mxu0
          %v6679 = vadd.f32 %v6562, %v6678
          %v6680 = vpop.f32.mrb[0].mxu0
          %v6681 = vpop.f32.mrb[0].mxu0
          %v6682 = vadd.f32 %v6562, %v6681
          %v6683 = vpop.f32.mrb[0].mxu0
          %6684 = vmatprep.mubr.bf16.mxu0 0
          %6685 = vmatmul.mubr.bf16.gmra.mrb[0].mxu0 %v6538
          %v6686 = vpop.f32.mrb[0].mxu0
          %v6687 = vadd.f32 %v6562, %v6686
          %v6688 = vpop.f32.mrb[0].mxu0
          %v6689 = vpop.f32.mrb[0].mxu0
          %v6690 = vadd.f32 %v6562, %v6689
          %v6691 = vpop.f32.mrb[0].mxu0
          %6692 = vmatprep.mubr.bf16.mxu0 0
          %6693 = vmatmul.mubr.bf16.gmra.mrb[0].mxu0 %v6539
          %v6694 = vpop.f32.mrb[0].mxu0
          %v6695 = vadd.f32 %v6562, %v6694
          %v6696 = vpop.f32.mrb[0].mxu0
          %v6697 = vpop.f32.mrb[0].mxu0
          %v6698 = vadd.f32 %v6562, %v6697
          %v6699 = vpop.f32.mrb[0].mxu0
          %6700 = vmatprep.mubr.bf16.mxu0 0
          %6701 = vmatmul.mubr.bf16.gmra.mrb[0].mxu0 %v6540
          %v6702 = vpop.f32.mrb[0].mxu0
          %v6703 = vadd.f32 %v6562, %v6702
          %v6704 = vpop.f32.mrb[0].mxu0
          %v6705 = vpop.f32.mrb[0].mxu0
          %v6706 = vadd.f32 %v6562, %v6705
          %v6707 = vpop.f32.mrb[0].mxu0
          %6708 = vdwg.mxu0
          %v6709 = vmax.f32 %v6647, 0.0
          %v6710 = vmax.f32 %v6650, 0.0
          %v6711 = vmax.f32 %v6655, 0.0
          %v6712 = vmax.f32 %v6658, 0.0
          %v6713 = vmax.f32 %v6663, 0.0
          %v6714 = vmax.f32 %v6666, 0.0
          %v6715 = vmax.f32 %v6671, 0.0
          %v6716 = vmax.f32 %v6674, 0.0
          %v6717 = vmax.f32 %v6679, 0.0
          %v6718 = vmax.f32 %v6682, 0.0
          %v6719 = vmax.f32 %v6687, 0.0
          %v6720 = vmax.f32 %v6690, 0.0
          %v6721 = vmax.f32 %v6695, 0.0
          %v6722 = vmax.f32 %v6698, 0.0
          %v6723 = vmax.f32 %v6703, 0.0
          %v6724 = vmax.f32 %v6706, 0.0
          %v6725 = vpack.c.bf16 %v6710, %v6709
          %v6726 = vpack.c.bf16 %v6712, %v6711
          %v6727 = vpack.c.bf16 %v6714, %v6713
          %v6728 = vpack.c.bf16 %v6716, %v6715
          %v6729 = vpack.c.bf16 %v6718, %v6717
          %v6730 = vpack.c.bf16 %v6720, %v6719
          %v6731 = vpack.c.bf16 %v6722, %v6721
          %v6732 = vpack.c.bf16 %v6724, %v6723
          %v6733 = vld [vmem:[#allocation21] sm:$0xf]
          %v6734 = vld [vmem:[#allocation21 + $0x4] sm:$0xf]
          %v6735 = vld [vmem:[#allocation21 + $0x8] sm:$0xf]
          %v6736 = vld [vmem:[#allocation21 + $0xc] sm:$0xf]
          %v6737 = vld [vmem:[#allocation21 + $0x10] sm:$0xf]
          %v6738 = vld [vmem:[#allocation21 + $0x14] sm:$0xf]
          %v6739 = vld [vmem:[#allocation21 + $0x18] sm:$0xf]
          %v6740 = vld [vmem:[#allocation21 + $0x1c] sm:$0xf]
          %v6741 = vld [vmem:[#allocation21 + $0x20] sm:$0xf]
          %v6742 = vld [vmem:[#allocation21 + $0x24] sm:$0xf]
          %v6743 = vld [vmem:[#allocation21 + $0x28] sm:$0xf]
          %v6744 = vld [vmem:[#allocation21 + $0x2c] sm:$0xf]
          %v6745 = vld [vmem:[#allocation21 + $0x30] sm:$0xf]
          %v6746 = vld [vmem:[#allocation21 + $0x34] sm:$0xf]
          %v6747 = vld [vmem:[#allocation21 + $0x38] sm:$0xf]
          %v6748 = vld [vmem:[#allocation21 + $0x3c] sm:$0xf]
          %v6749 = vld [vmem:[%s16] sm:$0x1]
          %v6751 = vlaneseq
          %v6752 = vshrl.u32 %v6751, 7
          %v6753 = vsub.s32 0, %v6752
          %v6754 = vrot.slane %v6749, %v6753
          %v6772 = vunpack.c.l.b16 %v6733
          %v6773 = vunpack.c.l.b16 %v6734
          %v6774 = vunpack.c.l.b16 %v6735
          %v6775 = vunpack.c.l.b16 %v6736
          %v6776 = vunpack.c.l.b16 %v6737
          %v6777 = vunpack.c.l.b16 %v6738
          %v6778 = vunpack.c.l.b16 %v6739
          %v6779 = vunpack.c.l.b16 %v6740
          %v6780 = vunpack.c.l.b16 %v6741
          %v6781 = vunpack.c.l.b16 %v6742
          %v6782 = vunpack.c.l.b16 %v6743
          %v6783 = vunpack.c.l.b16 %v6744
          %v6784 = vunpack.c.l.b16 %v6745
          %v6785 = vunpack.c.l.b16 %v6746
          %v6786 = vunpack.c.l.b16 %v6747
          %v6787 = vunpack.c.l.b16 %v6748
          %v6788 = vpack.c.b16 %v6773, %v6772
          %v6789 = vpack.c.b16 %v6775, %v6774
          %v6790 = vpack.c.b16 %v6777, %v6776
          %v6791 = vpack.c.b16 %v6779, %v6778
          %v6792 = vpack.c.b16 %v6781, %v6780
          %v6793 = vpack.c.b16 %v6783, %v6782
          %v6794 = vpack.c.b16 %v6785, %v6784
          %v6795 = vpack.c.b16 %v6787, %v6786
          %6804 = vmatprep.subr.bf16.mxu0 0
          %6805 = vmatpush1.bf16.msra.mxu0 %v6788
          %6806 = vmatprep.subr.bf16.mxu0 0
          %6807 = vmatpush1.bf16.msra.mxu0 %v6789
          %6808 = vmatprep.subr.bf16.mxu0 0
          %6809 = vmatpush1.bf16.msra.mxu0 %v6790
          %6810 = vmatprep.subr.bf16.mxu0 0
          %6811 = vmatpush1.bf16.msra.mxu0 %v6791
          %6812 = vmatprep.subr.bf16.mxu0 0
          %6813 = vmatpush1.bf16.msra.mxu0 %v6792
          %6814 = vmatprep.subr.bf16.mxu0 0
          %6815 = vmatpush1.bf16.msra.mxu0 %v6793
          %6816 = vmatprep.subr.bf16.mxu0 0
          %6817 = vmatpush1.bf16.msra.mxu0 %v6794
          %6818 = vmatprep.subr.bf16.mxu0 0
          %6819 = vmatpush1.bf16.msra.mxu0 %v6795
          %6820 = vmatprep.subr.bf16.mxu0 0
          %6821 = vmatpush1.bf16.msra.mxu0 0
          %6822 = vmatprep.subr.bf16.mxu0 0
          %6823 = vmatpush1.bf16.msra.mxu0 0
          %6824 = vmatprep.subr.bf16.mxu0 0
          %6825 = vmatpush1.bf16.msra.mxu0 0
          %6826 = vmatprep.subr.bf16.mxu0 0
          %6827 = vmatpush1.bf16.msra.mxu0 0
          %6828 = vmatprep.subr.bf16.mxu0 0
          %6829 = vmatpush1.bf16.msra.mxu0 0
          %6830 = vmatprep.subr.bf16.mxu0 0
          %6831 = vmatpush1.bf16.msra.mxu0 0
          %6832 = vmatprep.subr.bf16.mxu0 0
          %6833 = vmatpush1.bf16.msra.mxu0 0
          %6834 = vmatprep.subr.bf16.mxu0 0
          %6835 = vmatpush1.bf16.msra.mxu0 0
          %6836 = vmatprep.mubr.bf16.mxu0 0
          %6837 = vmatmul.mubr.bf16.gmra.mrb[0].mxu0 %v6725
          %v6838 = vpop.f32.mrb[0].mxu0
          %v6839 = vadd.f32 %v6754, %v6838
          %v6840 = vpop.f32.mrb[0].mxu0
          %v6841 = vpop.f32.mrb[0].mxu0
          %v6842 = vadd.f32 %v6754, %v6841
          %v6843 = vpop.f32.mrb[0].mxu0
          %6844 = vmatprep.mubr.bf16.mxu0 0
          %6845 = vmatmul.mubr.bf16.gmra.mrb[0].mxu0 %v6726
          %v6846 = vpop.f32.mrb[0].mxu0
          %v6847 = vadd.f32 %v6754, %v6846
          %v6848 = vpop.f32.mrb[0].mxu0
          %v6849 = vpop.f32.mrb[0].mxu0
          %v6850 = vadd.f32 %v6754, %v6849
          %v6851 = vpop.f32.mrb[0].mxu0
          %6852 = vmatprep.mubr.bf16.mxu0 0
          %6853 = vmatmul.mubr.bf16.gmra.mrb[0].mxu0 %v6727
          %v6854 = vpop.f32.mrb[0].mxu0
          %v6855 = vadd.f32 %v6754, %v6854
          %v6856 = vpop.f32.mrb[0].mxu0
          %v6857 = vpop.f32.mrb[0].mxu0
          %v6858 = vadd.f32 %v6754, %v6857
          %v6859 = vpop.f32.mrb[0].mxu0
          %6860 = vmatprep.mubr.bf16.mxu0 0
          %6861 = vmatmul.mubr.bf16.gmra.mrb[0].mxu0 %v6728
          %v6862 = vpop.f32.mrb[0].mxu0
          %v6863 = vadd.f32 %v6754, %v6862
          %v6864 = vpop.f32.mrb[0].mxu0
          %v6865 = vpop.f32.mrb[0].mxu0
          %v6866 = vadd.f32 %v6754, %v6865
          %v6867 = vpop.f32.mrb[0].mxu0
          %6868 = vmatprep.mubr.bf16.mxu0 0
          %6869 = vmatmul.mubr.bf16.gmra.mrb[0].mxu0 %v6729
          %v6870 = vpop.f32.mrb[0].mxu0
          %v6871 = vadd.f32 %v6754, %v6870
          %v6872 = vpop.f32.mrb[0].mxu0
          %v6873 = vpop.f32.mrb[0].mxu0
          %v6874 = vadd.f32 %v6754, %v6873
          %v6875 = vpop.f32.mrb[0].mxu0
          %6876 = vmatprep.mubr.bf16.mxu0 0
          %6877 = vmatmul.mubr.bf16.gmra.mrb[0].mxu0 %v6730
          %v6878 = vpop.f32.mrb[0].mxu0
          %v6879 = vadd.f32 %v6754, %v6878
          %v6880 = vpop.f32.mrb[0].mxu0
          %v6881 = vpop.f32.mrb[0].mxu0
          %v6882 = vadd.f32 %v6754, %v6881
          %v6883 = vpop.f32.mrb[0].mxu0
          %6884 = vmatprep.mubr.bf16.mxu0 0
          %6885 = vmatmul.mubr.bf16.gmra.mrb[0].mxu0 %v6731
          %v6886 = vpop.f32.mrb[0].mxu0
          %v6887 = vadd.f32 %v6754, %v6886
          %v6888 = vpop.f32.mrb[0].mxu0
          %v6889 = vpop.f32.mrb[0].mxu0
          %v6890 = vadd.f32 %v6754, %v6889
          %v6891 = vpop.f32.mrb[0].mxu0
          %6892 = vmatprep.mubr.bf16.mxu0 0
          %6893 = vmatmul.mubr.bf16.gmra.mrb[0].mxu0 %v6732
          %v6894 = vpop.f32.mrb[0].mxu0
          %v6895 = vadd.f32 %v6754, %v6894
          %v6896 = vpop.f32.mrb[0].mxu0
          %v6897 = vpop.f32.mrb[0].mxu0
          %v6898 = vadd.f32 %v6754, %v6897
          %v6899 = vpop.f32.mrb[0].mxu0
          %6900 = vdwg.mxu0
          %v6901 = vadd.f32 %v6839, %v6517
          %v6902 = vadd.f32 %v6842, %v6518
          %v6903 = vadd.f32 %v6847, %v6519
          %v6904 = vadd.f32 %v6850, %v6520
          %v6905 = vadd.f32 %v6855, %v6521
          %v6906 = vadd.f32 %v6858, %v6522
          %v6907 = vadd.f32 %v6863, %v6523
          %v6908 = vadd.f32 %v6866, %v6524
          %v6909 = vadd.f32 %v6871, %v6525
          %v6910 = vadd.f32 %v6874, %v6526
          %v6911 = vadd.f32 %v6879, %v6527
          %v6912 = vadd.f32 %v6882, %v6528
          %v6913 = vadd.f32 %v6887, %v6529
          %v6914 = vadd.f32 %v6890, %v6530
          %v6915 = vadd.f32 %v6895, %v6531
          %v6916 = vadd.f32 %v6898, %v6532
          %v6917 = vadd.f32 %v6901, %v6294
          %v6918 = vadd.f32 %v6902, %v6295
          %v6919 = vadd.f32 %v6903, %v6296
          %v6920 = vadd.f32 %v6904, %v6297
          %v6921 = vadd.f32 %v6905, %v6298
          %v6922 = vadd.f32 %v6906, %v6299
          %v6923 = vadd.f32 %v6907, %v6300
          %v6924 = vadd.f32 %v6908, %v6301
          %v6925 = vadd.f32 %v6909, %v6302
          %v6926 = vadd.f32 %v6910, %v6303
          %v6927 = vadd.f32 %v6911, %v6304
          %v6928 = vadd.f32 %v6912, %v6305
          %v6929 = vadd.f32 %v6913, %v6306
          %v6930 = vadd.f32 %v6914, %v6307
          %v6931 = vadd.f32 %v6915, %v6308
          %v6932 = vadd.f32 %v6916, %v6309
          %6933 = vst [vmem:[%s749] sm:$0xff] %v6917
          %6934 = vst [vmem:[%s749 + $0x8] sm:$0xff] %v6918
          %6935 = vst [vmem:[%s749 + $0x10] sm:$0xff] %v6919
          %6936 = vst [vmem:[%s749 + $0x18] sm:$0xff] %v6920
          %6937 = vst [vmem:[%s749 + $0x20] sm:$0xff] %v6921
          %6938 = vst [vmem:[%s749 + $0x28] sm:$0xff] %v6922
          %6939 = vst [vmem:[%s749 + $0x30] sm:$0xff] %v6923
          %6940 = vst [vmem:[%s749 + $0x38] sm:$0xff] %v6924
          %6941 = vst [vmem:[%s749 + $0x40] sm:$0xff] %v6925
          %6942 = vst [vmem:[%s749 + $0x48] sm:$0xff] %v6926
          %6943 = vst [vmem:[%s749 + $0x50] sm:$0xff] %v6927
          %6944 = vst [vmem:[%s749 + $0x58] sm:$0xff] %v6928
          %6945 = vst [vmem:[%s749 + $0x60] sm:$0xff] %v6929
          %6946 = vst [vmem:[%s749 + $0x68] sm:$0xff] %v6930
          %6947 = vst [vmem:[%s749 + $0x70] sm:$0xff] %v6931
          %6948 = vst [vmem:[%s749 + $0x78] sm:$0xff] %v6932
        $region132: #{tpu_custom_call.1} parent=87 // pred_fallthru
          _
        %s6949 = sand.u32 %s447, 1
        %s6950 = scalar_lea.sflag [#allocation11], %s6949
        %s6951 = sand.u32 %s447, 1
        %s6952 = smul.addr %s6951, 128
        %s6953 = scalar_lea.vmem [#allocation23], %s6952
        // Predicated region
        $region133: #{tpu_custom_call.1} parent=87 // pred_check
          %p6954 = pneg %p457
        $region134: #{tpu_custom_call.1} parent=87 // pred_check_branch
          %6956 = sbr.rel (%p6954) target = $region136
        $region135: #{tpu_custom_call.1} parent=87 // pred_region
          %s6957 = smul.u32 16, %s46
          %s6959 = ssub.s32 2048, 2048
          %6960 = vsyncadd %s6950, %s6959
          %s6961 = smul.addr %s45, 32
          %s6962 = sadd.s32 %s6957, %s6961
          %s6963 = smul.addr %s6962, 128
          %s6964 = scalar_lea.hbm %s17, %s6963
          %s6965 = sshll.u32 %s6953, 4
          %s6966 = int_to_ptr.vmem [resolvable:$true] %s6965
          %6971 = dma.vmem_to_hbm [thread:$0]  %s6966, 2048, %s6964, %s6950, 128, 128, 8
        $region136: #{tpu_custom_call.1} parent=87 // pred_fallthru
          _
      $region88: #{tpu_custom_call.1} parent=5 // pred_fallthru
        _
      %p6972 = scmp.le.s32.totalorder 2, %s35
      // Predicated region
      $region137: #{tpu_custom_call.1} parent=5 // pred_check
        %p6973 = pneg %p6972
      $region138: #{tpu_custom_call.1} parent=5 // pred_check_branch
        %6975 = sbr.rel (%p6973) target = $region140
      $region139: #{tpu_custom_call.1} parent=5 // pred_region
        %s6976 = ssub.s32 %s35, 2
        // Predicated region
        $region141: #{tpu_custom_call.1} parent=139 // pred_check
          %p6977 = pneg %p463
        $region142: #{tpu_custom_call.1} parent=139 // pred_check_branch
          %6979 = sbr.rel (%p6977) target = $region144
        $region143: #{tpu_custom_call.1} parent=139 // pred_region
          %s6980 = sand.u32 %s448, 1
          %s6981 = scalar_lea.sflag [#allocation11], %s6980
          %s6982 = sand.u32 %s448, 1
          %s6983 = smul.addr %s6982, 128
          %s6984 = scalar_lea.vmem [#allocation23], %s6983
          %6985 = dma.done %s6981, 2048
        $region144: #{tpu_custom_call.1} parent=139 // pred_fallthru
          _
      $region140: #{tpu_custom_call.1} parent=5 // pred_fallthru
        _
    $region6: #{tpu_custom_call.1} parent=1 // loop_footer
      %s39 = sadd.s32 1, %s35
    $region7: #{tpu_custom_call.1} parent=1 // loop_footer_branch
      %34 = sbr.rel target = $region3
    $region8: #{tpu_custom_call.1} parent=1 // loop_exit
      _
    %6986 = vsyncpa [#allocation10], 1
    %s6987 = scalar_lea.sflag [#allocation10], 1
    %6988 = vsyncpa %s6987, 1
    %6989 = vsyncpa [#allocation13], 1
    %s6990 = scalar_lea.sflag [#allocation13], 1
    %6991 = vsyncpa %s6990, 1
    %6992 = vsyncpa [#allocation16], 1
    %6993 = vsyncpa [#allocation19], 1
    %6994 = vsyncpa [#allocation22], 1
    %6995 = vsyncpa [#allocation11], 1
    %s6996 = scalar_lea.sflag [#allocation11], 1
    %6997 = vsyncpa %s6996, 1

</llo_original>
